<compile_context>
chip_gen: v6e
topology: v6e:2x2x1
jax: 0.10.0
libtpu: 0.0.40
codegen_flags: <defaults>
</compile_context>

<pallas_src>
import jax
import jax.numpy as jnp
from jax.experimental import pallas as pl
from jax.experimental.pallas import tpu as pltpu


# ----------------------------------------------------------------------------
# Fused kernel factory
# ----------------------------------------------------------------------------
def _make_fused_kernel(T, BPL, H, n_emb_layers, n_layers):
    """Row layout of every activation buffer: row = t * BPL + b, with BPL = 8
    batch rows per program (one sublane tile); the grid axis tiles the batch.

    Kernel ref order:
      x2d block                              (T*BPL, D)        bf16
      for each layer l in range(n_layers):
        wx   (in, 8H) bf16   -- in = D for l==0, 2H otherwise (unsplit)
        whh  (2H, 8H) bf16   -- block-diag [W_hh_f.T | 0 ; 0 | W_hh_b.T]
        b    (1, 8H)  f32
      we (2H, E) bf16, be (1, E) f32
      wo (2H, n) bf16, bo (1, n) f32
      out_ref (T*BPL, n) f32, emb_ref (T*BPL, E) f32
      scratch: y (T*BPL, 2H) f32  [h_fwd | h_bwd],  gx (T*BPL, 8H) f32
    """
    G = 4 * H          # gates per direction
    H2 = 2 * H

    def kernel(*refs):
        it = iter(refs)
        x_ref = next(it)
        layer_refs = [(next(it), next(it), next(it)) for _ in range(n_layers)]
        we_ref, be_ref = next(it), next(it)
        wo_ref, bo_ref = next(it), next(it)
        out_ref, emb_ref = next(it), next(it)
        y_ref, gx_ref = next(it), next(it)

        def lstm_step(rf, rb, h_f, c_f, h_b, c_b, whh):
            # One merged MXU push per step: [h_f | h_b] @ block-diag W_hh.
            h_cat = jnp.concatenate([h_f, h_b], axis=1).astype(jnp.bfloat16)
            hw = jnp.dot(h_cat, whh, preferred_element_type=jnp.float32)
            g_f = gx_ref[pl.ds(rf, BPL), 0:G] + hw[:, 0:G]
            g_b = gx_ref[pl.ds(rb, BPL), G:2 * G] + hw[:, G:2 * G]
            # Full-tile (4H == 128-lane) nonlinearities, gates sliced afterwards.
            sg_f, th_f = jax.nn.sigmoid(g_f), jnp.tanh(g_f)
            sg_b, th_b = jax.nn.sigmoid(g_b), jnp.tanh(g_b)
            c_f = sg_f[:, H:2 * H] * c_f + sg_f[:, 0:H] * th_f[:, 2 * H:3 * H]
            c_b = sg_b[:, H:2 * H] * c_b + sg_b[:, 0:H] * th_b[:, 2 * H:3 * H]
            h_f = sg_f[:, 3 * H:G] * jnp.tanh(c_f)
            h_b = sg_b[:, 3 * H:G] * jnp.tanh(c_b)
            # Bidirectional output lives in one (T*BPL, 2H) slab (concat-free
            # consumption by the next layer / FC heads).
            y_ref[pl.ds(rf, BPL), 0:H] = h_f
            y_ref[pl.ds(rb, BPL), H:H2] = h_b
            return h_f, c_f, h_b, c_b

        def run_layer(l):
            wx_ref, whh_ref, b_ref = layer_refs[l]
            src = x_ref[...] if l == 0 else y_ref[...].astype(jnp.bfloat16)
            # Hoisted input projection: one bf16 MXU matmul for all timesteps
            # and both directions, bias fused once per layer (f32 accumulate).
            gx_ref[...] = (jnp.dot(src, wx_ref[...],
                                   preferred_element_type=jnp.float32)
                           + b_ref[...])
            whh = whh_ref[...]
            h_f = jnp.zeros((BPL, H), jnp.float32)
            c_f = jnp.zeros((BPL, H), jnp.float32)
            h_b = jnp.zeros((BPL, H), jnp.float32)
            c_b = jnp.zeros((BPL, H), jnp.float32)
            if T <= 32:
                # Small, static T: full unroll (max ILP on the serial path).
                for t in range(T):
                    h_f, c_f, h_b, c_b = lstm_step(
                        t * BPL, (T - 1 - t) * BPL, h_f, c_f, h_b, c_b, whh)
            else:
                # Production-sized T: bounded trace size / register pressure.
                def body(t, carry):
                    rf = pl.multiple_of(t * BPL, BPL)
                    rb = pl.multiple_of((T - 1 - t) * BPL, BPL)
                    return lstm_step(rf, rb, *carry, whh)
                jax.lax.fori_loop(0, T, body, (h_f, c_f, h_b, c_b), unroll=2)

        # ---------------- embedding LSTM stack ----------------
        for l in range(n_emb_layers):
            run_layer(l)

        # -------- embedding = F.normalize(tanh(Linear(y)), dim=time) --------
        y_emb = y_ref[...].astype(jnp.bfloat16)
        z = jnp.tanh(jnp.dot(y_emb, we_ref[...],
                             preferred_element_type=jnp.float32) + be_ref[...])
        sq = z * z
        acc = sq[0:BPL, :]
        for t in range(1, T):                      # sum over time, per (b, e)
            acc = acc + sq[t * BPL:(t + 1) * BPL, :]
        # one reciprocal + cheap vmuls instead of T divides (clamp_min(1e-12))
        inv = pl.reciprocal(jnp.maximum(jnp.sqrt(acc), 1e-12), approx=False)
        emb_ref[...] = z * jnp.concatenate([inv] * T, axis=0)   # single store

        # ---------------- blstm stack ----------------
        for l in range(n_emb_layers, n_layers):
            run_layer(l)

        # ---------------- output = sigmoid(Linear(y)) ----------------
        y_out = y_ref[...].astype(jnp.bfloat16)
        out_ref[...] = jax.nn.sigmoid(
            jnp.dot(y_out, wo_ref[...], preferred_element_type=jnp.float32)
            + bo_ref[...])

    return kernel


# ----------------------------------------------------------------------------
# Wrapper
# ----------------------------------------------------------------------------
def _prep_lstm_layer(layer_p):
    """PyTorch-layout LSTM weights -> kernel layout (bf16, fused/merged)."""
    W_ih_f, W_hh_f, b_ih_f, b_hh_f = layer_p["fwd"]
    W_ih_b, W_hh_b, b_ih_b, b_hh_b = layer_p["bwd"]
    H = W_hh_f.shape[1]
    # (in, 8H): cols [fwd i,f,g,o | bwd i,f,g,o]
    wx = jnp.concatenate([W_ih_f.T, W_ih_b.T], axis=1).astype(jnp.bfloat16)
    # block-diagonal recurrent weight: [h_f | h_b] @ whh -> [g_f | g_b]
    whh = jnp.zeros((2 * H, 8 * H), jnp.float32)
    whh = whh.at[:H, :4 * H].set(W_hh_f.T)
    whh = whh.at[H:, 4 * H:].set(W_hh_b.T)
    whh = whh.astype(jnp.bfloat16)
    b = jnp.concatenate([b_ih_f + b_hh_f,
                         b_ih_b + b_hh_b]).reshape(1, -1).astype(jnp.float32)
    return [wx, whh, b]


def blstm_e2e_lid_forward(x, params):
    """x: (B, T, input_dim) -> (output (B*T, n_lang), embedding (B, T, emb_dim))."""
    B, T, D = x.shape
    layers = list(params["emb_lstm"]) + list(params["blstm"])
    n_emb = len(params["emb_lstm"])
    H = layers[0]["fwd"][1].shape[1]
    W_e, b_e = params["emb_fc"]
    W_o, b_o = params["out_fc"]
    E = W_e.shape[0]
    n_lang = W_o.shape[0]

    BPL = 8                       # batch rows per program (one sublane tile)
    nbt = -(-B // BPL)            # batch tiles == grid size ("parallel" on v7x)
    BP = nbt * BPL

    # layout: row = bt*(T*BPL) + t*BPL + b   (per batch tile, time-major)
    x_tm = jnp.transpose(x, (1, 0, 2)).astype(jnp.float32)          # (T, B, D)
    x_p = jnp.zeros((T, BP, D), jnp.float32).at[:, :B, :].set(x_tm)
    x2d = (x_p.reshape(T, nbt, BPL, D).transpose(1, 0, 2, 3)
           .reshape(nbt * T * BPL, D).astype(jnp.bfloat16))

    operands = [x2d]
    for lp in layers:
        operands += _prep_lstm_layer(lp)
    operands += [W_e.T.astype(jnp.bfloat16),
                 b_e.reshape(1, -1).astype(jnp.float32),
                 W_o.T.astype(jnp.bfloat16),
                 b_o.reshape(1, -1).astype(jnp.float32)]

    in_specs = ([pl.BlockSpec((T * BPL, D), lambda i: (i, 0))]
                + [pl.BlockSpec(a.shape, lambda i: (0, 0))      # replicated weights
                   for a in operands[1:]])
    out_specs = (pl.BlockSpec((T * BPL, n_lang), lambda i: (i, 0)),
                 pl.BlockSpec((T * BPL, E), lambda i: (i, 0)))
    out_shape = (jax.ShapeDtypeStruct((nbt * T * BPL, n_lang), jnp.float32),
                 jax.ShapeDtypeStruct((nbt * T * BPL, E), jnp.float32))
    scratch_shapes = [pltpu.VMEM((T * BPL, 2 * H), jnp.float32),   # [h_f | h_b]
                      pltpu.VMEM((T * BPL, 8 * H), jnp.float32)]   # hoisted gates

    # Explicit scoped-VMEM budget (defaults are 16/32 MiB; fully-resident design
    # needs this once shapes grow).  Re-derive for v7x's 64 MiB physical VMEM.
    def _nbytes(a):
        return int(a.size) * a.dtype.itemsize
    per_prog = (sum(_nbytes(a) for a in operands[1:])
                + 2 * T * BPL * D * 2                      # x block (double-buffered)
                + 2 * T * BPL * (n_lang + E) * 4           # output blocks
                + T * BPL * (2 * H) * 4                    # y scratch
                + T * BPL * (8 * H) * 4)                   # gx scratch
    vmem_limit = int(max(32 << 20, min(112 << 20, 2 * per_prog + (4 << 20))))

    kernel = _make_fused_kernel(T, BPL, H, n_emb, len(layers))
    out2d, emb2d = pl.pallas_call(
        kernel,
        out_shape=out_shape,
        grid=(nbt,),
        in_specs=in_specs,
        out_specs=out_specs,
        scratch_shapes=scratch_shapes,
        compiler_params=pltpu.CompilerParams(
            dimension_semantics=("parallel",),
            vmem_limit_bytes=vmem_limit),
    )(*operands)

    # (bt, t, b, .) row layout -> (B*T, .) / (B, T, .) like the PyTorch module.
    out = (out2d.reshape(nbt, T, BPL, n_lang).transpose(0, 2, 1, 3)
           .reshape(BP, T, n_lang)[:B].reshape(B * T, n_lang))
    emb = (emb2d.reshape(nbt, T, BPL, E).transpose(0, 2, 1, 3)
           .reshape(BP, T, E)[:B])
    return out, emb


# ----------------------------------------------------------------------------
# Pure-JAX reference (independent code path, for validation)
# ----------------------------------------------------------------------------
def _lstm_layer_ref(x, p_fwd, p_bwd):
    W_ih_f, W_hh_f, b_ih_f, b_hh_f = p_fwd
    W_ih_b, W_hh_b, b_ih_b, b_hh_b = p_bwd
    H = W_hh_f.shape[1]
    B = x.shape[0]

    def run(xs, W_ih, W_hh, b):
        def step(carry, x_t):
            h, c = carry
            g = x_t @ W_ih.T + h @ W_hh.T + b
            i = jax.nn.sigmoid(g[:, :H])
            f = jax.nn.sigmoid(g[:, H:2 * H])
            gg = jnp.tanh(g[:, 2 * H:3 * H])
            o = jax.nn.sigmoid(g[:, 3 * H:])
            c = f * c + i * gg
            h = o * jnp.tanh(c)
            return (h, c), h
        init = (jnp.zeros((B, H), jnp.float32), jnp.zeros((B, H), jnp.float32))
        _, hs = jax.lax.scan(step, init, xs)
        return hs

    x_tm = jnp.transpose(x, (1, 0, 2))
    hf = run(x_tm, W_ih_f, W_hh_f, b_ih_f + b_hh_f)
    hb = run(x_tm[::-1], W_ih_b, W_hh_b, b_ih_b + b_hh_b)[::-1]
    return jnp.transpose(jnp.concatenate([hf, hb], axis=-1), (1, 0, 2))


def blstm_e2e_lid_reference(x, params):
    h = x
    for lp in params["emb_lstm"]:
        h = _lstm_layer_ref(h, lp["fwd"], lp["bwd"])
    W_e, b_e = params["emb_fc"]
    z = jnp.tanh(h @ W_e.T + b_e)
    nrm = jnp.sqrt(jnp.sum(z * z, axis=1, keepdims=True))
    embedding = z / jnp.maximum(nrm, 1e-12)
    for lp in params["blstm"]:
        h = _lstm_layer_ref(h, lp["fwd"], lp["bwd"])
    W_o, b_o = params["out_fc"]
    out = jax.nn.sigmoid(h @ W_o.T + b_o)
    return out.reshape(-1, W_o.shape[0]), embedding


# ----------------------------------------------------------------------------
# Deterministic parameter init (PyTorch-style uniform(-1/sqrt(H), 1/sqrt(H)))
# ----------------------------------------------------------------------------
def _init_lstm(key, num_layers, input_size, hidden_size):
    bound = 1.0 / (hidden_size ** 0.5)
    layers = []
    for layer in range(num_layers):
        in_sz = input_size if layer == 0 else 2 * hidden_size
        layer_p = {}
        for direction in ("fwd", "bwd"):
            key, k1, k2, k3, k4 = jax.random.split(key, 5)
            layer_p[direction] = (
                jax.random.uniform(k1, (4 * hidden_size, in_sz), jnp.float32, -bound, bound),
                jax.random.uniform(k2, (4 * hidden_size, hidden_size), jnp.float32, -bound, bound),
                jax.random.uniform(k3, (4 * hidden_size,), jnp.float32, -bound, bound),
                jax.random.uniform(k4, (4 * hidden_size,), jnp.float32, -bound, bound),
            )
        layers.append(layer_p)
    return key, layers


def _init_linear(key, out_dim, in_dim):
    bound = 1.0 / (in_dim ** 0.5)
    key, k1, k2 = jax.random.split(key, 3)
    W = jax.random.uniform(k1, (out_dim, in_dim), jnp.float32, -bound, bound)
    b = jax.random.uniform(k2, (out_dim,), jnp.float32, -bound, bound)
    return key, (W, b)


def init_params(key, n_lang, input_dim, hidden_size, num_emb_layer,
                num_lstm_layer, emb_dim):
    key, emb_lstm = _init_lstm(key, num_emb_layer, input_dim, hidden_size)
    key, emb_fc = _init_linear(key, emb_dim, 2 * hidden_size)
    key, blstm = _init_lstm(key, num_lstm_layer, 2 * hidden_size, hidden_size)
    key, out_fc = _init_linear(key, n_lang, 2 * hidden_size)
    return {"emb_lstm": emb_lstm, "emb_fc": emb_fc,
            "blstm": blstm, "out_fc": out_fc}


# ----------------------------------------------------------------------------
if __name__ == "__main__":
    N_LANG = 2
    INPUT_DIM = 16
    HIDDEN = 32
    EMB_DIM = 32
    NUM_EMB_LAYER = 2
    NUM_LSTM_LAYER = 3
    B, T = 2, 8

    root = jax.random.PRNGKey(0)
    k_params, k_x = jax.random.split(root)

    params = init_params(k_params, N_LANG, INPUT_DIM, HIDDEN,
                         NUM_EMB_LAYER, NUM_LSTM_LAYER, EMB_DIM)
    x = jax.random.normal(k_x, (B, T, INPUT_DIM), jnp.float32)

    fwd = jax.jit(lambda xx: blstm_e2e_lid_forward(xx, params))
    output, embedding = fwd(x)
    output = jax.block_until_ready(output)
    embedding = jax.block_until_ready(embedding)

    assert output.shape == (B * T, N_LANG), output.shape
    assert embedding.shape == (B, T, EMB_DIM), embedding.shape
    assert bool(jnp.all(jnp.isfinite(output)))
    assert bool(jnp.all(jnp.isfinite(embedding)))
    assert bool(jnp.all((output >= 0.0) & (output <= 1.0)))  # sigmoid range

    # Cross-check against an independent pure-JAX (f32) implementation of the
    # same forward pass.  Tolerance covers bf16 matmul operand rounding in the
    # kernel (weights + hidden state cast to bf16, f32 accumulate).
    ref_out, ref_emb = jax.jit(lambda xx: blstm_e2e_lid_reference(xx, params))(x)
    out_err = float(jnp.max(jnp.abs(output - ref_out)))
    emb_err = float(jnp.max(jnp.abs(embedding - ref_emb)))
    assert out_err < 5e-2, ("output mismatch vs reference", out_err)
    assert emb_err < 5e-2, ("embedding mismatch vs reference", emb_err)

    print("KERNEL_OK")
</pallas_src>

<mosaic_0001>
module attributes {stable_mosaic.version = 11 : i64} {
  func.func @kernel(%arg0: i32, %arg1: memref<64x16xbf16, #tpu.memory_space<vmem>>, %arg2: memref<16x256xbf16, #tpu.memory_space<vmem>>, %arg3: memref<64x256xbf16, #tpu.memory_space<vmem>>, %arg4: memref<1x256xf32, #tpu.memory_space<vmem>>, %arg5: memref<64x256xbf16, #tpu.memory_space<vmem>>, %arg6: memref<64x256xbf16, #tpu.memory_space<vmem>>, %arg7: memref<1x256xf32, #tpu.memory_space<vmem>>, %arg8: memref<64x256xbf16, #tpu.memory_space<vmem>>, %arg9: memref<64x256xbf16, #tpu.memory_space<vmem>>, %arg10: memref<1x256xf32, #tpu.memory_space<vmem>>, %arg11: memref<64x256xbf16, #tpu.memory_space<vmem>>, %arg12: memref<64x256xbf16, #tpu.memory_space<vmem>>, %arg13: memref<1x256xf32, #tpu.memory_space<vmem>>, %arg14: memref<64x256xbf16, #tpu.memory_space<vmem>>, %arg15: memref<64x256xbf16, #tpu.memory_space<vmem>>, %arg16: memref<1x256xf32, #tpu.memory_space<vmem>>, %arg17: memref<64x32xbf16, #tpu.memory_space<vmem>>, %arg18: memref<1x32xf32, #tpu.memory_space<vmem>>, %arg19: memref<64x2xbf16, #tpu.memory_space<vmem>>, %arg20: memref<1x2xf32, #tpu.memory_space<vmem>>, %arg21: memref<64x2xf32, #tpu.memory_space<vmem>>, %arg22: memref<64x32xf32, #tpu.memory_space<vmem>>, %arg23: memref<64x64xf32, #tpu.memory_space<vmem>>, %arg24: memref<64x256xf32, #tpu.memory_space<vmem>>) attributes {dimension_semantics = [#tpu.dimension_semantics<parallel>], iteration_bounds = array<i64: 1>, scalar_prefetch = 0 : i64, scratch_operands = 2 : i64, tpu.core_type = #tpu.core_type<tc>, window_params = [{transform_indices = @transform_0, window_bounds = array<i64: 64, 16>}, {pipeline_mode = #tpu.pipeline_mode<synchronous>, transform_indices = @transform_1, window_bounds = array<i64: 16, 256>}, {pipeline_mode = #tpu.pipeline_mode<synchronous>, transform_indices = @transform_2, window_bounds = array<i64: 64, 256>}, {pipeline_mode = #tpu.pipeline_mode<synchronous>, transform_indices = @transform_3, window_bounds = array<i64: 1, 256>}, {pipeline_mode = #tpu.pipeline_mode<synchronous>, transform_indices = @transform_4, window_bounds = array<i64: 64, 256>}, {pipeline_mode = #tpu.pipeline_mode<synchronous>, transform_indices = @transform_5, window_bounds = array<i64: 64, 256>}, {pipeline_mode = #tpu.pipeline_mode<synchronous>, transform_indices = @transform_6, window_bounds = array<i64: 1, 256>}, {pipeline_mode = #tpu.pipeline_mode<synchronous>, transform_indices = @transform_7, window_bounds = array<i64: 64, 256>}, {pipeline_mode = #tpu.pipeline_mode<synchronous>, transform_indices = @transform_8, window_bounds = array<i64: 64, 256>}, {pipeline_mode = #tpu.pipeline_mode<synchronous>, transform_indices = @transform_9, window_bounds = array<i64: 1, 256>}, {pipeline_mode = #tpu.pipeline_mode<synchronous>, transform_indices = @transform_10, window_bounds = array<i64: 64, 256>}, {pipeline_mode = #tpu.pipeline_mode<synchronous>, transform_indices = @transform_11, window_bounds = array<i64: 64, 256>}, {pipeline_mode = #tpu.pipeline_mode<synchronous>, transform_indices = @transform_12, window_bounds = array<i64: 1, 256>}, {pipeline_mode = #tpu.pipeline_mode<synchronous>, transform_indices = @transform_13, window_bounds = array<i64: 64, 256>}, {pipeline_mode = #tpu.pipeline_mode<synchronous>, transform_indices = @transform_14, window_bounds = array<i64: 64, 256>}, {pipeline_mode = #tpu.pipeline_mode<synchronous>, transform_indices = @transform_15, window_bounds = array<i64: 1, 256>}, {pipeline_mode = #tpu.pipeline_mode<synchronous>, transform_indices = @transform_16, window_bounds = array<i64: 64, 32>}, {pipeline_mode = #tpu.pipeline_mode<synchronous>, transform_indices = @transform_17, window_bounds = array<i64: 1, 32>}, {pipeline_mode = #tpu.pipeline_mode<synchronous>, transform_indices = @transform_18, window_bounds = array<i64: 64, 2>}, {pipeline_mode = #tpu.pipeline_mode<synchronous>, transform_indices = @transform_19, window_bounds = array<i64: 1, 2>}, {transform_indices = @transform_20, window_bounds = array<i64: 64, 2>}, {transform_indices = @transform_21, window_bounds = array<i64: 64, 32>}]} {
    %c0 = arith.constant 0 : index
    %c0_0 = arith.constant 0 : index
    %0 = vector.load %arg1[%c0, %c0_0] : memref<64x16xbf16, #tpu.memory_space<vmem>>, vector<64x16xbf16>
    %c0_1 = arith.constant 0 : index
    %c0_2 = arith.constant 0 : index
    %1 = vector.load %arg2[%c0_1, %c0_2] : memref<16x256xbf16, #tpu.memory_space<vmem>>, vector<16x256xbf16>
    %cst = arith.constant dense<0.000000e+00> : vector<64x256xf32>
    %2 = tpu.matmul %0, %1, %cst {dimension_numbers = #tpu.dot_dimension_numbers<[1], [0], [0], [1], [0, 0, 1, 1], [], []>} : vector<64x16xbf16>, vector<16x256xbf16>, vector<64x256xf32> -> vector<64x256xf32>
    %c0_3 = arith.constant 0 : index
    %c0_4 = arith.constant 0 : index
    %3 = vector.load %arg4[%c0_3, %c0_4] : memref<1x256xf32, #tpu.memory_space<vmem>>, vector<1x256xf32>
    %4 = vector.broadcast %3 : vector<1x256xf32> to vector<64x256xf32>
    %5 = arith.addf %2, %4 : vector<64x256xf32>
    %c0_5 = arith.constant 0 : index
    %c0_6 = arith.constant 0 : index
    %6 = vector.load %arg24[%c0_5, %c0_6] : memref<64x256xf32, #tpu.memory_space<vmem>>, vector<64x256xf32>
    tpu.vector_store %arg24[%c0_5, %c0_6], %5 {strides = array<i32>} : memref<64x256xf32, #tpu.memory_space<vmem>>, vector<64x256xf32>,
    %c0_7 = arith.constant 0 : index
    %c0_8 = arith.constant 0 : index
    %7 = vector.load %arg3[%c0_7, %c0_8] : memref<64x256xbf16, #tpu.memory_space<vmem>>, vector<64x256xbf16>
    %cst_9 = arith.constant 0.000000e+00 : f32
    %8 = vector.broadcast %cst_9 : f32 to vector<8x32xf32>
    %cst_10 = arith.constant 0.000000e+00 : f32
    %9 = vector.broadcast %cst_10 : f32 to vector<8x32xf32>
    %cst_11 = arith.constant 0.000000e+00 : f32
    %10 = vector.broadcast %cst_11 : f32 to vector<8x32xf32>
    %cst_12 = arith.constant 0.000000e+00 : f32
    %11 = vector.broadcast %cst_12 : f32 to vector<8x32xf32>
    %12 = tpu.concatenate %8, %10 in 1 : vector<8x32xf32>, vector<8x32xf32> -> vector<8x64xf32>
    %13 = arith.truncf %12 : vector<8x64xf32> to vector<8x64xbf16>
    %cst_13 = arith.constant dense<0.000000e+00> : vector<8x256xf32>
    %14 = tpu.matmul %13, %7, %cst_13 {dimension_numbers = #tpu.dot_dimension_numbers<[1], [0], [0], [1], [0, 0, 1, 1], [], []>} : vector<8x64xbf16>, vector<64x256xbf16>, vector<8x256xf32> -> vector<8x256xf32>
    %c0_14 = arith.constant 0 : index
    %c0_15 = arith.constant 0 : index
    %15 = vector.load %arg24[%c0_14, %c0_15] : memref<64x256xf32, #tpu.memory_space<vmem>>, vector<8x128xf32>
    %16 = vector.extract_strided_slice %14 {offsets = [0, 0], sizes = [8, 128], strides = [1, 1]} : vector<8x256xf32> to vector<8x128xf32>
    %17 = arith.addf %15, %16 : vector<8x128xf32>
    %c56 = arith.constant 56 : index
    %c128 = arith.constant 128 : index
    %18 = vector.load %arg24[%c56, %c128] : memref<64x256xf32, #tpu.memory_space<vmem>>, vector<8x128xf32>
    %19 = vector.extract_strided_slice %14 {offsets = [0, 128], sizes = [8, 128], strides = [1, 1]} : vector<8x256xf32> to vector<8x128xf32>
    %20 = arith.addf %18, %19 : vector<8x128xf32>
    %21 = arith.negf %17 : vector<8x128xf32>
    %22 = math.exp %21 : vector<8x128xf32>
    %cst_16 = arith.constant 1.000000e+00 : f32
    %23 = vector.broadcast %cst_16 : f32 to vector<8x128xf32>
    %24 = arith.addf %23, %22 : vector<8x128xf32>
    %25 = arith.divf %23, %24 : vector<8x128xf32>
    %26 = math.tanh %17 : vector<8x128xf32>
    %27 = arith.negf %20 : vector<8x128xf32>
    %28 = math.exp %27 : vector<8x128xf32>
    %cst_17 = arith.constant 1.000000e+00 : f32
    %29 = vector.broadcast %cst_17 : f32 to vector<8x128xf32>
    %30 = arith.addf %29, %28 : vector<8x128xf32>
    %31 = arith.divf %29, %30 : vector<8x128xf32>
    %32 = math.tanh %20 : vector<8x128xf32>
    %33 = vector.extract_strided_slice %25 {offsets = [0, 32], sizes = [8, 32], strides = [1, 1]} : vector<8x128xf32> to vector<8x32xf32>
    %34 = arith.mulf %33, %9 : vector<8x32xf32>
    %35 = vector.extract_strided_slice %25 {offsets = [0, 0], sizes = [8, 32], strides = [1, 1]} : vector<8x128xf32> to vector<8x32xf32>
    %36 = vector.extract_strided_slice %26 {offsets = [0, 64], sizes = [8, 32], strides = [1, 1]} : vector<8x128xf32> to vector<8x32xf32>
    %37 = arith.mulf %35, %36 : vector<8x32xf32>
    %38 = arith.addf %34, %37 : vector<8x32xf32>
    %39 = vector.extract_strided_slice %31 {offsets = [0, 32], sizes = [8, 32], strides = [1, 1]} : vector<8x128xf32> to vector<8x32xf32>
    %40 = arith.mulf %39, %11 : vector<8x32xf32>
    %41 = vector.extract_strided_slice %31 {offsets = [0, 0], sizes = [8, 32], strides = [1, 1]} : vector<8x128xf32> to vector<8x32xf32>
    %42 = vector.extract_strided_slice %32 {offsets = [0, 64], sizes = [8, 32], strides = [1, 1]} : vector<8x128xf32> to vector<8x32xf32>
    %43 = arith.mulf %41, %42 : vector<8x32xf32>
    %44 = arith.addf %40, %43 : vector<8x32xf32>
    %45 = vector.extract_strided_slice %25 {offsets = [0, 96], sizes = [8, 32], strides = [1, 1]} : vector<8x128xf32> to vector<8x32xf32>
    %46 = math.tanh %38 : vector<8x32xf32>
    %47 = arith.mulf %45, %46 : vector<8x32xf32>
    %48 = vector.extract_strided_slice %31 {offsets = [0, 96], sizes = [8, 32], strides = [1, 1]} : vector<8x128xf32> to vector<8x32xf32>
    %49 = math.tanh %44 : vector<8x32xf32>
    %50 = arith.mulf %48, %49 : vector<8x32xf32>
    %c0_18 = arith.constant 0 : index
    %c0_19 = arith.constant 0 : index
    %51 = vector.load %arg23[%c0_18, %c0_19] : memref<64x64xf32, #tpu.memory_space<vmem>>, vector<8x32xf32>
    tpu.vector_store %arg23[%c0_18, %c0_19], %47 {strides = array<i32>} : memref<64x64xf32, #tpu.memory_space<vmem>>, vector<8x32xf32>,
    %c56_20 = arith.constant 56 : index
    %c32 = arith.constant 32 : index
    %52 = vector.load %arg23[%c56_20, %c32] : memref<64x64xf32, #tpu.memory_space<vmem>>, vector<8x32xf32>
    tpu.vector_store %arg23[%c56_20, %c32], %50 {strides = array<i32>} : memref<64x64xf32, #tpu.memory_space<vmem>>, vector<8x32xf32>,
    %53 = tpu.concatenate %47, %50 in 1 : vector<8x32xf32>, vector<8x32xf32> -> vector<8x64xf32>
    %54 = arith.truncf %53 : vector<8x64xf32> to vector<8x64xbf16>
    %cst_21 = arith.constant dense<0.000000e+00> : vector<8x256xf32>
    %55 = tpu.matmul %54, %7, %cst_21 {dimension_numbers = #tpu.dot_dimension_numbers<[1], [0], [0], [1], [0, 0, 1, 1], [], []>} : vector<8x64xbf16>, vector<64x256xbf16>, vector<8x256xf32> -> vector<8x256xf32>
    %c8 = arith.constant 8 : index
    %c0_22 = arith.constant 0 : index
    %56 = vector.load %arg24[%c8, %c0_22] : memref<64x256xf32, #tpu.memory_space<vmem>>, vector<8x128xf32>
    %57 = vector.extract_strided_slice %55 {offsets = [0, 0], sizes = [8, 128], strides = [1, 1]} : vector<8x256xf32> to vector<8x128xf32>
    %58 = arith.addf %56, %57 : vector<8x128xf32>
    %c48 = arith.constant 48 : index
    %c128_23 = arith.constant 128 : index
    %59 = vector.load %arg24[%c48, %c128_23] : memref<64x256xf32, #tpu.memory_space<vmem>>, vector<8x128xf32>
    %60 = vector.extract_strided_slice %55 {offsets = [0, 128], sizes = [8, 128], strides = [1, 1]} : vector<8x256xf32> to vector<8x128xf32>
    %61 = arith.addf %59, %60 : vector<8x128xf32>
    %62 = arith.negf %58 : vector<8x128xf32>
    %63 = math.exp %62 : vector<8x128xf32>
    %cst_24 = arith.constant 1.000000e+00 : f32
    %64 = vector.broadcast %cst_24 : f32 to vector<8x128xf32>
    %65 = arith.addf %64, %63 : vector<8x128xf32>
    %66 = arith.divf %64, %65 : vector<8x128xf32>
    %67 = math.tanh %58 : vector<8x128xf32>
    %68 = arith.negf %61 : vector<8x128xf32>
    %69 = math.exp %68 : vector<8x128xf32>
    %cst_25 = arith.constant 1.000000e+00 : f32
    %70 = vector.broadcast %cst_25 : f32 to vector<8x128xf32>
    %71 = arith.addf %70, %69 : vector<8x128xf32>
    %72 = arith.divf %70, %71 : vector<8x128xf32>
    %73 = math.tanh %61 : vector<8x128xf32>
    %74 = vector.extract_strided_slice %66 {offsets = [0, 32], sizes = [8, 32], strides = [1, 1]} : vector<8x128xf32> to vector<8x32xf32>
    %75 = arith.mulf %74, %38 : vector<8x32xf32>
    %76 = vector.extract_strided_slice %66 {offsets = [0, 0], sizes = [8, 32], strides = [1, 1]} : vector<8x128xf32> to vector<8x32xf32>
    %77 = vector.extract_strided_slice %67 {offsets = [0, 64], sizes = [8, 32], strides = [1, 1]} : vector<8x128xf32> to vector<8x32xf32>
    %78 = arith.mulf %76, %77 : vector<8x32xf32>
    %79 = arith.addf %75, %78 : vector<8x32xf32>
    %80 = vector.extract_strided_slice %72 {offsets = [0, 32], sizes = [8, 32], strides = [1, 1]} : vector<8x128xf32> to vector<8x32xf32>
    %81 = arith.mulf %80, %44 : vector<8x32xf32>
    %82 = vector.extract_strided_slice %72 {offsets = [0, 0], sizes = [8, 32], strides = [1, 1]} : vector<8x128xf32> to vector<8x32xf32>
    %83 = vector.extract_strided_slice %73 {offsets = [0, 64], sizes = [8, 32], strides = [1, 1]} : vector<8x128xf32> to vector<8x32xf32>
    %84 = arith.mulf %82, %83 : vector<8x32xf32>
    %85 = arith.addf %81, %84 : vector<8x32xf32>
    %86 = vector.extract_strided_slice %66 {offsets = [0, 96], sizes = [8, 32], strides = [1, 1]} : vector<8x128xf32> to vector<8x32xf32>
    %87 = math.tanh %79 : vector<8x32xf32>
    %88 = arith.mulf %86, %87 : vector<8x32xf32>
    %89 = vector.extract_strided_slice %72 {offsets = [0, 96], sizes = [8, 32], strides = [1, 1]} : vector<8x128xf32> to vector<8x32xf32>
    %90 = math.tanh %85 : vector<8x32xf32>
    %91 = arith.mulf %89, %90 : vector<8x32xf32>
    %c8_26 = arith.constant 8 : index
    %c0_27 = arith.constant 0 : index
    %92 = vector.load %arg23[%c8_26, %c0_27] : memref<64x64xf32, #tpu.memory_space<vmem>>, vector<8x32xf32>
    tpu.vector_store %arg23[%c8_26, %c0_27], %88 {strides = array<i32>} : memref<64x64xf32, #tpu.memory_space<vmem>>, vector<8x32xf32>,
    %c48_28 = arith.constant 48 : index
    %c32_29 = arith.constant 32 : index
    %93 = vector.load %arg23[%c48_28, %c32_29] : memref<64x64xf32, #tpu.memory_space<vmem>>, vector<8x32xf32>
    tpu.vector_store %arg23[%c48_28, %c32_29], %91 {strides = array<i32>} : memref<64x64xf32, #tpu.memory_space<vmem>>, vector<8x32xf32>,
    %94 = tpu.concatenate %88, %91 in 1 : vector<8x32xf32>, vector<8x32xf32> -> vector<8x64xf32>
    %95 = arith.truncf %94 : vector<8x64xf32> to vector<8x64xbf16>
    %cst_30 = arith.constant dense<0.000000e+00> : vector<8x256xf32>
    %96 = tpu.matmul %95, %7, %cst_30 {dimension_numbers = #tpu.dot_dimension_numbers<[1], [0], [0], [1], [0, 0, 1, 1], [], []>} : vector<8x64xbf16>, vector<64x256xbf16>, vector<8x256xf32> -> vector<8x256xf32>
    %c16 = arith.constant 16 : index
    %c0_31 = arith.constant 0 : index
    %97 = vector.load %arg24[%c16, %c0_31] : memref<64x256xf32, #tpu.memory_space<vmem>>, vector<8x128xf32>
    %98 = vector.extract_strided_slice %96 {offsets = [0, 0], sizes = [8, 128], strides = [1, 1]} : vector<8x256xf32> to vector<8x128xf32>
    %99 = arith.addf %97, %98 : vector<8x128xf32>
    %c40 = arith.constant 40 : index
    %c128_32 = arith.constant 128 : index
    %100 = vector.load %arg24[%c40, %c128_32] : memref<64x256xf32, #tpu.memory_space<vmem>>, vector<8x128xf32>
    %101 = vector.extract_strided_slice %96 {offsets = [0, 128], sizes = [8, 128], strides = [1, 1]} : vector<8x256xf32> to vector<8x128xf32>
    %102 = arith.addf %100, %101 : vector<8x128xf32>
    %103 = arith.negf %99 : vector<8x128xf32>
    %104 = math.exp %103 : vector<8x128xf32>
    %cst_33 = arith.constant 1.000000e+00 : f32
    %105 = vector.broadcast %cst_33 : f32 to vector<8x128xf32>
    %106 = arith.addf %105, %104 : vector<8x128xf32>
    %107 = arith.divf %105, %106 : vector<8x128xf32>
    %108 = math.tanh %99 : vector<8x128xf32>
    %109 = arith.negf %102 : vector<8x128xf32>
    %110 = math.exp %109 : vector<8x128xf32>
    %cst_34 = arith.constant 1.000000e+00 : f32
    %111 = vector.broadcast %cst_34 : f32 to vector<8x128xf32>
    %112 = arith.addf %111, %110 : vector<8x128xf32>
    %113 = arith.divf %111, %112 : vector<8x128xf32>
    %114 = math.tanh %102 : vector<8x128xf32>
    %115 = vector.extract_strided_slice %107 {offsets = [0, 32], sizes = [8, 32], strides = [1, 1]} : vector<8x128xf32> to vector<8x32xf32>
    %116 = arith.mulf %115, %79 : vector<8x32xf32>
    %117 = vector.extract_strided_slice %107 {offsets = [0, 0], sizes = [8, 32], strides = [1, 1]} : vector<8x128xf32> to vector<8x32xf32>
    %118 = vector.extract_strided_slice %108 {offsets = [0, 64], sizes = [8, 32], strides = [1, 1]} : vector<8x128xf32> to vector<8x32xf32>
    %119 = arith.mulf %117, %118 : vector<8x32xf32>
    %120 = arith.addf %116, %119 : vector<8x32xf32>
    %121 = vector.extract_strided_slice %113 {offsets = [0, 32], sizes = [8, 32], strides = [1, 1]} : vector<8x128xf32> to vector<8x32xf32>
    %122 = arith.mulf %121, %85 : vector<8x32xf32>
    %123 = vector.extract_strided_slice %113 {offsets = [0, 0], sizes = [8, 32], strides = [1, 1]} : vector<8x128xf32> to vector<8x32xf32>
    %124 = vector.extract_strided_slice %114 {offsets = [0, 64], sizes = [8, 32], strides = [1, 1]} : vector<8x128xf32> to vector<8x32xf32>
    %125 = arith.mulf %123, %124 : vector<8x32xf32>
    %126 = arith.addf %122, %125 : vector<8x32xf32>
    %127 = vector.extract_strided_slice %107 {offsets = [0, 96], sizes = [8, 32], strides = [1, 1]} : vector<8x128xf32> to vector<8x32xf32>
    %128 = math.tanh %120 : vector<8x32xf32>
    %129 = arith.mulf %127, %128 : vector<8x32xf32>
    %130 = vector.extract_strided_slice %113 {offsets = [0, 96], sizes = [8, 32], strides = [1, 1]} : vector<8x128xf32> to vector<8x32xf32>
    %131 = math.tanh %126 : vector<8x32xf32>
    %132 = arith.mulf %130, %131 : vector<8x32xf32>
    %c16_35 = arith.constant 16 : index
    %c0_36 = arith.constant 0 : index
    %133 = vector.load %arg23[%c16_35, %c0_36] : memref<64x64xf32, #tpu.memory_space<vmem>>, vector<8x32xf32>
    tpu.vector_store %arg23[%c16_35, %c0_36], %129 {strides = array<i32>} : memref<64x64xf32, #tpu.memory_space<vmem>>, vector<8x32xf32>,
    %c40_37 = arith.constant 40 : index
    %c32_38 = arith.constant 32 : index
    %134 = vector.load %arg23[%c40_37, %c32_38] : memref<64x64xf32, #tpu.memory_space<vmem>>, vector<8x32xf32>
    tpu.vector_store %arg23[%c40_37, %c32_38], %132 {strides = array<i32>} : memref<64x64xf32, #tpu.memory_space<vmem>>, vector<8x32xf32>,
    %135 = tpu.concatenate %129, %132 in 1 : vector<8x32xf32>, vector<8x32xf32> -> vector<8x64xf32>
    %136 = arith.truncf %135 : vector<8x64xf32> to vector<8x64xbf16>
    %cst_39 = arith.constant dense<0.000000e+00> : vector<8x256xf32>
    %137 = tpu.matmul %136, %7, %cst_39 {dimension_numbers = #tpu.dot_dimension_numbers<[1], [0], [0], [1], [0, 0, 1, 1], [], []>} : vector<8x64xbf16>, vector<64x256xbf16>, vector<8x256xf32> -> vector<8x256xf32>
    %c24 = arith.constant 24 : index
    %c0_40 = arith.constant 0 : index
    %138 = vector.load %arg24[%c24, %c0_40] : memref<64x256xf32, #tpu.memory_space<vmem>>, vector<8x128xf32>
    %139 = vector.extract_strided_slice %137 {offsets = [0, 0], sizes = [8, 128], strides = [1, 1]} : vector<8x256xf32> to vector<8x128xf32>
    %140 = arith.addf %138, %139 : vector<8x128xf32>
    %c32_41 = arith.constant 32 : index
    %c128_42 = arith.constant 128 : index
    %141 = vector.load %arg24[%c32_41, %c128_42] : memref<64x256xf32, #tpu.memory_space<vmem>>, vector<8x128xf32>
    %142 = vector.extract_strided_slice %137 {offsets = [0, 128], sizes = [8, 128], strides = [1, 1]} : vector<8x256xf32> to vector<8x128xf32>
    %143 = arith.addf %141, %142 : vector<8x128xf32>
    %144 = arith.negf %140 : vector<8x128xf32>
    %145 = math.exp %144 : vector<8x128xf32>
    %cst_43 = arith.constant 1.000000e+00 : f32
    %146 = vector.broadcast %cst_43 : f32 to vector<8x128xf32>
    %147 = arith.addf %146, %145 : vector<8x128xf32>
    %148 = arith.divf %146, %147 : vector<8x128xf32>
    %149 = math.tanh %140 : vector<8x128xf32>
    %150 = arith.negf %143 : vector<8x128xf32>
    %151 = math.exp %150 : vector<8x128xf32>
    %cst_44 = arith.constant 1.000000e+00 : f32
    %152 = vector.broadcast %cst_44 : f32 to vector<8x128xf32>
    %153 = arith.addf %152, %151 : vector<8x128xf32>
    %154 = arith.divf %152, %153 : vector<8x128xf32>
    %155 = math.tanh %143 : vector<8x128xf32>
    %156 = vector.extract_strided_slice %148 {offsets = [0, 32], sizes = [8, 32], strides = [1, 1]} : vector<8x128xf32> to vector<8x32xf32>
    %157 = arith.mulf %156, %120 : vector<8x32xf32>
    %158 = vector.extract_strided_slice %148 {offsets = [0, 0], sizes = [8, 32], strides = [1, 1]} : vector<8x128xf32> to vector<8x32xf32>
    %159 = vector.extract_strided_slice %149 {offsets = [0, 64], sizes = [8, 32], strides = [1, 1]} : vector<8x128xf32> to vector<8x32xf32>
    %160 = arith.mulf %158, %159 : vector<8x32xf32>
    %161 = arith.addf %157, %160 : vector<8x32xf32>
    %162 = vector.extract_strided_slice %154 {offsets = [0, 32], sizes = [8, 32], strides = [1, 1]} : vector<8x128xf32> to vector<8x32xf32>
    %163 = arith.mulf %162, %126 : vector<8x32xf32>
    %164 = vector.extract_strided_slice %154 {offsets = [0, 0], sizes = [8, 32], strides = [1, 1]} : vector<8x128xf32> to vector<8x32xf32>
    %165 = vector.extract_strided_slice %155 {offsets = [0, 64], sizes = [8, 32], strides = [1, 1]} : vector<8x128xf32> to vector<8x32xf32>
    %166 = arith.mulf %164, %165 : vector<8x32xf32>
    %167 = arith.addf %163, %166 : vector<8x32xf32>
    %168 = vector.extract_strided_slice %148 {offsets = [0, 96], sizes = [8, 32], strides = [1, 1]} : vector<8x128xf32> to vector<8x32xf32>
    %169 = math.tanh %161 : vector<8x32xf32>
    %170 = arith.mulf %168, %169 : vector<8x32xf32>
    %171 = vector.extract_strided_slice %154 {offsets = [0, 96], sizes = [8, 32], strides = [1, 1]} : vector<8x128xf32> to vector<8x32xf32>
    %172 = math.tanh %167 : vector<8x32xf32>
    %173 = arith.mulf %171, %172 : vector<8x32xf32>
    %c24_45 = arith.constant 24 : index
    %c0_46 = arith.constant 0 : index
    %174 = vector.load %arg23[%c24_45, %c0_46] : memref<64x64xf32, #tpu.memory_space<vmem>>, vector<8x32xf32>
    tpu.vector_store %arg23[%c24_45, %c0_46], %170 {strides = array<i32>} : memref<64x64xf32, #tpu.memory_space<vmem>>, vector<8x32xf32>,
    %c32_47 = arith.constant 32 : index
    %c32_48 = arith.constant 32 : index
    %175 = vector.load %arg23[%c32_47, %c32_48] : memref<64x64xf32, #tpu.memory_space<vmem>>, vector<8x32xf32>
    tpu.vector_store %arg23[%c32_47, %c32_48], %173 {strides = array<i32>} : memref<64x64xf32, #tpu.memory_space<vmem>>, vector<8x32xf32>,
    %176 = tpu.concatenate %170, %173 in 1 : vector<8x32xf32>, vector<8x32xf32> -> vector<8x64xf32>
    %177 = arith.truncf %176 : vector<8x64xf32> to vector<8x64xbf16>
    %cst_49 = arith.constant dense<0.000000e+00> : vector<8x256xf32>
    %178 = tpu.matmul %177, %7, %cst_49 {dimension_numbers = #tpu.dot_dimension_numbers<[1], [0], [0], [1], [0, 0, 1, 1], [], []>} : vector<8x64xbf16>, vector<64x256xbf16>, vector<8x256xf32> -> vector<8x256xf32>
    %c32_50 = arith.constant 32 : index
    %c0_51 = arith.constant 0 : index
    %179 = vector.load %arg24[%c32_50, %c0_51] : memref<64x256xf32, #tpu.memory_space<vmem>>, vector<8x128xf32>
    %180 = vector.extract_strided_slice %178 {offsets = [0, 0], sizes = [8, 128], strides = [1, 1]} : vector<8x256xf32> to vector<8x128xf32>
    %181 = arith.addf %179, %180 : vector<8x128xf32>
    %c24_52 = arith.constant 24 : index
    %c128_53 = arith.constant 128 : index
    %182 = vector.load %arg24[%c24_52, %c128_53] : memref<64x256xf32, #tpu.memory_space<vmem>>, vector<8x128xf32>
    %183 = vector.extract_strided_slice %178 {offsets = [0, 128], sizes = [8, 128], strides = [1, 1]} : vector<8x256xf32> to vector<8x128xf32>
    %184 = arith.addf %182, %183 : vector<8x128xf32>
    %185 = arith.negf %181 : vector<8x128xf32>
    %186 = math.exp %185 : vector<8x128xf32>
    %cst_54 = arith.constant 1.000000e+00 : f32
    %187 = vector.broadcast %cst_54 : f32 to vector<8x128xf32>
    %188 = arith.addf %187, %186 : vector<8x128xf32>
    %189 = arith.divf %187, %188 : vector<8x128xf32>
    %190 = math.tanh %181 : vector<8x128xf32>
    %191 = arith.negf %184 : vector<8x128xf32>
    %192 = math.exp %191 : vector<8x128xf32>
    %cst_55 = arith.constant 1.000000e+00 : f32
    %193 = vector.broadcast %cst_55 : f32 to vector<8x128xf32>
    %194 = arith.addf %193, %192 : vector<8x128xf32>
    %195 = arith.divf %193, %194 : vector<8x128xf32>
    %196 = math.tanh %184 : vector<8x128xf32>
    %197 = vector.extract_strided_slice %189 {offsets = [0, 32], sizes = [8, 32], strides = [1, 1]} : vector<8x128xf32> to vector<8x32xf32>
    %198 = arith.mulf %197, %161 : vector<8x32xf32>
    %199 = vector.extract_strided_slice %189 {offsets = [0, 0], sizes = [8, 32], strides = [1, 1]} : vector<8x128xf32> to vector<8x32xf32>
    %200 = vector.extract_strided_slice %190 {offsets = [0, 64], sizes = [8, 32], strides = [1, 1]} : vector<8x128xf32> to vector<8x32xf32>
    %201 = arith.mulf %199, %200 : vector<8x32xf32>
    %202 = arith.addf %198, %201 : vector<8x32xf32>
    %203 = vector.extract_strided_slice %195 {offsets = [0, 32], sizes = [8, 32], strides = [1, 1]} : vector<8x128xf32> to vector<8x32xf32>
    %204 = arith.mulf %203, %167 : vector<8x32xf32>
    %205 = vector.extract_strided_slice %195 {offsets = [0, 0], sizes = [8, 32], strides = [1, 1]} : vector<8x128xf32> to vector<8x32xf32>
    %206 = vector.extract_strided_slice %196 {offsets = [0, 64], sizes = [8, 32], strides = [1, 1]} : vector<8x128xf32> to vector<8x32xf32>
    %207 = arith.mulf %205, %206 : vector<8x32xf32>
    %208 = arith.addf %204, %207 : vector<8x32xf32>
    %209 = vector.extract_strided_slice %189 {offsets = [0, 96], sizes = [8, 32], strides = [1, 1]} : vector<8x128xf32> to vector<8x32xf32>
    %210 = math.tanh %202 : vector<8x32xf32>
    %211 = arith.mulf %209, %210 : vector<8x32xf32>
    %212 = vector.extract_strided_slice %195 {offsets = [0, 96], sizes = [8, 32], strides = [1, 1]} : vector<8x128xf32> to vector<8x32xf32>
    %213 = math.tanh %208 : vector<8x32xf32>
    %214 = arith.mulf %212, %213 : vector<8x32xf32>
    %c32_56 = arith.constant 32 : index
    %c0_57 = arith.constant 0 : index
    %215 = vector.load %arg23[%c32_56, %c0_57] : memref<64x64xf32, #tpu.memory_space<vmem>>, vector<8x32xf32>
    tpu.vector_store %arg23[%c32_56, %c0_57], %211 {strides = array<i32>} : memref<64x64xf32, #tpu.memory_space<vmem>>, vector<8x32xf32>,
    %c24_58 = arith.constant 24 : index
    %c32_59 = arith.constant 32 : index
    %216 = vector.load %arg23[%c24_58, %c32_59] : memref<64x64xf32, #tpu.memory_space<vmem>>, vector<8x32xf32>
    tpu.vector_store %arg23[%c24_58, %c32_59], %214 {strides = array<i32>} : memref<64x64xf32, #tpu.memory_space<vmem>>, vector<8x32xf32>,
    %217 = tpu.concatenate %211, %214 in 1 : vector<8x32xf32>, vector<8x32xf32> -> vector<8x64xf32>
    %218 = arith.truncf %217 : vector<8x64xf32> to vector<8x64xbf16>
    %cst_60 = arith.constant dense<0.000000e+00> : vector<8x256xf32>
    %219 = tpu.matmul %218, %7, %cst_60 {dimension_numbers = #tpu.dot_dimension_numbers<[1], [0], [0], [1], [0, 0, 1, 1], [], []>} : vector<8x64xbf16>, vector<64x256xbf16>, vector<8x256xf32> -> vector<8x256xf32>
    %c40_61 = arith.constant 40 : index
    %c0_62 = arith.constant 0 : index
    %220 = vector.load %arg24[%c40_61, %c0_62] : memref<64x256xf32, #tpu.memory_space<vmem>>, vector<8x128xf32>
    %221 = vector.extract_strided_slice %219 {offsets = [0, 0], sizes = [8, 128], strides = [1, 1]} : vector<8x256xf32> to vector<8x128xf32>
    %222 = arith.addf %220, %221 : vector<8x128xf32>
    %c16_63 = arith.constant 16 : index
    %c128_64 = arith.constant 128 : index
    %223 = vector.load %arg24[%c16_63, %c128_64] : memref<64x256xf32, #tpu.memory_space<vmem>>, vector<8x128xf32>
    %224 = vector.extract_strided_slice %219 {offsets = [0, 128], sizes = [8, 128], strides = [1, 1]} : vector<8x256xf32> to vector<8x128xf32>
    %225 = arith.addf %223, %224 : vector<8x128xf32>
    %226 = arith.negf %222 : vector<8x128xf32>
    %227 = math.exp %226 : vector<8x128xf32>
    %cst_65 = arith.constant 1.000000e+00 : f32
    %228 = vector.broadcast %cst_65 : f32 to vector<8x128xf32>
    %229 = arith.addf %228, %227 : vector<8x128xf32>
    %230 = arith.divf %228, %229 : vector<8x128xf32>
    %231 = math.tanh %222 : vector<8x128xf32>
    %232 = arith.negf %225 : vector<8x128xf32>
    %233 = math.exp %232 : vector<8x128xf32>
    %cst_66 = arith.constant 1.000000e+00 : f32
    %234 = vector.broadcast %cst_66 : f32 to vector<8x128xf32>
    %235 = arith.addf %234, %233 : vector<8x128xf32>
    %236 = arith.divf %234, %235 : vector<8x128xf32>
    %237 = math.tanh %225 : vector<8x128xf32>
    %238 = vector.extract_strided_slice %230 {offsets = [0, 32], sizes = [8, 32], strides = [1, 1]} : vector<8x128xf32> to vector<8x32xf32>
    %239 = arith.mulf %238, %202 : vector<8x32xf32>
    %240 = vector.extract_strided_slice %230 {offsets = [0, 0], sizes = [8, 32], strides = [1, 1]} : vector<8x128xf32> to vector<8x32xf32>
    %241 = vector.extract_strided_slice %231 {offsets = [0, 64], sizes = [8, 32], strides = [1, 1]} : vector<8x128xf32> to vector<8x32xf32>
    %242 = arith.mulf %240, %241 : vector<8x32xf32>
    %243 = arith.addf %239, %242 : vector<8x32xf32>
    %244 = vector.extract_strided_slice %236 {offsets = [0, 32], sizes = [8, 32], strides = [1, 1]} : vector<8x128xf32> to vector<8x32xf32>
    %245 = arith.mulf %244, %208 : vector<8x32xf32>
    %246 = vector.extract_strided_slice %236 {offsets = [0, 0], sizes = [8, 32], strides = [1, 1]} : vector<8x128xf32> to vector<8x32xf32>
    %247 = vector.extract_strided_slice %237 {offsets = [0, 64], sizes = [8, 32], strides = [1, 1]} : vector<8x128xf32> to vector<8x32xf32>
    %248 = arith.mulf %246, %247 : vector<8x32xf32>
    %249 = arith.addf %245, %248 : vector<8x32xf32>
    %250 = vector.extract_strided_slice %230 {offsets = [0, 96], sizes = [8, 32], strides = [1, 1]} : vector<8x128xf32> to vector<8x32xf32>
    %251 = math.tanh %243 : vector<8x32xf32>
    %252 = arith.mulf %250, %251 : vector<8x32xf32>
    %253 = vector.extract_strided_slice %236 {offsets = [0, 96], sizes = [8, 32], strides = [1, 1]} : vector<8x128xf32> to vector<8x32xf32>
    %254 = math.tanh %249 : vector<8x32xf32>
    %255 = arith.mulf %253, %254 : vector<8x32xf32>
    %c40_67 = arith.constant 40 : index
    %c0_68 = arith.constant 0 : index
    %256 = vector.load %arg23[%c40_67, %c0_68] : memref<64x64xf32, #tpu.memory_space<vmem>>, vector<8x32xf32>
    tpu.vector_store %arg23[%c40_67, %c0_68], %252 {strides = array<i32>} : memref<64x64xf32, #tpu.memory_space<vmem>>, vector<8x32xf32>,
    %c16_69 = arith.constant 16 : index
    %c32_70 = arith.constant 32 : index
    %257 = vector.load %arg23[%c16_69, %c32_70] : memref<64x64xf32, #tpu.memory_space<vmem>>, vector<8x32xf32>
    tpu.vector_store %arg23[%c16_69, %c32_70], %255 {strides = array<i32>} : memref<64x64xf32, #tpu.memory_space<vmem>>, vector<8x32xf32>,
    %258 = tpu.concatenate %252, %255 in 1 : vector<8x32xf32>, vector<8x32xf32> -> vector<8x64xf32>
    %259 = arith.truncf %258 : vector<8x64xf32> to vector<8x64xbf16>
    %cst_71 = arith.constant dense<0.000000e+00> : vector<8x256xf32>
    %260 = tpu.matmul %259, %7, %cst_71 {dimension_numbers = #tpu.dot_dimension_numbers<[1], [0], [0], [1], [0, 0, 1, 1], [], []>} : vector<8x64xbf16>, vector<64x256xbf16>, vector<8x256xf32> -> vector<8x256xf32>
    %c48_72 = arith.constant 48 : index
    %c0_73 = arith.constant 0 : index
    %261 = vector.load %arg24[%c48_72, %c0_73] : memref<64x256xf32, #tpu.memory_space<vmem>>, vector<8x128xf32>
    %262 = vector.extract_strided_slice %260 {offsets = [0, 0], sizes = [8, 128], strides = [1, 1]} : vector<8x256xf32> to vector<8x128xf32>
    %263 = arith.addf %261, %262 : vector<8x128xf32>
    %c8_74 = arith.constant 8 : index
    %c128_75 = arith.constant 128 : index
    %264 = vector.load %arg24[%c8_74, %c128_75] : memref<64x256xf32, #tpu.memory_space<vmem>>, vector<8x128xf32>
    %265 = vector.extract_strided_slice %260 {offsets = [0, 128], sizes = [8, 128], strides = [1, 1]} : vector<8x256xf32> to vector<8x128xf32>
    %266 = arith.addf %264, %265 : vector<8x128xf32>
    %267 = arith.negf %263 : vector<8x128xf32>
    %268 = math.exp %267 : vector<8x128xf32>
    %cst_76 = arith.constant 1.000000e+00 : f32
    %269 = vector.broadcast %cst_76 : f32 to vector<8x128xf32>
    %270 = arith.addf %269, %268 : vector<8x128xf32>
    %271 = arith.divf %269, %270 : vector<8x128xf32>
    %272 = math.tanh %263 : vector<8x128xf32>
    %273 = arith.negf %266 : vector<8x128xf32>
    %274 = math.exp %273 : vector<8x128xf32>
    %cst_77 = arith.constant 1.000000e+00 : f32
    %275 = vector.broadcast %cst_77 : f32 to vector<8x128xf32>
    %276 = arith.addf %275, %274 : vector<8x128xf32>
    %277 = arith.divf %275, %276 : vector<8x128xf32>
    %278 = math.tanh %266 : vector<8x128xf32>
    %279 = vector.extract_strided_slice %271 {offsets = [0, 32], sizes = [8, 32], strides = [1, 1]} : vector<8x128xf32> to vector<8x32xf32>
    %280 = arith.mulf %279, %243 : vector<8x32xf32>
    %281 = vector.extract_strided_slice %271 {offsets = [0, 0], sizes = [8, 32], strides = [1, 1]} : vector<8x128xf32> to vector<8x32xf32>
    %282 = vector.extract_strided_slice %272 {offsets = [0, 64], sizes = [8, 32], strides = [1, 1]} : vector<8x128xf32> to vector<8x32xf32>
    %283 = arith.mulf %281, %282 : vector<8x32xf32>
    %284 = arith.addf %280, %283 : vector<8x32xf32>
    %285 = vector.extract_strided_slice %277 {offsets = [0, 32], sizes = [8, 32], strides = [1, 1]} : vector<8x128xf32> to vector<8x32xf32>
    %286 = arith.mulf %285, %249 : vector<8x32xf32>
    %287 = vector.extract_strided_slice %277 {offsets = [0, 0], sizes = [8, 32], strides = [1, 1]} : vector<8x128xf32> to vector<8x32xf32>
    %288 = vector.extract_strided_slice %278 {offsets = [0, 64], sizes = [8, 32], strides = [1, 1]} : vector<8x128xf32> to vector<8x32xf32>
    %289 = arith.mulf %287, %288 : vector<8x32xf32>
    %290 = arith.addf %286, %289 : vector<8x32xf32>
    %291 = vector.extract_strided_slice %271 {offsets = [0, 96], sizes = [8, 32], strides = [1, 1]} : vector<8x128xf32> to vector<8x32xf32>
    %292 = math.tanh %284 : vector<8x32xf32>
    %293 = arith.mulf %291, %292 : vector<8x32xf32>
    %294 = vector.extract_strided_slice %277 {offsets = [0, 96], sizes = [8, 32], strides = [1, 1]} : vector<8x128xf32> to vector<8x32xf32>
    %295 = math.tanh %290 : vector<8x32xf32>
    %296 = arith.mulf %294, %295 : vector<8x32xf32>
    %c48_78 = arith.constant 48 : index
    %c0_79 = arith.constant 0 : index
    %297 = vector.load %arg23[%c48_78, %c0_79] : memref<64x64xf32, #tpu.memory_space<vmem>>, vector<8x32xf32>
    tpu.vector_store %arg23[%c48_78, %c0_79], %293 {strides = array<i32>} : memref<64x64xf32, #tpu.memory_space<vmem>>, vector<8x32xf32>,
    %c8_80 = arith.constant 8 : index
    %c32_81 = arith.constant 32 : index
    %298 = vector.load %arg23[%c8_80, %c32_81] : memref<64x64xf32, #tpu.memory_space<vmem>>, vector<8x32xf32>
    tpu.vector_store %arg23[%c8_80, %c32_81], %296 {strides = array<i32>} : memref<64x64xf32, #tpu.memory_space<vmem>>, vector<8x32xf32>,
    %299 = tpu.concatenate %293, %296 in 1 : vector<8x32xf32>, vector<8x32xf32> -> vector<8x64xf32>
    %300 = arith.truncf %299 : vector<8x64xf32> to vector<8x64xbf16>
    %cst_82 = arith.constant dense<0.000000e+00> : vector<8x256xf32>
    %301 = tpu.matmul %300, %7, %cst_82 {dimension_numbers = #tpu.dot_dimension_numbers<[1], [0], [0], [1], [0, 0, 1, 1], [], []>} : vector<8x64xbf16>, vector<64x256xbf16>, vector<8x256xf32> -> vector<8x256xf32>
    %c56_83 = arith.constant 56 : index
    %c0_84 = arith.constant 0 : index
    %302 = vector.load %arg24[%c56_83, %c0_84] : memref<64x256xf32, #tpu.memory_space<vmem>>, vector<8x128xf32>
    %303 = vector.extract_strided_slice %301 {offsets = [0, 0], sizes = [8, 128], strides = [1, 1]} : vector<8x256xf32> to vector<8x128xf32>
    %304 = arith.addf %302, %303 : vector<8x128xf32>
    %c0_85 = arith.constant 0 : index
    %c128_86 = arith.constant 128 : index
    %305 = vector.load %arg24[%c0_85, %c128_86] : memref<64x256xf32, #tpu.memory_space<vmem>>, vector<8x128xf32>
    %306 = vector.extract_strided_slice %301 {offsets = [0, 128], sizes = [8, 128], strides = [1, 1]} : vector<8x256xf32> to vector<8x128xf32>
    %307 = arith.addf %305, %306 : vector<8x128xf32>
    %308 = arith.negf %304 : vector<8x128xf32>
    %309 = math.exp %308 : vector<8x128xf32>
    %cst_87 = arith.constant 1.000000e+00 : f32
    %310 = vector.broadcast %cst_87 : f32 to vector<8x128xf32>
    %311 = arith.addf %310, %309 : vector<8x128xf32>
    %312 = arith.divf %310, %311 : vector<8x128xf32>
    %313 = math.tanh %304 : vector<8x128xf32>
    %314 = arith.negf %307 : vector<8x128xf32>
    %315 = math.exp %314 : vector<8x128xf32>
    %cst_88 = arith.constant 1.000000e+00 : f32
    %316 = vector.broadcast %cst_88 : f32 to vector<8x128xf32>
    %317 = arith.addf %316, %315 : vector<8x128xf32>
    %318 = arith.divf %316, %317 : vector<8x128xf32>
    %319 = math.tanh %307 : vector<8x128xf32>
    %320 = vector.extract_strided_slice %312 {offsets = [0, 32], sizes = [8, 32], strides = [1, 1]} : vector<8x128xf32> to vector<8x32xf32>
    %321 = arith.mulf %320, %284 : vector<8x32xf32>
    %322 = vector.extract_strided_slice %312 {offsets = [0, 0], sizes = [8, 32], strides = [1, 1]} : vector<8x128xf32> to vector<8x32xf32>
    %323 = vector.extract_strided_slice %313 {offsets = [0, 64], sizes = [8, 32], strides = [1, 1]} : vector<8x128xf32> to vector<8x32xf32>
    %324 = arith.mulf %322, %323 : vector<8x32xf32>
    %325 = arith.addf %321, %324 : vector<8x32xf32>
    %326 = vector.extract_strided_slice %318 {offsets = [0, 32], sizes = [8, 32], strides = [1, 1]} : vector<8x128xf32> to vector<8x32xf32>
    %327 = arith.mulf %326, %290 : vector<8x32xf32>
    %328 = vector.extract_strided_slice %318 {offsets = [0, 0], sizes = [8, 32], strides = [1, 1]} : vector<8x128xf32> to vector<8x32xf32>
    %329 = vector.extract_strided_slice %319 {offsets = [0, 64], sizes = [8, 32], strides = [1, 1]} : vector<8x128xf32> to vector<8x32xf32>
    %330 = arith.mulf %328, %329 : vector<8x32xf32>
    %331 = arith.addf %327, %330 : vector<8x32xf32>
    %332 = vector.extract_strided_slice %312 {offsets = [0, 96], sizes = [8, 32], strides = [1, 1]} : vector<8x128xf32> to vector<8x32xf32>
    %333 = math.tanh %325 : vector<8x32xf32>
    %334 = arith.mulf %332, %333 : vector<8x32xf32>
    %335 = vector.extract_strided_slice %318 {offsets = [0, 96], sizes = [8, 32], strides = [1, 1]} : vector<8x128xf32> to vector<8x32xf32>
    %336 = math.tanh %331 : vector<8x32xf32>
    %337 = arith.mulf %335, %336 : vector<8x32xf32>
    %c56_89 = arith.constant 56 : index
    %c0_90 = arith.constant 0 : index
    %338 = vector.load %arg23[%c56_89, %c0_90] : memref<64x64xf32, #tpu.memory_space<vmem>>, vector<8x32xf32>
    tpu.vector_store %arg23[%c56_89, %c0_90], %334 {strides = array<i32>} : memref<64x64xf32, #tpu.memory_space<vmem>>, vector<8x32xf32>,
    %c0_91 = arith.constant 0 : index
    %c32_92 = arith.constant 32 : index
    %339 = vector.load %arg23[%c0_91, %c32_92] : memref<64x64xf32, #tpu.memory_space<vmem>>, vector<8x32xf32>
    tpu.vector_store %arg23[%c0_91, %c32_92], %337 {strides = array<i32>} : memref<64x64xf32, #tpu.memory_space<vmem>>, vector<8x32xf32>,
    %c0_93 = arith.constant 0 : index
    %c0_94 = arith.constant 0 : index
    %340 = vector.load %arg23[%c0_93, %c0_94] : memref<64x64xf32, #tpu.memory_space<vmem>>, vector<64x64xf32>
    %341 = arith.truncf %340 : vector<64x64xf32> to vector<64x64xbf16>
    %c0_95 = arith.constant 0 : index
    %c0_96 = arith.constant 0 : index
    %342 = vector.load %arg5[%c0_95, %c0_96] : memref<64x256xbf16, #tpu.memory_space<vmem>>, vector<64x256xbf16>
    %cst_97 = arith.constant dense<0.000000e+00> : vector<64x256xf32>
    %343 = tpu.matmul %341, %342, %cst_97 {dimension_numbers = #tpu.dot_dimension_numbers<[1], [0], [0], [1], [0, 0, 1, 1], [], []>} : vector<64x64xbf16>, vector<64x256xbf16>, vector<64x256xf32> -> vector<64x256xf32>
    %c0_98 = arith.constant 0 : index
    %c0_99 = arith.constant 0 : index
    %344 = vector.load %arg7[%c0_98, %c0_99] : memref<1x256xf32, #tpu.memory_space<vmem>>, vector<1x256xf32>
    %345 = vector.broadcast %344 : vector<1x256xf32> to vector<64x256xf32>
    %346 = arith.addf %343, %345 : vector<64x256xf32>
    %c0_100 = arith.constant 0 : index
    %c0_101 = arith.constant 0 : index
    %347 = vector.load %arg24[%c0_100, %c0_101] : memref<64x256xf32, #tpu.memory_space<vmem>>, vector<64x256xf32>
    tpu.vector_store %arg24[%c0_100, %c0_101], %346 {strides = array<i32>} : memref<64x256xf32, #tpu.memory_space<vmem>>, vector<64x256xf32>,
    %c0_102 = arith.constant 0 : index
    %c0_103 = arith.constant 0 : index
    %348 = vector.load %arg6[%c0_102, %c0_103] : memref<64x256xbf16, #tpu.memory_space<vmem>>, vector<64x256xbf16>
    %cst_104 = arith.constant 0.000000e+00 : f32
    %349 = vector.broadcast %cst_104 : f32 to vector<8x32xf32>
    %cst_105 = arith.constant 0.000000e+00 : f32
    %350 = vector.broadcast %cst_105 : f32 to vector<8x32xf32>
    %cst_106 = arith.constant 0.000000e+00 : f32
    %351 = vector.broadcast %cst_106 : f32 to vector<8x32xf32>
    %cst_107 = arith.constant 0.000000e+00 : f32
    %352 = vector.broadcast %cst_107 : f32 to vector<8x32xf32>
    %353 = tpu.concatenate %349, %351 in 1 : vector<8x32xf32>, vector<8x32xf32> -> vector<8x64xf32>
    %354 = arith.truncf %353 : vector<8x64xf32> to vector<8x64xbf16>
    %cst_108 = arith.constant dense<0.000000e+00> : vector<8x256xf32>
    %355 = tpu.matmul %354, %348, %cst_108 {dimension_numbers = #tpu.dot_dimension_numbers<[1], [0], [0], [1], [0, 0, 1, 1], [], []>} : vector<8x64xbf16>, vector<64x256xbf16>, vector<8x256xf32> -> vector<8x256xf32>
    %c0_109 = arith.constant 0 : index
    %c0_110 = arith.constant 0 : index
    %356 = vector.load %arg24[%c0_109, %c0_110] : memref<64x256xf32, #tpu.memory_space<vmem>>, vector<8x128xf32>
    %357 = vector.extract_strided_slice %355 {offsets = [0, 0], sizes = [8, 128], strides = [1, 1]} : vector<8x256xf32> to vector<8x128xf32>
    %358 = arith.addf %356, %357 : vector<8x128xf32>
    %c56_111 = arith.constant 56 : index
    %c128_112 = arith.constant 128 : index
    %359 = vector.load %arg24[%c56_111, %c128_112] : memref<64x256xf32, #tpu.memory_space<vmem>>, vector<8x128xf32>
    %360 = vector.extract_strided_slice %355 {offsets = [0, 128], sizes = [8, 128], strides = [1, 1]} : vector<8x256xf32> to vector<8x128xf32>
    %361 = arith.addf %359, %360 : vector<8x128xf32>
    %362 = arith.negf %358 : vector<8x128xf32>
    %363 = math.exp %362 : vector<8x128xf32>
    %cst_113 = arith.constant 1.000000e+00 : f32
    %364 = vector.broadcast %cst_113 : f32 to vector<8x128xf32>
    %365 = arith.addf %364, %363 : vector<8x128xf32>
    %366 = arith.divf %364, %365 : vector<8x128xf32>
    %367 = math.tanh %358 : vector<8x128xf32>
    %368 = arith.negf %361 : vector<8x128xf32>
    %369 = math.exp %368 : vector<8x128xf32>
    %cst_114 = arith.constant 1.000000e+00 : f32
    %370 = vector.broadcast %cst_114 : f32 to vector<8x128xf32>
    %371 = arith.addf %370, %369 : vector<8x128xf32>
    %372 = arith.divf %370, %371 : vector<8x128xf32>
    %373 = math.tanh %361 : vector<8x128xf32>
    %374 = vector.extract_strided_slice %366 {offsets = [0, 32], sizes = [8, 32], strides = [1, 1]} : vector<8x128xf32> to vector<8x32xf32>
    %375 = arith.mulf %374, %350 : vector<8x32xf32>
    %376 = vector.extract_strided_slice %366 {offsets = [0, 0], sizes = [8, 32], strides = [1, 1]} : vector<8x128xf32> to vector<8x32xf32>
    %377 = vector.extract_strided_slice %367 {offsets = [0, 64], sizes = [8, 32], strides = [1, 1]} : vector<8x128xf32> to vector<8x32xf32>
    %378 = arith.mulf %376, %377 : vector<8x32xf32>
    %379 = arith.addf %375, %378 : vector<8x32xf32>
    %380 = vector.extract_strided_slice %372 {offsets = [0, 32], sizes = [8, 32], strides = [1, 1]} : vector<8x128xf32> to vector<8x32xf32>
    %381 = arith.mulf %380, %352 : vector<8x32xf32>
    %382 = vector.extract_strided_slice %372 {offsets = [0, 0], sizes = [8, 32], strides = [1, 1]} : vector<8x128xf32> to vector<8x32xf32>
    %383 = vector.extract_strided_slice %373 {offsets = [0, 64], sizes = [8, 32], strides = [1, 1]} : vector<8x128xf32> to vector<8x32xf32>
    %384 = arith.mulf %382, %383 : vector<8x32xf32>
    %385 = arith.addf %381, %384 : vector<8x32xf32>
    %386 = vector.extract_strided_slice %366 {offsets = [0, 96], sizes = [8, 32], strides = [1, 1]} : vector<8x128xf32> to vector<8x32xf32>
    %387 = math.tanh %379 : vector<8x32xf32>
    %388 = arith.mulf %386, %387 : vector<8x32xf32>
    %389 = vector.extract_strided_slice %372 {offsets = [0, 96], sizes = [8, 32], strides = [1, 1]} : vector<8x128xf32> to vector<8x32xf32>
    %390 = math.tanh %385 : vector<8x32xf32>
    %391 = arith.mulf %389, %390 : vector<8x32xf32>
    %c0_115 = arith.constant 0 : index
    %c0_116 = arith.constant 0 : index
    %392 = vector.load %arg23[%c0_115, %c0_116] : memref<64x64xf32, #tpu.memory_space<vmem>>, vector<8x32xf32>
    tpu.vector_store %arg23[%c0_115, %c0_116], %388 {strides = array<i32>} : memref<64x64xf32, #tpu.memory_space<vmem>>, vector<8x32xf32>,
    %c56_117 = arith.constant 56 : index
    %c32_118 = arith.constant 32 : index
    %393 = vector.load %arg23[%c56_117, %c32_118] : memref<64x64xf32, #tpu.memory_space<vmem>>, vector<8x32xf32>
    tpu.vector_store %arg23[%c56_117, %c32_118], %391 {strides = array<i32>} : memref<64x64xf32, #tpu.memory_space<vmem>>, vector<8x32xf32>,
    %394 = tpu.concatenate %388, %391 in 1 : vector<8x32xf32>, vector<8x32xf32> -> vector<8x64xf32>
    %395 = arith.truncf %394 : vector<8x64xf32> to vector<8x64xbf16>
    %cst_119 = arith.constant dense<0.000000e+00> : vector<8x256xf32>
    %396 = tpu.matmul %395, %348, %cst_119 {dimension_numbers = #tpu.dot_dimension_numbers<[1], [0], [0], [1], [0, 0, 1, 1], [], []>} : vector<8x64xbf16>, vector<64x256xbf16>, vector<8x256xf32> -> vector<8x256xf32>
    %c8_120 = arith.constant 8 : index
    %c0_121 = arith.constant 0 : index
    %397 = vector.load %arg24[%c8_120, %c0_121] : memref<64x256xf32, #tpu.memory_space<vmem>>, vector<8x128xf32>
    %398 = vector.extract_strided_slice %396 {offsets = [0, 0], sizes = [8, 128], strides = [1, 1]} : vector<8x256xf32> to vector<8x128xf32>
    %399 = arith.addf %397, %398 : vector<8x128xf32>
    %c48_122 = arith.constant 48 : index
    %c128_123 = arith.constant 128 : index
    %400 = vector.load %arg24[%c48_122, %c128_123] : memref<64x256xf32, #tpu.memory_space<vmem>>, vector<8x128xf32>
    %401 = vector.extract_strided_slice %396 {offsets = [0, 128], sizes = [8, 128], strides = [1, 1]} : vector<8x256xf32> to vector<8x128xf32>
    %402 = arith.addf %400, %401 : vector<8x128xf32>
    %403 = arith.negf %399 : vector<8x128xf32>
    %404 = math.exp %403 : vector<8x128xf32>
    %cst_124 = arith.constant 1.000000e+00 : f32
    %405 = vector.broadcast %cst_124 : f32 to vector<8x128xf32>
    %406 = arith.addf %405, %404 : vector<8x128xf32>
    %407 = arith.divf %405, %406 : vector<8x128xf32>
    %408 = math.tanh %399 : vector<8x128xf32>
    %409 = arith.negf %402 : vector<8x128xf32>
    %410 = math.exp %409 : vector<8x128xf32>
    %cst_125 = arith.constant 1.000000e+00 : f32
    %411 = vector.broadcast %cst_125 : f32 to vector<8x128xf32>
    %412 = arith.addf %411, %410 : vector<8x128xf32>
    %413 = arith.divf %411, %412 : vector<8x128xf32>
    %414 = math.tanh %402 : vector<8x128xf32>
    %415 = vector.extract_strided_slice %407 {offsets = [0, 32], sizes = [8, 32], strides = [1, 1]} : vector<8x128xf32> to vector<8x32xf32>
    %416 = arith.mulf %415, %379 : vector<8x32xf32>
    %417 = vector.extract_strided_slice %407 {offsets = [0, 0], sizes = [8, 32], strides = [1, 1]} : vector<8x128xf32> to vector<8x32xf32>
    %418 = vector.extract_strided_slice %408 {offsets = [0, 64], sizes = [8, 32], strides = [1, 1]} : vector<8x128xf32> to vector<8x32xf32>
    %419 = arith.mulf %417, %418 : vector<8x32xf32>
    %420 = arith.addf %416, %419 : vector<8x32xf32>
    %421 = vector.extract_strided_slice %413 {offsets = [0, 32], sizes = [8, 32], strides = [1, 1]} : vector<8x128xf32> to vector<8x32xf32>
    %422 = arith.mulf %421, %385 : vector<8x32xf32>
    %423 = vector.extract_strided_slice %413 {offsets = [0, 0], sizes = [8, 32], strides = [1, 1]} : vector<8x128xf32> to vector<8x32xf32>
    %424 = vector.extract_strided_slice %414 {offsets = [0, 64], sizes = [8, 32], strides = [1, 1]} : vector<8x128xf32> to vector<8x32xf32>
    %425 = arith.mulf %423, %424 : vector<8x32xf32>
    %426 = arith.addf %422, %425 : vector<8x32xf32>
    %427 = vector.extract_strided_slice %407 {offsets = [0, 96], sizes = [8, 32], strides = [1, 1]} : vector<8x128xf32> to vector<8x32xf32>
    %428 = math.tanh %420 : vector<8x32xf32>
    %429 = arith.mulf %427, %428 : vector<8x32xf32>
    %430 = vector.extract_strided_slice %413 {offsets = [0, 96], sizes = [8, 32], strides = [1, 1]} : vector<8x128xf32> to vector<8x32xf32>
    %431 = math.tanh %426 : vector<8x32xf32>
    %432 = arith.mulf %430, %431 : vector<8x32xf32>
    %c8_126 = arith.constant 8 : index
    %c0_127 = arith.constant 0 : index
    %433 = vector.load %arg23[%c8_126, %c0_127] : memref<64x64xf32, #tpu.memory_space<vmem>>, vector<8x32xf32>
    tpu.vector_store %arg23[%c8_126, %c0_127], %429 {strides = array<i32>} : memref<64x64xf32, #tpu.memory_space<vmem>>, vector<8x32xf32>,
    %c48_128 = arith.constant 48 : index
    %c32_129 = arith.constant 32 : index
    %434 = vector.load %arg23[%c48_128, %c32_129] : memref<64x64xf32, #tpu.memory_space<vmem>>, vector<8x32xf32>
    tpu.vector_store %arg23[%c48_128, %c32_129], %432 {strides = array<i32>} : memref<64x64xf32, #tpu.memory_space<vmem>>, vector<8x32xf32>,
    %435 = tpu.concatenate %429, %432 in 1 : vector<8x32xf32>, vector<8x32xf32> -> vector<8x64xf32>
    %436 = arith.truncf %435 : vector<8x64xf32> to vector<8x64xbf16>
    %cst_130 = arith.constant dense<0.000000e+00> : vector<8x256xf32>
    %437 = tpu.matmul %436, %348, %cst_130 {dimension_numbers = #tpu.dot_dimension_numbers<[1], [0], [0], [1], [0, 0, 1, 1], [], []>} : vector<8x64xbf16>, vector<64x256xbf16>, vector<8x256xf32> -> vector<8x256xf32>
    %c16_131 = arith.constant 16 : index
    %c0_132 = arith.constant 0 : index
    %438 = vector.load %arg24[%c16_131, %c0_132] : memref<64x256xf32, #tpu.memory_space<vmem>>, vector<8x128xf32>
    %439 = vector.extract_strided_slice %437 {offsets = [0, 0], sizes = [8, 128], strides = [1, 1]} : vector<8x256xf32> to vector<8x128xf32>
    %440 = arith.addf %438, %439 : vector<8x128xf32>
    %c40_133 = arith.constant 40 : index
    %c128_134 = arith.constant 128 : index
    %441 = vector.load %arg24[%c40_133, %c128_134] : memref<64x256xf32, #tpu.memory_space<vmem>>, vector<8x128xf32>
    %442 = vector.extract_strided_slice %437 {offsets = [0, 128], sizes = [8, 128], strides = [1, 1]} : vector<8x256xf32> to vector<8x128xf32>
    %443 = arith.addf %441, %442 : vector<8x128xf32>
    %444 = arith.negf %440 : vector<8x128xf32>
    %445 = math.exp %444 : vector<8x128xf32>
    %cst_135 = arith.constant 1.000000e+00 : f32
    %446 = vector.broadcast %cst_135 : f32 to vector<8x128xf32>
    %447 = arith.addf %446, %445 : vector<8x128xf32>
    %448 = arith.divf %446, %447 : vector<8x128xf32>
    %449 = math.tanh %440 : vector<8x128xf32>
    %450 = arith.negf %443 : vector<8x128xf32>
    %451 = math.exp %450 : vector<8x128xf32>
    %cst_136 = arith.constant 1.000000e+00 : f32
    %452 = vector.broadcast %cst_136 : f32 to vector<8x128xf32>
    %453 = arith.addf %452, %451 : vector<8x128xf32>
    %454 = arith.divf %452, %453 : vector<8x128xf32>
    %455 = math.tanh %443 : vector<8x128xf32>
    %456 = vector.extract_strided_slice %448 {offsets = [0, 32], sizes = [8, 32], strides = [1, 1]} : vector<8x128xf32> to vector<8x32xf32>
    %457 = arith.mulf %456, %420 : vector<8x32xf32>
    %458 = vector.extract_strided_slice %448 {offsets = [0, 0], sizes = [8, 32], strides = [1, 1]} : vector<8x128xf32> to vector<8x32xf32>
    %459 = vector.extract_strided_slice %449 {offsets = [0, 64], sizes = [8, 32], strides = [1, 1]} : vector<8x128xf32> to vector<8x32xf32>
    %460 = arith.mulf %458, %459 : vector<8x32xf32>
    %461 = arith.addf %457, %460 : vector<8x32xf32>
    %462 = vector.extract_strided_slice %454 {offsets = [0, 32], sizes = [8, 32], strides = [1, 1]} : vector<8x128xf32> to vector<8x32xf32>
    %463 = arith.mulf %462, %426 : vector<8x32xf32>
    %464 = vector.extract_strided_slice %454 {offsets = [0, 0], sizes = [8, 32], strides = [1, 1]} : vector<8x128xf32> to vector<8x32xf32>
    %465 = vector.extract_strided_slice %455 {offsets = [0, 64], sizes = [8, 32], strides = [1, 1]} : vector<8x128xf32> to vector<8x32xf32>
    %466 = arith.mulf %464, %465 : vector<8x32xf32>
    %467 = arith.addf %463, %466 : vector<8x32xf32>
    %468 = vector.extract_strided_slice %448 {offsets = [0, 96], sizes = [8, 32], strides = [1, 1]} : vector<8x128xf32> to vector<8x32xf32>
    %469 = math.tanh %461 : vector<8x32xf32>
    %470 = arith.mulf %468, %469 : vector<8x32xf32>
    %471 = vector.extract_strided_slice %454 {offsets = [0, 96], sizes = [8, 32], strides = [1, 1]} : vector<8x128xf32> to vector<8x32xf32>
    %472 = math.tanh %467 : vector<8x32xf32>
    %473 = arith.mulf %471, %472 : vector<8x32xf32>
    %c16_137 = arith.constant 16 : index
    %c0_138 = arith.constant 0 : index
    %474 = vector.load %arg23[%c16_137, %c0_138] : memref<64x64xf32, #tpu.memory_space<vmem>>, vector<8x32xf32>
    tpu.vector_store %arg23[%c16_137, %c0_138], %470 {strides = array<i32>} : memref<64x64xf32, #tpu.memory_space<vmem>>, vector<8x32xf32>,
    %c40_139 = arith.constant 40 : index
    %c32_140 = arith.constant 32 : index
    %475 = vector.load %arg23[%c40_139, %c32_140] : memref<64x64xf32, #tpu.memory_space<vmem>>, vector<8x32xf32>
    tpu.vector_store %arg23[%c40_139, %c32_140], %473 {strides = array<i32>} : memref<64x64xf32, #tpu.memory_space<vmem>>, vector<8x32xf32>,
    %476 = tpu.concatenate %470, %473 in 1 : vector<8x32xf32>, vector<8x32xf32> -> vector<8x64xf32>
    %477 = arith.truncf %476 : vector<8x64xf32> to vector<8x64xbf16>
    %cst_141 = arith.constant dense<0.000000e+00> : vector<8x256xf32>
    %478 = tpu.matmul %477, %348, %cst_141 {dimension_numbers = #tpu.dot_dimension_numbers<[1], [0], [0], [1], [0, 0, 1, 1], [], []>} : vector<8x64xbf16>, vector<64x256xbf16>, vector<8x256xf32> -> vector<8x256xf32>
    %c24_142 = arith.constant 24 : index
    %c0_143 = arith.constant 0 : index
    %479 = vector.load %arg24[%c24_142, %c0_143] : memref<64x256xf32, #tpu.memory_space<vmem>>, vector<8x128xf32>
    %480 = vector.extract_strided_slice %478 {offsets = [0, 0], sizes = [8, 128], strides = [1, 1]} : vector<8x256xf32> to vector<8x128xf32>
    %481 = arith.addf %479, %480 : vector<8x128xf32>
    %c32_144 = arith.constant 32 : index
    %c128_145 = arith.constant 128 : index
    %482 = vector.load %arg24[%c32_144, %c128_145] : memref<64x256xf32, #tpu.memory_space<vmem>>, vector<8x128xf32>
    %483 = vector.extract_strided_slice %478 {offsets = [0, 128], sizes = [8, 128], strides = [1, 1]} : vector<8x256xf32> to vector<8x128xf32>
    %484 = arith.addf %482, %483 : vector<8x128xf32>
    %485 = arith.negf %481 : vector<8x128xf32>
    %486 = math.exp %485 : vector<8x128xf32>
    %cst_146 = arith.constant 1.000000e+00 : f32
    %487 = vector.broadcast %cst_146 : f32 to vector<8x128xf32>
    %488 = arith.addf %487, %486 : vector<8x128xf32>
    %489 = arith.divf %487, %488 : vector<8x128xf32>
    %490 = math.tanh %481 : vector<8x128xf32>
    %491 = arith.negf %484 : vector<8x128xf32>
    %492 = math.exp %491 : vector<8x128xf32>
    %cst_147 = arith.constant 1.000000e+00 : f32
    %493 = vector.broadcast %cst_147 : f32 to vector<8x128xf32>
    %494 = arith.addf %493, %492 : vector<8x128xf32>
    %495 = arith.divf %493, %494 : vector<8x128xf32>
    %496 = math.tanh %484 : vector<8x128xf32>
    %497 = vector.extract_strided_slice %489 {offsets = [0, 32], sizes = [8, 32], strides = [1, 1]} : vector<8x128xf32> to vector<8x32xf32>
    %498 = arith.mulf %497, %461 : vector<8x32xf32>
    %499 = vector.extract_strided_slice %489 {offsets = [0, 0], sizes = [8, 32], strides = [1, 1]} : vector<8x128xf32> to vector<8x32xf32>
    %500 = vector.extract_strided_slice %490 {offsets = [0, 64], sizes = [8, 32], strides = [1, 1]} : vector<8x128xf32> to vector<8x32xf32>
    %501 = arith.mulf %499, %500 : vector<8x32xf32>
    %502 = arith.addf %498, %501 : vector<8x32xf32>
    %503 = vector.extract_strided_slice %495 {offsets = [0, 32], sizes = [8, 32], strides = [1, 1]} : vector<8x128xf32> to vector<8x32xf32>
    %504 = arith.mulf %503, %467 : vector<8x32xf32>
    %505 = vector.extract_strided_slice %495 {offsets = [0, 0], sizes = [8, 32], strides = [1, 1]} : vector<8x128xf32> to vector<8x32xf32>
    %506 = vector.extract_strided_slice %496 {offsets = [0, 64], sizes = [8, 32], strides = [1, 1]} : vector<8x128xf32> to vector<8x32xf32>
    %507 = arith.mulf %505, %506 : vector<8x32xf32>
    %508 = arith.addf %504, %507 : vector<8x32xf32>
    %509 = vector.extract_strided_slice %489 {offsets = [0, 96], sizes = [8, 32], strides = [1, 1]} : vector<8x128xf32> to vector<8x32xf32>
    %510 = math.tanh %502 : vector<8x32xf32>
    %511 = arith.mulf %509, %510 : vector<8x32xf32>
    %512 = vector.extract_strided_slice %495 {offsets = [0, 96], sizes = [8, 32], strides = [1, 1]} : vector<8x128xf32> to vector<8x32xf32>
    %513 = math.tanh %508 : vector<8x32xf32>
    %514 = arith.mulf %512, %513 : vector<8x32xf32>
    %c24_148 = arith.constant 24 : index
    %c0_149 = arith.constant 0 : index
    %515 = vector.load %arg23[%c24_148, %c0_149] : memref<64x64xf32, #tpu.memory_space<vmem>>, vector<8x32xf32>
    tpu.vector_store %arg23[%c24_148, %c0_149], %511 {strides = array<i32>} : memref<64x64xf32, #tpu.memory_space<vmem>>, vector<8x32xf32>,
    %c32_150 = arith.constant 32 : index
    %c32_151 = arith.constant 32 : index
    %516 = vector.load %arg23[%c32_150, %c32_151] : memref<64x64xf32, #tpu.memory_space<vmem>>, vector<8x32xf32>
    tpu.vector_store %arg23[%c32_150, %c32_151], %514 {strides = array<i32>} : memref<64x64xf32, #tpu.memory_space<vmem>>, vector<8x32xf32>,
    %517 = tpu.concatenate %511, %514 in 1 : vector<8x32xf32>, vector<8x32xf32> -> vector<8x64xf32>
    %518 = arith.truncf %517 : vector<8x64xf32> to vector<8x64xbf16>
    %cst_152 = arith.constant dense<0.000000e+00> : vector<8x256xf32>
    %519 = tpu.matmul %518, %348, %cst_152 {dimension_numbers = #tpu.dot_dimension_numbers<[1], [0], [0], [1], [0, 0, 1, 1], [], []>} : vector<8x64xbf16>, vector<64x256xbf16>, vector<8x256xf32> -> vector<8x256xf32>
    %c32_153 = arith.constant 32 : index
    %c0_154 = arith.constant 0 : index
    %520 = vector.load %arg24[%c32_153, %c0_154] : memref<64x256xf32, #tpu.memory_space<vmem>>, vector<8x128xf32>
    %521 = vector.extract_strided_slice %519 {offsets = [0, 0], sizes = [8, 128], strides = [1, 1]} : vector<8x256xf32> to vector<8x128xf32>
    %522 = arith.addf %520, %521 : vector<8x128xf32>
    %c24_155 = arith.constant 24 : index
    %c128_156 = arith.constant 128 : index
    %523 = vector.load %arg24[%c24_155, %c128_156] : memref<64x256xf32, #tpu.memory_space<vmem>>, vector<8x128xf32>
    %524 = vector.extract_strided_slice %519 {offsets = [0, 128], sizes = [8, 128], strides = [1, 1]} : vector<8x256xf32> to vector<8x128xf32>
    %525 = arith.addf %523, %524 : vector<8x128xf32>
    %526 = arith.negf %522 : vector<8x128xf32>
    %527 = math.exp %526 : vector<8x128xf32>
    %cst_157 = arith.constant 1.000000e+00 : f32
    %528 = vector.broadcast %cst_157 : f32 to vector<8x128xf32>
    %529 = arith.addf %528, %527 : vector<8x128xf32>
    %530 = arith.divf %528, %529 : vector<8x128xf32>
    %531 = math.tanh %522 : vector<8x128xf32>
    %532 = arith.negf %525 : vector<8x128xf32>
    %533 = math.exp %532 : vector<8x128xf32>
    %cst_158 = arith.constant 1.000000e+00 : f32
    %534 = vector.broadcast %cst_158 : f32 to vector<8x128xf32>
    %535 = arith.addf %534, %533 : vector<8x128xf32>
    %536 = arith.divf %534, %535 : vector<8x128xf32>
    %537 = math.tanh %525 : vector<8x128xf32>
    %538 = vector.extract_strided_slice %530 {offsets = [0, 32], sizes = [8, 32], strides = [1, 1]} : vector<8x128xf32> to vector<8x32xf32>
    %539 = arith.mulf %538, %502 : vector<8x32xf32>
    %540 = vector.extract_strided_slice %530 {offsets = [0, 0], sizes = [8, 32], strides = [1, 1]} : vector<8x128xf32> to vector<8x32xf32>
    %541 = vector.extract_strided_slice %531 {offsets = [0, 64], sizes = [8, 32], strides = [1, 1]} : vector<8x128xf32> to vector<8x32xf32>
    %542 = arith.mulf %540, %541 : vector<8x32xf32>
    %543 = arith.addf %539, %542 : vector<8x32xf32>
    %544 = vector.extract_strided_slice %536 {offsets = [0, 32], sizes = [8, 32], strides = [1, 1]} : vector<8x128xf32> to vector<8x32xf32>
    %545 = arith.mulf %544, %508 : vector<8x32xf32>
    %546 = vector.extract_strided_slice %536 {offsets = [0, 0], sizes = [8, 32], strides = [1, 1]} : vector<8x128xf32> to vector<8x32xf32>
    %547 = vector.extract_strided_slice %537 {offsets = [0, 64], sizes = [8, 32], strides = [1, 1]} : vector<8x128xf32> to vector<8x32xf32>
    %548 = arith.mulf %546, %547 : vector<8x32xf32>
    %549 = arith.addf %545, %548 : vector<8x32xf32>
    %550 = vector.extract_strided_slice %530 {offsets = [0, 96], sizes = [8, 32], strides = [1, 1]} : vector<8x128xf32> to vector<8x32xf32>
    %551 = math.tanh %543 : vector<8x32xf32>
    %552 = arith.mulf %550, %551 : vector<8x32xf32>
    %553 = vector.extract_strided_slice %536 {offsets = [0, 96], sizes = [8, 32], strides = [1, 1]} : vector<8x128xf32> to vector<8x32xf32>
    %554 = math.tanh %549 : vector<8x32xf32>
    %555 = arith.mulf %553, %554 : vector<8x32xf32>
    %c32_159 = arith.constant 32 : index
    %c0_160 = arith.constant 0 : index
    %556 = vector.load %arg23[%c32_159, %c0_160] : memref<64x64xf32, #tpu.memory_space<vmem>>, vector<8x32xf32>
    tpu.vector_store %arg23[%c32_159, %c0_160], %552 {strides = array<i32>} : memref<64x64xf32, #tpu.memory_space<vmem>>, vector<8x32xf32>,
    %c24_161 = arith.constant 24 : index
    %c32_162 = arith.constant 32 : index
    %557 = vector.load %arg23[%c24_161, %c32_162] : memref<64x64xf32, #tpu.memory_space<vmem>>, vector<8x32xf32>
    tpu.vector_store %arg23[%c24_161, %c32_162], %555 {strides = array<i32>} : memref<64x64xf32, #tpu.memory_space<vmem>>, vector<8x32xf32>,
    %558 = tpu.concatenate %552, %555 in 1 : vector<8x32xf32>, vector<8x32xf32> -> vector<8x64xf32>
    %559 = arith.truncf %558 : vector<8x64xf32> to vector<8x64xbf16>
    %cst_163 = arith.constant dense<0.000000e+00> : vector<8x256xf32>
    %560 = tpu.matmul %559, %348, %cst_163 {dimension_numbers = #tpu.dot_dimension_numbers<[1], [0], [0], [1], [0, 0, 1, 1], [], []>} : vector<8x64xbf16>, vector<64x256xbf16>, vector<8x256xf32> -> vector<8x256xf32>
    %c40_164 = arith.constant 40 : index
    %c0_165 = arith.constant 0 : index
    %561 = vector.load %arg24[%c40_164, %c0_165] : memref<64x256xf32, #tpu.memory_space<vmem>>, vector<8x128xf32>
    %562 = vector.extract_strided_slice %560 {offsets = [0, 0], sizes = [8, 128], strides = [1, 1]} : vector<8x256xf32> to vector<8x128xf32>
    %563 = arith.addf %561, %562 : vector<8x128xf32>
    %c16_166 = arith.constant 16 : index
    %c128_167 = arith.constant 128 : index
    %564 = vector.load %arg24[%c16_166, %c128_167] : memref<64x256xf32, #tpu.memory_space<vmem>>, vector<8x128xf32>
    %565 = vector.extract_strided_slice %560 {offsets = [0, 128], sizes = [8, 128], strides = [1, 1]} : vector<8x256xf32> to vector<8x128xf32>
    %566 = arith.addf %564, %565 : vector<8x128xf32>
    %567 = arith.negf %563 : vector<8x128xf32>
    %568 = math.exp %567 : vector<8x128xf32>
    %cst_168 = arith.constant 1.000000e+00 : f32
    %569 = vector.broadcast %cst_168 : f32 to vector<8x128xf32>
    %570 = arith.addf %569, %568 : vector<8x128xf32>
    %571 = arith.divf %569, %570 : vector<8x128xf32>
    %572 = math.tanh %563 : vector<8x128xf32>
    %573 = arith.negf %566 : vector<8x128xf32>
    %574 = math.exp %573 : vector<8x128xf32>
    %cst_169 = arith.constant 1.000000e+00 : f32
    %575 = vector.broadcast %cst_169 : f32 to vector<8x128xf32>
    %576 = arith.addf %575, %574 : vector<8x128xf32>
    %577 = arith.divf %575, %576 : vector<8x128xf32>
    %578 = math.tanh %566 : vector<8x128xf32>
    %579 = vector.extract_strided_slice %571 {offsets = [0, 32], sizes = [8, 32], strides = [1, 1]} : vector<8x128xf32> to vector<8x32xf32>
    %580 = arith.mulf %579, %543 : vector<8x32xf32>
    %581 = vector.extract_strided_slice %571 {offsets = [0, 0], sizes = [8, 32], strides = [1, 1]} : vector<8x128xf32> to vector<8x32xf32>
    %582 = vector.extract_strided_slice %572 {offsets = [0, 64], sizes = [8, 32], strides = [1, 1]} : vector<8x128xf32> to vector<8x32xf32>
    %583 = arith.mulf %581, %582 : vector<8x32xf32>
    %584 = arith.addf %580, %583 : vector<8x32xf32>
    %585 = vector.extract_strided_slice %577 {offsets = [0, 32], sizes = [8, 32], strides = [1, 1]} : vector<8x128xf32> to vector<8x32xf32>
    %586 = arith.mulf %585, %549 : vector<8x32xf32>
    %587 = vector.extract_strided_slice %577 {offsets = [0, 0], sizes = [8, 32], strides = [1, 1]} : vector<8x128xf32> to vector<8x32xf32>
    %588 = vector.extract_strided_slice %578 {offsets = [0, 64], sizes = [8, 32], strides = [1, 1]} : vector<8x128xf32> to vector<8x32xf32>
    %589 = arith.mulf %587, %588 : vector<8x32xf32>
    %590 = arith.addf %586, %589 : vector<8x32xf32>
    %591 = vector.extract_strided_slice %571 {offsets = [0, 96], sizes = [8, 32], strides = [1, 1]} : vector<8x128xf32> to vector<8x32xf32>
    %592 = math.tanh %584 : vector<8x32xf32>
    %593 = arith.mulf %591, %592 : vector<8x32xf32>
    %594 = vector.extract_strided_slice %577 {offsets = [0, 96], sizes = [8, 32], strides = [1, 1]} : vector<8x128xf32> to vector<8x32xf32>
    %595 = math.tanh %590 : vector<8x32xf32>
    %596 = arith.mulf %594, %595 : vector<8x32xf32>
    %c40_170 = arith.constant 40 : index
    %c0_171 = arith.constant 0 : index
    %597 = vector.load %arg23[%c40_170, %c0_171] : memref<64x64xf32, #tpu.memory_space<vmem>>, vector<8x32xf32>
    tpu.vector_store %arg23[%c40_170, %c0_171], %593 {strides = array<i32>} : memref<64x64xf32, #tpu.memory_space<vmem>>, vector<8x32xf32>,
    %c16_172 = arith.constant 16 : index
    %c32_173 = arith.constant 32 : index
    %598 = vector.load %arg23[%c16_172, %c32_173] : memref<64x64xf32, #tpu.memory_space<vmem>>, vector<8x32xf32>
    tpu.vector_store %arg23[%c16_172, %c32_173], %596 {strides = array<i32>} : memref<64x64xf32, #tpu.memory_space<vmem>>, vector<8x32xf32>,
    %599 = tpu.concatenate %593, %596 in 1 : vector<8x32xf32>, vector<8x32xf32> -> vector<8x64xf32>
    %600 = arith.truncf %599 : vector<8x64xf32> to vector<8x64xbf16>
    %cst_174 = arith.constant dense<0.000000e+00> : vector<8x256xf32>
    %601 = tpu.matmul %600, %348, %cst_174 {dimension_numbers = #tpu.dot_dimension_numbers<[1], [0], [0], [1], [0, 0, 1, 1], [], []>} : vector<8x64xbf16>, vector<64x256xbf16>, vector<8x256xf32> -> vector<8x256xf32>
    %c48_175 = arith.constant 48 : index
    %c0_176 = arith.constant 0 : index
    %602 = vector.load %arg24[%c48_175, %c0_176] : memref<64x256xf32, #tpu.memory_space<vmem>>, vector<8x128xf32>
    %603 = vector.extract_strided_slice %601 {offsets = [0, 0], sizes = [8, 128], strides = [1, 1]} : vector<8x256xf32> to vector<8x128xf32>
    %604 = arith.addf %602, %603 : vector<8x128xf32>
    %c8_177 = arith.constant 8 : index
    %c128_178 = arith.constant 128 : index
    %605 = vector.load %arg24[%c8_177, %c128_178] : memref<64x256xf32, #tpu.memory_space<vmem>>, vector<8x128xf32>
    %606 = vector.extract_strided_slice %601 {offsets = [0, 128], sizes = [8, 128], strides = [1, 1]} : vector<8x256xf32> to vector<8x128xf32>
    %607 = arith.addf %605, %606 : vector<8x128xf32>
    %608 = arith.negf %604 : vector<8x128xf32>
    %609 = math.exp %608 : vector<8x128xf32>
    %cst_179 = arith.constant 1.000000e+00 : f32
    %610 = vector.broadcast %cst_179 : f32 to vector<8x128xf32>
    %611 = arith.addf %610, %609 : vector<8x128xf32>
    %612 = arith.divf %610, %611 : vector<8x128xf32>
    %613 = math.tanh %604 : vector<8x128xf32>
    %614 = arith.negf %607 : vector<8x128xf32>
    %615 = math.exp %614 : vector<8x128xf32>
    %cst_180 = arith.constant 1.000000e+00 : f32
    %616 = vector.broadcast %cst_180 : f32 to vector<8x128xf32>
    %617 = arith.addf %616, %615 : vector<8x128xf32>
    %618 = arith.divf %616, %617 : vector<8x128xf32>
    %619 = math.tanh %607 : vector<8x128xf32>
    %620 = vector.extract_strided_slice %612 {offsets = [0, 32], sizes = [8, 32], strides = [1, 1]} : vector<8x128xf32> to vector<8x32xf32>
    %621 = arith.mulf %620, %584 : vector<8x32xf32>
    %622 = vector.extract_strided_slice %612 {offsets = [0, 0], sizes = [8, 32], strides = [1, 1]} : vector<8x128xf32> to vector<8x32xf32>
    %623 = vector.extract_strided_slice %613 {offsets = [0, 64], sizes = [8, 32], strides = [1, 1]} : vector<8x128xf32> to vector<8x32xf32>
    %624 = arith.mulf %622, %623 : vector<8x32xf32>
    %625 = arith.addf %621, %624 : vector<8x32xf32>
    %626 = vector.extract_strided_slice %618 {offsets = [0, 32], sizes = [8, 32], strides = [1, 1]} : vector<8x128xf32> to vector<8x32xf32>
    %627 = arith.mulf %626, %590 : vector<8x32xf32>
    %628 = vector.extract_strided_slice %618 {offsets = [0, 0], sizes = [8, 32], strides = [1, 1]} : vector<8x128xf32> to vector<8x32xf32>
    %629 = vector.extract_strided_slice %619 {offsets = [0, 64], sizes = [8, 32], strides = [1, 1]} : vector<8x128xf32> to vector<8x32xf32>
    %630 = arith.mulf %628, %629 : vector<8x32xf32>
    %631 = arith.addf %627, %630 : vector<8x32xf32>
    %632 = vector.extract_strided_slice %612 {offsets = [0, 96], sizes = [8, 32], strides = [1, 1]} : vector<8x128xf32> to vector<8x32xf32>
    %633 = math.tanh %625 : vector<8x32xf32>
    %634 = arith.mulf %632, %633 : vector<8x32xf32>
    %635 = vector.extract_strided_slice %618 {offsets = [0, 96], sizes = [8, 32], strides = [1, 1]} : vector<8x128xf32> to vector<8x32xf32>
    %636 = math.tanh %631 : vector<8x32xf32>
    %637 = arith.mulf %635, %636 : vector<8x32xf32>
    %c48_181 = arith.constant 48 : index
    %c0_182 = arith.constant 0 : index
    %638 = vector.load %arg23[%c48_181, %c0_182] : memref<64x64xf32, #tpu.memory_space<vmem>>, vector<8x32xf32>
    tpu.vector_store %arg23[%c48_181, %c0_182], %634 {strides = array<i32>} : memref<64x64xf32, #tpu.memory_space<vmem>>, vector<8x32xf32>,
    %c8_183 = arith.constant 8 : index
    %c32_184 = arith.constant 32 : index
    %639 = vector.load %arg23[%c8_183, %c32_184] : memref<64x64xf32, #tpu.memory_space<vmem>>, vector<8x32xf32>
    tpu.vector_store %arg23[%c8_183, %c32_184], %637 {strides = array<i32>} : memref<64x64xf32, #tpu.memory_space<vmem>>, vector<8x32xf32>,
    %640 = tpu.concatenate %634, %637 in 1 : vector<8x32xf32>, vector<8x32xf32> -> vector<8x64xf32>
    %641 = arith.truncf %640 : vector<8x64xf32> to vector<8x64xbf16>
    %cst_185 = arith.constant dense<0.000000e+00> : vector<8x256xf32>
    %642 = tpu.matmul %641, %348, %cst_185 {dimension_numbers = #tpu.dot_dimension_numbers<[1], [0], [0], [1], [0, 0, 1, 1], [], []>} : vector<8x64xbf16>, vector<64x256xbf16>, vector<8x256xf32> -> vector<8x256xf32>
    %c56_186 = arith.constant 56 : index
    %c0_187 = arith.constant 0 : index
    %643 = vector.load %arg24[%c56_186, %c0_187] : memref<64x256xf32, #tpu.memory_space<vmem>>, vector<8x128xf32>
    %644 = vector.extract_strided_slice %642 {offsets = [0, 0], sizes = [8, 128], strides = [1, 1]} : vector<8x256xf32> to vector<8x128xf32>
    %645 = arith.addf %643, %644 : vector<8x128xf32>
    %c0_188 = arith.constant 0 : index
    %c128_189 = arith.constant 128 : index
    %646 = vector.load %arg24[%c0_188, %c128_189] : memref<64x256xf32, #tpu.memory_space<vmem>>, vector<8x128xf32>
    %647 = vector.extract_strided_slice %642 {offsets = [0, 128], sizes = [8, 128], strides = [1, 1]} : vector<8x256xf32> to vector<8x128xf32>
    %648 = arith.addf %646, %647 : vector<8x128xf32>
    %649 = arith.negf %645 : vector<8x128xf32>
    %650 = math.exp %649 : vector<8x128xf32>
    %cst_190 = arith.constant 1.000000e+00 : f32
    %651 = vector.broadcast %cst_190 : f32 to vector<8x128xf32>
    %652 = arith.addf %651, %650 : vector<8x128xf32>
    %653 = arith.divf %651, %652 : vector<8x128xf32>
    %654 = math.tanh %645 : vector<8x128xf32>
    %655 = arith.negf %648 : vector<8x128xf32>
    %656 = math.exp %655 : vector<8x128xf32>
    %cst_191 = arith.constant 1.000000e+00 : f32
    %657 = vector.broadcast %cst_191 : f32 to vector<8x128xf32>
    %658 = arith.addf %657, %656 : vector<8x128xf32>
    %659 = arith.divf %657, %658 : vector<8x128xf32>
    %660 = math.tanh %648 : vector<8x128xf32>
    %661 = vector.extract_strided_slice %653 {offsets = [0, 32], sizes = [8, 32], strides = [1, 1]} : vector<8x128xf32> to vector<8x32xf32>
    %662 = arith.mulf %661, %625 : vector<8x32xf32>
    %663 = vector.extract_strided_slice %653 {offsets = [0, 0], sizes = [8, 32], strides = [1, 1]} : vector<8x128xf32> to vector<8x32xf32>
    %664 = vector.extract_strided_slice %654 {offsets = [0, 64], sizes = [8, 32], strides = [1, 1]} : vector<8x128xf32> to vector<8x32xf32>
    %665 = arith.mulf %663, %664 : vector<8x32xf32>
    %666 = arith.addf %662, %665 : vector<8x32xf32>
    %667 = vector.extract_strided_slice %659 {offsets = [0, 32], sizes = [8, 32], strides = [1, 1]} : vector<8x128xf32> to vector<8x32xf32>
    %668 = arith.mulf %667, %631 : vector<8x32xf32>
    %669 = vector.extract_strided_slice %659 {offsets = [0, 0], sizes = [8, 32], strides = [1, 1]} : vector<8x128xf32> to vector<8x32xf32>
    %670 = vector.extract_strided_slice %660 {offsets = [0, 64], sizes = [8, 32], strides = [1, 1]} : vector<8x128xf32> to vector<8x32xf32>
    %671 = arith.mulf %669, %670 : vector<8x32xf32>
    %672 = arith.addf %668, %671 : vector<8x32xf32>
    %673 = vector.extract_strided_slice %653 {offsets = [0, 96], sizes = [8, 32], strides = [1, 1]} : vector<8x128xf32> to vector<8x32xf32>
    %674 = math.tanh %666 : vector<8x32xf32>
    %675 = arith.mulf %673, %674 : vector<8x32xf32>
    %676 = vector.extract_strided_slice %659 {offsets = [0, 96], sizes = [8, 32], strides = [1, 1]} : vector<8x128xf32> to vector<8x32xf32>
    %677 = math.tanh %672 : vector<8x32xf32>
    %678 = arith.mulf %676, %677 : vector<8x32xf32>
    %c56_192 = arith.constant 56 : index
    %c0_193 = arith.constant 0 : index
    %679 = vector.load %arg23[%c56_192, %c0_193] : memref<64x64xf32, #tpu.memory_space<vmem>>, vector<8x32xf32>
    tpu.vector_store %arg23[%c56_192, %c0_193], %675 {strides = array<i32>} : memref<64x64xf32, #tpu.memory_space<vmem>>, vector<8x32xf32>,
    %c0_194 = arith.constant 0 : index
    %c32_195 = arith.constant 32 : index
    %680 = vector.load %arg23[%c0_194, %c32_195] : memref<64x64xf32, #tpu.memory_space<vmem>>, vector<8x32xf32>
    tpu.vector_store %arg23[%c0_194, %c32_195], %678 {strides = array<i32>} : memref<64x64xf32, #tpu.memory_space<vmem>>, vector<8x32xf32>,
    %c0_196 = arith.constant 0 : index
    %c0_197 = arith.constant 0 : index
    %681 = vector.load %arg23[%c0_196, %c0_197] : memref<64x64xf32, #tpu.memory_space<vmem>>, vector<64x64xf32>
    %682 = arith.truncf %681 : vector<64x64xf32> to vector<64x64xbf16>
    %c0_198 = arith.constant 0 : index
    %c0_199 = arith.constant 0 : index
    %683 = vector.load %arg17[%c0_198, %c0_199] : memref<64x32xbf16, #tpu.memory_space<vmem>>, vector<64x32xbf16>
    %cst_200 = arith.constant dense<0.000000e+00> : vector<64x32xf32>
    %684 = tpu.matmul %682, %683, %cst_200 {dimension_numbers = #tpu.dot_dimension_numbers<[1], [0], [0], [1], [0, 0, 1, 1], [], []>} : vector<64x64xbf16>, vector<64x32xbf16>, vector<64x32xf32> -> vector<64x32xf32>
    %c0_201 = arith.constant 0 : index
    %c0_202 = arith.constant 0 : index
    %685 = vector.load %arg18[%c0_201, %c0_202] : memref<1x32xf32, #tpu.memory_space<vmem>>, vector<1x32xf32>
    %686 = vector.broadcast %685 : vector<1x32xf32> to vector<64x32xf32>
    %687 = arith.addf %684, %686 : vector<64x32xf32>
    %688 = math.tanh %687 : vector<64x32xf32>
    %689 = arith.mulf %688, %688 : vector<64x32xf32>
    %690 = vector.extract_strided_slice %689 {offsets = [0, 0], sizes = [8, 32], strides = [1, 1]} : vector<64x32xf32> to vector<8x32xf32>
    %691 = vector.extract_strided_slice %689 {offsets = [8, 0], sizes = [8, 32], strides = [1, 1]} : vector<64x32xf32> to vector<8x32xf32>
    %692 = arith.addf %690, %691 : vector<8x32xf32>
    %693 = vector.extract_strided_slice %689 {offsets = [16, 0], sizes = [8, 32], strides = [1, 1]} : vector<64x32xf32> to vector<8x32xf32>
    %694 = arith.addf %692, %693 : vector<8x32xf32>
    %695 = vector.extract_strided_slice %689 {offsets = [24, 0], sizes = [8, 32], strides = [1, 1]} : vector<64x32xf32> to vector<8x32xf32>
    %696 = arith.addf %694, %695 : vector<8x32xf32>
    %697 = vector.extract_strided_slice %689 {offsets = [32, 0], sizes = [8, 32], strides = [1, 1]} : vector<64x32xf32> to vector<8x32xf32>
    %698 = arith.addf %696, %697 : vector<8x32xf32>
    %699 = vector.extract_strided_slice %689 {offsets = [40, 0], sizes = [8, 32], strides = [1, 1]} : vector<64x32xf32> to vector<8x32xf32>
    %700 = arith.addf %698, %699 : vector<8x32xf32>
    %701 = vector.extract_strided_slice %689 {offsets = [48, 0], sizes = [8, 32], strides = [1, 1]} : vector<64x32xf32> to vector<8x32xf32>
    %702 = arith.addf %700, %701 : vector<8x32xf32>
    %703 = vector.extract_strided_slice %689 {offsets = [56, 0], sizes = [8, 32], strides = [1, 1]} : vector<64x32xf32> to vector<8x32xf32>
    %704 = arith.addf %702, %703 : vector<8x32xf32>
    %705 = math.sqrt %704 : vector<8x32xf32>
    %cst_203 = arith.constant 9.99999996E-13 : f32
    %706 = vector.broadcast %cst_203 : f32 to vector<8x32xf32>
    %707 = arith.maximumf %705, %706 : vector<8x32xf32>
    %708 = tpu.reciprocal %707 : vector<8x32xf32> -> vector<8x32xf32>
    %709 = tpu.concatenate %708, %708, %708, %708, %708, %708, %708, %708 in 0 : vector<8x32xf32>, vector<8x32xf32>, vector<8x32xf32>, vector<8x32xf32>, vector<8x32xf32>, vector<8x32xf32>, vector<8x32xf32>, vector<8x32xf32> -> vector<64x32xf32>
    %710 = arith.mulf %688, %709 : vector<64x32xf32>
    %c0_204 = arith.constant 0 : index
    %c0_205 = arith.constant 0 : index
    %711 = vector.load %arg22[%c0_204, %c0_205] : memref<64x32xf32, #tpu.memory_space<vmem>>, vector<64x32xf32>
    tpu.vector_store %arg22[%c0_204, %c0_205], %710 {strides = array<i32>} : memref<64x32xf32, #tpu.memory_space<vmem>>, vector<64x32xf32>,
    %c0_206 = arith.constant 0 : index
    %c0_207 = arith.constant 0 : index
    %712 = vector.load %arg23[%c0_206, %c0_207] : memref<64x64xf32, #tpu.memory_space<vmem>>, vector<64x64xf32>
    %713 = arith.truncf %712 : vector<64x64xf32> to vector<64x64xbf16>
    %c0_208 = arith.constant 0 : index
    %c0_209 = arith.constant 0 : index
    %714 = vector.load %arg8[%c0_208, %c0_209] : memref<64x256xbf16, #tpu.memory_space<vmem>>, vector<64x256xbf16>
    %cst_210 = arith.constant dense<0.000000e+00> : vector<64x256xf32>
    %715 = tpu.matmul %713, %714, %cst_210 {dimension_numbers = #tpu.dot_dimension_numbers<[1], [0], [0], [1], [0, 0, 1, 1], [], []>} : vector<64x64xbf16>, vector<64x256xbf16>, vector<64x256xf32> -> vector<64x256xf32>
    %c0_211 = arith.constant 0 : index
    %c0_212 = arith.constant 0 : index
    %716 = vector.load %arg10[%c0_211, %c0_212] : memref<1x256xf32, #tpu.memory_space<vmem>>, vector<1x256xf32>
    %717 = vector.broadcast %716 : vector<1x256xf32> to vector<64x256xf32>
    %718 = arith.addf %715, %717 : vector<64x256xf32>
    %c0_213 = arith.constant 0 : index
    %c0_214 = arith.constant 0 : index
    %719 = vector.load %arg24[%c0_213, %c0_214] : memref<64x256xf32, #tpu.memory_space<vmem>>, vector<64x256xf32>
    tpu.vector_store %arg24[%c0_213, %c0_214], %718 {strides = array<i32>} : memref<64x256xf32, #tpu.memory_space<vmem>>, vector<64x256xf32>,
    %c0_215 = arith.constant 0 : index
    %c0_216 = arith.constant 0 : index
    %720 = vector.load %arg9[%c0_215, %c0_216] : memref<64x256xbf16, #tpu.memory_space<vmem>>, vector<64x256xbf16>
    %cst_217 = arith.constant 0.000000e+00 : f32
    %721 = vector.broadcast %cst_217 : f32 to vector<8x32xf32>
    %cst_218 = arith.constant 0.000000e+00 : f32
    %722 = vector.broadcast %cst_218 : f32 to vector<8x32xf32>
    %cst_219 = arith.constant 0.000000e+00 : f32
    %723 = vector.broadcast %cst_219 : f32 to vector<8x32xf32>
    %cst_220 = arith.constant 0.000000e+00 : f32
    %724 = vector.broadcast %cst_220 : f32 to vector<8x32xf32>
    %725 = tpu.concatenate %721, %723 in 1 : vector<8x32xf32>, vector<8x32xf32> -> vector<8x64xf32>
    %726 = arith.truncf %725 : vector<8x64xf32> to vector<8x64xbf16>
    %cst_221 = arith.constant dense<0.000000e+00> : vector<8x256xf32>
    %727 = tpu.matmul %726, %720, %cst_221 {dimension_numbers = #tpu.dot_dimension_numbers<[1], [0], [0], [1], [0, 0, 1, 1], [], []>} : vector<8x64xbf16>, vector<64x256xbf16>, vector<8x256xf32> -> vector<8x256xf32>
    %c0_222 = arith.constant 0 : index
    %c0_223 = arith.constant 0 : index
    %728 = vector.load %arg24[%c0_222, %c0_223] : memref<64x256xf32, #tpu.memory_space<vmem>>, vector<8x128xf32>
    %729 = vector.extract_strided_slice %727 {offsets = [0, 0], sizes = [8, 128], strides = [1, 1]} : vector<8x256xf32> to vector<8x128xf32>
    %730 = arith.addf %728, %729 : vector<8x128xf32>
    %c56_224 = arith.constant 56 : index
    %c128_225 = arith.constant 128 : index
    %731 = vector.load %arg24[%c56_224, %c128_225] : memref<64x256xf32, #tpu.memory_space<vmem>>, vector<8x128xf32>
    %732 = vector.extract_strided_slice %727 {offsets = [0, 128], sizes = [8, 128], strides = [1, 1]} : vector<8x256xf32> to vector<8x128xf32>
    %733 = arith.addf %731, %732 : vector<8x128xf32>
    %734 = arith.negf %730 : vector<8x128xf32>
    %735 = math.exp %734 : vector<8x128xf32>
    %cst_226 = arith.constant 1.000000e+00 : f32
    %736 = vector.broadcast %cst_226 : f32 to vector<8x128xf32>
    %737 = arith.addf %736, %735 : vector<8x128xf32>
    %738 = arith.divf %736, %737 : vector<8x128xf32>
    %739 = math.tanh %730 : vector<8x128xf32>
    %740 = arith.negf %733 : vector<8x128xf32>
    %741 = math.exp %740 : vector<8x128xf32>
    %cst_227 = arith.constant 1.000000e+00 : f32
    %742 = vector.broadcast %cst_227 : f32 to vector<8x128xf32>
    %743 = arith.addf %742, %741 : vector<8x128xf32>
    %744 = arith.divf %742, %743 : vector<8x128xf32>
    %745 = math.tanh %733 : vector<8x128xf32>
    %746 = vector.extract_strided_slice %738 {offsets = [0, 32], sizes = [8, 32], strides = [1, 1]} : vector<8x128xf32> to vector<8x32xf32>
    %747 = arith.mulf %746, %722 : vector<8x32xf32>
    %748 = vector.extract_strided_slice %738 {offsets = [0, 0], sizes = [8, 32], strides = [1, 1]} : vector<8x128xf32> to vector<8x32xf32>
    %749 = vector.extract_strided_slice %739 {offsets = [0, 64], sizes = [8, 32], strides = [1, 1]} : vector<8x128xf32> to vector<8x32xf32>
    %750 = arith.mulf %748, %749 : vector<8x32xf32>
    %751 = arith.addf %747, %750 : vector<8x32xf32>
    %752 = vector.extract_strided_slice %744 {offsets = [0, 32], sizes = [8, 32], strides = [1, 1]} : vector<8x128xf32> to vector<8x32xf32>
    %753 = arith.mulf %752, %724 : vector<8x32xf32>
    %754 = vector.extract_strided_slice %744 {offsets = [0, 0], sizes = [8, 32], strides = [1, 1]} : vector<8x128xf32> to vector<8x32xf32>
    %755 = vector.extract_strided_slice %745 {offsets = [0, 64], sizes = [8, 32], strides = [1, 1]} : vector<8x128xf32> to vector<8x32xf32>
    %756 = arith.mulf %754, %755 : vector<8x32xf32>
    %757 = arith.addf %753, %756 : vector<8x32xf32>
    %758 = vector.extract_strided_slice %738 {offsets = [0, 96], sizes = [8, 32], strides = [1, 1]} : vector<8x128xf32> to vector<8x32xf32>
    %759 = math.tanh %751 : vector<8x32xf32>
    %760 = arith.mulf %758, %759 : vector<8x32xf32>
    %761 = vector.extract_strided_slice %744 {offsets = [0, 96], sizes = [8, 32], strides = [1, 1]} : vector<8x128xf32> to vector<8x32xf32>
    %762 = math.tanh %757 : vector<8x32xf32>
    %763 = arith.mulf %761, %762 : vector<8x32xf32>
    %c0_228 = arith.constant 0 : index
    %c0_229 = arith.constant 0 : index
    %764 = vector.load %arg23[%c0_228, %c0_229] : memref<64x64xf32, #tpu.memory_space<vmem>>, vector<8x32xf32>
    tpu.vector_store %arg23[%c0_228, %c0_229], %760 {strides = array<i32>} : memref<64x64xf32, #tpu.memory_space<vmem>>, vector<8x32xf32>,
    %c56_230 = arith.constant 56 : index
    %c32_231 = arith.constant 32 : index
    %765 = vector.load %arg23[%c56_230, %c32_231] : memref<64x64xf32, #tpu.memory_space<vmem>>, vector<8x32xf32>
    tpu.vector_store %arg23[%c56_230, %c32_231], %763 {strides = array<i32>} : memref<64x64xf32, #tpu.memory_space<vmem>>, vector<8x32xf32>,
    %766 = tpu.concatenate %760, %763 in 1 : vector<8x32xf32>, vector<8x32xf32> -> vector<8x64xf32>
    %767 = arith.truncf %766 : vector<8x64xf32> to vector<8x64xbf16>
    %cst_232 = arith.constant dense<0.000000e+00> : vector<8x256xf32>
    %768 = tpu.matmul %767, %720, %cst_232 {dimension_numbers = #tpu.dot_dimension_numbers<[1], [0], [0], [1], [0, 0, 1, 1], [], []>} : vector<8x64xbf16>, vector<64x256xbf16>, vector<8x256xf32> -> vector<8x256xf32>
    %c8_233 = arith.constant 8 : index
    %c0_234 = arith.constant 0 : index
    %769 = vector.load %arg24[%c8_233, %c0_234] : memref<64x256xf32, #tpu.memory_space<vmem>>, vector<8x128xf32>
    %770 = vector.extract_strided_slice %768 {offsets = [0, 0], sizes = [8, 128], strides = [1, 1]} : vector<8x256xf32> to vector<8x128xf32>
    %771 = arith.addf %769, %770 : vector<8x128xf32>
    %c48_235 = arith.constant 48 : index
    %c128_236 = arith.constant 128 : index
    %772 = vector.load %arg24[%c48_235, %c128_236] : memref<64x256xf32, #tpu.memory_space<vmem>>, vector<8x128xf32>
    %773 = vector.extract_strided_slice %768 {offsets = [0, 128], sizes = [8, 128], strides = [1, 1]} : vector<8x256xf32> to vector<8x128xf32>
    %774 = arith.addf %772, %773 : vector<8x128xf32>
    %775 = arith.negf %771 : vector<8x128xf32>
    %776 = math.exp %775 : vector<8x128xf32>
    %cst_237 = arith.constant 1.000000e+00 : f32
    %777 = vector.broadcast %cst_237 : f32 to vector<8x128xf32>
    %778 = arith.addf %777, %776 : vector<8x128xf32>
    %779 = arith.divf %777, %778 : vector<8x128xf32>
    %780 = math.tanh %771 : vector<8x128xf32>
    %781 = arith.negf %774 : vector<8x128xf32>
    %782 = math.exp %781 : vector<8x128xf32>
    %cst_238 = arith.constant 1.000000e+00 : f32
    %783 = vector.broadcast %cst_238 : f32 to vector<8x128xf32>
    %784 = arith.addf %783, %782 : vector<8x128xf32>
    %785 = arith.divf %783, %784 : vector<8x128xf32>
    %786 = math.tanh %774 : vector<8x128xf32>
    %787 = vector.extract_strided_slice %779 {offsets = [0, 32], sizes = [8, 32], strides = [1, 1]} : vector<8x128xf32> to vector<8x32xf32>
    %788 = arith.mulf %787, %751 : vector<8x32xf32>
    %789 = vector.extract_strided_slice %779 {offsets = [0, 0], sizes = [8, 32], strides = [1, 1]} : vector<8x128xf32> to vector<8x32xf32>
    %790 = vector.extract_strided_slice %780 {offsets = [0, 64], sizes = [8, 32], strides = [1, 1]} : vector<8x128xf32> to vector<8x32xf32>
    %791 = arith.mulf %789, %790 : vector<8x32xf32>
    %792 = arith.addf %788, %791 : vector<8x32xf32>
    %793 = vector.extract_strided_slice %785 {offsets = [0, 32], sizes = [8, 32], strides = [1, 1]} : vector<8x128xf32> to vector<8x32xf32>
    %794 = arith.mulf %793, %757 : vector<8x32xf32>
    %795 = vector.extract_strided_slice %785 {offsets = [0, 0], sizes = [8, 32], strides = [1, 1]} : vector<8x128xf32> to vector<8x32xf32>
    %796 = vector.extract_strided_slice %786 {offsets = [0, 64], sizes = [8, 32], strides = [1, 1]} : vector<8x128xf32> to vector<8x32xf32>
    %797 = arith.mulf %795, %796 : vector<8x32xf32>
    %798 = arith.addf %794, %797 : vector<8x32xf32>
    %799 = vector.extract_strided_slice %779 {offsets = [0, 96], sizes = [8, 32], strides = [1, 1]} : vector<8x128xf32> to vector<8x32xf32>
    %800 = math.tanh %792 : vector<8x32xf32>
    %801 = arith.mulf %799, %800 : vector<8x32xf32>
    %802 = vector.extract_strided_slice %785 {offsets = [0, 96], sizes = [8, 32], strides = [1, 1]} : vector<8x128xf32> to vector<8x32xf32>
    %803 = math.tanh %798 : vector<8x32xf32>
    %804 = arith.mulf %802, %803 : vector<8x32xf32>
    %c8_239 = arith.constant 8 : index
    %c0_240 = arith.constant 0 : index
    %805 = vector.load %arg23[%c8_239, %c0_240] : memref<64x64xf32, #tpu.memory_space<vmem>>, vector<8x32xf32>
    tpu.vector_store %arg23[%c8_239, %c0_240], %801 {strides = array<i32>} : memref<64x64xf32, #tpu.memory_space<vmem>>, vector<8x32xf32>,
    %c48_241 = arith.constant 48 : index
    %c32_242 = arith.constant 32 : index
    %806 = vector.load %arg23[%c48_241, %c32_242] : memref<64x64xf32, #tpu.memory_space<vmem>>, vector<8x32xf32>
    tpu.vector_store %arg23[%c48_241, %c32_242], %804 {strides = array<i32>} : memref<64x64xf32, #tpu.memory_space<vmem>>, vector<8x32xf32>,
    %807 = tpu.concatenate %801, %804 in 1 : vector<8x32xf32>, vector<8x32xf32> -> vector<8x64xf32>
    %808 = arith.truncf %807 : vector<8x64xf32> to vector<8x64xbf16>
    %cst_243 = arith.constant dense<0.000000e+00> : vector<8x256xf32>
    %809 = tpu.matmul %808, %720, %cst_243 {dimension_numbers = #tpu.dot_dimension_numbers<[1], [0], [0], [1], [0, 0, 1, 1], [], []>} : vector<8x64xbf16>, vector<64x256xbf16>, vector<8x256xf32> -> vector<8x256xf32>
    %c16_244 = arith.constant 16 : index
    %c0_245 = arith.constant 0 : index
    %810 = vector.load %arg24[%c16_244, %c0_245] : memref<64x256xf32, #tpu.memory_space<vmem>>, vector<8x128xf32>
    %811 = vector.extract_strided_slice %809 {offsets = [0, 0], sizes = [8, 128], strides = [1, 1]} : vector<8x256xf32> to vector<8x128xf32>
    %812 = arith.addf %810, %811 : vector<8x128xf32>
    %c40_246 = arith.constant 40 : index
    %c128_247 = arith.constant 128 : index
    %813 = vector.load %arg24[%c40_246, %c128_247] : memref<64x256xf32, #tpu.memory_space<vmem>>, vector<8x128xf32>
    %814 = vector.extract_strided_slice %809 {offsets = [0, 128], sizes = [8, 128], strides = [1, 1]} : vector<8x256xf32> to vector<8x128xf32>
    %815 = arith.addf %813, %814 : vector<8x128xf32>
    %816 = arith.negf %812 : vector<8x128xf32>
    %817 = math.exp %816 : vector<8x128xf32>
    %cst_248 = arith.constant 1.000000e+00 : f32
    %818 = vector.broadcast %cst_248 : f32 to vector<8x128xf32>
    %819 = arith.addf %818, %817 : vector<8x128xf32>
    %820 = arith.divf %818, %819 : vector<8x128xf32>
    %821 = math.tanh %812 : vector<8x128xf32>
    %822 = arith.negf %815 : vector<8x128xf32>
    %823 = math.exp %822 : vector<8x128xf32>
    %cst_249 = arith.constant 1.000000e+00 : f32
    %824 = vector.broadcast %cst_249 : f32 to vector<8x128xf32>
    %825 = arith.addf %824, %823 : vector<8x128xf32>
    %826 = arith.divf %824, %825 : vector<8x128xf32>
    %827 = math.tanh %815 : vector<8x128xf32>
    %828 = vector.extract_strided_slice %820 {offsets = [0, 32], sizes = [8, 32], strides = [1, 1]} : vector<8x128xf32> to vector<8x32xf32>
    %829 = arith.mulf %828, %792 : vector<8x32xf32>
    %830 = vector.extract_strided_slice %820 {offsets = [0, 0], sizes = [8, 32], strides = [1, 1]} : vector<8x128xf32> to vector<8x32xf32>
    %831 = vector.extract_strided_slice %821 {offsets = [0, 64], sizes = [8, 32], strides = [1, 1]} : vector<8x128xf32> to vector<8x32xf32>
    %832 = arith.mulf %830, %831 : vector<8x32xf32>
    %833 = arith.addf %829, %832 : vector<8x32xf32>
    %834 = vector.extract_strided_slice %826 {offsets = [0, 32], sizes = [8, 32], strides = [1, 1]} : vector<8x128xf32> to vector<8x32xf32>
    %835 = arith.mulf %834, %798 : vector<8x32xf32>
    %836 = vector.extract_strided_slice %826 {offsets = [0, 0], sizes = [8, 32], strides = [1, 1]} : vector<8x128xf32> to vector<8x32xf32>
    %837 = vector.extract_strided_slice %827 {offsets = [0, 64], sizes = [8, 32], strides = [1, 1]} : vector<8x128xf32> to vector<8x32xf32>
    %838 = arith.mulf %836, %837 : vector<8x32xf32>
    %839 = arith.addf %835, %838 : vector<8x32xf32>
    %840 = vector.extract_strided_slice %820 {offsets = [0, 96], sizes = [8, 32], strides = [1, 1]} : vector<8x128xf32> to vector<8x32xf32>
    %841 = math.tanh %833 : vector<8x32xf32>
    %842 = arith.mulf %840, %841 : vector<8x32xf32>
    %843 = vector.extract_strided_slice %826 {offsets = [0, 96], sizes = [8, 32], strides = [1, 1]} : vector<8x128xf32> to vector<8x32xf32>
    %844 = math.tanh %839 : vector<8x32xf32>
    %845 = arith.mulf %843, %844 : vector<8x32xf32>
    %c16_250 = arith.constant 16 : index
    %c0_251 = arith.constant 0 : index
    %846 = vector.load %arg23[%c16_250, %c0_251] : memref<64x64xf32, #tpu.memory_space<vmem>>, vector<8x32xf32>
    tpu.vector_store %arg23[%c16_250, %c0_251], %842 {strides = array<i32>} : memref<64x64xf32, #tpu.memory_space<vmem>>, vector<8x32xf32>,
    %c40_252 = arith.constant 40 : index
    %c32_253 = arith.constant 32 : index
    %847 = vector.load %arg23[%c40_252, %c32_253] : memref<64x64xf32, #tpu.memory_space<vmem>>, vector<8x32xf32>
    tpu.vector_store %arg23[%c40_252, %c32_253], %845 {strides = array<i32>} : memref<64x64xf32, #tpu.memory_space<vmem>>, vector<8x32xf32>,
    %848 = tpu.concatenate %842, %845 in 1 : vector<8x32xf32>, vector<8x32xf32> -> vector<8x64xf32>
    %849 = arith.truncf %848 : vector<8x64xf32> to vector<8x64xbf16>
    %cst_254 = arith.constant dense<0.000000e+00> : vector<8x256xf32>
    %850 = tpu.matmul %849, %720, %cst_254 {dimension_numbers = #tpu.dot_dimension_numbers<[1], [0], [0], [1], [0, 0, 1, 1], [], []>} : vector<8x64xbf16>, vector<64x256xbf16>, vector<8x256xf32> -> vector<8x256xf32>
    %c24_255 = arith.constant 24 : index
    %c0_256 = arith.constant 0 : index
    %851 = vector.load %arg24[%c24_255, %c0_256] : memref<64x256xf32, #tpu.memory_space<vmem>>, vector<8x128xf32>
    %852 = vector.extract_strided_slice %850 {offsets = [0, 0], sizes = [8, 128], strides = [1, 1]} : vector<8x256xf32> to vector<8x128xf32>
    %853 = arith.addf %851, %852 : vector<8x128xf32>
    %c32_257 = arith.constant 32 : index
    %c128_258 = arith.constant 128 : index
    %854 = vector.load %arg24[%c32_257, %c128_258] : memref<64x256xf32, #tpu.memory_space<vmem>>, vector<8x128xf32>
    %855 = vector.extract_strided_slice %850 {offsets = [0, 128], sizes = [8, 128], strides = [1, 1]} : vector<8x256xf32> to vector<8x128xf32>
    %856 = arith.addf %854, %855 : vector<8x128xf32>
    %857 = arith.negf %853 : vector<8x128xf32>
    %858 = math.exp %857 : vector<8x128xf32>
    %cst_259 = arith.constant 1.000000e+00 : f32
    %859 = vector.broadcast %cst_259 : f32 to vector<8x128xf32>
    %860 = arith.addf %859, %858 : vector<8x128xf32>
    %861 = arith.divf %859, %860 : vector<8x128xf32>
    %862 = math.tanh %853 : vector<8x128xf32>
    %863 = arith.negf %856 : vector<8x128xf32>
    %864 = math.exp %863 : vector<8x128xf32>
    %cst_260 = arith.constant 1.000000e+00 : f32
    %865 = vector.broadcast %cst_260 : f32 to vector<8x128xf32>
    %866 = arith.addf %865, %864 : vector<8x128xf32>
    %867 = arith.divf %865, %866 : vector<8x128xf32>
    %868 = math.tanh %856 : vector<8x128xf32>
    %869 = vector.extract_strided_slice %861 {offsets = [0, 32], sizes = [8, 32], strides = [1, 1]} : vector<8x128xf32> to vector<8x32xf32>
    %870 = arith.mulf %869, %833 : vector<8x32xf32>
    %871 = vector.extract_strided_slice %861 {offsets = [0, 0], sizes = [8, 32], strides = [1, 1]} : vector<8x128xf32> to vector<8x32xf32>
    %872 = vector.extract_strided_slice %862 {offsets = [0, 64], sizes = [8, 32], strides = [1, 1]} : vector<8x128xf32> to vector<8x32xf32>
    %873 = arith.mulf %871, %872 : vector<8x32xf32>
    %874 = arith.addf %870, %873 : vector<8x32xf32>
    %875 = vector.extract_strided_slice %867 {offsets = [0, 32], sizes = [8, 32], strides = [1, 1]} : vector<8x128xf32> to vector<8x32xf32>
    %876 = arith.mulf %875, %839 : vector<8x32xf32>
    %877 = vector.extract_strided_slice %867 {offsets = [0, 0], sizes = [8, 32], strides = [1, 1]} : vector<8x128xf32> to vector<8x32xf32>
    %878 = vector.extract_strided_slice %868 {offsets = [0, 64], sizes = [8, 32], strides = [1, 1]} : vector<8x128xf32> to vector<8x32xf32>
    %879 = arith.mulf %877, %878 : vector<8x32xf32>
    %880 = arith.addf %876, %879 : vector<8x32xf32>
    %881 = vector.extract_strided_slice %861 {offsets = [0, 96], sizes = [8, 32], strides = [1, 1]} : vector<8x128xf32> to vector<8x32xf32>
    %882 = math.tanh %874 : vector<8x32xf32>
    %883 = arith.mulf %881, %882 : vector<8x32xf32>
    %884 = vector.extract_strided_slice %867 {offsets = [0, 96], sizes = [8, 32], strides = [1, 1]} : vector<8x128xf32> to vector<8x32xf32>
    %885 = math.tanh %880 : vector<8x32xf32>
    %886 = arith.mulf %884, %885 : vector<8x32xf32>
    %c24_261 = arith.constant 24 : index
    %c0_262 = arith.constant 0 : index
    %887 = vector.load %arg23[%c24_261, %c0_262] : memref<64x64xf32, #tpu.memory_space<vmem>>, vector<8x32xf32>
    tpu.vector_store %arg23[%c24_261, %c0_262], %883 {strides = array<i32>} : memref<64x64xf32, #tpu.memory_space<vmem>>, vector<8x32xf32>,
    %c32_263 = arith.constant 32 : index
    %c32_264 = arith.constant 32 : index
    %888 = vector.load %arg23[%c32_263, %c32_264] : memref<64x64xf32, #tpu.memory_space<vmem>>, vector<8x32xf32>
    tpu.vector_store %arg23[%c32_263, %c32_264], %886 {strides = array<i32>} : memref<64x64xf32, #tpu.memory_space<vmem>>, vector<8x32xf32>,
    %889 = tpu.concatenate %883, %886 in 1 : vector<8x32xf32>, vector<8x32xf32> -> vector<8x64xf32>
    %890 = arith.truncf %889 : vector<8x64xf32> to vector<8x64xbf16>
    %cst_265 = arith.constant dense<0.000000e+00> : vector<8x256xf32>
    %891 = tpu.matmul %890, %720, %cst_265 {dimension_numbers = #tpu.dot_dimension_numbers<[1], [0], [0], [1], [0, 0, 1, 1], [], []>} : vector<8x64xbf16>, vector<64x256xbf16>, vector<8x256xf32> -> vector<8x256xf32>
    %c32_266 = arith.constant 32 : index
    %c0_267 = arith.constant 0 : index
    %892 = vector.load %arg24[%c32_266, %c0_267] : memref<64x256xf32, #tpu.memory_space<vmem>>, vector<8x128xf32>
    %893 = vector.extract_strided_slice %891 {offsets = [0, 0], sizes = [8, 128], strides = [1, 1]} : vector<8x256xf32> to vector<8x128xf32>
    %894 = arith.addf %892, %893 : vector<8x128xf32>
    %c24_268 = arith.constant 24 : index
    %c128_269 = arith.constant 128 : index
    %895 = vector.load %arg24[%c24_268, %c128_269] : memref<64x256xf32, #tpu.memory_space<vmem>>, vector<8x128xf32>
    %896 = vector.extract_strided_slice %891 {offsets = [0, 128], sizes = [8, 128], strides = [1, 1]} : vector<8x256xf32> to vector<8x128xf32>
    %897 = arith.addf %895, %896 : vector<8x128xf32>
    %898 = arith.negf %894 : vector<8x128xf32>
    %899 = math.exp %898 : vector<8x128xf32>
    %cst_270 = arith.constant 1.000000e+00 : f32
    %900 = vector.broadcast %cst_270 : f32 to vector<8x128xf32>
    %901 = arith.addf %900, %899 : vector<8x128xf32>
    %902 = arith.divf %900, %901 : vector<8x128xf32>
    %903 = math.tanh %894 : vector<8x128xf32>
    %904 = arith.negf %897 : vector<8x128xf32>
    %905 = math.exp %904 : vector<8x128xf32>
    %cst_271 = arith.constant 1.000000e+00 : f32
    %906 = vector.broadcast %cst_271 : f32 to vector<8x128xf32>
    %907 = arith.addf %906, %905 : vector<8x128xf32>
    %908 = arith.divf %906, %907 : vector<8x128xf32>
    %909 = math.tanh %897 : vector<8x128xf32>
    %910 = vector.extract_strided_slice %902 {offsets = [0, 32], sizes = [8, 32], strides = [1, 1]} : vector<8x128xf32> to vector<8x32xf32>
    %911 = arith.mulf %910, %874 : vector<8x32xf32>
    %912 = vector.extract_strided_slice %902 {offsets = [0, 0], sizes = [8, 32], strides = [1, 1]} : vector<8x128xf32> to vector<8x32xf32>
    %913 = vector.extract_strided_slice %903 {offsets = [0, 64], sizes = [8, 32], strides = [1, 1]} : vector<8x128xf32> to vector<8x32xf32>
    %914 = arith.mulf %912, %913 : vector<8x32xf32>
    %915 = arith.addf %911, %914 : vector<8x32xf32>
    %916 = vector.extract_strided_slice %908 {offsets = [0, 32], sizes = [8, 32], strides = [1, 1]} : vector<8x128xf32> to vector<8x32xf32>
    %917 = arith.mulf %916, %880 : vector<8x32xf32>
    %918 = vector.extract_strided_slice %908 {offsets = [0, 0], sizes = [8, 32], strides = [1, 1]} : vector<8x128xf32> to vector<8x32xf32>
    %919 = vector.extract_strided_slice %909 {offsets = [0, 64], sizes = [8, 32], strides = [1, 1]} : vector<8x128xf32> to vector<8x32xf32>
    %920 = arith.mulf %918, %919 : vector<8x32xf32>
    %921 = arith.addf %917, %920 : vector<8x32xf32>
    %922 = vector.extract_strided_slice %902 {offsets = [0, 96], sizes = [8, 32], strides = [1, 1]} : vector<8x128xf32> to vector<8x32xf32>
    %923 = math.tanh %915 : vector<8x32xf32>
    %924 = arith.mulf %922, %923 : vector<8x32xf32>
    %925 = vector.extract_strided_slice %908 {offsets = [0, 96], sizes = [8, 32], strides = [1, 1]} : vector<8x128xf32> to vector<8x32xf32>
    %926 = math.tanh %921 : vector<8x32xf32>
    %927 = arith.mulf %925, %926 : vector<8x32xf32>
    %c32_272 = arith.constant 32 : index
    %c0_273 = arith.constant 0 : index
    %928 = vector.load %arg23[%c32_272, %c0_273] : memref<64x64xf32, #tpu.memory_space<vmem>>, vector<8x32xf32>
    tpu.vector_store %arg23[%c32_272, %c0_273], %924 {strides = array<i32>} : memref<64x64xf32, #tpu.memory_space<vmem>>, vector<8x32xf32>,
    %c24_274 = arith.constant 24 : index
    %c32_275 = arith.constant 32 : index
    %929 = vector.load %arg23[%c24_274, %c32_275] : memref<64x64xf32, #tpu.memory_space<vmem>>, vector<8x32xf32>
    tpu.vector_store %arg23[%c24_274, %c32_275], %927 {strides = array<i32>} : memref<64x64xf32, #tpu.memory_space<vmem>>, vector<8x32xf32>,
    %930 = tpu.concatenate %924, %927 in 1 : vector<8x32xf32>, vector<8x32xf32> -> vector<8x64xf32>
    %931 = arith.truncf %930 : vector<8x64xf32> to vector<8x64xbf16>
    %cst_276 = arith.constant dense<0.000000e+00> : vector<8x256xf32>
    %932 = tpu.matmul %931, %720, %cst_276 {dimension_numbers = #tpu.dot_dimension_numbers<[1], [0], [0], [1], [0, 0, 1, 1], [], []>} : vector<8x64xbf16>, vector<64x256xbf16>, vector<8x256xf32> -> vector<8x256xf32>
    %c40_277 = arith.constant 40 : index
    %c0_278 = arith.constant 0 : index
    %933 = vector.load %arg24[%c40_277, %c0_278] : memref<64x256xf32, #tpu.memory_space<vmem>>, vector<8x128xf32>
    %934 = vector.extract_strided_slice %932 {offsets = [0, 0], sizes = [8, 128], strides = [1, 1]} : vector<8x256xf32> to vector<8x128xf32>
    %935 = arith.addf %933, %934 : vector<8x128xf32>
    %c16_279 = arith.constant 16 : index
    %c128_280 = arith.constant 128 : index
    %936 = vector.load %arg24[%c16_279, %c128_280] : memref<64x256xf32, #tpu.memory_space<vmem>>, vector<8x128xf32>
    %937 = vector.extract_strided_slice %932 {offsets = [0, 128], sizes = [8, 128], strides = [1, 1]} : vector<8x256xf32> to vector<8x128xf32>
    %938 = arith.addf %936, %937 : vector<8x128xf32>
    %939 = arith.negf %935 : vector<8x128xf32>
    %940 = math.exp %939 : vector<8x128xf32>
    %cst_281 = arith.constant 1.000000e+00 : f32
    %941 = vector.broadcast %cst_281 : f32 to vector<8x128xf32>
    %942 = arith.addf %941, %940 : vector<8x128xf32>
    %943 = arith.divf %941, %942 : vector<8x128xf32>
    %944 = math.tanh %935 : vector<8x128xf32>
    %945 = arith.negf %938 : vector<8x128xf32>
    %946 = math.exp %945 : vector<8x128xf32>
    %cst_282 = arith.constant 1.000000e+00 : f32
    %947 = vector.broadcast %cst_282 : f32 to vector<8x128xf32>
    %948 = arith.addf %947, %946 : vector<8x128xf32>
    %949 = arith.divf %947, %948 : vector<8x128xf32>
    %950 = math.tanh %938 : vector<8x128xf32>
    %951 = vector.extract_strided_slice %943 {offsets = [0, 32], sizes = [8, 32], strides = [1, 1]} : vector<8x128xf32> to vector<8x32xf32>
    %952 = arith.mulf %951, %915 : vector<8x32xf32>
    %953 = vector.extract_strided_slice %943 {offsets = [0, 0], sizes = [8, 32], strides = [1, 1]} : vector<8x128xf32> to vector<8x32xf32>
    %954 = vector.extract_strided_slice %944 {offsets = [0, 64], sizes = [8, 32], strides = [1, 1]} : vector<8x128xf32> to vector<8x32xf32>
    %955 = arith.mulf %953, %954 : vector<8x32xf32>
    %956 = arith.addf %952, %955 : vector<8x32xf32>
    %957 = vector.extract_strided_slice %949 {offsets = [0, 32], sizes = [8, 32], strides = [1, 1]} : vector<8x128xf32> to vector<8x32xf32>
    %958 = arith.mulf %957, %921 : vector<8x32xf32>
    %959 = vector.extract_strided_slice %949 {offsets = [0, 0], sizes = [8, 32], strides = [1, 1]} : vector<8x128xf32> to vector<8x32xf32>
    %960 = vector.extract_strided_slice %950 {offsets = [0, 64], sizes = [8, 32], strides = [1, 1]} : vector<8x128xf32> to vector<8x32xf32>
    %961 = arith.mulf %959, %960 : vector<8x32xf32>
    %962 = arith.addf %958, %961 : vector<8x32xf32>
    %963 = vector.extract_strided_slice %943 {offsets = [0, 96], sizes = [8, 32], strides = [1, 1]} : vector<8x128xf32> to vector<8x32xf32>
    %964 = math.tanh %956 : vector<8x32xf32>
    %965 = arith.mulf %963, %964 : vector<8x32xf32>
    %966 = vector.extract_strided_slice %949 {offsets = [0, 96], sizes = [8, 32], strides = [1, 1]} : vector<8x128xf32> to vector<8x32xf32>
    %967 = math.tanh %962 : vector<8x32xf32>
    %968 = arith.mulf %966, %967 : vector<8x32xf32>
    %c40_283 = arith.constant 40 : index
    %c0_284 = arith.constant 0 : index
    %969 = vector.load %arg23[%c40_283, %c0_284] : memref<64x64xf32, #tpu.memory_space<vmem>>, vector<8x32xf32>
    tpu.vector_store %arg23[%c40_283, %c0_284], %965 {strides = array<i32>} : memref<64x64xf32, #tpu.memory_space<vmem>>, vector<8x32xf32>,
    %c16_285 = arith.constant 16 : index
    %c32_286 = arith.constant 32 : index
    %970 = vector.load %arg23[%c16_285, %c32_286] : memref<64x64xf32, #tpu.memory_space<vmem>>, vector<8x32xf32>
    tpu.vector_store %arg23[%c16_285, %c32_286], %968 {strides = array<i32>} : memref<64x64xf32, #tpu.memory_space<vmem>>, vector<8x32xf32>,
    %971 = tpu.concatenate %965, %968 in 1 : vector<8x32xf32>, vector<8x32xf32> -> vector<8x64xf32>
    %972 = arith.truncf %971 : vector<8x64xf32> to vector<8x64xbf16>
    %cst_287 = arith.constant dense<0.000000e+00> : vector<8x256xf32>
    %973 = tpu.matmul %972, %720, %cst_287 {dimension_numbers = #tpu.dot_dimension_numbers<[1], [0], [0], [1], [0, 0, 1, 1], [], []>} : vector<8x64xbf16>, vector<64x256xbf16>, vector<8x256xf32> -> vector<8x256xf32>
    %c48_288 = arith.constant 48 : index
    %c0_289 = arith.constant 0 : index
    %974 = vector.load %arg24[%c48_288, %c0_289] : memref<64x256xf32, #tpu.memory_space<vmem>>, vector<8x128xf32>
    %975 = vector.extract_strided_slice %973 {offsets = [0, 0], sizes = [8, 128], strides = [1, 1]} : vector<8x256xf32> to vector<8x128xf32>
    %976 = arith.addf %974, %975 : vector<8x128xf32>
    %c8_290 = arith.constant 8 : index
    %c128_291 = arith.constant 128 : index
    %977 = vector.load %arg24[%c8_290, %c128_291] : memref<64x256xf32, #tpu.memory_space<vmem>>, vector<8x128xf32>
    %978 = vector.extract_strided_slice %973 {offsets = [0, 128], sizes = [8, 128], strides = [1, 1]} : vector<8x256xf32> to vector<8x128xf32>
    %979 = arith.addf %977, %978 : vector<8x128xf32>
    %980 = arith.negf %976 : vector<8x128xf32>
    %981 = math.exp %980 : vector<8x128xf32>
    %cst_292 = arith.constant 1.000000e+00 : f32
    %982 = vector.broadcast %cst_292 : f32 to vector<8x128xf32>
    %983 = arith.addf %982, %981 : vector<8x128xf32>
    %984 = arith.divf %982, %983 : vector<8x128xf32>
    %985 = math.tanh %976 : vector<8x128xf32>
    %986 = arith.negf %979 : vector<8x128xf32>
    %987 = math.exp %986 : vector<8x128xf32>
    %cst_293 = arith.constant 1.000000e+00 : f32
    %988 = vector.broadcast %cst_293 : f32 to vector<8x128xf32>
    %989 = arith.addf %988, %987 : vector<8x128xf32>
    %990 = arith.divf %988, %989 : vector<8x128xf32>
    %991 = math.tanh %979 : vector<8x128xf32>
    %992 = vector.extract_strided_slice %984 {offsets = [0, 32], sizes = [8, 32], strides = [1, 1]} : vector<8x128xf32> to vector<8x32xf32>
    %993 = arith.mulf %992, %956 : vector<8x32xf32>
    %994 = vector.extract_strided_slice %984 {offsets = [0, 0], sizes = [8, 32], strides = [1, 1]} : vector<8x128xf32> to vector<8x32xf32>
    %995 = vector.extract_strided_slice %985 {offsets = [0, 64], sizes = [8, 32], strides = [1, 1]} : vector<8x128xf32> to vector<8x32xf32>
    %996 = arith.mulf %994, %995 : vector<8x32xf32>
    %997 = arith.addf %993, %996 : vector<8x32xf32>
    %998 = vector.extract_strided_slice %990 {offsets = [0, 32], sizes = [8, 32], strides = [1, 1]} : vector<8x128xf32> to vector<8x32xf32>
    %999 = arith.mulf %998, %962 : vector<8x32xf32>
    %1000 = vector.extract_strided_slice %990 {offsets = [0, 0], sizes = [8, 32], strides = [1, 1]} : vector<8x128xf32> to vector<8x32xf32>
    %1001 = vector.extract_strided_slice %991 {offsets = [0, 64], sizes = [8, 32], strides = [1, 1]} : vector<8x128xf32> to vector<8x32xf32>
    %1002 = arith.mulf %1000, %1001 : vector<8x32xf32>
    %1003 = arith.addf %999, %1002 : vector<8x32xf32>
    %1004 = vector.extract_strided_slice %984 {offsets = [0, 96], sizes = [8, 32], strides = [1, 1]} : vector<8x128xf32> to vector<8x32xf32>
    %1005 = math.tanh %997 : vector<8x32xf32>
    %1006 = arith.mulf %1004, %1005 : vector<8x32xf32>
    %1007 = vector.extract_strided_slice %990 {offsets = [0, 96], sizes = [8, 32], strides = [1, 1]} : vector<8x128xf32> to vector<8x32xf32>
    %1008 = math.tanh %1003 : vector<8x32xf32>
    %1009 = arith.mulf %1007, %1008 : vector<8x32xf32>
    %c48_294 = arith.constant 48 : index
    %c0_295 = arith.constant 0 : index
    %1010 = vector.load %arg23[%c48_294, %c0_295] : memref<64x64xf32, #tpu.memory_space<vmem>>, vector<8x32xf32>
    tpu.vector_store %arg23[%c48_294, %c0_295], %1006 {strides = array<i32>} : memref<64x64xf32, #tpu.memory_space<vmem>>, vector<8x32xf32>,
    %c8_296 = arith.constant 8 : index
    %c32_297 = arith.constant 32 : index
    %1011 = vector.load %arg23[%c8_296, %c32_297] : memref<64x64xf32, #tpu.memory_space<vmem>>, vector<8x32xf32>
    tpu.vector_store %arg23[%c8_296, %c32_297], %1009 {strides = array<i32>} : memref<64x64xf32, #tpu.memory_space<vmem>>, vector<8x32xf32>,
    %1012 = tpu.concatenate %1006, %1009 in 1 : vector<8x32xf32>, vector<8x32xf32> -> vector<8x64xf32>
    %1013 = arith.truncf %1012 : vector<8x64xf32> to vector<8x64xbf16>
    %cst_298 = arith.constant dense<0.000000e+00> : vector<8x256xf32>
    %1014 = tpu.matmul %1013, %720, %cst_298 {dimension_numbers = #tpu.dot_dimension_numbers<[1], [0], [0], [1], [0, 0, 1, 1], [], []>} : vector<8x64xbf16>, vector<64x256xbf16>, vector<8x256xf32> -> vector<8x256xf32>
    %c56_299 = arith.constant 56 : index
    %c0_300 = arith.constant 0 : index
    %1015 = vector.load %arg24[%c56_299, %c0_300] : memref<64x256xf32, #tpu.memory_space<vmem>>, vector<8x128xf32>
    %1016 = vector.extract_strided_slice %1014 {offsets = [0, 0], sizes = [8, 128], strides = [1, 1]} : vector<8x256xf32> to vector<8x128xf32>
    %1017 = arith.addf %1015, %1016 : vector<8x128xf32>
    %c0_301 = arith.constant 0 : index
    %c128_302 = arith.constant 128 : index
    %1018 = vector.load %arg24[%c0_301, %c128_302] : memref<64x256xf32, #tpu.memory_space<vmem>>, vector<8x128xf32>
    %1019 = vector.extract_strided_slice %1014 {offsets = [0, 128], sizes = [8, 128], strides = [1, 1]} : vector<8x256xf32> to vector<8x128xf32>
    %1020 = arith.addf %1018, %1019 : vector<8x128xf32>
    %1021 = arith.negf %1017 : vector<8x128xf32>
    %1022 = math.exp %1021 : vector<8x128xf32>
    %cst_303 = arith.constant 1.000000e+00 : f32
    %1023 = vector.broadcast %cst_303 : f32 to vector<8x128xf32>
    %1024 = arith.addf %1023, %1022 : vector<8x128xf32>
    %1025 = arith.divf %1023, %1024 : vector<8x128xf32>
    %1026 = math.tanh %1017 : vector<8x128xf32>
    %1027 = arith.negf %1020 : vector<8x128xf32>
    %1028 = math.exp %1027 : vector<8x128xf32>
    %cst_304 = arith.constant 1.000000e+00 : f32
    %1029 = vector.broadcast %cst_304 : f32 to vector<8x128xf32>
    %1030 = arith.addf %1029, %1028 : vector<8x128xf32>
    %1031 = arith.divf %1029, %1030 : vector<8x128xf32>
    %1032 = math.tanh %1020 : vector<8x128xf32>
    %1033 = vector.extract_strided_slice %1025 {offsets = [0, 32], sizes = [8, 32], strides = [1, 1]} : vector<8x128xf32> to vector<8x32xf32>
    %1034 = arith.mulf %1033, %997 : vector<8x32xf32>
    %1035 = vector.extract_strided_slice %1025 {offsets = [0, 0], sizes = [8, 32], strides = [1, 1]} : vector<8x128xf32> to vector<8x32xf32>
    %1036 = vector.extract_strided_slice %1026 {offsets = [0, 64], sizes = [8, 32], strides = [1, 1]} : vector<8x128xf32> to vector<8x32xf32>
    %1037 = arith.mulf %1035, %1036 : vector<8x32xf32>
    %1038 = arith.addf %1034, %1037 : vector<8x32xf32>
    %1039 = vector.extract_strided_slice %1031 {offsets = [0, 32], sizes = [8, 32], strides = [1, 1]} : vector<8x128xf32> to vector<8x32xf32>
    %1040 = arith.mulf %1039, %1003 : vector<8x32xf32>
    %1041 = vector.extract_strided_slice %1031 {offsets = [0, 0], sizes = [8, 32], strides = [1, 1]} : vector<8x128xf32> to vector<8x32xf32>
    %1042 = vector.extract_strided_slice %1032 {offsets = [0, 64], sizes = [8, 32], strides = [1, 1]} : vector<8x128xf32> to vector<8x32xf32>
    %1043 = arith.mulf %1041, %1042 : vector<8x32xf32>
    %1044 = arith.addf %1040, %1043 : vector<8x32xf32>
    %1045 = vector.extract_strided_slice %1025 {offsets = [0, 96], sizes = [8, 32], strides = [1, 1]} : vector<8x128xf32> to vector<8x32xf32>
    %1046 = math.tanh %1038 : vector<8x32xf32>
    %1047 = arith.mulf %1045, %1046 : vector<8x32xf32>
    %1048 = vector.extract_strided_slice %1031 {offsets = [0, 96], sizes = [8, 32], strides = [1, 1]} : vector<8x128xf32> to vector<8x32xf32>
    %1049 = math.tanh %1044 : vector<8x32xf32>
    %1050 = arith.mulf %1048, %1049 : vector<8x32xf32>
    %c56_305 = arith.constant 56 : index
    %c0_306 = arith.constant 0 : index
    %1051 = vector.load %arg23[%c56_305, %c0_306] : memref<64x64xf32, #tpu.memory_space<vmem>>, vector<8x32xf32>
    tpu.vector_store %arg23[%c56_305, %c0_306], %1047 {strides = array<i32>} : memref<64x64xf32, #tpu.memory_space<vmem>>, vector<8x32xf32>,
    %c0_307 = arith.constant 0 : index
    %c32_308 = arith.constant 32 : index
    %1052 = vector.load %arg23[%c0_307, %c32_308] : memref<64x64xf32, #tpu.memory_space<vmem>>, vector<8x32xf32>
    tpu.vector_store %arg23[%c0_307, %c32_308], %1050 {strides = array<i32>} : memref<64x64xf32, #tpu.memory_space<vmem>>, vector<8x32xf32>,
    %c0_309 = arith.constant 0 : index
    %c0_310 = arith.constant 0 : index
    %1053 = vector.load %arg23[%c0_309, %c0_310] : memref<64x64xf32, #tpu.memory_space<vmem>>, vector<64x64xf32>
    %1054 = arith.truncf %1053 : vector<64x64xf32> to vector<64x64xbf16>
    %c0_311 = arith.constant 0 : index
    %c0_312 = arith.constant 0 : index
    %1055 = vector.load %arg11[%c0_311, %c0_312] : memref<64x256xbf16, #tpu.memory_space<vmem>>, vector<64x256xbf16>
    %cst_313 = arith.constant dense<0.000000e+00> : vector<64x256xf32>
    %1056 = tpu.matmul %1054, %1055, %cst_313 {dimension_numbers = #tpu.dot_dimension_numbers<[1], [0], [0], [1], [0, 0, 1, 1], [], []>} : vector<64x64xbf16>, vector<64x256xbf16>, vector<64x256xf32> -> vector<64x256xf32>
    %c0_314 = arith.constant 0 : index
    %c0_315 = arith.constant 0 : index
    %1057 = vector.load %arg13[%c0_314, %c0_315] : memref<1x256xf32, #tpu.memory_space<vmem>>, vector<1x256xf32>
    %1058 = vector.broadcast %1057 : vector<1x256xf32> to vector<64x256xf32>
    %1059 = arith.addf %1056, %1058 : vector<64x256xf32>
    %c0_316 = arith.constant 0 : index
    %c0_317 = arith.constant 0 : index
    %1060 = vector.load %arg24[%c0_316, %c0_317] : memref<64x256xf32, #tpu.memory_space<vmem>>, vector<64x256xf32>
    tpu.vector_store %arg24[%c0_316, %c0_317], %1059 {strides = array<i32>} : memref<64x256xf32, #tpu.memory_space<vmem>>, vector<64x256xf32>,
    %c0_318 = arith.constant 0 : index
    %c0_319 = arith.constant 0 : index
    %1061 = vector.load %arg12[%c0_318, %c0_319] : memref<64x256xbf16, #tpu.memory_space<vmem>>, vector<64x256xbf16>
    %cst_320 = arith.constant 0.000000e+00 : f32
    %1062 = vector.broadcast %cst_320 : f32 to vector<8x32xf32>
    %cst_321 = arith.constant 0.000000e+00 : f32
    %1063 = vector.broadcast %cst_321 : f32 to vector<8x32xf32>
    %cst_322 = arith.constant 0.000000e+00 : f32
    %1064 = vector.broadcast %cst_322 : f32 to vector<8x32xf32>
    %cst_323 = arith.constant 0.000000e+00 : f32
    %1065 = vector.broadcast %cst_323 : f32 to vector<8x32xf32>
    %1066 = tpu.concatenate %1062, %1064 in 1 : vector<8x32xf32>, vector<8x32xf32> -> vector<8x64xf32>
    %1067 = arith.truncf %1066 : vector<8x64xf32> to vector<8x64xbf16>
    %cst_324 = arith.constant dense<0.000000e+00> : vector<8x256xf32>
    %1068 = tpu.matmul %1067, %1061, %cst_324 {dimension_numbers = #tpu.dot_dimension_numbers<[1], [0], [0], [1], [0, 0, 1, 1], [], []>} : vector<8x64xbf16>, vector<64x256xbf16>, vector<8x256xf32> -> vector<8x256xf32>
    %c0_325 = arith.constant 0 : index
    %c0_326 = arith.constant 0 : index
    %1069 = vector.load %arg24[%c0_325, %c0_326] : memref<64x256xf32, #tpu.memory_space<vmem>>, vector<8x128xf32>
    %1070 = vector.extract_strided_slice %1068 {offsets = [0, 0], sizes = [8, 128], strides = [1, 1]} : vector<8x256xf32> to vector<8x128xf32>
    %1071 = arith.addf %1069, %1070 : vector<8x128xf32>
    %c56_327 = arith.constant 56 : index
    %c128_328 = arith.constant 128 : index
    %1072 = vector.load %arg24[%c56_327, %c128_328] : memref<64x256xf32, #tpu.memory_space<vmem>>, vector<8x128xf32>
    %1073 = vector.extract_strided_slice %1068 {offsets = [0, 128], sizes = [8, 128], strides = [1, 1]} : vector<8x256xf32> to vector<8x128xf32>
    %1074 = arith.addf %1072, %1073 : vector<8x128xf32>
    %1075 = arith.negf %1071 : vector<8x128xf32>
    %1076 = math.exp %1075 : vector<8x128xf32>
    %cst_329 = arith.constant 1.000000e+00 : f32
    %1077 = vector.broadcast %cst_329 : f32 to vector<8x128xf32>
    %1078 = arith.addf %1077, %1076 : vector<8x128xf32>
    %1079 = arith.divf %1077, %1078 : vector<8x128xf32>
    %1080 = math.tanh %1071 : vector<8x128xf32>
    %1081 = arith.negf %1074 : vector<8x128xf32>
    %1082 = math.exp %1081 : vector<8x128xf32>
    %cst_330 = arith.constant 1.000000e+00 : f32
    %1083 = vector.broadcast %cst_330 : f32 to vector<8x128xf32>
    %1084 = arith.addf %1083, %1082 : vector<8x128xf32>
    %1085 = arith.divf %1083, %1084 : vector<8x128xf32>
    %1086 = math.tanh %1074 : vector<8x128xf32>
    %1087 = vector.extract_strided_slice %1079 {offsets = [0, 32], sizes = [8, 32], strides = [1, 1]} : vector<8x128xf32> to vector<8x32xf32>
    %1088 = arith.mulf %1087, %1063 : vector<8x32xf32>
    %1089 = vector.extract_strided_slice %1079 {offsets = [0, 0], sizes = [8, 32], strides = [1, 1]} : vector<8x128xf32> to vector<8x32xf32>
    %1090 = vector.extract_strided_slice %1080 {offsets = [0, 64], sizes = [8, 32], strides = [1, 1]} : vector<8x128xf32> to vector<8x32xf32>
    %1091 = arith.mulf %1089, %1090 : vector<8x32xf32>
    %1092 = arith.addf %1088, %1091 : vector<8x32xf32>
    %1093 = vector.extract_strided_slice %1085 {offsets = [0, 32], sizes = [8, 32], strides = [1, 1]} : vector<8x128xf32> to vector<8x32xf32>
    %1094 = arith.mulf %1093, %1065 : vector<8x32xf32>
    %1095 = vector.extract_strided_slice %1085 {offsets = [0, 0], sizes = [8, 32], strides = [1, 1]} : vector<8x128xf32> to vector<8x32xf32>
    %1096 = vector.extract_strided_slice %1086 {offsets = [0, 64], sizes = [8, 32], strides = [1, 1]} : vector<8x128xf32> to vector<8x32xf32>
    %1097 = arith.mulf %1095, %1096 : vector<8x32xf32>
    %1098 = arith.addf %1094, %1097 : vector<8x32xf32>
    %1099 = vector.extract_strided_slice %1079 {offsets = [0, 96], sizes = [8, 32], strides = [1, 1]} : vector<8x128xf32> to vector<8x32xf32>
    %1100 = math.tanh %1092 : vector<8x32xf32>
    %1101 = arith.mulf %1099, %1100 : vector<8x32xf32>
    %1102 = vector.extract_strided_slice %1085 {offsets = [0, 96], sizes = [8, 32], strides = [1, 1]} : vector<8x128xf32> to vector<8x32xf32>
    %1103 = math.tanh %1098 : vector<8x32xf32>
    %1104 = arith.mulf %1102, %1103 : vector<8x32xf32>
    %c0_331 = arith.constant 0 : index
    %c0_332 = arith.constant 0 : index
    %1105 = vector.load %arg23[%c0_331, %c0_332] : memref<64x64xf32, #tpu.memory_space<vmem>>, vector<8x32xf32>
    tpu.vector_store %arg23[%c0_331, %c0_332], %1101 {strides = array<i32>} : memref<64x64xf32, #tpu.memory_space<vmem>>, vector<8x32xf32>,
    %c56_333 = arith.constant 56 : index
    %c32_334 = arith.constant 32 : index
    %1106 = vector.load %arg23[%c56_333, %c32_334] : memref<64x64xf32, #tpu.memory_space<vmem>>, vector<8x32xf32>
    tpu.vector_store %arg23[%c56_333, %c32_334], %1104 {strides = array<i32>} : memref<64x64xf32, #tpu.memory_space<vmem>>, vector<8x32xf32>,
    %1107 = tpu.concatenate %1101, %1104 in 1 : vector<8x32xf32>, vector<8x32xf32> -> vector<8x64xf32>
    %1108 = arith.truncf %1107 : vector<8x64xf32> to vector<8x64xbf16>
    %cst_335 = arith.constant dense<0.000000e+00> : vector<8x256xf32>
    %1109 = tpu.matmul %1108, %1061, %cst_335 {dimension_numbers = #tpu.dot_dimension_numbers<[1], [0], [0], [1], [0, 0, 1, 1], [], []>} : vector<8x64xbf16>, vector<64x256xbf16>, vector<8x256xf32> -> vector<8x256xf32>
    %c8_336 = arith.constant 8 : index
    %c0_337 = arith.constant 0 : index
    %1110 = vector.load %arg24[%c8_336, %c0_337] : memref<64x256xf32, #tpu.memory_space<vmem>>, vector<8x128xf32>
    %1111 = vector.extract_strided_slice %1109 {offsets = [0, 0], sizes = [8, 128], strides = [1, 1]} : vector<8x256xf32> to vector<8x128xf32>
    %1112 = arith.addf %1110, %1111 : vector<8x128xf32>
    %c48_338 = arith.constant 48 : index
    %c128_339 = arith.constant 128 : index
    %1113 = vector.load %arg24[%c48_338, %c128_339] : memref<64x256xf32, #tpu.memory_space<vmem>>, vector<8x128xf32>
    %1114 = vector.extract_strided_slice %1109 {offsets = [0, 128], sizes = [8, 128], strides = [1, 1]} : vector<8x256xf32> to vector<8x128xf32>
    %1115 = arith.addf %1113, %1114 : vector<8x128xf32>
    %1116 = arith.negf %1112 : vector<8x128xf32>
    %1117 = math.exp %1116 : vector<8x128xf32>
    %cst_340 = arith.constant 1.000000e+00 : f32
    %1118 = vector.broadcast %cst_340 : f32 to vector<8x128xf32>
    %1119 = arith.addf %1118, %1117 : vector<8x128xf32>
    %1120 = arith.divf %1118, %1119 : vector<8x128xf32>
    %1121 = math.tanh %1112 : vector<8x128xf32>
    %1122 = arith.negf %1115 : vector<8x128xf32>
    %1123 = math.exp %1122 : vector<8x128xf32>
    %cst_341 = arith.constant 1.000000e+00 : f32
    %1124 = vector.broadcast %cst_341 : f32 to vector<8x128xf32>
    %1125 = arith.addf %1124, %1123 : vector<8x128xf32>
    %1126 = arith.divf %1124, %1125 : vector<8x128xf32>
    %1127 = math.tanh %1115 : vector<8x128xf32>
    %1128 = vector.extract_strided_slice %1120 {offsets = [0, 32], sizes = [8, 32], strides = [1, 1]} : vector<8x128xf32> to vector<8x32xf32>
    %1129 = arith.mulf %1128, %1092 : vector<8x32xf32>
    %1130 = vector.extract_strided_slice %1120 {offsets = [0, 0], sizes = [8, 32], strides = [1, 1]} : vector<8x128xf32> to vector<8x32xf32>
    %1131 = vector.extract_strided_slice %1121 {offsets = [0, 64], sizes = [8, 32], strides = [1, 1]} : vector<8x128xf32> to vector<8x32xf32>
    %1132 = arith.mulf %1130, %1131 : vector<8x32xf32>
    %1133 = arith.addf %1129, %1132 : vector<8x32xf32>
    %1134 = vector.extract_strided_slice %1126 {offsets = [0, 32], sizes = [8, 32], strides = [1, 1]} : vector<8x128xf32> to vector<8x32xf32>
    %1135 = arith.mulf %1134, %1098 : vector<8x32xf32>
    %1136 = vector.extract_strided_slice %1126 {offsets = [0, 0], sizes = [8, 32], strides = [1, 1]} : vector<8x128xf32> to vector<8x32xf32>
    %1137 = vector.extract_strided_slice %1127 {offsets = [0, 64], sizes = [8, 32], strides = [1, 1]} : vector<8x128xf32> to vector<8x32xf32>
    %1138 = arith.mulf %1136, %1137 : vector<8x32xf32>
    %1139 = arith.addf %1135, %1138 : vector<8x32xf32>
    %1140 = vector.extract_strided_slice %1120 {offsets = [0, 96], sizes = [8, 32], strides = [1, 1]} : vector<8x128xf32> to vector<8x32xf32>
    %1141 = math.tanh %1133 : vector<8x32xf32>
    %1142 = arith.mulf %1140, %1141 : vector<8x32xf32>
    %1143 = vector.extract_strided_slice %1126 {offsets = [0, 96], sizes = [8, 32], strides = [1, 1]} : vector<8x128xf32> to vector<8x32xf32>
    %1144 = math.tanh %1139 : vector<8x32xf32>
    %1145 = arith.mulf %1143, %1144 : vector<8x32xf32>
    %c8_342 = arith.constant 8 : index
    %c0_343 = arith.constant 0 : index
    %1146 = vector.load %arg23[%c8_342, %c0_343] : memref<64x64xf32, #tpu.memory_space<vmem>>, vector<8x32xf32>
    tpu.vector_store %arg23[%c8_342, %c0_343], %1142 {strides = array<i32>} : memref<64x64xf32, #tpu.memory_space<vmem>>, vector<8x32xf32>,
    %c48_344 = arith.constant 48 : index
    %c32_345 = arith.constant 32 : index
    %1147 = vector.load %arg23[%c48_344, %c32_345] : memref<64x64xf32, #tpu.memory_space<vmem>>, vector<8x32xf32>
    tpu.vector_store %arg23[%c48_344, %c32_345], %1145 {strides = array<i32>} : memref<64x64xf32, #tpu.memory_space<vmem>>, vector<8x32xf32>,
    %1148 = tpu.concatenate %1142, %1145 in 1 : vector<8x32xf32>, vector<8x32xf32> -> vector<8x64xf32>
    %1149 = arith.truncf %1148 : vector<8x64xf32> to vector<8x64xbf16>
    %cst_346 = arith.constant dense<0.000000e+00> : vector<8x256xf32>
    %1150 = tpu.matmul %1149, %1061, %cst_346 {dimension_numbers = #tpu.dot_dimension_numbers<[1], [0], [0], [1], [0, 0, 1, 1], [], []>} : vector<8x64xbf16>, vector<64x256xbf16>, vector<8x256xf32> -> vector<8x256xf32>
    %c16_347 = arith.constant 16 : index
    %c0_348 = arith.constant 0 : index
    %1151 = vector.load %arg24[%c16_347, %c0_348] : memref<64x256xf32, #tpu.memory_space<vmem>>, vector<8x128xf32>
    %1152 = vector.extract_strided_slice %1150 {offsets = [0, 0], sizes = [8, 128], strides = [1, 1]} : vector<8x256xf32> to vector<8x128xf32>
    %1153 = arith.addf %1151, %1152 : vector<8x128xf32>
    %c40_349 = arith.constant 40 : index
    %c128_350 = arith.constant 128 : index
    %1154 = vector.load %arg24[%c40_349, %c128_350] : memref<64x256xf32, #tpu.memory_space<vmem>>, vector<8x128xf32>
    %1155 = vector.extract_strided_slice %1150 {offsets = [0, 128], sizes = [8, 128], strides = [1, 1]} : vector<8x256xf32> to vector<8x128xf32>
    %1156 = arith.addf %1154, %1155 : vector<8x128xf32>
    %1157 = arith.negf %1153 : vector<8x128xf32>
    %1158 = math.exp %1157 : vector<8x128xf32>
    %cst_351 = arith.constant 1.000000e+00 : f32
    %1159 = vector.broadcast %cst_351 : f32 to vector<8x128xf32>
    %1160 = arith.addf %1159, %1158 : vector<8x128xf32>
    %1161 = arith.divf %1159, %1160 : vector<8x128xf32>
    %1162 = math.tanh %1153 : vector<8x128xf32>
    %1163 = arith.negf %1156 : vector<8x128xf32>
    %1164 = math.exp %1163 : vector<8x128xf32>
    %cst_352 = arith.constant 1.000000e+00 : f32
    %1165 = vector.broadcast %cst_352 : f32 to vector<8x128xf32>
    %1166 = arith.addf %1165, %1164 : vector<8x128xf32>
    %1167 = arith.divf %1165, %1166 : vector<8x128xf32>
    %1168 = math.tanh %1156 : vector<8x128xf32>
    %1169 = vector.extract_strided_slice %1161 {offsets = [0, 32], sizes = [8, 32], strides = [1, 1]} : vector<8x128xf32> to vector<8x32xf32>
    %1170 = arith.mulf %1169, %1133 : vector<8x32xf32>
    %1171 = vector.extract_strided_slice %1161 {offsets = [0, 0], sizes = [8, 32], strides = [1, 1]} : vector<8x128xf32> to vector<8x32xf32>
    %1172 = vector.extract_strided_slice %1162 {offsets = [0, 64], sizes = [8, 32], strides = [1, 1]} : vector<8x128xf32> to vector<8x32xf32>
    %1173 = arith.mulf %1171, %1172 : vector<8x32xf32>
    %1174 = arith.addf %1170, %1173 : vector<8x32xf32>
    %1175 = vector.extract_strided_slice %1167 {offsets = [0, 32], sizes = [8, 32], strides = [1, 1]} : vector<8x128xf32> to vector<8x32xf32>
    %1176 = arith.mulf %1175, %1139 : vector<8x32xf32>
    %1177 = vector.extract_strided_slice %1167 {offsets = [0, 0], sizes = [8, 32], strides = [1, 1]} : vector<8x128xf32> to vector<8x32xf32>
    %1178 = vector.extract_strided_slice %1168 {offsets = [0, 64], sizes = [8, 32], strides = [1, 1]} : vector<8x128xf32> to vector<8x32xf32>
    %1179 = arith.mulf %1177, %1178 : vector<8x32xf32>
    %1180 = arith.addf %1176, %1179 : vector<8x32xf32>
    %1181 = vector.extract_strided_slice %1161 {offsets = [0, 96], sizes = [8, 32], strides = [1, 1]} : vector<8x128xf32> to vector<8x32xf32>
    %1182 = math.tanh %1174 : vector<8x32xf32>
    %1183 = arith.mulf %1181, %1182 : vector<8x32xf32>
    %1184 = vector.extract_strided_slice %1167 {offsets = [0, 96], sizes = [8, 32], strides = [1, 1]} : vector<8x128xf32> to vector<8x32xf32>
    %1185 = math.tanh %1180 : vector<8x32xf32>
    %1186 = arith.mulf %1184, %1185 : vector<8x32xf32>
    %c16_353 = arith.constant 16 : index
    %c0_354 = arith.constant 0 : index
    %1187 = vector.load %arg23[%c16_353, %c0_354] : memref<64x64xf32, #tpu.memory_space<vmem>>, vector<8x32xf32>
    tpu.vector_store %arg23[%c16_353, %c0_354], %1183 {strides = array<i32>} : memref<64x64xf32, #tpu.memory_space<vmem>>, vector<8x32xf32>,
    %c40_355 = arith.constant 40 : index
    %c32_356 = arith.constant 32 : index
    %1188 = vector.load %arg23[%c40_355, %c32_356] : memref<64x64xf32, #tpu.memory_space<vmem>>, vector<8x32xf32>
    tpu.vector_store %arg23[%c40_355, %c32_356], %1186 {strides = array<i32>} : memref<64x64xf32, #tpu.memory_space<vmem>>, vector<8x32xf32>,
    %1189 = tpu.concatenate %1183, %1186 in 1 : vector<8x32xf32>, vector<8x32xf32> -> vector<8x64xf32>
    %1190 = arith.truncf %1189 : vector<8x64xf32> to vector<8x64xbf16>
    %cst_357 = arith.constant dense<0.000000e+00> : vector<8x256xf32>
    %1191 = tpu.matmul %1190, %1061, %cst_357 {dimension_numbers = #tpu.dot_dimension_numbers<[1], [0], [0], [1], [0, 0, 1, 1], [], []>} : vector<8x64xbf16>, vector<64x256xbf16>, vector<8x256xf32> -> vector<8x256xf32>
    %c24_358 = arith.constant 24 : index
    %c0_359 = arith.constant 0 : index
    %1192 = vector.load %arg24[%c24_358, %c0_359] : memref<64x256xf32, #tpu.memory_space<vmem>>, vector<8x128xf32>
    %1193 = vector.extract_strided_slice %1191 {offsets = [0, 0], sizes = [8, 128], strides = [1, 1]} : vector<8x256xf32> to vector<8x128xf32>
    %1194 = arith.addf %1192, %1193 : vector<8x128xf32>
    %c32_360 = arith.constant 32 : index
    %c128_361 = arith.constant 128 : index
    %1195 = vector.load %arg24[%c32_360, %c128_361] : memref<64x256xf32, #tpu.memory_space<vmem>>, vector<8x128xf32>
    %1196 = vector.extract_strided_slice %1191 {offsets = [0, 128], sizes = [8, 128], strides = [1, 1]} : vector<8x256xf32> to vector<8x128xf32>
    %1197 = arith.addf %1195, %1196 : vector<8x128xf32>
    %1198 = arith.negf %1194 : vector<8x128xf32>
    %1199 = math.exp %1198 : vector<8x128xf32>
    %cst_362 = arith.constant 1.000000e+00 : f32
    %1200 = vector.broadcast %cst_362 : f32 to vector<8x128xf32>
    %1201 = arith.addf %1200, %1199 : vector<8x128xf32>
    %1202 = arith.divf %1200, %1201 : vector<8x128xf32>
    %1203 = math.tanh %1194 : vector<8x128xf32>
    %1204 = arith.negf %1197 : vector<8x128xf32>
    %1205 = math.exp %1204 : vector<8x128xf32>
    %cst_363 = arith.constant 1.000000e+00 : f32
    %1206 = vector.broadcast %cst_363 : f32 to vector<8x128xf32>
    %1207 = arith.addf %1206, %1205 : vector<8x128xf32>
    %1208 = arith.divf %1206, %1207 : vector<8x128xf32>
    %1209 = math.tanh %1197 : vector<8x128xf32>
    %1210 = vector.extract_strided_slice %1202 {offsets = [0, 32], sizes = [8, 32], strides = [1, 1]} : vector<8x128xf32> to vector<8x32xf32>
    %1211 = arith.mulf %1210, %1174 : vector<8x32xf32>
    %1212 = vector.extract_strided_slice %1202 {offsets = [0, 0], sizes = [8, 32], strides = [1, 1]} : vector<8x128xf32> to vector<8x32xf32>
    %1213 = vector.extract_strided_slice %1203 {offsets = [0, 64], sizes = [8, 32], strides = [1, 1]} : vector<8x128xf32> to vector<8x32xf32>
    %1214 = arith.mulf %1212, %1213 : vector<8x32xf32>
    %1215 = arith.addf %1211, %1214 : vector<8x32xf32>
    %1216 = vector.extract_strided_slice %1208 {offsets = [0, 32], sizes = [8, 32], strides = [1, 1]} : vector<8x128xf32> to vector<8x32xf32>
    %1217 = arith.mulf %1216, %1180 : vector<8x32xf32>
    %1218 = vector.extract_strided_slice %1208 {offsets = [0, 0], sizes = [8, 32], strides = [1, 1]} : vector<8x128xf32> to vector<8x32xf32>
    %1219 = vector.extract_strided_slice %1209 {offsets = [0, 64], sizes = [8, 32], strides = [1, 1]} : vector<8x128xf32> to vector<8x32xf32>
    %1220 = arith.mulf %1218, %1219 : vector<8x32xf32>
    %1221 = arith.addf %1217, %1220 : vector<8x32xf32>
    %1222 = vector.extract_strided_slice %1202 {offsets = [0, 96], sizes = [8, 32], strides = [1, 1]} : vector<8x128xf32> to vector<8x32xf32>
    %1223 = math.tanh %1215 : vector<8x32xf32>
    %1224 = arith.mulf %1222, %1223 : vector<8x32xf32>
    %1225 = vector.extract_strided_slice %1208 {offsets = [0, 96], sizes = [8, 32], strides = [1, 1]} : vector<8x128xf32> to vector<8x32xf32>
    %1226 = math.tanh %1221 : vector<8x32xf32>
    %1227 = arith.mulf %1225, %1226 : vector<8x32xf32>
    %c24_364 = arith.constant 24 : index
    %c0_365 = arith.constant 0 : index
    %1228 = vector.load %arg23[%c24_364, %c0_365] : memref<64x64xf32, #tpu.memory_space<vmem>>, vector<8x32xf32>
    tpu.vector_store %arg23[%c24_364, %c0_365], %1224 {strides = array<i32>} : memref<64x64xf32, #tpu.memory_space<vmem>>, vector<8x32xf32>,
    %c32_366 = arith.constant 32 : index
    %c32_367 = arith.constant 32 : index
    %1229 = vector.load %arg23[%c32_366, %c32_367] : memref<64x64xf32, #tpu.memory_space<vmem>>, vector<8x32xf32>
    tpu.vector_store %arg23[%c32_366, %c32_367], %1227 {strides = array<i32>} : memref<64x64xf32, #tpu.memory_space<vmem>>, vector<8x32xf32>,
    %1230 = tpu.concatenate %1224, %1227 in 1 : vector<8x32xf32>, vector<8x32xf32> -> vector<8x64xf32>
    %1231 = arith.truncf %1230 : vector<8x64xf32> to vector<8x64xbf16>
    %cst_368 = arith.constant dense<0.000000e+00> : vector<8x256xf32>
    %1232 = tpu.matmul %1231, %1061, %cst_368 {dimension_numbers = #tpu.dot_dimension_numbers<[1], [0], [0], [1], [0, 0, 1, 1], [], []>} : vector<8x64xbf16>, vector<64x256xbf16>, vector<8x256xf32> -> vector<8x256xf32>
    %c32_369 = arith.constant 32 : index
    %c0_370 = arith.constant 0 : index
    %1233 = vector.load %arg24[%c32_369, %c0_370] : memref<64x256xf32, #tpu.memory_space<vmem>>, vector<8x128xf32>
    %1234 = vector.extract_strided_slice %1232 {offsets = [0, 0], sizes = [8, 128], strides = [1, 1]} : vector<8x256xf32> to vector<8x128xf32>
    %1235 = arith.addf %1233, %1234 : vector<8x128xf32>
    %c24_371 = arith.constant 24 : index
    %c128_372 = arith.constant 128 : index
    %1236 = vector.load %arg24[%c24_371, %c128_372] : memref<64x256xf32, #tpu.memory_space<vmem>>, vector<8x128xf32>
    %1237 = vector.extract_strided_slice %1232 {offsets = [0, 128], sizes = [8, 128], strides = [1, 1]} : vector<8x256xf32> to vector<8x128xf32>
    %1238 = arith.addf %1236, %1237 : vector<8x128xf32>
    %1239 = arith.negf %1235 : vector<8x128xf32>
    %1240 = math.exp %1239 : vector<8x128xf32>
    %cst_373 = arith.constant 1.000000e+00 : f32
    %1241 = vector.broadcast %cst_373 : f32 to vector<8x128xf32>
    %1242 = arith.addf %1241, %1240 : vector<8x128xf32>
    %1243 = arith.divf %1241, %1242 : vector<8x128xf32>
    %1244 = math.tanh %1235 : vector<8x128xf32>
    %1245 = arith.negf %1238 : vector<8x128xf32>
    %1246 = math.exp %1245 : vector<8x128xf32>
    %cst_374 = arith.constant 1.000000e+00 : f32
    %1247 = vector.broadcast %cst_374 : f32 to vector<8x128xf32>
    %1248 = arith.addf %1247, %1246 : vector<8x128xf32>
    %1249 = arith.divf %1247, %1248 : vector<8x128xf32>
    %1250 = math.tanh %1238 : vector<8x128xf32>
    %1251 = vector.extract_strided_slice %1243 {offsets = [0, 32], sizes = [8, 32], strides = [1, 1]} : vector<8x128xf32> to vector<8x32xf32>
    %1252 = arith.mulf %1251, %1215 : vector<8x32xf32>
    %1253 = vector.extract_strided_slice %1243 {offsets = [0, 0], sizes = [8, 32], strides = [1, 1]} : vector<8x128xf32> to vector<8x32xf32>
    %1254 = vector.extract_strided_slice %1244 {offsets = [0, 64], sizes = [8, 32], strides = [1, 1]} : vector<8x128xf32> to vector<8x32xf32>
    %1255 = arith.mulf %1253, %1254 : vector<8x32xf32>
    %1256 = arith.addf %1252, %1255 : vector<8x32xf32>
    %1257 = vector.extract_strided_slice %1249 {offsets = [0, 32], sizes = [8, 32], strides = [1, 1]} : vector<8x128xf32> to vector<8x32xf32>
    %1258 = arith.mulf %1257, %1221 : vector<8x32xf32>
    %1259 = vector.extract_strided_slice %1249 {offsets = [0, 0], sizes = [8, 32], strides = [1, 1]} : vector<8x128xf32> to vector<8x32xf32>
    %1260 = vector.extract_strided_slice %1250 {offsets = [0, 64], sizes = [8, 32], strides = [1, 1]} : vector<8x128xf32> to vector<8x32xf32>
    %1261 = arith.mulf %1259, %1260 : vector<8x32xf32>
    %1262 = arith.addf %1258, %1261 : vector<8x32xf32>
    %1263 = vector.extract_strided_slice %1243 {offsets = [0, 96], sizes = [8, 32], strides = [1, 1]} : vector<8x128xf32> to vector<8x32xf32>
    %1264 = math.tanh %1256 : vector<8x32xf32>
    %1265 = arith.mulf %1263, %1264 : vector<8x32xf32>
    %1266 = vector.extract_strided_slice %1249 {offsets = [0, 96], sizes = [8, 32], strides = [1, 1]} : vector<8x128xf32> to vector<8x32xf32>
    %1267 = math.tanh %1262 : vector<8x32xf32>
    %1268 = arith.mulf %1266, %1267 : vector<8x32xf32>
    %c32_375 = arith.constant 32 : index
    %c0_376 = arith.constant 0 : index
    %1269 = vector.load %arg23[%c32_375, %c0_376] : memref<64x64xf32, #tpu.memory_space<vmem>>, vector<8x32xf32>
    tpu.vector_store %arg23[%c32_375, %c0_376], %1265 {strides = array<i32>} : memref<64x64xf32, #tpu.memory_space<vmem>>, vector<8x32xf32>,
    %c24_377 = arith.constant 24 : index
    %c32_378 = arith.constant 32 : index
    %1270 = vector.load %arg23[%c24_377, %c32_378] : memref<64x64xf32, #tpu.memory_space<vmem>>, vector<8x32xf32>
    tpu.vector_store %arg23[%c24_377, %c32_378], %1268 {strides = array<i32>} : memref<64x64xf32, #tpu.memory_space<vmem>>, vector<8x32xf32>,
    %1271 = tpu.concatenate %1265, %1268 in 1 : vector<8x32xf32>, vector<8x32xf32> -> vector<8x64xf32>
    %1272 = arith.truncf %1271 : vector<8x64xf32> to vector<8x64xbf16>
    %cst_379 = arith.constant dense<0.000000e+00> : vector<8x256xf32>
    %1273 = tpu.matmul %1272, %1061, %cst_379 {dimension_numbers = #tpu.dot_dimension_numbers<[1], [0], [0], [1], [0, 0, 1, 1], [], []>} : vector<8x64xbf16>, vector<64x256xbf16>, vector<8x256xf32> -> vector<8x256xf32>
    %c40_380 = arith.constant 40 : index
    %c0_381 = arith.constant 0 : index
    %1274 = vector.load %arg24[%c40_380, %c0_381] : memref<64x256xf32, #tpu.memory_space<vmem>>, vector<8x128xf32>
    %1275 = vector.extract_strided_slice %1273 {offsets = [0, 0], sizes = [8, 128], strides = [1, 1]} : vector<8x256xf32> to vector<8x128xf32>
    %1276 = arith.addf %1274, %1275 : vector<8x128xf32>
    %c16_382 = arith.constant 16 : index
    %c128_383 = arith.constant 128 : index
    %1277 = vector.load %arg24[%c16_382, %c128_383] : memref<64x256xf32, #tpu.memory_space<vmem>>, vector<8x128xf32>
    %1278 = vector.extract_strided_slice %1273 {offsets = [0, 128], sizes = [8, 128], strides = [1, 1]} : vector<8x256xf32> to vector<8x128xf32>
    %1279 = arith.addf %1277, %1278 : vector<8x128xf32>
    %1280 = arith.negf %1276 : vector<8x128xf32>
    %1281 = math.exp %1280 : vector<8x128xf32>
    %cst_384 = arith.constant 1.000000e+00 : f32
    %1282 = vector.broadcast %cst_384 : f32 to vector<8x128xf32>
    %1283 = arith.addf %1282, %1281 : vector<8x128xf32>
    %1284 = arith.divf %1282, %1283 : vector<8x128xf32>
    %1285 = math.tanh %1276 : vector<8x128xf32>
    %1286 = arith.negf %1279 : vector<8x128xf32>
    %1287 = math.exp %1286 : vector<8x128xf32>
    %cst_385 = arith.constant 1.000000e+00 : f32
    %1288 = vector.broadcast %cst_385 : f32 to vector<8x128xf32>
    %1289 = arith.addf %1288, %1287 : vector<8x128xf32>
    %1290 = arith.divf %1288, %1289 : vector<8x128xf32>
    %1291 = math.tanh %1279 : vector<8x128xf32>
    %1292 = vector.extract_strided_slice %1284 {offsets = [0, 32], sizes = [8, 32], strides = [1, 1]} : vector<8x128xf32> to vector<8x32xf32>
    %1293 = arith.mulf %1292, %1256 : vector<8x32xf32>
    %1294 = vector.extract_strided_slice %1284 {offsets = [0, 0], sizes = [8, 32], strides = [1, 1]} : vector<8x128xf32> to vector<8x32xf32>
    %1295 = vector.extract_strided_slice %1285 {offsets = [0, 64], sizes = [8, 32], strides = [1, 1]} : vector<8x128xf32> to vector<8x32xf32>
    %1296 = arith.mulf %1294, %1295 : vector<8x32xf32>
    %1297 = arith.addf %1293, %1296 : vector<8x32xf32>
    %1298 = vector.extract_strided_slice %1290 {offsets = [0, 32], sizes = [8, 32], strides = [1, 1]} : vector<8x128xf32> to vector<8x32xf32>
    %1299 = arith.mulf %1298, %1262 : vector<8x32xf32>
    %1300 = vector.extract_strided_slice %1290 {offsets = [0, 0], sizes = [8, 32], strides = [1, 1]} : vector<8x128xf32> to vector<8x32xf32>
    %1301 = vector.extract_strided_slice %1291 {offsets = [0, 64], sizes = [8, 32], strides = [1, 1]} : vector<8x128xf32> to vector<8x32xf32>
    %1302 = arith.mulf %1300, %1301 : vector<8x32xf32>
    %1303 = arith.addf %1299, %1302 : vector<8x32xf32>
    %1304 = vector.extract_strided_slice %1284 {offsets = [0, 96], sizes = [8, 32], strides = [1, 1]} : vector<8x128xf32> to vector<8x32xf32>
    %1305 = math.tanh %1297 : vector<8x32xf32>
    %1306 = arith.mulf %1304, %1305 : vector<8x32xf32>
    %1307 = vector.extract_strided_slice %1290 {offsets = [0, 96], sizes = [8, 32], strides = [1, 1]} : vector<8x128xf32> to vector<8x32xf32>
    %1308 = math.tanh %1303 : vector<8x32xf32>
    %1309 = arith.mulf %1307, %1308 : vector<8x32xf32>
    %c40_386 = arith.constant 40 : index
    %c0_387 = arith.constant 0 : index
    %1310 = vector.load %arg23[%c40_386, %c0_387] : memref<64x64xf32, #tpu.memory_space<vmem>>, vector<8x32xf32>
    tpu.vector_store %arg23[%c40_386, %c0_387], %1306 {strides = array<i32>} : memref<64x64xf32, #tpu.memory_space<vmem>>, vector<8x32xf32>,
    %c16_388 = arith.constant 16 : index
    %c32_389 = arith.constant 32 : index
    %1311 = vector.load %arg23[%c16_388, %c32_389] : memref<64x64xf32, #tpu.memory_space<vmem>>, vector<8x32xf32>
    tpu.vector_store %arg23[%c16_388, %c32_389], %1309 {strides = array<i32>} : memref<64x64xf32, #tpu.memory_space<vmem>>, vector<8x32xf32>,
    %1312 = tpu.concatenate %1306, %1309 in 1 : vector<8x32xf32>, vector<8x32xf32> -> vector<8x64xf32>
    %1313 = arith.truncf %1312 : vector<8x64xf32> to vector<8x64xbf16>
    %cst_390 = arith.constant dense<0.000000e+00> : vector<8x256xf32>
    %1314 = tpu.matmul %1313, %1061, %cst_390 {dimension_numbers = #tpu.dot_dimension_numbers<[1], [0], [0], [1], [0, 0, 1, 1], [], []>} : vector<8x64xbf16>, vector<64x256xbf16>, vector<8x256xf32> -> vector<8x256xf32>
    %c48_391 = arith.constant 48 : index
    %c0_392 = arith.constant 0 : index
    %1315 = vector.load %arg24[%c48_391, %c0_392] : memref<64x256xf32, #tpu.memory_space<vmem>>, vector<8x128xf32>
    %1316 = vector.extract_strided_slice %1314 {offsets = [0, 0], sizes = [8, 128], strides = [1, 1]} : vector<8x256xf32> to vector<8x128xf32>
    %1317 = arith.addf %1315, %1316 : vector<8x128xf32>
    %c8_393 = arith.constant 8 : index
    %c128_394 = arith.constant 128 : index
    %1318 = vector.load %arg24[%c8_393, %c128_394] : memref<64x256xf32, #tpu.memory_space<vmem>>, vector<8x128xf32>
    %1319 = vector.extract_strided_slice %1314 {offsets = [0, 128], sizes = [8, 128], strides = [1, 1]} : vector<8x256xf32> to vector<8x128xf32>
    %1320 = arith.addf %1318, %1319 : vector<8x128xf32>
    %1321 = arith.negf %1317 : vector<8x128xf32>
    %1322 = math.exp %1321 : vector<8x128xf32>
    %cst_395 = arith.constant 1.000000e+00 : f32
    %1323 = vector.broadcast %cst_395 : f32 to vector<8x128xf32>
    %1324 = arith.addf %1323, %1322 : vector<8x128xf32>
    %1325 = arith.divf %1323, %1324 : vector<8x128xf32>
    %1326 = math.tanh %1317 : vector<8x128xf32>
    %1327 = arith.negf %1320 : vector<8x128xf32>
    %1328 = math.exp %1327 : vector<8x128xf32>
    %cst_396 = arith.constant 1.000000e+00 : f32
    %1329 = vector.broadcast %cst_396 : f32 to vector<8x128xf32>
    %1330 = arith.addf %1329, %1328 : vector<8x128xf32>
    %1331 = arith.divf %1329, %1330 : vector<8x128xf32>
    %1332 = math.tanh %1320 : vector<8x128xf32>
    %1333 = vector.extract_strided_slice %1325 {offsets = [0, 32], sizes = [8, 32], strides = [1, 1]} : vector<8x128xf32> to vector<8x32xf32>
    %1334 = arith.mulf %1333, %1297 : vector<8x32xf32>
    %1335 = vector.extract_strided_slice %1325 {offsets = [0, 0], sizes = [8, 32], strides = [1, 1]} : vector<8x128xf32> to vector<8x32xf32>
    %1336 = vector.extract_strided_slice %1326 {offsets = [0, 64], sizes = [8, 32], strides = [1, 1]} : vector<8x128xf32> to vector<8x32xf32>
    %1337 = arith.mulf %1335, %1336 : vector<8x32xf32>
    %1338 = arith.addf %1334, %1337 : vector<8x32xf32>
    %1339 = vector.extract_strided_slice %1331 {offsets = [0, 32], sizes = [8, 32], strides = [1, 1]} : vector<8x128xf32> to vector<8x32xf32>
    %1340 = arith.mulf %1339, %1303 : vector<8x32xf32>
    %1341 = vector.extract_strided_slice %1331 {offsets = [0, 0], sizes = [8, 32], strides = [1, 1]} : vector<8x128xf32> to vector<8x32xf32>
    %1342 = vector.extract_strided_slice %1332 {offsets = [0, 64], sizes = [8, 32], strides = [1, 1]} : vector<8x128xf32> to vector<8x32xf32>
    %1343 = arith.mulf %1341, %1342 : vector<8x32xf32>
    %1344 = arith.addf %1340, %1343 : vector<8x32xf32>
    %1345 = vector.extract_strided_slice %1325 {offsets = [0, 96], sizes = [8, 32], strides = [1, 1]} : vector<8x128xf32> to vector<8x32xf32>
    %1346 = math.tanh %1338 : vector<8x32xf32>
    %1347 = arith.mulf %1345, %1346 : vector<8x32xf32>
    %1348 = vector.extract_strided_slice %1331 {offsets = [0, 96], sizes = [8, 32], strides = [1, 1]} : vector<8x128xf32> to vector<8x32xf32>
    %1349 = math.tanh %1344 : vector<8x32xf32>
    %1350 = arith.mulf %1348, %1349 : vector<8x32xf32>
    %c48_397 = arith.constant 48 : index
    %c0_398 = arith.constant 0 : index
    %1351 = vector.load %arg23[%c48_397, %c0_398] : memref<64x64xf32, #tpu.memory_space<vmem>>, vector<8x32xf32>
    tpu.vector_store %arg23[%c48_397, %c0_398], %1347 {strides = array<i32>} : memref<64x64xf32, #tpu.memory_space<vmem>>, vector<8x32xf32>,
    %c8_399 = arith.constant 8 : index
    %c32_400 = arith.constant 32 : index
    %1352 = vector.load %arg23[%c8_399, %c32_400] : memref<64x64xf32, #tpu.memory_space<vmem>>, vector<8x32xf32>
    tpu.vector_store %arg23[%c8_399, %c32_400], %1350 {strides = array<i32>} : memref<64x64xf32, #tpu.memory_space<vmem>>, vector<8x32xf32>,
    %1353 = tpu.concatenate %1347, %1350 in 1 : vector<8x32xf32>, vector<8x32xf32> -> vector<8x64xf32>
    %1354 = arith.truncf %1353 : vector<8x64xf32> to vector<8x64xbf16>
    %cst_401 = arith.constant dense<0.000000e+00> : vector<8x256xf32>
    %1355 = tpu.matmul %1354, %1061, %cst_401 {dimension_numbers = #tpu.dot_dimension_numbers<[1], [0], [0], [1], [0, 0, 1, 1], [], []>} : vector<8x64xbf16>, vector<64x256xbf16>, vector<8x256xf32> -> vector<8x256xf32>
    %c56_402 = arith.constant 56 : index
    %c0_403 = arith.constant 0 : index
    %1356 = vector.load %arg24[%c56_402, %c0_403] : memref<64x256xf32, #tpu.memory_space<vmem>>, vector<8x128xf32>
    %1357 = vector.extract_strided_slice %1355 {offsets = [0, 0], sizes = [8, 128], strides = [1, 1]} : vector<8x256xf32> to vector<8x128xf32>
    %1358 = arith.addf %1356, %1357 : vector<8x128xf32>
    %c0_404 = arith.constant 0 : index
    %c128_405 = arith.constant 128 : index
    %1359 = vector.load %arg24[%c0_404, %c128_405] : memref<64x256xf32, #tpu.memory_space<vmem>>, vector<8x128xf32>
    %1360 = vector.extract_strided_slice %1355 {offsets = [0, 128], sizes = [8, 128], strides = [1, 1]} : vector<8x256xf32> to vector<8x128xf32>
    %1361 = arith.addf %1359, %1360 : vector<8x128xf32>
    %1362 = arith.negf %1358 : vector<8x128xf32>
    %1363 = math.exp %1362 : vector<8x128xf32>
    %cst_406 = arith.constant 1.000000e+00 : f32
    %1364 = vector.broadcast %cst_406 : f32 to vector<8x128xf32>
    %1365 = arith.addf %1364, %1363 : vector<8x128xf32>
    %1366 = arith.divf %1364, %1365 : vector<8x128xf32>
    %1367 = math.tanh %1358 : vector<8x128xf32>
    %1368 = arith.negf %1361 : vector<8x128xf32>
    %1369 = math.exp %1368 : vector<8x128xf32>
    %cst_407 = arith.constant 1.000000e+00 : f32
    %1370 = vector.broadcast %cst_407 : f32 to vector<8x128xf32>
    %1371 = arith.addf %1370, %1369 : vector<8x128xf32>
    %1372 = arith.divf %1370, %1371 : vector<8x128xf32>
    %1373 = math.tanh %1361 : vector<8x128xf32>
    %1374 = vector.extract_strided_slice %1366 {offsets = [0, 32], sizes = [8, 32], strides = [1, 1]} : vector<8x128xf32> to vector<8x32xf32>
    %1375 = arith.mulf %1374, %1338 : vector<8x32xf32>
    %1376 = vector.extract_strided_slice %1366 {offsets = [0, 0], sizes = [8, 32], strides = [1, 1]} : vector<8x128xf32> to vector<8x32xf32>
    %1377 = vector.extract_strided_slice %1367 {offsets = [0, 64], sizes = [8, 32], strides = [1, 1]} : vector<8x128xf32> to vector<8x32xf32>
    %1378 = arith.mulf %1376, %1377 : vector<8x32xf32>
    %1379 = arith.addf %1375, %1378 : vector<8x32xf32>
    %1380 = vector.extract_strided_slice %1372 {offsets = [0, 32], sizes = [8, 32], strides = [1, 1]} : vector<8x128xf32> to vector<8x32xf32>
    %1381 = arith.mulf %1380, %1344 : vector<8x32xf32>
    %1382 = vector.extract_strided_slice %1372 {offsets = [0, 0], sizes = [8, 32], strides = [1, 1]} : vector<8x128xf32> to vector<8x32xf32>
    %1383 = vector.extract_strided_slice %1373 {offsets = [0, 64], sizes = [8, 32], strides = [1, 1]} : vector<8x128xf32> to vector<8x32xf32>
    %1384 = arith.mulf %1382, %1383 : vector<8x32xf32>
    %1385 = arith.addf %1381, %1384 : vector<8x32xf32>
    %1386 = vector.extract_strided_slice %1366 {offsets = [0, 96], sizes = [8, 32], strides = [1, 1]} : vector<8x128xf32> to vector<8x32xf32>
    %1387 = math.tanh %1379 : vector<8x32xf32>
    %1388 = arith.mulf %1386, %1387 : vector<8x32xf32>
    %1389 = vector.extract_strided_slice %1372 {offsets = [0, 96], sizes = [8, 32], strides = [1, 1]} : vector<8x128xf32> to vector<8x32xf32>
    %1390 = math.tanh %1385 : vector<8x32xf32>
    %1391 = arith.mulf %1389, %1390 : vector<8x32xf32>
    %c56_408 = arith.constant 56 : index
    %c0_409 = arith.constant 0 : index
    %1392 = vector.load %arg23[%c56_408, %c0_409] : memref<64x64xf32, #tpu.memory_space<vmem>>, vector<8x32xf32>
    tpu.vector_store %arg23[%c56_408, %c0_409], %1388 {strides = array<i32>} : memref<64x64xf32, #tpu.memory_space<vmem>>, vector<8x32xf32>,
    %c0_410 = arith.constant 0 : index
    %c32_411 = arith.constant 32 : index
    %1393 = vector.load %arg23[%c0_410, %c32_411] : memref<64x64xf32, #tpu.memory_space<vmem>>, vector<8x32xf32>
    tpu.vector_store %arg23[%c0_410, %c32_411], %1391 {strides = array<i32>} : memref<64x64xf32, #tpu.memory_space<vmem>>, vector<8x32xf32>,
    %c0_412 = arith.constant 0 : index
    %c0_413 = arith.constant 0 : index
    %1394 = vector.load %arg23[%c0_412, %c0_413] : memref<64x64xf32, #tpu.memory_space<vmem>>, vector<64x64xf32>
    %1395 = arith.truncf %1394 : vector<64x64xf32> to vector<64x64xbf16>
    %c0_414 = arith.constant 0 : index
    %c0_415 = arith.constant 0 : index
    %1396 = vector.load %arg14[%c0_414, %c0_415] : memref<64x256xbf16, #tpu.memory_space<vmem>>, vector<64x256xbf16>
    %cst_416 = arith.constant dense<0.000000e+00> : vector<64x256xf32>
    %1397 = tpu.matmul %1395, %1396, %cst_416 {dimension_numbers = #tpu.dot_dimension_numbers<[1], [0], [0], [1], [0, 0, 1, 1], [], []>} : vector<64x64xbf16>, vector<64x256xbf16>, vector<64x256xf32> -> vector<64x256xf32>
    %c0_417 = arith.constant 0 : index
    %c0_418 = arith.constant 0 : index
    %1398 = vector.load %arg16[%c0_417, %c0_418] : memref<1x256xf32, #tpu.memory_space<vmem>>, vector<1x256xf32>
    %1399 = vector.broadcast %1398 : vector<1x256xf32> to vector<64x256xf32>
    %1400 = arith.addf %1397, %1399 : vector<64x256xf32>
    %c0_419 = arith.constant 0 : index
    %c0_420 = arith.constant 0 : index
    %1401 = vector.load %arg24[%c0_419, %c0_420] : memref<64x256xf32, #tpu.memory_space<vmem>>, vector<64x256xf32>
    tpu.vector_store %arg24[%c0_419, %c0_420], %1400 {strides = array<i32>} : memref<64x256xf32, #tpu.memory_space<vmem>>, vector<64x256xf32>,
    %c0_421 = arith.constant 0 : index
    %c0_422 = arith.constant 0 : index
    %1402 = vector.load %arg15[%c0_421, %c0_422] : memref<64x256xbf16, #tpu.memory_space<vmem>>, vector<64x256xbf16>
    %cst_423 = arith.constant 0.000000e+00 : f32
    %1403 = vector.broadcast %cst_423 : f32 to vector<8x32xf32>
    %cst_424 = arith.constant 0.000000e+00 : f32
    %1404 = vector.broadcast %cst_424 : f32 to vector<8x32xf32>
    %cst_425 = arith.constant 0.000000e+00 : f32
    %1405 = vector.broadcast %cst_425 : f32 to vector<8x32xf32>
    %cst_426 = arith.constant 0.000000e+00 : f32
    %1406 = vector.broadcast %cst_426 : f32 to vector<8x32xf32>
    %1407 = tpu.concatenate %1403, %1405 in 1 : vector<8x32xf32>, vector<8x32xf32> -> vector<8x64xf32>
    %1408 = arith.truncf %1407 : vector<8x64xf32> to vector<8x64xbf16>
    %cst_427 = arith.constant dense<0.000000e+00> : vector<8x256xf32>
    %1409 = tpu.matmul %1408, %1402, %cst_427 {dimension_numbers = #tpu.dot_dimension_numbers<[1], [0], [0], [1], [0, 0, 1, 1], [], []>} : vector<8x64xbf16>, vector<64x256xbf16>, vector<8x256xf32> -> vector<8x256xf32>
    %c0_428 = arith.constant 0 : index
    %c0_429 = arith.constant 0 : index
    %1410 = vector.load %arg24[%c0_428, %c0_429] : memref<64x256xf32, #tpu.memory_space<vmem>>, vector<8x128xf32>
    %1411 = vector.extract_strided_slice %1409 {offsets = [0, 0], sizes = [8, 128], strides = [1, 1]} : vector<8x256xf32> to vector<8x128xf32>
    %1412 = arith.addf %1410, %1411 : vector<8x128xf32>
    %c56_430 = arith.constant 56 : index
    %c128_431 = arith.constant 128 : index
    %1413 = vector.load %arg24[%c56_430, %c128_431] : memref<64x256xf32, #tpu.memory_space<vmem>>, vector<8x128xf32>
    %1414 = vector.extract_strided_slice %1409 {offsets = [0, 128], sizes = [8, 128], strides = [1, 1]} : vector<8x256xf32> to vector<8x128xf32>
    %1415 = arith.addf %1413, %1414 : vector<8x128xf32>
    %1416 = arith.negf %1412 : vector<8x128xf32>
    %1417 = math.exp %1416 : vector<8x128xf32>
    %cst_432 = arith.constant 1.000000e+00 : f32
    %1418 = vector.broadcast %cst_432 : f32 to vector<8x128xf32>
    %1419 = arith.addf %1418, %1417 : vector<8x128xf32>
    %1420 = arith.divf %1418, %1419 : vector<8x128xf32>
    %1421 = math.tanh %1412 : vector<8x128xf32>
    %1422 = arith.negf %1415 : vector<8x128xf32>
    %1423 = math.exp %1422 : vector<8x128xf32>
    %cst_433 = arith.constant 1.000000e+00 : f32
    %1424 = vector.broadcast %cst_433 : f32 to vector<8x128xf32>
    %1425 = arith.addf %1424, %1423 : vector<8x128xf32>
    %1426 = arith.divf %1424, %1425 : vector<8x128xf32>
    %1427 = math.tanh %1415 : vector<8x128xf32>
    %1428 = vector.extract_strided_slice %1420 {offsets = [0, 32], sizes = [8, 32], strides = [1, 1]} : vector<8x128xf32> to vector<8x32xf32>
    %1429 = arith.mulf %1428, %1404 : vector<8x32xf32>
    %1430 = vector.extract_strided_slice %1420 {offsets = [0, 0], sizes = [8, 32], strides = [1, 1]} : vector<8x128xf32> to vector<8x32xf32>
    %1431 = vector.extract_strided_slice %1421 {offsets = [0, 64], sizes = [8, 32], strides = [1, 1]} : vector<8x128xf32> to vector<8x32xf32>
    %1432 = arith.mulf %1430, %1431 : vector<8x32xf32>
    %1433 = arith.addf %1429, %1432 : vector<8x32xf32>
    %1434 = vector.extract_strided_slice %1426 {offsets = [0, 32], sizes = [8, 32], strides = [1, 1]} : vector<8x128xf32> to vector<8x32xf32>
    %1435 = arith.mulf %1434, %1406 : vector<8x32xf32>
    %1436 = vector.extract_strided_slice %1426 {offsets = [0, 0], sizes = [8, 32], strides = [1, 1]} : vector<8x128xf32> to vector<8x32xf32>
    %1437 = vector.extract_strided_slice %1427 {offsets = [0, 64], sizes = [8, 32], strides = [1, 1]} : vector<8x128xf32> to vector<8x32xf32>
    %1438 = arith.mulf %1436, %1437 : vector<8x32xf32>
    %1439 = arith.addf %1435, %1438 : vector<8x32xf32>
    %1440 = vector.extract_strided_slice %1420 {offsets = [0, 96], sizes = [8, 32], strides = [1, 1]} : vector<8x128xf32> to vector<8x32xf32>
    %1441 = math.tanh %1433 : vector<8x32xf32>
    %1442 = arith.mulf %1440, %1441 : vector<8x32xf32>
    %1443 = vector.extract_strided_slice %1426 {offsets = [0, 96], sizes = [8, 32], strides = [1, 1]} : vector<8x128xf32> to vector<8x32xf32>
    %1444 = math.tanh %1439 : vector<8x32xf32>
    %1445 = arith.mulf %1443, %1444 : vector<8x32xf32>
    %c0_434 = arith.constant 0 : index
    %c0_435 = arith.constant 0 : index
    %1446 = vector.load %arg23[%c0_434, %c0_435] : memref<64x64xf32, #tpu.memory_space<vmem>>, vector<8x32xf32>
    tpu.vector_store %arg23[%c0_434, %c0_435], %1442 {strides = array<i32>} : memref<64x64xf32, #tpu.memory_space<vmem>>, vector<8x32xf32>,
    %c56_436 = arith.constant 56 : index
    %c32_437 = arith.constant 32 : index
    %1447 = vector.load %arg23[%c56_436, %c32_437] : memref<64x64xf32, #tpu.memory_space<vmem>>, vector<8x32xf32>
    tpu.vector_store %arg23[%c56_436, %c32_437], %1445 {strides = array<i32>} : memref<64x64xf32, #tpu.memory_space<vmem>>, vector<8x32xf32>,
    %1448 = tpu.concatenate %1442, %1445 in 1 : vector<8x32xf32>, vector<8x32xf32> -> vector<8x64xf32>
    %1449 = arith.truncf %1448 : vector<8x64xf32> to vector<8x64xbf16>
    %cst_438 = arith.constant dense<0.000000e+00> : vector<8x256xf32>
    %1450 = tpu.matmul %1449, %1402, %cst_438 {dimension_numbers = #tpu.dot_dimension_numbers<[1], [0], [0], [1], [0, 0, 1, 1], [], []>} : vector<8x64xbf16>, vector<64x256xbf16>, vector<8x256xf32> -> vector<8x256xf32>
    %c8_439 = arith.constant 8 : index
    %c0_440 = arith.constant 0 : index
    %1451 = vector.load %arg24[%c8_439, %c0_440] : memref<64x256xf32, #tpu.memory_space<vmem>>, vector<8x128xf32>
    %1452 = vector.extract_strided_slice %1450 {offsets = [0, 0], sizes = [8, 128], strides = [1, 1]} : vector<8x256xf32> to vector<8x128xf32>
    %1453 = arith.addf %1451, %1452 : vector<8x128xf32>
    %c48_441 = arith.constant 48 : index
    %c128_442 = arith.constant 128 : index
    %1454 = vector.load %arg24[%c48_441, %c128_442] : memref<64x256xf32, #tpu.memory_space<vmem>>, vector<8x128xf32>
    %1455 = vector.extract_strided_slice %1450 {offsets = [0, 128], sizes = [8, 128], strides = [1, 1]} : vector<8x256xf32> to vector<8x128xf32>
    %1456 = arith.addf %1454, %1455 : vector<8x128xf32>
    %1457 = arith.negf %1453 : vector<8x128xf32>
    %1458 = math.exp %1457 : vector<8x128xf32>
    %cst_443 = arith.constant 1.000000e+00 : f32
    %1459 = vector.broadcast %cst_443 : f32 to vector<8x128xf32>
    %1460 = arith.addf %1459, %1458 : vector<8x128xf32>
    %1461 = arith.divf %1459, %1460 : vector<8x128xf32>
    %1462 = math.tanh %1453 : vector<8x128xf32>
    %1463 = arith.negf %1456 : vector<8x128xf32>
    %1464 = math.exp %1463 : vector<8x128xf32>
    %cst_444 = arith.constant 1.000000e+00 : f32
    %1465 = vector.broadcast %cst_444 : f32 to vector<8x128xf32>
    %1466 = arith.addf %1465, %1464 : vector<8x128xf32>
    %1467 = arith.divf %1465, %1466 : vector<8x128xf32>
    %1468 = math.tanh %1456 : vector<8x128xf32>
    %1469 = vector.extract_strided_slice %1461 {offsets = [0, 32], sizes = [8, 32], strides = [1, 1]} : vector<8x128xf32> to vector<8x32xf32>
    %1470 = arith.mulf %1469, %1433 : vector<8x32xf32>
    %1471 = vector.extract_strided_slice %1461 {offsets = [0, 0], sizes = [8, 32], strides = [1, 1]} : vector<8x128xf32> to vector<8x32xf32>
    %1472 = vector.extract_strided_slice %1462 {offsets = [0, 64], sizes = [8, 32], strides = [1, 1]} : vector<8x128xf32> to vector<8x32xf32>
    %1473 = arith.mulf %1471, %1472 : vector<8x32xf32>
    %1474 = arith.addf %1470, %1473 : vector<8x32xf32>
    %1475 = vector.extract_strided_slice %1467 {offsets = [0, 32], sizes = [8, 32], strides = [1, 1]} : vector<8x128xf32> to vector<8x32xf32>
    %1476 = arith.mulf %1475, %1439 : vector<8x32xf32>
    %1477 = vector.extract_strided_slice %1467 {offsets = [0, 0], sizes = [8, 32], strides = [1, 1]} : vector<8x128xf32> to vector<8x32xf32>
    %1478 = vector.extract_strided_slice %1468 {offsets = [0, 64], sizes = [8, 32], strides = [1, 1]} : vector<8x128xf32> to vector<8x32xf32>
    %1479 = arith.mulf %1477, %1478 : vector<8x32xf32>
    %1480 = arith.addf %1476, %1479 : vector<8x32xf32>
    %1481 = vector.extract_strided_slice %1461 {offsets = [0, 96], sizes = [8, 32], strides = [1, 1]} : vector<8x128xf32> to vector<8x32xf32>
    %1482 = math.tanh %1474 : vector<8x32xf32>
    %1483 = arith.mulf %1481, %1482 : vector<8x32xf32>
    %1484 = vector.extract_strided_slice %1467 {offsets = [0, 96], sizes = [8, 32], strides = [1, 1]} : vector<8x128xf32> to vector<8x32xf32>
    %1485 = math.tanh %1480 : vector<8x32xf32>
    %1486 = arith.mulf %1484, %1485 : vector<8x32xf32>
    %c8_445 = arith.constant 8 : index
    %c0_446 = arith.constant 0 : index
    %1487 = vector.load %arg23[%c8_445, %c0_446] : memref<64x64xf32, #tpu.memory_space<vmem>>, vector<8x32xf32>
    tpu.vector_store %arg23[%c8_445, %c0_446], %1483 {strides = array<i32>} : memref<64x64xf32, #tpu.memory_space<vmem>>, vector<8x32xf32>,
    %c48_447 = arith.constant 48 : index
    %c32_448 = arith.constant 32 : index
    %1488 = vector.load %arg23[%c48_447, %c32_448] : memref<64x64xf32, #tpu.memory_space<vmem>>, vector<8x32xf32>
    tpu.vector_store %arg23[%c48_447, %c32_448], %1486 {strides = array<i32>} : memref<64x64xf32, #tpu.memory_space<vmem>>, vector<8x32xf32>,
    %1489 = tpu.concatenate %1483, %1486 in 1 : vector<8x32xf32>, vector<8x32xf32> -> vector<8x64xf32>
    %1490 = arith.truncf %1489 : vector<8x64xf32> to vector<8x64xbf16>
    %cst_449 = arith.constant dense<0.000000e+00> : vector<8x256xf32>
    %1491 = tpu.matmul %1490, %1402, %cst_449 {dimension_numbers = #tpu.dot_dimension_numbers<[1], [0], [0], [1], [0, 0, 1, 1], [], []>} : vector<8x64xbf16>, vector<64x256xbf16>, vector<8x256xf32> -> vector<8x256xf32>
    %c16_450 = arith.constant 16 : index
    %c0_451 = arith.constant 0 : index
    %1492 = vector.load %arg24[%c16_450, %c0_451] : memref<64x256xf32, #tpu.memory_space<vmem>>, vector<8x128xf32>
    %1493 = vector.extract_strided_slice %1491 {offsets = [0, 0], sizes = [8, 128], strides = [1, 1]} : vector<8x256xf32> to vector<8x128xf32>
    %1494 = arith.addf %1492, %1493 : vector<8x128xf32>
    %c40_452 = arith.constant 40 : index
    %c128_453 = arith.constant 128 : index
    %1495 = vector.load %arg24[%c40_452, %c128_453] : memref<64x256xf32, #tpu.memory_space<vmem>>, vector<8x128xf32>
    %1496 = vector.extract_strided_slice %1491 {offsets = [0, 128], sizes = [8, 128], strides = [1, 1]} : vector<8x256xf32> to vector<8x128xf32>
    %1497 = arith.addf %1495, %1496 : vector<8x128xf32>
    %1498 = arith.negf %1494 : vector<8x128xf32>
    %1499 = math.exp %1498 : vector<8x128xf32>
    %cst_454 = arith.constant 1.000000e+00 : f32
    %1500 = vector.broadcast %cst_454 : f32 to vector<8x128xf32>
    %1501 = arith.addf %1500, %1499 : vector<8x128xf32>
    %1502 = arith.divf %1500, %1501 : vector<8x128xf32>
    %1503 = math.tanh %1494 : vector<8x128xf32>
    %1504 = arith.negf %1497 : vector<8x128xf32>
    %1505 = math.exp %1504 : vector<8x128xf32>
    %cst_455 = arith.constant 1.000000e+00 : f32
    %1506 = vector.broadcast %cst_455 : f32 to vector<8x128xf32>
    %1507 = arith.addf %1506, %1505 : vector<8x128xf32>
    %1508 = arith.divf %1506, %1507 : vector<8x128xf32>
    %1509 = math.tanh %1497 : vector<8x128xf32>
    %1510 = vector.extract_strided_slice %1502 {offsets = [0, 32], sizes = [8, 32], strides = [1, 1]} : vector<8x128xf32> to vector<8x32xf32>
    %1511 = arith.mulf %1510, %1474 : vector<8x32xf32>
    %1512 = vector.extract_strided_slice %1502 {offsets = [0, 0], sizes = [8, 32], strides = [1, 1]} : vector<8x128xf32> to vector<8x32xf32>
    %1513 = vector.extract_strided_slice %1503 {offsets = [0, 64], sizes = [8, 32], strides = [1, 1]} : vector<8x128xf32> to vector<8x32xf32>
    %1514 = arith.mulf %1512, %1513 : vector<8x32xf32>
    %1515 = arith.addf %1511, %1514 : vector<8x32xf32>
    %1516 = vector.extract_strided_slice %1508 {offsets = [0, 32], sizes = [8, 32], strides = [1, 1]} : vector<8x128xf32> to vector<8x32xf32>
    %1517 = arith.mulf %1516, %1480 : vector<8x32xf32>
    %1518 = vector.extract_strided_slice %1508 {offsets = [0, 0], sizes = [8, 32], strides = [1, 1]} : vector<8x128xf32> to vector<8x32xf32>
    %1519 = vector.extract_strided_slice %1509 {offsets = [0, 64], sizes = [8, 32], strides = [1, 1]} : vector<8x128xf32> to vector<8x32xf32>
    %1520 = arith.mulf %1518, %1519 : vector<8x32xf32>
    %1521 = arith.addf %1517, %1520 : vector<8x32xf32>
    %1522 = vector.extract_strided_slice %1502 {offsets = [0, 96], sizes = [8, 32], strides = [1, 1]} : vector<8x128xf32> to vector<8x32xf32>
    %1523 = math.tanh %1515 : vector<8x32xf32>
    %1524 = arith.mulf %1522, %1523 : vector<8x32xf32>
    %1525 = vector.extract_strided_slice %1508 {offsets = [0, 96], sizes = [8, 32], strides = [1, 1]} : vector<8x128xf32> to vector<8x32xf32>
    %1526 = math.tanh %1521 : vector<8x32xf32>
    %1527 = arith.mulf %1525, %1526 : vector<8x32xf32>
    %c16_456 = arith.constant 16 : index
    %c0_457 = arith.constant 0 : index
    %1528 = vector.load %arg23[%c16_456, %c0_457] : memref<64x64xf32, #tpu.memory_space<vmem>>, vector<8x32xf32>
    tpu.vector_store %arg23[%c16_456, %c0_457], %1524 {strides = array<i32>} : memref<64x64xf32, #tpu.memory_space<vmem>>, vector<8x32xf32>,
    %c40_458 = arith.constant 40 : index
    %c32_459 = arith.constant 32 : index
    %1529 = vector.load %arg23[%c40_458, %c32_459] : memref<64x64xf32, #tpu.memory_space<vmem>>, vector<8x32xf32>
    tpu.vector_store %arg23[%c40_458, %c32_459], %1527 {strides = array<i32>} : memref<64x64xf32, #tpu.memory_space<vmem>>, vector<8x32xf32>,
    %1530 = tpu.concatenate %1524, %1527 in 1 : vector<8x32xf32>, vector<8x32xf32> -> vector<8x64xf32>
    %1531 = arith.truncf %1530 : vector<8x64xf32> to vector<8x64xbf16>
    %cst_460 = arith.constant dense<0.000000e+00> : vector<8x256xf32>
    %1532 = tpu.matmul %1531, %1402, %cst_460 {dimension_numbers = #tpu.dot_dimension_numbers<[1], [0], [0], [1], [0, 0, 1, 1], [], []>} : vector<8x64xbf16>, vector<64x256xbf16>, vector<8x256xf32> -> vector<8x256xf32>
    %c24_461 = arith.constant 24 : index
    %c0_462 = arith.constant 0 : index
    %1533 = vector.load %arg24[%c24_461, %c0_462] : memref<64x256xf32, #tpu.memory_space<vmem>>, vector<8x128xf32>
    %1534 = vector.extract_strided_slice %1532 {offsets = [0, 0], sizes = [8, 128], strides = [1, 1]} : vector<8x256xf32> to vector<8x128xf32>
    %1535 = arith.addf %1533, %1534 : vector<8x128xf32>
    %c32_463 = arith.constant 32 : index
    %c128_464 = arith.constant 128 : index
    %1536 = vector.load %arg24[%c32_463, %c128_464] : memref<64x256xf32, #tpu.memory_space<vmem>>, vector<8x128xf32>
    %1537 = vector.extract_strided_slice %1532 {offsets = [0, 128], sizes = [8, 128], strides = [1, 1]} : vector<8x256xf32> to vector<8x128xf32>
    %1538 = arith.addf %1536, %1537 : vector<8x128xf32>
    %1539 = arith.negf %1535 : vector<8x128xf32>
    %1540 = math.exp %1539 : vector<8x128xf32>
    %cst_465 = arith.constant 1.000000e+00 : f32
    %1541 = vector.broadcast %cst_465 : f32 to vector<8x128xf32>
    %1542 = arith.addf %1541, %1540 : vector<8x128xf32>
    %1543 = arith.divf %1541, %1542 : vector<8x128xf32>
    %1544 = math.tanh %1535 : vector<8x128xf32>
    %1545 = arith.negf %1538 : vector<8x128xf32>
    %1546 = math.exp %1545 : vector<8x128xf32>
    %cst_466 = arith.constant 1.000000e+00 : f32
    %1547 = vector.broadcast %cst_466 : f32 to vector<8x128xf32>
    %1548 = arith.addf %1547, %1546 : vector<8x128xf32>
    %1549 = arith.divf %1547, %1548 : vector<8x128xf32>
    %1550 = math.tanh %1538 : vector<8x128xf32>
    %1551 = vector.extract_strided_slice %1543 {offsets = [0, 32], sizes = [8, 32], strides = [1, 1]} : vector<8x128xf32> to vector<8x32xf32>
    %1552 = arith.mulf %1551, %1515 : vector<8x32xf32>
    %1553 = vector.extract_strided_slice %1543 {offsets = [0, 0], sizes = [8, 32], strides = [1, 1]} : vector<8x128xf32> to vector<8x32xf32>
    %1554 = vector.extract_strided_slice %1544 {offsets = [0, 64], sizes = [8, 32], strides = [1, 1]} : vector<8x128xf32> to vector<8x32xf32>
    %1555 = arith.mulf %1553, %1554 : vector<8x32xf32>
    %1556 = arith.addf %1552, %1555 : vector<8x32xf32>
    %1557 = vector.extract_strided_slice %1549 {offsets = [0, 32], sizes = [8, 32], strides = [1, 1]} : vector<8x128xf32> to vector<8x32xf32>
    %1558 = arith.mulf %1557, %1521 : vector<8x32xf32>
    %1559 = vector.extract_strided_slice %1549 {offsets = [0, 0], sizes = [8, 32], strides = [1, 1]} : vector<8x128xf32> to vector<8x32xf32>
    %1560 = vector.extract_strided_slice %1550 {offsets = [0, 64], sizes = [8, 32], strides = [1, 1]} : vector<8x128xf32> to vector<8x32xf32>
    %1561 = arith.mulf %1559, %1560 : vector<8x32xf32>
    %1562 = arith.addf %1558, %1561 : vector<8x32xf32>
    %1563 = vector.extract_strided_slice %1543 {offsets = [0, 96], sizes = [8, 32], strides = [1, 1]} : vector<8x128xf32> to vector<8x32xf32>
    %1564 = math.tanh %1556 : vector<8x32xf32>
    %1565 = arith.mulf %1563, %1564 : vector<8x32xf32>
    %1566 = vector.extract_strided_slice %1549 {offsets = [0, 96], sizes = [8, 32], strides = [1, 1]} : vector<8x128xf32> to vector<8x32xf32>
    %1567 = math.tanh %1562 : vector<8x32xf32>
    %1568 = arith.mulf %1566, %1567 : vector<8x32xf32>
    %c24_467 = arith.constant 24 : index
    %c0_468 = arith.constant 0 : index
    %1569 = vector.load %arg23[%c24_467, %c0_468] : memref<64x64xf32, #tpu.memory_space<vmem>>, vector<8x32xf32>
    tpu.vector_store %arg23[%c24_467, %c0_468], %1565 {strides = array<i32>} : memref<64x64xf32, #tpu.memory_space<vmem>>, vector<8x32xf32>,
    %c32_469 = arith.constant 32 : index
    %c32_470 = arith.constant 32 : index
    %1570 = vector.load %arg23[%c32_469, %c32_470] : memref<64x64xf32, #tpu.memory_space<vmem>>, vector<8x32xf32>
    tpu.vector_store %arg23[%c32_469, %c32_470], %1568 {strides = array<i32>} : memref<64x64xf32, #tpu.memory_space<vmem>>, vector<8x32xf32>,
    %1571 = tpu.concatenate %1565, %1568 in 1 : vector<8x32xf32>, vector<8x32xf32> -> vector<8x64xf32>
    %1572 = arith.truncf %1571 : vector<8x64xf32> to vector<8x64xbf16>
    %cst_471 = arith.constant dense<0.000000e+00> : vector<8x256xf32>
    %1573 = tpu.matmul %1572, %1402, %cst_471 {dimension_numbers = #tpu.dot_dimension_numbers<[1], [0], [0], [1], [0, 0, 1, 1], [], []>} : vector<8x64xbf16>, vector<64x256xbf16>, vector<8x256xf32> -> vector<8x256xf32>
    %c32_472 = arith.constant 32 : index
    %c0_473 = arith.constant 0 : index
    %1574 = vector.load %arg24[%c32_472, %c0_473] : memref<64x256xf32, #tpu.memory_space<vmem>>, vector<8x128xf32>
    %1575 = vector.extract_strided_slice %1573 {offsets = [0, 0], sizes = [8, 128], strides = [1, 1]} : vector<8x256xf32> to vector<8x128xf32>
    %1576 = arith.addf %1574, %1575 : vector<8x128xf32>
    %c24_474 = arith.constant 24 : index
    %c128_475 = arith.constant 128 : index
    %1577 = vector.load %arg24[%c24_474, %c128_475] : memref<64x256xf32, #tpu.memory_space<vmem>>, vector<8x128xf32>
    %1578 = vector.extract_strided_slice %1573 {offsets = [0, 128], sizes = [8, 128], strides = [1, 1]} : vector<8x256xf32> to vector<8x128xf32>
    %1579 = arith.addf %1577, %1578 : vector<8x128xf32>
    %1580 = arith.negf %1576 : vector<8x128xf32>
    %1581 = math.exp %1580 : vector<8x128xf32>
    %cst_476 = arith.constant 1.000000e+00 : f32
    %1582 = vector.broadcast %cst_476 : f32 to vector<8x128xf32>
    %1583 = arith.addf %1582, %1581 : vector<8x128xf32>
    %1584 = arith.divf %1582, %1583 : vector<8x128xf32>
    %1585 = math.tanh %1576 : vector<8x128xf32>
    %1586 = arith.negf %1579 : vector<8x128xf32>
    %1587 = math.exp %1586 : vector<8x128xf32>
    %cst_477 = arith.constant 1.000000e+00 : f32
    %1588 = vector.broadcast %cst_477 : f32 to vector<8x128xf32>
    %1589 = arith.addf %1588, %1587 : vector<8x128xf32>
    %1590 = arith.divf %1588, %1589 : vector<8x128xf32>
    %1591 = math.tanh %1579 : vector<8x128xf32>
    %1592 = vector.extract_strided_slice %1584 {offsets = [0, 32], sizes = [8, 32], strides = [1, 1]} : vector<8x128xf32> to vector<8x32xf32>
    %1593 = arith.mulf %1592, %1556 : vector<8x32xf32>
    %1594 = vector.extract_strided_slice %1584 {offsets = [0, 0], sizes = [8, 32], strides = [1, 1]} : vector<8x128xf32> to vector<8x32xf32>
    %1595 = vector.extract_strided_slice %1585 {offsets = [0, 64], sizes = [8, 32], strides = [1, 1]} : vector<8x128xf32> to vector<8x32xf32>
    %1596 = arith.mulf %1594, %1595 : vector<8x32xf32>
    %1597 = arith.addf %1593, %1596 : vector<8x32xf32>
    %1598 = vector.extract_strided_slice %1590 {offsets = [0, 32], sizes = [8, 32], strides = [1, 1]} : vector<8x128xf32> to vector<8x32xf32>
    %1599 = arith.mulf %1598, %1562 : vector<8x32xf32>
    %1600 = vector.extract_strided_slice %1590 {offsets = [0, 0], sizes = [8, 32], strides = [1, 1]} : vector<8x128xf32> to vector<8x32xf32>
    %1601 = vector.extract_strided_slice %1591 {offsets = [0, 64], sizes = [8, 32], strides = [1, 1]} : vector<8x128xf32> to vector<8x32xf32>
    %1602 = arith.mulf %1600, %1601 : vector<8x32xf32>
    %1603 = arith.addf %1599, %1602 : vector<8x32xf32>
    %1604 = vector.extract_strided_slice %1584 {offsets = [0, 96], sizes = [8, 32], strides = [1, 1]} : vector<8x128xf32> to vector<8x32xf32>
    %1605 = math.tanh %1597 : vector<8x32xf32>
    %1606 = arith.mulf %1604, %1605 : vector<8x32xf32>
    %1607 = vector.extract_strided_slice %1590 {offsets = [0, 96], sizes = [8, 32], strides = [1, 1]} : vector<8x128xf32> to vector<8x32xf32>
    %1608 = math.tanh %1603 : vector<8x32xf32>
    %1609 = arith.mulf %1607, %1608 : vector<8x32xf32>
    %c32_478 = arith.constant 32 : index
    %c0_479 = arith.constant 0 : index
    %1610 = vector.load %arg23[%c32_478, %c0_479] : memref<64x64xf32, #tpu.memory_space<vmem>>, vector<8x32xf32>
    tpu.vector_store %arg23[%c32_478, %c0_479], %1606 {strides = array<i32>} : memref<64x64xf32, #tpu.memory_space<vmem>>, vector<8x32xf32>,
    %c24_480 = arith.constant 24 : index
    %c32_481 = arith.constant 32 : index
    %1611 = vector.load %arg23[%c24_480, %c32_481] : memref<64x64xf32, #tpu.memory_space<vmem>>, vector<8x32xf32>
    tpu.vector_store %arg23[%c24_480, %c32_481], %1609 {strides = array<i32>} : memref<64x64xf32, #tpu.memory_space<vmem>>, vector<8x32xf32>,
    %1612 = tpu.concatenate %1606, %1609 in 1 : vector<8x32xf32>, vector<8x32xf32> -> vector<8x64xf32>
    %1613 = arith.truncf %1612 : vector<8x64xf32> to vector<8x64xbf16>
    %cst_482 = arith.constant dense<0.000000e+00> : vector<8x256xf32>
    %1614 = tpu.matmul %1613, %1402, %cst_482 {dimension_numbers = #tpu.dot_dimension_numbers<[1], [0], [0], [1], [0, 0, 1, 1], [], []>} : vector<8x64xbf16>, vector<64x256xbf16>, vector<8x256xf32> -> vector<8x256xf32>
    %c40_483 = arith.constant 40 : index
    %c0_484 = arith.constant 0 : index
    %1615 = vector.load %arg24[%c40_483, %c0_484] : memref<64x256xf32, #tpu.memory_space<vmem>>, vector<8x128xf32>
    %1616 = vector.extract_strided_slice %1614 {offsets = [0, 0], sizes = [8, 128], strides = [1, 1]} : vector<8x256xf32> to vector<8x128xf32>
    %1617 = arith.addf %1615, %1616 : vector<8x128xf32>
    %c16_485 = arith.constant 16 : index
    %c128_486 = arith.constant 128 : index
    %1618 = vector.load %arg24[%c16_485, %c128_486] : memref<64x256xf32, #tpu.memory_space<vmem>>, vector<8x128xf32>
    %1619 = vector.extract_strided_slice %1614 {offsets = [0, 128], sizes = [8, 128], strides = [1, 1]} : vector<8x256xf32> to vector<8x128xf32>
    %1620 = arith.addf %1618, %1619 : vector<8x128xf32>
    %1621 = arith.negf %1617 : vector<8x128xf32>
    %1622 = math.exp %1621 : vector<8x128xf32>
    %cst_487 = arith.constant 1.000000e+00 : f32
    %1623 = vector.broadcast %cst_487 : f32 to vector<8x128xf32>
    %1624 = arith.addf %1623, %1622 : vector<8x128xf32>
    %1625 = arith.divf %1623, %1624 : vector<8x128xf32>
    %1626 = math.tanh %1617 : vector<8x128xf32>
    %1627 = arith.negf %1620 : vector<8x128xf32>
    %1628 = math.exp %1627 : vector<8x128xf32>
    %cst_488 = arith.constant 1.000000e+00 : f32
    %1629 = vector.broadcast %cst_488 : f32 to vector<8x128xf32>
    %1630 = arith.addf %1629, %1628 : vector<8x128xf32>
    %1631 = arith.divf %1629, %1630 : vector<8x128xf32>
    %1632 = math.tanh %1620 : vector<8x128xf32>
    %1633 = vector.extract_strided_slice %1625 {offsets = [0, 32], sizes = [8, 32], strides = [1, 1]} : vector<8x128xf32> to vector<8x32xf32>
    %1634 = arith.mulf %1633, %1597 : vector<8x32xf32>
    %1635 = vector.extract_strided_slice %1625 {offsets = [0, 0], sizes = [8, 32], strides = [1, 1]} : vector<8x128xf32> to vector<8x32xf32>
    %1636 = vector.extract_strided_slice %1626 {offsets = [0, 64], sizes = [8, 32], strides = [1, 1]} : vector<8x128xf32> to vector<8x32xf32>
    %1637 = arith.mulf %1635, %1636 : vector<8x32xf32>
    %1638 = arith.addf %1634, %1637 : vector<8x32xf32>
    %1639 = vector.extract_strided_slice %1631 {offsets = [0, 32], sizes = [8, 32], strides = [1, 1]} : vector<8x128xf32> to vector<8x32xf32>
    %1640 = arith.mulf %1639, %1603 : vector<8x32xf32>
    %1641 = vector.extract_strided_slice %1631 {offsets = [0, 0], sizes = [8, 32], strides = [1, 1]} : vector<8x128xf32> to vector<8x32xf32>
    %1642 = vector.extract_strided_slice %1632 {offsets = [0, 64], sizes = [8, 32], strides = [1, 1]} : vector<8x128xf32> to vector<8x32xf32>
    %1643 = arith.mulf %1641, %1642 : vector<8x32xf32>
    %1644 = arith.addf %1640, %1643 : vector<8x32xf32>
    %1645 = vector.extract_strided_slice %1625 {offsets = [0, 96], sizes = [8, 32], strides = [1, 1]} : vector<8x128xf32> to vector<8x32xf32>
    %1646 = math.tanh %1638 : vector<8x32xf32>
    %1647 = arith.mulf %1645, %1646 : vector<8x32xf32>
    %1648 = vector.extract_strided_slice %1631 {offsets = [0, 96], sizes = [8, 32], strides = [1, 1]} : vector<8x128xf32> to vector<8x32xf32>
    %1649 = math.tanh %1644 : vector<8x32xf32>
    %1650 = arith.mulf %1648, %1649 : vector<8x32xf32>
    %c40_489 = arith.constant 40 : index
    %c0_490 = arith.constant 0 : index
    %1651 = vector.load %arg23[%c40_489, %c0_490] : memref<64x64xf32, #tpu.memory_space<vmem>>, vector<8x32xf32>
    tpu.vector_store %arg23[%c40_489, %c0_490], %1647 {strides = array<i32>} : memref<64x64xf32, #tpu.memory_space<vmem>>, vector<8x32xf32>,
    %c16_491 = arith.constant 16 : index
    %c32_492 = arith.constant 32 : index
    %1652 = vector.load %arg23[%c16_491, %c32_492] : memref<64x64xf32, #tpu.memory_space<vmem>>, vector<8x32xf32>
    tpu.vector_store %arg23[%c16_491, %c32_492], %1650 {strides = array<i32>} : memref<64x64xf32, #tpu.memory_space<vmem>>, vector<8x32xf32>,
    %1653 = tpu.concatenate %1647, %1650 in 1 : vector<8x32xf32>, vector<8x32xf32> -> vector<8x64xf32>
    %1654 = arith.truncf %1653 : vector<8x64xf32> to vector<8x64xbf16>
    %cst_493 = arith.constant dense<0.000000e+00> : vector<8x256xf32>
    %1655 = tpu.matmul %1654, %1402, %cst_493 {dimension_numbers = #tpu.dot_dimension_numbers<[1], [0], [0], [1], [0, 0, 1, 1], [], []>} : vector<8x64xbf16>, vector<64x256xbf16>, vector<8x256xf32> -> vector<8x256xf32>
    %c48_494 = arith.constant 48 : index
    %c0_495 = arith.constant 0 : index
    %1656 = vector.load %arg24[%c48_494, %c0_495] : memref<64x256xf32, #tpu.memory_space<vmem>>, vector<8x128xf32>
    %1657 = vector.extract_strided_slice %1655 {offsets = [0, 0], sizes = [8, 128], strides = [1, 1]} : vector<8x256xf32> to vector<8x128xf32>
    %1658 = arith.addf %1656, %1657 : vector<8x128xf32>
    %c8_496 = arith.constant 8 : index
    %c128_497 = arith.constant 128 : index
    %1659 = vector.load %arg24[%c8_496, %c128_497] : memref<64x256xf32, #tpu.memory_space<vmem>>, vector<8x128xf32>
    %1660 = vector.extract_strided_slice %1655 {offsets = [0, 128], sizes = [8, 128], strides = [1, 1]} : vector<8x256xf32> to vector<8x128xf32>
    %1661 = arith.addf %1659, %1660 : vector<8x128xf32>
    %1662 = arith.negf %1658 : vector<8x128xf32>
    %1663 = math.exp %1662 : vector<8x128xf32>
    %cst_498 = arith.constant 1.000000e+00 : f32
    %1664 = vector.broadcast %cst_498 : f32 to vector<8x128xf32>
    %1665 = arith.addf %1664, %1663 : vector<8x128xf32>
    %1666 = arith.divf %1664, %1665 : vector<8x128xf32>
    %1667 = math.tanh %1658 : vector<8x128xf32>
    %1668 = arith.negf %1661 : vector<8x128xf32>
    %1669 = math.exp %1668 : vector<8x128xf32>
    %cst_499 = arith.constant 1.000000e+00 : f32
    %1670 = vector.broadcast %cst_499 : f32 to vector<8x128xf32>
    %1671 = arith.addf %1670, %1669 : vector<8x128xf32>
    %1672 = arith.divf %1670, %1671 : vector<8x128xf32>
    %1673 = math.tanh %1661 : vector<8x128xf32>
    %1674 = vector.extract_strided_slice %1666 {offsets = [0, 32], sizes = [8, 32], strides = [1, 1]} : vector<8x128xf32> to vector<8x32xf32>
    %1675 = arith.mulf %1674, %1638 : vector<8x32xf32>
    %1676 = vector.extract_strided_slice %1666 {offsets = [0, 0], sizes = [8, 32], strides = [1, 1]} : vector<8x128xf32> to vector<8x32xf32>
    %1677 = vector.extract_strided_slice %1667 {offsets = [0, 64], sizes = [8, 32], strides = [1, 1]} : vector<8x128xf32> to vector<8x32xf32>
    %1678 = arith.mulf %1676, %1677 : vector<8x32xf32>
    %1679 = arith.addf %1675, %1678 : vector<8x32xf32>
    %1680 = vector.extract_strided_slice %1672 {offsets = [0, 32], sizes = [8, 32], strides = [1, 1]} : vector<8x128xf32> to vector<8x32xf32>
    %1681 = arith.mulf %1680, %1644 : vector<8x32xf32>
    %1682 = vector.extract_strided_slice %1672 {offsets = [0, 0], sizes = [8, 32], strides = [1, 1]} : vector<8x128xf32> to vector<8x32xf32>
    %1683 = vector.extract_strided_slice %1673 {offsets = [0, 64], sizes = [8, 32], strides = [1, 1]} : vector<8x128xf32> to vector<8x32xf32>
    %1684 = arith.mulf %1682, %1683 : vector<8x32xf32>
    %1685 = arith.addf %1681, %1684 : vector<8x32xf32>
    %1686 = vector.extract_strided_slice %1666 {offsets = [0, 96], sizes = [8, 32], strides = [1, 1]} : vector<8x128xf32> to vector<8x32xf32>
    %1687 = math.tanh %1679 : vector<8x32xf32>
    %1688 = arith.mulf %1686, %1687 : vector<8x32xf32>
    %1689 = vector.extract_strided_slice %1672 {offsets = [0, 96], sizes = [8, 32], strides = [1, 1]} : vector<8x128xf32> to vector<8x32xf32>
    %1690 = math.tanh %1685 : vector<8x32xf32>
    %1691 = arith.mulf %1689, %1690 : vector<8x32xf32>
    %c48_500 = arith.constant 48 : index
    %c0_501 = arith.constant 0 : index
    %1692 = vector.load %arg23[%c48_500, %c0_501] : memref<64x64xf32, #tpu.memory_space<vmem>>, vector<8x32xf32>
    tpu.vector_store %arg23[%c48_500, %c0_501], %1688 {strides = array<i32>} : memref<64x64xf32, #tpu.memory_space<vmem>>, vector<8x32xf32>,
    %c8_502 = arith.constant 8 : index
    %c32_503 = arith.constant 32 : index
    %1693 = vector.load %arg23[%c8_502, %c32_503] : memref<64x64xf32, #tpu.memory_space<vmem>>, vector<8x32xf32>
    tpu.vector_store %arg23[%c8_502, %c32_503], %1691 {strides = array<i32>} : memref<64x64xf32, #tpu.memory_space<vmem>>, vector<8x32xf32>,
    %1694 = tpu.concatenate %1688, %1691 in 1 : vector<8x32xf32>, vector<8x32xf32> -> vector<8x64xf32>
    %1695 = arith.truncf %1694 : vector<8x64xf32> to vector<8x64xbf16>
    %cst_504 = arith.constant dense<0.000000e+00> : vector<8x256xf32>
    %1696 = tpu.matmul %1695, %1402, %cst_504 {dimension_numbers = #tpu.dot_dimension_numbers<[1], [0], [0], [1], [0, 0, 1, 1], [], []>} : vector<8x64xbf16>, vector<64x256xbf16>, vector<8x256xf32> -> vector<8x256xf32>
    %c56_505 = arith.constant 56 : index
    %c0_506 = arith.constant 0 : index
    %1697 = vector.load %arg24[%c56_505, %c0_506] : memref<64x256xf32, #tpu.memory_space<vmem>>, vector<8x128xf32>
    %1698 = vector.extract_strided_slice %1696 {offsets = [0, 0], sizes = [8, 128], strides = [1, 1]} : vector<8x256xf32> to vector<8x128xf32>
    %1699 = arith.addf %1697, %1698 : vector<8x128xf32>
    %c0_507 = arith.constant 0 : index
    %c128_508 = arith.constant 128 : index
    %1700 = vector.load %arg24[%c0_507, %c128_508] : memref<64x256xf32, #tpu.memory_space<vmem>>, vector<8x128xf32>
    %1701 = vector.extract_strided_slice %1696 {offsets = [0, 128], sizes = [8, 128], strides = [1, 1]} : vector<8x256xf32> to vector<8x128xf32>
    %1702 = arith.addf %1700, %1701 : vector<8x128xf32>
    %1703 = arith.negf %1699 : vector<8x128xf32>
    %1704 = math.exp %1703 : vector<8x128xf32>
    %cst_509 = arith.constant 1.000000e+00 : f32
    %1705 = vector.broadcast %cst_509 : f32 to vector<8x128xf32>
    %1706 = arith.addf %1705, %1704 : vector<8x128xf32>
    %1707 = arith.divf %1705, %1706 : vector<8x128xf32>
    %1708 = math.tanh %1699 : vector<8x128xf32>
    %1709 = arith.negf %1702 : vector<8x128xf32>
    %1710 = math.exp %1709 : vector<8x128xf32>
    %cst_510 = arith.constant 1.000000e+00 : f32
    %1711 = vector.broadcast %cst_510 : f32 to vector<8x128xf32>
    %1712 = arith.addf %1711, %1710 : vector<8x128xf32>
    %1713 = arith.divf %1711, %1712 : vector<8x128xf32>
    %1714 = math.tanh %1702 : vector<8x128xf32>
    %1715 = vector.extract_strided_slice %1707 {offsets = [0, 32], sizes = [8, 32], strides = [1, 1]} : vector<8x128xf32> to vector<8x32xf32>
    %1716 = arith.mulf %1715, %1679 : vector<8x32xf32>
    %1717 = vector.extract_strided_slice %1707 {offsets = [0, 0], sizes = [8, 32], strides = [1, 1]} : vector<8x128xf32> to vector<8x32xf32>
    %1718 = vector.extract_strided_slice %1708 {offsets = [0, 64], sizes = [8, 32], strides = [1, 1]} : vector<8x128xf32> to vector<8x32xf32>
    %1719 = arith.mulf %1717, %1718 : vector<8x32xf32>
    %1720 = arith.addf %1716, %1719 : vector<8x32xf32>
    %1721 = vector.extract_strided_slice %1713 {offsets = [0, 32], sizes = [8, 32], strides = [1, 1]} : vector<8x128xf32> to vector<8x32xf32>
    %1722 = arith.mulf %1721, %1685 : vector<8x32xf32>
    %1723 = vector.extract_strided_slice %1713 {offsets = [0, 0], sizes = [8, 32], strides = [1, 1]} : vector<8x128xf32> to vector<8x32xf32>
    %1724 = vector.extract_strided_slice %1714 {offsets = [0, 64], sizes = [8, 32], strides = [1, 1]} : vector<8x128xf32> to vector<8x32xf32>
    %1725 = arith.mulf %1723, %1724 : vector<8x32xf32>
    %1726 = arith.addf %1722, %1725 : vector<8x32xf32>
    %1727 = vector.extract_strided_slice %1707 {offsets = [0, 96], sizes = [8, 32], strides = [1, 1]} : vector<8x128xf32> to vector<8x32xf32>
    %1728 = math.tanh %1720 : vector<8x32xf32>
    %1729 = arith.mulf %1727, %1728 : vector<8x32xf32>
    %1730 = vector.extract_strided_slice %1713 {offsets = [0, 96], sizes = [8, 32], strides = [1, 1]} : vector<8x128xf32> to vector<8x32xf32>
    %1731 = math.tanh %1726 : vector<8x32xf32>
    %1732 = arith.mulf %1730, %1731 : vector<8x32xf32>
    %c56_511 = arith.constant 56 : index
    %c0_512 = arith.constant 0 : index
    %1733 = vector.load %arg23[%c56_511, %c0_512] : memref<64x64xf32, #tpu.memory_space<vmem>>, vector<8x32xf32>
    tpu.vector_store %arg23[%c56_511, %c0_512], %1729 {strides = array<i32>} : memref<64x64xf32, #tpu.memory_space<vmem>>, vector<8x32xf32>,
    %c0_513 = arith.constant 0 : index
    %c32_514 = arith.constant 32 : index
    %1734 = vector.load %arg23[%c0_513, %c32_514] : memref<64x64xf32, #tpu.memory_space<vmem>>, vector<8x32xf32>
    tpu.vector_store %arg23[%c0_513, %c32_514], %1732 {strides = array<i32>} : memref<64x64xf32, #tpu.memory_space<vmem>>, vector<8x32xf32>,
    %c0_515 = arith.constant 0 : index
    %c0_516 = arith.constant 0 : index
    %1735 = vector.load %arg23[%c0_515, %c0_516] : memref<64x64xf32, #tpu.memory_space<vmem>>, vector<64x64xf32>
    %1736 = arith.truncf %1735 : vector<64x64xf32> to vector<64x64xbf16>
    %c0_517 = arith.constant 0 : index
    %c0_518 = arith.constant 0 : index
    %1737 = vector.load %arg19[%c0_517, %c0_518] : memref<64x2xbf16, #tpu.memory_space<vmem>>, vector<64x2xbf16>
    %cst_519 = arith.constant dense<0.000000e+00> : vector<64x2xf32>
    %1738 = tpu.matmul %1736, %1737, %cst_519 {dimension_numbers = #tpu.dot_dimension_numbers<[1], [0], [0], [1], [0, 0, 1, 1], [], []>} : vector<64x64xbf16>, vector<64x2xbf16>, vector<64x2xf32> -> vector<64x2xf32>
    %c0_520 = arith.constant 0 : index
    %c0_521 = arith.constant 0 : index
    %1739 = vector.load %arg20[%c0_520, %c0_521] : memref<1x2xf32, #tpu.memory_space<vmem>>, vector<1x2xf32>
    %1740 = vector.broadcast %1739 : vector<1x2xf32> to vector<64x2xf32>
    %1741 = arith.addf %1738, %1740 : vector<64x2xf32>
    %1742 = arith.negf %1741 : vector<64x2xf32>
    %1743 = math.exp %1742 : vector<64x2xf32>
    %cst_522 = arith.constant 1.000000e+00 : f32
    %1744 = vector.broadcast %cst_522 : f32 to vector<64x2xf32>
    %1745 = arith.addf %1744, %1743 : vector<64x2xf32>
    %1746 = arith.divf %1744, %1745 : vector<64x2xf32>
    %c0_523 = arith.constant 0 : index
    %c0_524 = arith.constant 0 : index
    %1747 = vector.load %arg21[%c0_523, %c0_524] : memref<64x2xf32, #tpu.memory_space<vmem>>, vector<64x2xf32>
    tpu.vector_store %arg21[%c0_523, %c0_524], %1746 {strides = array<i32>} : memref<64x2xf32, #tpu.memory_space<vmem>>, vector<64x2xf32>,
    return
  }
  func.func @transform_0(%arg0: i32) -> (i32, i32) {
    %c0_i32 = arith.constant 0 : i32
    %c0_i32_0 = arith.constant 0 : i32
    return %arg0, %c0_i32 : i32, i32
  }
  func.func @transform_1(%arg0: i32) -> (i32, i32) {
    %c0_i32 = arith.constant 0 : i32
    %c0_i32_0 = arith.constant 0 : i32
    %c0_i32_1 = arith.constant 0 : i32
    return %c0_i32, %c0_i32_0 : i32, i32
  }
  func.func @transform_2(%arg0: i32) -> (i32, i32) {
    %c0_i32 = arith.constant 0 : i32
    %c0_i32_0 = arith.constant 0 : i32
    %c0_i32_1 = arith.constant 0 : i32
    return %c0_i32, %c0_i32_0 : i32, i32
  }
  func.func @transform_3(%arg0: i32) -> (i32, i32) {
    %c0_i32 = arith.constant 0 : i32
    %c0_i32_0 = arith.constant 0 : i32
    %c0_i32_1 = arith.constant 0 : i32
    return %c0_i32, %c0_i32_0 : i32, i32
  }
  func.func @transform_4(%arg0: i32) -> (i32, i32) {
    %c0_i32 = arith.constant 0 : i32
    %c0_i32_0 = arith.constant 0 : i32
    %c0_i32_1 = arith.constant 0 : i32
    return %c0_i32, %c0_i32_0 : i32, i32
  }
  func.func @transform_5(%arg0: i32) -> (i32, i32) {
    %c0_i32 = arith.constant 0 : i32
    %c0_i32_0 = arith.constant 0 : i32
    %c0_i32_1 = arith.constant 0 : i32
    return %c0_i32, %c0_i32_0 : i32, i32
  }
  func.func @transform_6(%arg0: i32) -> (i32, i32) {
    %c0_i32 = arith.constant 0 : i32
    %c0_i32_0 = arith.constant 0 : i32
    %c0_i32_1 = arith.constant 0 : i32
    return %c0_i32, %c0_i32_0 : i32, i32
  }
  func.func @transform_7(%arg0: i32) -> (i32, i32) {
    %c0_i32 = arith.constant 0 : i32
    %c0_i32_0 = arith.constant 0 : i32
    %c0_i32_1 = arith.constant 0 : i32
    return %c0_i32, %c0_i32_0 : i32, i32
  }
  func.func @transform_8(%arg0: i32) -> (i32, i32) {
    %c0_i32 = arith.constant 0 : i32
    %c0_i32_0 = arith.constant 0 : i32
    %c0_i32_1 = arith.constant 0 : i32
    return %c0_i32, %c0_i32_0 : i32, i32
  }
  func.func @transform_9(%arg0: i32) -> (i32, i32) {
    %c0_i32 = arith.constant 0 : i32
    %c0_i32_0 = arith.constant 0 : i32
    %c0_i32_1 = arith.constant 0 : i32
    return %c0_i32, %c0_i32_0 : i32, i32
  }
  func.func @transform_10(%arg0: i32) -> (i32, i32) {
    %c0_i32 = arith.constant 0 : i32
    %c0_i32_0 = arith.constant 0 : i32
    %c0_i32_1 = arith.constant 0 : i32
    return %c0_i32, %c0_i32_0 : i32, i32
  }
  func.func @transform_11(%arg0: i32) -> (i32, i32) {
    %c0_i32 = arith.constant 0 : i32
    %c0_i32_0 = arith.constant 0 : i32
    %c0_i32_1 = arith.constant 0 : i32
    return %c0_i32, %c0_i32_0 : i32, i32
  }
  func.func @transform_12(%arg0: i32) -> (i32, i32) {
    %c0_i32 = arith.constant 0 : i32
    %c0_i32_0 = arith.constant 0 : i32
    %c0_i32_1 = arith.constant 0 : i32
    return %c0_i32, %c0_i32_0 : i32, i32
  }
  func.func @transform_13(%arg0: i32) -> (i32, i32) {
    %c0_i32 = arith.constant 0 : i32
    %c0_i32_0 = arith.constant 0 : i32
    %c0_i32_1 = arith.constant 0 : i32
    return %c0_i32, %c0_i32_0 : i32, i32
  }
  func.func @transform_14(%arg0: i32) -> (i32, i32) {
    %c0_i32 = arith.constant 0 : i32
    %c0_i32_0 = arith.constant 0 : i32
    %c0_i32_1 = arith.constant 0 : i32
    return %c0_i32, %c0_i32_0 : i32, i32
  }
  func.func @transform_15(%arg0: i32) -> (i32, i32) {
    %c0_i32 = arith.constant 0 : i32
    %c0_i32_0 = arith.constant 0 : i32
    %c0_i32_1 = arith.constant 0 : i32
    return %c0_i32, %c0_i32_0 : i32, i32
  }
  func.func @transform_16(%arg0: i32) -> (i32, i32) {
    %c0_i32 = arith.constant 0 : i32
    %c0_i32_0 = arith.constant 0 : i32
    %c0_i32_1 = arith.constant 0 : i32
    return %c0_i32, %c0_i32_0 : i32, i32
  }
  func.func @transform_17(%arg0: i32) -> (i32, i32) {
    %c0_i32 = arith.constant 0 : i32
    %c0_i32_0 = arith.constant 0 : i32
    %c0_i32_1 = arith.constant 0 : i32
    return %c0_i32, %c0_i32_0 : i32, i32
  }
  func.func @transform_18(%arg0: i32) -> (i32, i32) {
    %c0_i32 = arith.constant 0 : i32
    %c0_i32_0 = arith.constant 0 : i32
    %c0_i32_1 = arith.constant 0 : i32
    return %c0_i32, %c0_i32_0 : i32, i32
  }
  func.func @transform_19(%arg0: i32) -> (i32, i32) {
    %c0_i32 = arith.constant 0 : i32
    %c0_i32_0 = arith.constant 0 : i32
    %c0_i32_1 = arith.constant 0 : i32
    return %c0_i32, %c0_i32_0 : i32, i32
  }
  func.func @transform_20(%arg0: i32) -> (i32, i32) {
    %c0_i32 = arith.constant 0 : i32
    %c0_i32_0 = arith.constant 0 : i32
    return %arg0, %c0_i32 : i32, i32
  }
  func.func @transform_21(%arg0: i32) -> (i32, i32) {
    %c0_i32 = arith.constant 0 : i32
    %c0_i32_0 = arith.constant 0 : i32
    return %arg0, %c0_i32 : i32, i32
  }
}

</mosaic_0001>

<llo_original>
// kernel: _lambda_.1
$region0: #{_lambda_.1}
  #allocation0 [shape = 'u32[]', space=smem, size = 0x4, offset = 0x4, fixed_abs, tag = 'smem constant byte address 0x4 - core index']
  #allocation1 [shape = 'u32[144,128]{1,0:T(1,128)}', space=vmem, size = 0x12000, scoped, tag = 'internal scratch']
  #allocation2 [shape = 'f32[64,64]{1,0:T(8,128)}', space=vmem, size = 0x8000, scoped, tag = 'scratch operand']
  #allocation3 [shape = 'f32[64,256]{1,0:T(8,128)}', space=vmem, size = 0x10000, scoped, tag = 'scratch operand']
  %s0 = inlined_call_operand.vmem [shape: bf16[64,16], index: 0, kind: input, shape index: {}]
  %s1 = inlined_call_operand.vmem [shape: bf16[16,256], index: 1, kind: input, shape index: {}]
  %s2 = inlined_call_operand.hbm [shape: bf16[64,256], index: 2, kind: input, shape index: {}]
  %s3 = inlined_call_operand.vmem [shape: f32[1,256], index: 3, kind: input, shape index: {}]
  %s4 = inlined_call_operand.hbm [shape: bf16[64,256], index: 4, kind: input, shape index: {}]
  %s5 = inlined_call_operand.hbm [shape: bf16[64,256], index: 5, kind: input, shape index: {}]
  %s6 = inlined_call_operand.hbm [shape: f32[1,256], index: 6, kind: input, shape index: {}]
  %s7 = inlined_call_operand.hbm [shape: bf16[64,256], index: 7, kind: input, shape index: {}]
  %s8 = inlined_call_operand.hbm [shape: bf16[64,256], index: 8, kind: input, shape index: {}]
  %s9 = inlined_call_operand.hbm [shape: f32[1,256], index: 9, kind: input, shape index: {}]
  %s10 = inlined_call_operand.hbm [shape: bf16[64,256], index: 10, kind: input, shape index: {}]
  %s11 = inlined_call_operand.hbm [shape: bf16[64,256], index: 11, kind: input, shape index: {}]
  %s12 = inlined_call_operand.hbm [shape: f32[1,256], index: 12, kind: input, shape index: {}]
  %s13 = inlined_call_operand.hbm [shape: bf16[64,256], index: 13, kind: input, shape index: {}]
  %s14 = inlined_call_operand.vmem [shape: bf16[64,256], index: 14, kind: input, shape index: {}]
  %s15 = inlined_call_operand.hbm [shape: f32[1,256], index: 15, kind: input, shape index: {}]
  %s16 = inlined_call_operand.vmem [shape: bf16[64,32], index: 16, kind: input, shape index: {}]
  %s17 = inlined_call_operand.hbm [shape: f32[1,32], index: 17, kind: input, shape index: {}]
  %s18 = inlined_call_operand.hbm [shape: bf16[64,2], index: 18, kind: input, shape index: {}]
  %s19 = inlined_call_operand.hbm [shape: f32[1,2], index: 19, kind: input, shape index: {}]
  %s20 = inlined_call_operand.vmem [shape: f32[64,2], index: 20, kind: output, shape index: {0}]
  %s21 = inlined_call_operand.vmem [shape: f32[64,32], index: 21, kind: output, shape index: {1}]
  %22 = xla_tuple %s20, %s21
  %s23 = sld [smem:[#allocation0]]
  $region158: #{_lambda_.1} parent=0
    _
  %s25 = ssub.s32 1, %s23
  %s26 = scalar_select 0, %s25, %s23
  $region1: #{_lambda_.1} parent=0
    #allocation4 [shape = 'u8[32768]{0}', space=vmem, size = 0x8000, scoped, tag = 'input window, operand 2, single buffered']
    #allocation5 [shape = 's32[1]{0}', space=sflag, size = 0x4, scoped, tag = 'scoped memory for _lambda_.1']
    #allocation6 [shape = 'u8[32768]{0}', space=vmem, size = 0x8000, scoped, tag = 'input window, operand 4, single buffered']
    #allocation7 [shape = 's32[1]{0}', space=sflag, size = 0x4, scoped, tag = 'scoped memory for _lambda_.1']
    #allocation8 [shape = 'u8[32768]{0}', space=vmem, size = 0x8000, scoped, tag = 'input window, operand 5, single buffered']
    #allocation9 [shape = 'u8[1024]{0}', space=vmem, size = 0x400, scoped, tag = 'input window, operand 6, single buffered']
    #allocation10 [shape = 's32[1]{0}', space=sflag, size = 0x4, scoped, tag = 'scoped memory for _lambda_.1']
    #allocation11 [shape = 'u8[32768]{0}', space=vmem, size = 0x8000, scoped, tag = 'input window, operand 7, single buffered']
    #allocation12 [shape = 'u8[32768]{0}', space=vmem, size = 0x8000, scoped, tag = 'input window, operand 8, single buffered']
    #allocation13 [shape = 's32[1]{0}', space=sflag, size = 0x4, scoped, tag = 'scoped memory for _lambda_.1']
    #allocation14 [shape = 'u8[1024]{0}', space=vmem, size = 0x400, scoped, tag = 'input window, operand 9, single buffered']
    #allocation15 [shape = 'u8[32768]{0}', space=vmem, size = 0x8000, scoped, tag = 'input window, operand 10, single buffered']
    #allocation16 [shape = 's32[1]{0}', space=sflag, size = 0x4, scoped, tag = 'scoped memory for _lambda_.1']
    #allocation17 [shape = 'u8[32768]{0}', space=vmem, size = 0x8000, scoped, tag = 'input window, operand 11, single buffered']
    #allocation18 [shape = 'u8[1024]{0}', space=vmem, size = 0x400, scoped, tag = 'input window, operand 12, single buffered']
    #allocation19 [shape = 's32[1]{0}', space=sflag, size = 0x4, scoped, tag = 'scoped memory for _lambda_.1']
    #allocation20 [shape = 'u8[32768]{0}', space=vmem, size = 0x8000, scoped, tag = 'input window, operand 13, single buffered']
    #allocation21 [shape = 'u8[1024]{0}', space=vmem, size = 0x400, scoped, tag = 'input window, operand 15, single buffered']
    #allocation22 [shape = 's32[1]{0}', space=sflag, size = 0x4, scoped, tag = 'scoped memory for _lambda_.1']
    #allocation23 [shape = 'u8[512]{0}', space=vmem, size = 0x400, scoped, tag = 'input window, operand 17, single buffered']
    #allocation24 [shape = 'u8[16384]{0}', space=vmem, size = 0x4000, scoped, tag = 'input window, operand 18, single buffered']
    #allocation25 [shape = 's32[1]{0}', space=sflag, size = 0x4, scoped, tag = 'scoped memory for _lambda_.1']
    #allocation26 [shape = 'u8[512]{0}', space=vmem, size = 0x400, scoped, tag = 'input window, operand 19, single buffered']
    %27 = vsyncpa [#allocation5], 0
    %28 = vsyncpa [#allocation7], 0
    %29 = vsyncpa [#allocation10], 0
    %30 = vsyncpa [#allocation13], 0
    %31 = vsyncpa [#allocation16], 0
    %32 = vsyncpa [#allocation19], 0
    %33 = vsyncpa [#allocation22], 0
    %34 = vsyncpa [#allocation25], 0
    // Predicated region
    $region2: #{_lambda_.1} parent=1 // pred_check
      _
    $region3: #{_lambda_.1} parent=1 // pred_check_branch
      %36 = sbr.rel (0) target = $region5
    $region4: #{_lambda_.1} parent=1 // pred_region
      _
    $region5: #{_lambda_.1} parent=1 // pred_fallthru
      _
    // Predicated region
    $region6: #{_lambda_.1} parent=1 // pred_check
      _
    $region7: #{_lambda_.1} parent=1 // pred_check_branch
      %38 = sbr.rel (0) target = $region9
    $region8: #{_lambda_.1} parent=1 // pred_region
      _
    $region9: #{_lambda_.1} parent=1 // pred_fallthru
      _
    // Predicated region
    $region10: #{_lambda_.1} parent=1 // pred_check
      _
    $region11: #{_lambda_.1} parent=1 // pred_check_branch
      %40 = sbr.rel (0) target = $region13
    $region12: #{_lambda_.1} parent=1 // pred_region
      %s42 = ssub.s32 1024, 1024
      %43 = vsyncadd [#allocation5], %s42
      %s44 = sshll.u32 [#allocation4], 4
      %s45 = int_to_ptr.vmem [resolvable:$true] %s44
      %50 = dma.hbm_to_vmem [thread:$0]  %s2, 1024, %s45, [#allocation5], 128, 128, 8
    $region13: #{_lambda_.1} parent=1 // pred_fallthru
      _
    // Predicated region
    $region14: #{_lambda_.1} parent=1 // pred_check
      _
    $region15: #{_lambda_.1} parent=1 // pred_check_branch
      %52 = sbr.rel (0) target = $region17
    $region16: #{_lambda_.1} parent=1 // pred_region
      _
    $region17: #{_lambda_.1} parent=1 // pred_fallthru
      _
    // Predicated region
    $region18: #{_lambda_.1} parent=1 // pred_check
      _
    $region19: #{_lambda_.1} parent=1 // pred_check_branch
      %54 = sbr.rel (0) target = $region21
    $region20: #{_lambda_.1} parent=1 // pred_region
      %s56 = ssub.s32 1024, 1024
      %57 = vsyncadd [#allocation7], %s56
      %s58 = sshll.u32 [#allocation6], 4
      %s59 = int_to_ptr.vmem [resolvable:$true] %s58
      %64 = dma.hbm_to_vmem [thread:$0]  %s4, 1024, %s59, [#allocation7], 128, 128, 8
    $region21: #{_lambda_.1} parent=1 // pred_fallthru
      _
    // Predicated region
    $region22: #{_lambda_.1} parent=1 // pred_check
      _
    $region23: #{_lambda_.1} parent=1 // pred_check_branch
      %66 = sbr.rel (0) target = $region25
    $region24: #{_lambda_.1} parent=1 // pred_region
      %s68 = ssub.s32 1024, 1024
      %69 = vsyncadd [#allocation7], %s68
      %s70 = sshll.u32 [#allocation8], 4
      %s71 = int_to_ptr.vmem [resolvable:$true] %s70
      %76 = dma.hbm_to_vmem [thread:$0]  %s5, 1024, %s71, [#allocation7], 128, 128, 8
    $region25: #{_lambda_.1} parent=1 // pred_fallthru
      _
    // Predicated region
    $region26: #{_lambda_.1} parent=1 // pred_check
      _
    $region27: #{_lambda_.1} parent=1 // pred_check_branch
      %78 = sbr.rel (0) target = $region29
    $region28: #{_lambda_.1} parent=1 // pred_region
      %s80 = ssub.s32 32, 32
      %81 = vsyncadd [#allocation10], %s80
      %s83 = sshll.u32 [#allocation9], 4
      %s84 = int_to_ptr.vmem [resolvable:$true] %s83
      %86 = dma.hbm_to_vmem [thread:$0]  %s6, 32, %s84, [#allocation10]
    $region29: #{_lambda_.1} parent=1 // pred_fallthru
      _
    // Predicated region
    $region30: #{_lambda_.1} parent=1 // pred_check
      _
    $region31: #{_lambda_.1} parent=1 // pred_check_branch
      %88 = sbr.rel (0) target = $region33
    $region32: #{_lambda_.1} parent=1 // pred_region
      %s90 = ssub.s32 1024, 1024
      %91 = vsyncadd [#allocation10], %s90
      %s92 = sshll.u32 [#allocation11], 4
      %s93 = int_to_ptr.vmem [resolvable:$true] %s92
      %98 = dma.hbm_to_vmem [thread:$0]  %s7, 1024, %s93, [#allocation10], 128, 128, 8
    $region33: #{_lambda_.1} parent=1 // pred_fallthru
      _
    // Predicated region
    $region34: #{_lambda_.1} parent=1 // pred_check
      _
    $region35: #{_lambda_.1} parent=1 // pred_check_branch
      %100 = sbr.rel (0) target = $region37
    $region36: #{_lambda_.1} parent=1 // pred_region
      %s102 = ssub.s32 1024, 1024
      %103 = vsyncadd [#allocation13], %s102
      %s104 = sshll.u32 [#allocation12], 4
      %s105 = int_to_ptr.vmem [resolvable:$true] %s104
      %110 = dma.hbm_to_vmem [thread:$0]  %s8, 1024, %s105, [#allocation13], 128, 128, 8
    $region37: #{_lambda_.1} parent=1 // pred_fallthru
      _
    // Predicated region
    $region38: #{_lambda_.1} parent=1 // pred_check
      _
    $region39: #{_lambda_.1} parent=1 // pred_check_branch
      %112 = sbr.rel (0) target = $region41
    $region40: #{_lambda_.1} parent=1 // pred_region
      %s114 = ssub.s32 32, 32
      %115 = vsyncadd [#allocation13], %s114
      %s117 = sshll.u32 [#allocation14], 4
      %s118 = int_to_ptr.vmem [resolvable:$true] %s117
      %120 = dma.hbm_to_vmem [thread:$0]  %s9, 32, %s118, [#allocation13]
    $region41: #{_lambda_.1} parent=1 // pred_fallthru
      _
    // Predicated region
    $region42: #{_lambda_.1} parent=1 // pred_check
      _
    $region43: #{_lambda_.1} parent=1 // pred_check_branch
      %122 = sbr.rel (0) target = $region45
    $region44: #{_lambda_.1} parent=1 // pred_region
      %s124 = ssub.s32 1024, 1024
      %125 = vsyncadd [#allocation16], %s124
      %s126 = sshll.u32 [#allocation15], 4
      %s127 = int_to_ptr.vmem [resolvable:$true] %s126
      %132 = dma.hbm_to_vmem [thread:$0]  %s10, 1024, %s127, [#allocation16], 128, 128, 8
    $region45: #{_lambda_.1} parent=1 // pred_fallthru
      _
    // Predicated region
    $region46: #{_lambda_.1} parent=1 // pred_check
      _
    $region47: #{_lambda_.1} parent=1 // pred_check_branch
      %134 = sbr.rel (0) target = $region49
    $region48: #{_lambda_.1} parent=1 // pred_region
      %s136 = ssub.s32 1024, 1024
      %137 = vsyncadd [#allocation16], %s136
      %s138 = sshll.u32 [#allocation17], 4
      %s139 = int_to_ptr.vmem [resolvable:$true] %s138
      %144 = dma.hbm_to_vmem [thread:$0]  %s11, 1024, %s139, [#allocation16], 128, 128, 8
    $region49: #{_lambda_.1} parent=1 // pred_fallthru
      _
    // Predicated region
    $region50: #{_lambda_.1} parent=1 // pred_check
      _
    $region51: #{_lambda_.1} parent=1 // pred_check_branch
      %146 = sbr.rel (0) target = $region53
    $region52: #{_lambda_.1} parent=1 // pred_region
      %s148 = ssub.s32 32, 32
      %149 = vsyncadd [#allocation19], %s148
      %s151 = sshll.u32 [#allocation18], 4
      %s152 = int_to_ptr.vmem [resolvable:$true] %s151
      %154 = dma.hbm_to_vmem [thread:$0]  %s12, 32, %s152, [#allocation19]
    $region53: #{_lambda_.1} parent=1 // pred_fallthru
      _
    // Predicated region
    $region54: #{_lambda_.1} parent=1 // pred_check
      _
    $region55: #{_lambda_.1} parent=1 // pred_check_branch
      %156 = sbr.rel (0) target = $region57
    $region56: #{_lambda_.1} parent=1 // pred_region
      %s158 = ssub.s32 1024, 1024
      %159 = vsyncadd [#allocation19], %s158
      %s160 = sshll.u32 [#allocation20], 4
      %s161 = int_to_ptr.vmem [resolvable:$true] %s160
      %166 = dma.hbm_to_vmem [thread:$0]  %s13, 1024, %s161, [#allocation19], 128, 128, 8
    $region57: #{_lambda_.1} parent=1 // pred_fallthru
      _
    // Predicated region
    $region58: #{_lambda_.1} parent=1 // pred_check
      _
    $region59: #{_lambda_.1} parent=1 // pred_check_branch
      %168 = sbr.rel (0) target = $region61
    $region60: #{_lambda_.1} parent=1 // pred_region
      _
    $region61: #{_lambda_.1} parent=1 // pred_fallthru
      _
    // Predicated region
    $region62: #{_lambda_.1} parent=1 // pred_check
      _
    $region63: #{_lambda_.1} parent=1 // pred_check_branch
      %170 = sbr.rel (0) target = $region65
    $region64: #{_lambda_.1} parent=1 // pred_region
      %s172 = ssub.s32 32, 32
      %173 = vsyncadd [#allocation22], %s172
      %s175 = sshll.u32 [#allocation21], 4
      %s176 = int_to_ptr.vmem [resolvable:$true] %s175
      %178 = dma.hbm_to_vmem [thread:$0]  %s15, 32, %s176, [#allocation22]
    $region65: #{_lambda_.1} parent=1 // pred_fallthru
      _
    // Predicated region
    $region66: #{_lambda_.1} parent=1 // pred_check
      _
    $region67: #{_lambda_.1} parent=1 // pred_check_branch
      %180 = sbr.rel (0) target = $region69
    $region68: #{_lambda_.1} parent=1 // pred_region
      _
    $region69: #{_lambda_.1} parent=1 // pred_fallthru
      _
    // Predicated region
    $region70: #{_lambda_.1} parent=1 // pred_check
      _
    $region71: #{_lambda_.1} parent=1 // pred_check_branch
      %182 = sbr.rel (0) target = $region73
    $region72: #{_lambda_.1} parent=1 // pred_region
      %s184 = ssub.s32 16, 16
      %185 = vsyncadd [#allocation22], %s184
      %s187 = sshll.u32 [#allocation23], 4
      %s188 = int_to_ptr.vmem [resolvable:$true] %s187
      %190 = dma.hbm_to_vmem [thread:$0]  %s17, 16, %s188, [#allocation22]
    $region73: #{_lambda_.1} parent=1 // pred_fallthru
      _
    // Predicated region
    $region74: #{_lambda_.1} parent=1 // pred_check
      _
    $region75: #{_lambda_.1} parent=1 // pred_check_branch
      %192 = sbr.rel (0) target = $region77
    $region76: #{_lambda_.1} parent=1 // pred_region
      %s194 = ssub.s32 512, 512
      %195 = vsyncadd [#allocation25], %s194
      %s196 = sshll.u32 [#allocation24], 4
      %s197 = int_to_ptr.vmem [resolvable:$true] %s196
      %202 = dma.hbm_to_vmem [thread:$0]  %s18, 512, %s197, [#allocation25], 64, 64, 4
    $region77: #{_lambda_.1} parent=1 // pred_fallthru
      _
    // Predicated region
    $region78: #{_lambda_.1} parent=1 // pred_check
      _
    $region79: #{_lambda_.1} parent=1 // pred_check_branch
      %204 = sbr.rel (0) target = $region81
    $region80: #{_lambda_.1} parent=1 // pred_region
      %s206 = ssub.s32 16, 16
      %207 = vsyncadd [#allocation25], %s206
      %s209 = sshll.u32 [#allocation26], 4
      %s210 = int_to_ptr.vmem [resolvable:$true] %s209
      %212 = dma.hbm_to_vmem [thread:$0]  %s19, 16, %s210, [#allocation25]
    $region81: #{_lambda_.1} parent=1 // pred_fallthru
      _
    // Predicated region
    $region82: #{_lambda_.1} parent=1 // pred_check
      _
    $region83: #{_lambda_.1} parent=1 // pred_check_branch
      %214 = sbr.rel (0) target = $region85
    $region84: #{_lambda_.1} parent=1 // pred_region
      %215 = dma.done [#allocation5], 1024
    $region85: #{_lambda_.1} parent=1 // pred_fallthru
      _
    // Predicated region
    $region86: #{_lambda_.1} parent=1 // pred_check
      _
    $region87: #{_lambda_.1} parent=1 // pred_check_branch
      %217 = sbr.rel (0) target = $region89
    $region88: #{_lambda_.1} parent=1 // pred_region
      %218 = dma.done [#allocation7], 1024
    $region89: #{_lambda_.1} parent=1 // pred_fallthru
      _
    // Predicated region
    $region90: #{_lambda_.1} parent=1 // pred_check
      _
    $region91: #{_lambda_.1} parent=1 // pred_check_branch
      %220 = sbr.rel (0) target = $region93
    $region92: #{_lambda_.1} parent=1 // pred_region
      %221 = dma.done [#allocation7], 1024
    $region93: #{_lambda_.1} parent=1 // pred_fallthru
      _
    // Predicated region
    $region94: #{_lambda_.1} parent=1 // pred_check
      _
    $region95: #{_lambda_.1} parent=1 // pred_check_branch
      %223 = sbr.rel (0) target = $region97
    $region96: #{_lambda_.1} parent=1 // pred_region
      %224 = dma.done [#allocation10], 32
    $region97: #{_lambda_.1} parent=1 // pred_fallthru
      _
    // Predicated region
    $region98: #{_lambda_.1} parent=1 // pred_check
      _
    $region99: #{_lambda_.1} parent=1 // pred_check_branch
      %226 = sbr.rel (0) target = $region101
    $region100: #{_lambda_.1} parent=1 // pred_region
      %227 = dma.done [#allocation10], 1024
    $region101: #{_lambda_.1} parent=1 // pred_fallthru
      _
    // Predicated region
    $region102: #{_lambda_.1} parent=1 // pred_check
      _
    $region103: #{_lambda_.1} parent=1 // pred_check_branch
      %229 = sbr.rel (0) target = $region105
    $region104: #{_lambda_.1} parent=1 // pred_region
      %230 = dma.done [#allocation13], 1024
    $region105: #{_lambda_.1} parent=1 // pred_fallthru
      _
    // Predicated region
    $region106: #{_lambda_.1} parent=1 // pred_check
      _
    $region107: #{_lambda_.1} parent=1 // pred_check_branch
      %232 = sbr.rel (0) target = $region109
    $region108: #{_lambda_.1} parent=1 // pred_region
      %233 = dma.done [#allocation13], 32
    $region109: #{_lambda_.1} parent=1 // pred_fallthru
      _
    // Predicated region
    $region110: #{_lambda_.1} parent=1 // pred_check
      _
    $region111: #{_lambda_.1} parent=1 // pred_check_branch
      %235 = sbr.rel (0) target = $region113
    $region112: #{_lambda_.1} parent=1 // pred_region
      %236 = dma.done [#allocation16], 1024
    $region113: #{_lambda_.1} parent=1 // pred_fallthru
      _
    // Predicated region
    $region114: #{_lambda_.1} parent=1 // pred_check
      _
    $region115: #{_lambda_.1} parent=1 // pred_check_branch
      %238 = sbr.rel (0) target = $region117
    $region116: #{_lambda_.1} parent=1 // pred_region
      %239 = dma.done [#allocation16], 1024
    $region117: #{_lambda_.1} parent=1 // pred_fallthru
      _
    // Predicated region
    $region118: #{_lambda_.1} parent=1 // pred_check
      _
    $region119: #{_lambda_.1} parent=1 // pred_check_branch
      %241 = sbr.rel (0) target = $region121
    $region120: #{_lambda_.1} parent=1 // pred_region
      %242 = dma.done [#allocation19], 32
    $region121: #{_lambda_.1} parent=1 // pred_fallthru
      _
    // Predicated region
    $region122: #{_lambda_.1} parent=1 // pred_check
      _
    $region123: #{_lambda_.1} parent=1 // pred_check_branch
      %244 = sbr.rel (0) target = $region125
    $region124: #{_lambda_.1} parent=1 // pred_region
      %245 = dma.done [#allocation19], 1024
    $region125: #{_lambda_.1} parent=1 // pred_fallthru
      _
    // Predicated region
    $region126: #{_lambda_.1} parent=1 // pred_check
      _
    $region127: #{_lambda_.1} parent=1 // pred_check_branch
      %247 = sbr.rel (0) target = $region129
    $region128: #{_lambda_.1} parent=1 // pred_region
      %248 = dma.done [#allocation22], 32
    $region129: #{_lambda_.1} parent=1 // pred_fallthru
      _
    // Predicated region
    $region130: #{_lambda_.1} parent=1 // pred_check
      _
    $region131: #{_lambda_.1} parent=1 // pred_check_branch
      %250 = sbr.rel (0) target = $region133
    $region132: #{_lambda_.1} parent=1 // pred_region
      %251 = dma.done [#allocation22], 16
    $region133: #{_lambda_.1} parent=1 // pred_fallthru
      _
    // Predicated region
    $region134: #{_lambda_.1} parent=1 // pred_check
      _
    $region135: #{_lambda_.1} parent=1 // pred_check_branch
      %253 = sbr.rel (0) target = $region137
    $region136: #{_lambda_.1} parent=1 // pred_region
      %254 = dma.done [#allocation25], 512
    $region137: #{_lambda_.1} parent=1 // pred_fallthru
      _
    // Predicated region
    $region138: #{_lambda_.1} parent=1 // pred_check
      _
    $region139: #{_lambda_.1} parent=1 // pred_check_branch
      %256 = sbr.rel (0) target = $region141
    $region140: #{_lambda_.1} parent=1 // pred_region
      %257 = dma.done [#allocation25], 16
    $region141: #{_lambda_.1} parent=1 // pred_fallthru
      _
    %v259 = vld [vmem:[%s0] sm:$0xf]
    %v260 = vld [vmem:[%s0 + $0x4] sm:$0xf]
    %v261 = vld [vmem:[%s0 + $0x8] sm:$0xf]
    %v262 = vld [vmem:[%s0 + $0xc] sm:$0xf]
    %v263 = vld [vmem:[%s0 + $0x10] sm:$0xf]
    %v264 = vld [vmem:[%s0 + $0x14] sm:$0xf]
    %v265 = vld [vmem:[%s0 + $0x18] sm:$0xf]
    %v266 = vld [vmem:[%s0 + $0x1c] sm:$0xf]
    %v267 = vld [vmem:[%s1] sm:$0xff]
    %v268 = vld [vmem:[%s1 + $0x8] sm:$0xff]
    %v269 = vld [vmem:[%s3] sm:$0x3]
    %v271 = vlaneseq
    %v272 = vshrl.u32 %v271, 7
    %v273 = vsub.s32 0, %v272
    %v274 = vrot.slane %v269, %v273
    %v275 = vlaneseq
    %v276 = vshrl.u32 %v275, 7
    %v277 = vsub.s32 1, %v276
    %v278 = vrot.slane %v269, %v277
    %v289 = vunpack.c.l.b16 %v259
    %v290 = vunpack.c.l.b16 %v260
    %v291 = vunpack.c.l.b16 %v261
    %v292 = vunpack.c.l.b16 %v262
    %v293 = vunpack.c.l.b16 %v263
    %v294 = vunpack.c.l.b16 %v264
    %v295 = vunpack.c.l.b16 %v265
    %v296 = vunpack.c.l.b16 %v266
    %v297 = vpack.c.b16 %v290, %v289
    %v298 = vpack.c.b16 %v292, %v291
    %v299 = vpack.c.b16 %v294, %v293
    %v300 = vpack.c.b16 %v296, %v295
    %v303 = vunpack.c.l.b16 %v267
    %v304 = vunpack.c.h.b16 %v267
    %v305 = vunpack.c.l.b16 %v268
    %v306 = vunpack.c.h.b16 %v268
    %v307 = vpack.c.b16 %v305, %v303
    %v308 = vpack.c.b16 %v306, %v304
    %vm311 = vcmask 130048
    %v313 = vsel %vm311, %v297, 0
    %v316 = vsel %vm311, %v298, 0
    %v319 = vsel %vm311, %v299, 0
    %v322 = vsel %vm311, %v300, 0
    %324 = vmatprep.subr.bf16.mxu0 0
    %325 = vmatpush1.bf16.msra.mxu0 0
    %326 = vmatprep.subr.bf16.mxu0 0
    %327 = vmatpush1.bf16.msra.mxu0 0
    %328 = vmatprep.subr.bf16.mxu0 0
    %329 = vmatpush1.bf16.msra.mxu0 0
    %330 = vmatprep.subr.bf16.mxu0 0
    %331 = vmatpush1.bf16.msra.mxu0 0
    %332 = vmatprep.subr.bf16.mxu0 0
    %333 = vmatpush1.bf16.msra.mxu0 0
    %334 = vmatprep.subr.bf16.mxu0 0
    %335 = vmatpush1.bf16.msra.mxu0 0
    %336 = vmatprep.subr.bf16.mxu0 0
    %337 = vmatpush1.bf16.msra.mxu0 0
    %338 = vmatprep.subr.bf16.mxu0 %v308
    %339 = vmatpush1.bf16.msra.mxu0 %v307
    %340 = vmatprep.subr.bf16.mxu0 0
    %341 = vmatpush2.bf16.msra.mxu0 0
    %342 = vmatprep.subr.bf16.mxu0 0
    %343 = vmatpush2.bf16.msra.mxu0 0
    %344 = vmatprep.subr.bf16.mxu0 0
    %345 = vmatpush2.bf16.msra.mxu0 0
    %346 = vmatprep.subr.bf16.mxu0 0
    %347 = vmatpush2.bf16.msra.mxu0 0
    %348 = vmatprep.subr.bf16.mxu0 0
    %349 = vmatpush2.bf16.msra.mxu0 0
    %350 = vmatprep.subr.bf16.mxu0 0
    %351 = vmatpush2.bf16.msra.mxu0 0
    %352 = vmatprep.subr.bf16.mxu0 0
    %353 = vmatpush2.bf16.msra.mxu0 0
    %354 = vmatprep.subr.bf16.mxu0 0
    %355 = vmatpush2.bf16.msra.mxu0 0
    %356 = vmatprep.mubr.bf16.mxu0 0
    %357 = vmatmul.mubr.bf16.gmra.mxu0 %v313
    %v358 = vpop.f32.mrf.mxu0
    %v359 = vadd.f32 %v274, %v358
    %v360 = vpop.f32.mrf.mxu0
    %v361 = vadd.f32 %v278, %v360
    %v362 = vpop.f32.mrf.mxu0
    %v363 = vadd.f32 %v274, %v362
    %v364 = vpop.f32.mrf.mxu0
    %v365 = vadd.f32 %v278, %v364
    %366 = vmatprep.mubr.bf16.mxu0 0
    %367 = vmatmul.mubr.bf16.gmra.mxu0 %v316
    %v368 = vpop.f32.mrf.mxu0
    %v369 = vadd.f32 %v274, %v368
    %v370 = vpop.f32.mrf.mxu0
    %v371 = vadd.f32 %v278, %v370
    %v372 = vpop.f32.mrf.mxu0
    %v373 = vadd.f32 %v274, %v372
    %v374 = vpop.f32.mrf.mxu0
    %v375 = vadd.f32 %v278, %v374
    %376 = vmatprep.mubr.bf16.mxu0 0
    %377 = vmatmul.mubr.bf16.gmra.mxu0 %v319
    %v378 = vpop.f32.mrf.mxu0
    %v379 = vadd.f32 %v274, %v378
    %v380 = vpop.f32.mrf.mxu0
    %v381 = vadd.f32 %v278, %v380
    %v382 = vpop.f32.mrf.mxu0
    %v383 = vadd.f32 %v274, %v382
    %v384 = vpop.f32.mrf.mxu0
    %v385 = vadd.f32 %v278, %v384
    %386 = vmatprep.mubr.bf16.mxu0 0
    %387 = vmatmul.mubr.bf16.gmra.mxu0 %v322
    %v388 = vpop.f32.mrf.mxu0
    %v389 = vadd.f32 %v274, %v388
    %v390 = vpop.f32.mrf.mxu0
    %v391 = vadd.f32 %v278, %v390
    %v392 = vpop.f32.mrf.mxu0
    %v393 = vadd.f32 %v274, %v392
    %v394 = vpop.f32.mrf.mxu0
    %v395 = vadd.f32 %v278, %v394
    %396 = vdwg.mxu0
    %397 = vst [vmem:[#allocation3] sm:$0xff] %v359
    %398 = vst [vmem:[#allocation3 + $0x8] sm:$0xff] %v361
    %399 = vst [vmem:[#allocation3 + $0x10] sm:$0xff] %v363
    %400 = vst [vmem:[#allocation3 + $0x18] sm:$0xff] %v365
    %401 = vst [vmem:[#allocation3 + $0x20] sm:$0xff] %v369
    %402 = vst [vmem:[#allocation3 + $0x28] sm:$0xff] %v371
    %403 = vst [vmem:[#allocation3 + $0x30] sm:$0xff] %v373
    %404 = vst [vmem:[#allocation3 + $0x38] sm:$0xff] %v375
    %405 = vst [vmem:[#allocation3 + $0x40] sm:$0xff] %v379
    %406 = vst [vmem:[#allocation3 + $0x48] sm:$0xff] %v381
    %407 = vst [vmem:[#allocation3 + $0x50] sm:$0xff] %v383
    %408 = vst [vmem:[#allocation3 + $0x58] sm:$0xff] %v385
    %409 = vst [vmem:[#allocation3 + $0x60] sm:$0xff] %v389
    %410 = vst [vmem:[#allocation3 + $0x68] sm:$0xff] %v391
    %411 = vst [vmem:[#allocation3 + $0x70] sm:$0xff] %v393
    %412 = vst [vmem:[#allocation3 + $0x78] sm:$0xff] %v395
    %v413 = vld [vmem:[#allocation4] sm:$0xff]
    %v414 = vld [vmem:[#allocation4 + $0x8] sm:$0xff]
    %v415 = vld [vmem:[#allocation4 + $0x10] sm:$0xff]
    %v416 = vld [vmem:[#allocation4 + $0x18] sm:$0xff]
    %v417 = vld [vmem:[#allocation4 + $0x20] sm:$0xff]
    %v418 = vld [vmem:[#allocation4 + $0x28] sm:$0xff]
    %v419 = vld [vmem:[#allocation4 + $0x30] sm:$0xff]
    %v420 = vld [vmem:[#allocation4 + $0x38] sm:$0xff]
    %v421 = vpack.c.bf16 0.0, 0.0
    %v430 = vunpack.c.l.b16 %v413
    %v431 = vunpack.c.h.b16 %v413
    %v432 = vunpack.c.l.b16 %v414
    %v433 = vunpack.c.h.b16 %v414
    %v434 = vunpack.c.l.b16 %v415
    %v435 = vunpack.c.h.b16 %v415
    %v436 = vunpack.c.l.b16 %v416
    %v437 = vunpack.c.h.b16 %v416
    %v438 = vunpack.c.l.b16 %v417
    %v439 = vunpack.c.h.b16 %v417
    %v440 = vunpack.c.l.b16 %v418
    %v441 = vunpack.c.h.b16 %v418
    %v442 = vunpack.c.l.b16 %v419
    %v443 = vunpack.c.h.b16 %v419
    %v444 = vunpack.c.l.b16 %v420
    %v445 = vunpack.c.h.b16 %v420
    %v446 = vpack.c.b16 %v432, %v430
    %v447 = vpack.c.b16 %v433, %v431
    %v448 = vpack.c.b16 %v436, %v434
    %v449 = vpack.c.b16 %v437, %v435
    %v450 = vpack.c.b16 %v440, %v438
    %v451 = vpack.c.b16 %v441, %v439
    %v452 = vpack.c.b16 %v444, %v442
    %v453 = vpack.c.b16 %v445, %v443
    %vm462 = vcmask 523264
    %v464 = vsel %vm462, %v421, 0
    %466 = vmatprep.subr.bf16.mxu0 0
    %467 = vmatpush1.bf16.msra.mxu0 0
    %468 = vmatprep.subr.bf16.mxu0 0
    %469 = vmatpush1.bf16.msra.mxu0 0
    %470 = vmatprep.subr.bf16.mxu0 0
    %471 = vmatpush1.bf16.msra.mxu0 0
    %472 = vmatprep.subr.bf16.mxu0 0
    %473 = vmatpush1.bf16.msra.mxu0 0
    %474 = vmatprep.subr.bf16.mxu0 %v453
    %475 = vmatpush1.bf16.msra.mxu0 %v452
    %476 = vmatprep.subr.bf16.mxu0 %v451
    %477 = vmatpush1.bf16.msra.mxu0 %v450
    %478 = vmatprep.subr.bf16.mxu0 %v449
    %479 = vmatpush1.bf16.msra.mxu0 %v448
    %480 = vmatprep.subr.bf16.mxu0 %v447
    %481 = vmatpush1.bf16.msra.mxu0 %v446
    %482 = vmatprep.subr.bf16.mxu0 0
    %483 = vmatpush2.bf16.msra.mxu0 0
    %484 = vmatprep.subr.bf16.mxu0 0
    %485 = vmatpush2.bf16.msra.mxu0 0
    %486 = vmatprep.subr.bf16.mxu0 0
    %487 = vmatpush2.bf16.msra.mxu0 0
    %488 = vmatprep.subr.bf16.mxu0 0
    %489 = vmatpush2.bf16.msra.mxu0 0
    %490 = vmatprep.subr.bf16.mxu0 0
    %491 = vmatpush2.bf16.msra.mxu0 0
    %492 = vmatprep.subr.bf16.mxu0 0
    %493 = vmatpush2.bf16.msra.mxu0 0
    %494 = vmatprep.subr.bf16.mxu0 0
    %495 = vmatpush2.bf16.msra.mxu0 0
    %496 = vmatprep.subr.bf16.mxu0 0
    %497 = vmatpush2.bf16.msra.mxu0 0
    %498 = vmatprep.mubr.bf16.mxu0 0
    %499 = vmatmul.mubr.bf16.gmra.mxu0 %v464
    %v500 = vpop.f32.mrf.mxu0
    %v501 = vadd.f32 0.0, %v500
    %v502 = vpop.f32.mrf.mxu0
    %v503 = vadd.f32 0.0, %v502
    %v504 = vpop.f32.mrf.mxu0
    %v505 = vpop.f32.mrf.mxu0
    %506 = vdwg.mxu0
    %v507 = vld [vmem:[#allocation3] sm:$0xff]
    %v508 = vadd.f32 %v507, %v501
    %v509 = vld [vmem:[#allocation3 + $0x78] sm:$0xff]
    %v510 = vadd.f32 %v509, %v503
    %v511 = vxor.u32 %v508, 2147483648
    %v512 = vmul.f32 %v511, 1.442695
    %v513 = vpow.pop %v512
    %v514 = vadd.f32 %v513, 1.0
    %v515 = vrcp.pop %v514
    %v516 = vmul.f32 1.0, %v515
    %v517 = vtanh.pop %v508
    %v518 = vxor.u32 %v510, 2147483648
    %v519 = vmul.f32 %v518, 1.442695
    %v520 = vpow.pop %v519
    %v521 = vadd.f32 %v520, 1.0
    %v522 = vrcp.pop %v521
    %v523 = vmul.f32 1.0, %v522
    %v524 = vtanh.pop %v510
    %v525 = vmul.f32 %v516, 0.0
    %527 = vrot.lane.b32.xlu0 %v517, 64
    %v528 = vpop.permute.xlu0 %527
    %v530 = vmul.f32 %v516, %v528
    %532 = vrot.lane.b32.xlu0 %v530, 32
    %v533 = vpop.permute.xlu0 %532
    %v535 = vadd.f32 %v525, %v533
    %v536 = vmul.f32 %v523, 0.0
    %538 = vrot.lane.b32.xlu0 %v524, 64
    %v539 = vpop.permute.xlu0 %538
    %v541 = vmul.f32 %v523, %v539
    %543 = vrot.lane.b32.xlu0 %v541, 32
    %v544 = vpop.permute.xlu0 %543
    %v546 = vadd.f32 %v536, %v544
    %v547 = vtanh.pop %v535
    %549 = vrot.lane.b32.xlu0 %v547, 64
    %v550 = vpop.permute.xlu0 %549
    %v552 = vmul.f32 %v516, %v550
    %v553 = vtanh.pop %v546
    %555 = vrot.lane.b32.xlu0 %v553, 64
    %v556 = vpop.permute.xlu0 %555
    %v558 = vmul.f32 %v523, %v556
    %560 = vrot.lane.b32.xlu0 %v552, 32
    %v561 = vpop.permute.xlu0 %560
    %vm563 = vcmask 261120
    %564 = vst.msk [vmem:[#allocation2] sm:$0xff] %vm563, %v561
    %566 = vrot.lane.b32.xlu0 %v558, 64
    %v567 = vpop.permute.xlu0 %566
    %vm569 = vcmask 523520
    %570 = vst.msk [vmem:[#allocation2 + $0x38] sm:$0xff] %vm569, %v567
    %v571 = vsel %vm563, %v561, %v567
    %v572 = vpack.c.bf16 %v571, %v571
    %v574 = vsel %vm462, %v572, 0
    %576 = vmatprep.subr.bf16.mxu0 0
    %577 = vmatpush1.bf16.msra.mxu0 0
    %578 = vmatprep.subr.bf16.mxu0 0
    %579 = vmatpush1.bf16.msra.mxu0 0
    %580 = vmatprep.subr.bf16.mxu0 0
    %581 = vmatpush1.bf16.msra.mxu0 0
    %582 = vmatprep.subr.bf16.mxu0 0
    %583 = vmatpush1.bf16.msra.mxu0 0
    %584 = vmatprep.subr.bf16.mxu0 %v453
    %585 = vmatpush1.bf16.msra.mxu0 %v452
    %586 = vmatprep.subr.bf16.mxu0 %v451
    %587 = vmatpush1.bf16.msra.mxu0 %v450
    %588 = vmatprep.subr.bf16.mxu0 %v449
    %589 = vmatpush1.bf16.msra.mxu0 %v448
    %590 = vmatprep.subr.bf16.mxu0 %v447
    %591 = vmatpush1.bf16.msra.mxu0 %v446
    %592 = vmatprep.subr.bf16.mxu0 0
    %593 = vmatpush2.bf16.msra.mxu0 0
    %594 = vmatprep.subr.bf16.mxu0 0
    %595 = vmatpush2.bf16.msra.mxu0 0
    %596 = vmatprep.subr.bf16.mxu0 0
    %597 = vmatpush2.bf16.msra.mxu0 0
    %598 = vmatprep.subr.bf16.mxu0 0
    %599 = vmatpush2.bf16.msra.mxu0 0
    %600 = vmatprep.subr.bf16.mxu0 0
    %601 = vmatpush2.bf16.msra.mxu0 0
    %602 = vmatprep.subr.bf16.mxu0 0
    %603 = vmatpush2.bf16.msra.mxu0 0
    %604 = vmatprep.subr.bf16.mxu0 0
    %605 = vmatpush2.bf16.msra.mxu0 0
    %606 = vmatprep.subr.bf16.mxu0 0
    %607 = vmatpush2.bf16.msra.mxu0 0
    %608 = vmatprep.mubr.bf16.mxu0 0
    %609 = vmatmul.mubr.bf16.gmra.mxu0 %v574
    %v610 = vpop.f32.mrf.mxu0
    %v611 = vadd.f32 0.0, %v610
    %v612 = vpop.f32.mrf.mxu0
    %v613 = vadd.f32 0.0, %v612
    %v614 = vpop.f32.mrf.mxu0
    %v615 = vpop.f32.mrf.mxu0
    %616 = vdwg.mxu0
    %v617 = vld [vmem:[#allocation3 + $0x10] sm:$0xff]
    %v618 = vadd.f32 %v617, %v611
    %v619 = vld [vmem:[#allocation3 + $0x68] sm:$0xff]
    %v620 = vadd.f32 %v619, %v613
    %v621 = vxor.u32 %v618, 2147483648
    %v622 = vmul.f32 %v621, 1.442695
    %v623 = vpow.pop %v622
    %v624 = vadd.f32 %v623, 1.0
    %v625 = vrcp.pop %v624
    %v626 = vmul.f32 1.0, %v625
    %v627 = vtanh.pop %v618
    %v628 = vxor.u32 %v620, 2147483648
    %v629 = vmul.f32 %v628, 1.442695
    %v630 = vpow.pop %v629
    %v631 = vadd.f32 %v630, 1.0
    %v632 = vrcp.pop %v631
    %v633 = vmul.f32 1.0, %v632
    %v634 = vtanh.pop %v620
    %v635 = vmul.f32 %v626, %v535
    %637 = vrot.lane.b32.xlu0 %v627, 64
    %v638 = vpop.permute.xlu0 %637
    %v640 = vmul.f32 %v626, %v638
    %642 = vrot.lane.b32.xlu0 %v640, 32
    %v643 = vpop.permute.xlu0 %642
    %v645 = vadd.f32 %v635, %v643
    %v646 = vmul.f32 %v633, %v546
    %648 = vrot.lane.b32.xlu0 %v634, 64
    %v649 = vpop.permute.xlu0 %648
    %v651 = vmul.f32 %v633, %v649
    %653 = vrot.lane.b32.xlu0 %v651, 32
    %v654 = vpop.permute.xlu0 %653
    %v656 = vadd.f32 %v646, %v654
    %v657 = vtanh.pop %v645
    %659 = vrot.lane.b32.xlu0 %v657, 64
    %v660 = vpop.permute.xlu0 %659
    %v662 = vmul.f32 %v626, %v660
    %v663 = vtanh.pop %v656
    %665 = vrot.lane.b32.xlu0 %v663, 64
    %v666 = vpop.permute.xlu0 %665
    %v668 = vmul.f32 %v633, %v666
    %670 = vrot.lane.b32.xlu0 %v662, 32
    %v671 = vpop.permute.xlu0 %670
    %673 = vst.msk [vmem:[#allocation2 + $0x8] sm:$0xff] %vm563, %v671
    %675 = vrot.lane.b32.xlu0 %v668, 64
    %v676 = vpop.permute.xlu0 %675
    %678 = vst.msk [vmem:[#allocation2 + $0x30] sm:$0xff] %vm569, %v676
    %v679 = vsel %vm563, %v671, %v676
    %v680 = vpack.c.bf16 %v679, %v679
    %v682 = vsel %vm462, %v680, 0
    %684 = vmatprep.subr.bf16.mxu0 0
    %685 = vmatpush1.bf16.msra.mxu0 0
    %686 = vmatprep.subr.bf16.mxu0 0
    %687 = vmatpush1.bf16.msra.mxu0 0
    %688 = vmatprep.subr.bf16.mxu0 0
    %689 = vmatpush1.bf16.msra.mxu0 0
    %690 = vmatprep.subr.bf16.mxu0 0
    %691 = vmatpush1.bf16.msra.mxu0 0
    %692 = vmatprep.subr.bf16.mxu0 %v453
    %693 = vmatpush1.bf16.msra.mxu0 %v452
    %694 = vmatprep.subr.bf16.mxu0 %v451
    %695 = vmatpush1.bf16.msra.mxu0 %v450
    %696 = vmatprep.subr.bf16.mxu0 %v449
    %697 = vmatpush1.bf16.msra.mxu0 %v448
    %698 = vmatprep.subr.bf16.mxu0 %v447
    %699 = vmatpush1.bf16.msra.mxu0 %v446
    %700 = vmatprep.subr.bf16.mxu0 0
    %701 = vmatpush2.bf16.msra.mxu0 0
    %702 = vmatprep.subr.bf16.mxu0 0
    %703 = vmatpush2.bf16.msra.mxu0 0
    %704 = vmatprep.subr.bf16.mxu0 0
    %705 = vmatpush2.bf16.msra.mxu0 0
    %706 = vmatprep.subr.bf16.mxu0 0
    %707 = vmatpush2.bf16.msra.mxu0 0
    %708 = vmatprep.subr.bf16.mxu0 0
    %709 = vmatpush2.bf16.msra.mxu0 0
    %710 = vmatprep.subr.bf16.mxu0 0
    %711 = vmatpush2.bf16.msra.mxu0 0
    %712 = vmatprep.subr.bf16.mxu0 0
    %713 = vmatpush2.bf16.msra.mxu0 0
    %714 = vmatprep.subr.bf16.mxu0 0
    %715 = vmatpush2.bf16.msra.mxu0 0
    %716 = vmatprep.mubr.bf16.mxu0 0
    %717 = vmatmul.mubr.bf16.gmra.mxu0 %v682
    %v718 = vpop.f32.mrf.mxu0
    %v719 = vadd.f32 0.0, %v718
    %v720 = vpop.f32.mrf.mxu0
    %v721 = vadd.f32 0.0, %v720
    %v722 = vpop.f32.mrf.mxu0
    %v723 = vpop.f32.mrf.mxu0
    %724 = vdwg.mxu0
    %v725 = vld [vmem:[#allocation3 + $0x20] sm:$0xff]
    %v726 = vadd.f32 %v725, %v719
    %v727 = vld [vmem:[#allocation3 + $0x58] sm:$0xff]
    %v728 = vadd.f32 %v727, %v721
    %v729 = vxor.u32 %v726, 2147483648
    %v730 = vmul.f32 %v729, 1.442695
    %v731 = vpow.pop %v730
    %v732 = vadd.f32 %v731, 1.0
    %v733 = vrcp.pop %v732
    %v734 = vmul.f32 1.0, %v733
    %v735 = vtanh.pop %v726
    %v736 = vxor.u32 %v728, 2147483648
    %v737 = vmul.f32 %v736, 1.442695
    %v738 = vpow.pop %v737
    %v739 = vadd.f32 %v738, 1.0
    %v740 = vrcp.pop %v739
    %v741 = vmul.f32 1.0, %v740
    %v742 = vtanh.pop %v728
    %v743 = vmul.f32 %v734, %v645
    %745 = vrot.lane.b32.xlu0 %v735, 64
    %v746 = vpop.permute.xlu0 %745
    %v748 = vmul.f32 %v734, %v746
    %750 = vrot.lane.b32.xlu0 %v748, 32
    %v751 = vpop.permute.xlu0 %750
    %v753 = vadd.f32 %v743, %v751
    %v754 = vmul.f32 %v741, %v656
    %756 = vrot.lane.b32.xlu0 %v742, 64
    %v757 = vpop.permute.xlu0 %756
    %v759 = vmul.f32 %v741, %v757
    %761 = vrot.lane.b32.xlu0 %v759, 32
    %v762 = vpop.permute.xlu0 %761
    %v764 = vadd.f32 %v754, %v762
    %v765 = vtanh.pop %v753
    %767 = vrot.lane.b32.xlu0 %v765, 64
    %v768 = vpop.permute.xlu0 %767
    %v770 = vmul.f32 %v734, %v768
    %v771 = vtanh.pop %v764
    %773 = vrot.lane.b32.xlu0 %v771, 64
    %v774 = vpop.permute.xlu0 %773
    %v776 = vmul.f32 %v741, %v774
    %778 = vrot.lane.b32.xlu0 %v770, 32
    %v779 = vpop.permute.xlu0 %778
    %781 = vst.msk [vmem:[#allocation2 + $0x10] sm:$0xff] %vm563, %v779
    %783 = vrot.lane.b32.xlu0 %v776, 64
    %v784 = vpop.permute.xlu0 %783
    %786 = vst.msk [vmem:[#allocation2 + $0x28] sm:$0xff] %vm569, %v784
    %v787 = vsel %vm563, %v779, %v784
    %v788 = vpack.c.bf16 %v787, %v787
    %v790 = vsel %vm462, %v788, 0
    %792 = vmatprep.subr.bf16.mxu0 0
    %793 = vmatpush1.bf16.msra.mxu0 0
    %794 = vmatprep.subr.bf16.mxu0 0
    %795 = vmatpush1.bf16.msra.mxu0 0
    %796 = vmatprep.subr.bf16.mxu0 0
    %797 = vmatpush1.bf16.msra.mxu0 0
    %798 = vmatprep.subr.bf16.mxu0 0
    %799 = vmatpush1.bf16.msra.mxu0 0
    %800 = vmatprep.subr.bf16.mxu0 %v453
    %801 = vmatpush1.bf16.msra.mxu0 %v452
    %802 = vmatprep.subr.bf16.mxu0 %v451
    %803 = vmatpush1.bf16.msra.mxu0 %v450
    %804 = vmatprep.subr.bf16.mxu0 %v449
    %805 = vmatpush1.bf16.msra.mxu0 %v448
    %806 = vmatprep.subr.bf16.mxu0 %v447
    %807 = vmatpush1.bf16.msra.mxu0 %v446
    %808 = vmatprep.subr.bf16.mxu0 0
    %809 = vmatpush2.bf16.msra.mxu0 0
    %810 = vmatprep.subr.bf16.mxu0 0
    %811 = vmatpush2.bf16.msra.mxu0 0
    %812 = vmatprep.subr.bf16.mxu0 0
    %813 = vmatpush2.bf16.msra.mxu0 0
    %814 = vmatprep.subr.bf16.mxu0 0
    %815 = vmatpush2.bf16.msra.mxu0 0
    %816 = vmatprep.subr.bf16.mxu0 0
    %817 = vmatpush2.bf16.msra.mxu0 0
    %818 = vmatprep.subr.bf16.mxu0 0
    %819 = vmatpush2.bf16.msra.mxu0 0
    %820 = vmatprep.subr.bf16.mxu0 0
    %821 = vmatpush2.bf16.msra.mxu0 0
    %822 = vmatprep.subr.bf16.mxu0 0
    %823 = vmatpush2.bf16.msra.mxu0 0
    %824 = vmatprep.mubr.bf16.mxu0 0
    %825 = vmatmul.mubr.bf16.gmra.mxu0 %v790
    %v826 = vpop.f32.mrf.mxu0
    %v827 = vadd.f32 0.0, %v826
    %v828 = vpop.f32.mrf.mxu0
    %v829 = vadd.f32 0.0, %v828
    %v830 = vpop.f32.mrf.mxu0
    %v831 = vpop.f32.mrf.mxu0
    %832 = vdwg.mxu0
    %v833 = vld [vmem:[#allocation3 + $0x30] sm:$0xff]
    %v834 = vadd.f32 %v833, %v827
    %v835 = vld [vmem:[#allocation3 + $0x48] sm:$0xff]
    %v836 = vadd.f32 %v835, %v829
    %v837 = vxor.u32 %v834, 2147483648
    %v838 = vmul.f32 %v837, 1.442695
    %v839 = vpow.pop %v838
    %v840 = vadd.f32 %v839, 1.0
    %v841 = vrcp.pop %v840
    %v842 = vmul.f32 1.0, %v841
    %v843 = vtanh.pop %v834
    %v844 = vxor.u32 %v836, 2147483648
    %v845 = vmul.f32 %v844, 1.442695
    %v846 = vpow.pop %v845
    %v847 = vadd.f32 %v846, 1.0
    %v848 = vrcp.pop %v847
    %v849 = vmul.f32 1.0, %v848
    %v850 = vtanh.pop %v836
    %v851 = vmul.f32 %v842, %v753
    %853 = vrot.lane.b32.xlu0 %v843, 64
    %v854 = vpop.permute.xlu0 %853
    %v856 = vmul.f32 %v842, %v854
    %858 = vrot.lane.b32.xlu0 %v856, 32
    %v859 = vpop.permute.xlu0 %858
    %v861 = vadd.f32 %v851, %v859
    %v862 = vmul.f32 %v849, %v764
    %864 = vrot.lane.b32.xlu0 %v850, 64
    %v865 = vpop.permute.xlu0 %864
    %v867 = vmul.f32 %v849, %v865
    %869 = vrot.lane.b32.xlu0 %v867, 32
    %v870 = vpop.permute.xlu0 %869
    %v872 = vadd.f32 %v862, %v870
    %v873 = vtanh.pop %v861
    %875 = vrot.lane.b32.xlu0 %v873, 64
    %v876 = vpop.permute.xlu0 %875
    %v878 = vmul.f32 %v842, %v876
    %v879 = vtanh.pop %v872
    %881 = vrot.lane.b32.xlu0 %v879, 64
    %v882 = vpop.permute.xlu0 %881
    %v884 = vmul.f32 %v849, %v882
    %886 = vrot.lane.b32.xlu0 %v878, 32
    %v887 = vpop.permute.xlu0 %886
    %889 = vst.msk [vmem:[#allocation2 + $0x18] sm:$0xff] %vm563, %v887
    %891 = vrot.lane.b32.xlu0 %v884, 64
    %v892 = vpop.permute.xlu0 %891
    %894 = vst.msk [vmem:[#allocation2 + $0x20] sm:$0xff] %vm569, %v892
    %v895 = vsel %vm563, %v887, %v892
    %v896 = vpack.c.bf16 %v895, %v895
    %v898 = vsel %vm462, %v896, 0
    %900 = vmatprep.subr.bf16.mxu0 0
    %901 = vmatpush1.bf16.msra.mxu0 0
    %902 = vmatprep.subr.bf16.mxu0 0
    %903 = vmatpush1.bf16.msra.mxu0 0
    %904 = vmatprep.subr.bf16.mxu0 0
    %905 = vmatpush1.bf16.msra.mxu0 0
    %906 = vmatprep.subr.bf16.mxu0 0
    %907 = vmatpush1.bf16.msra.mxu0 0
    %908 = vmatprep.subr.bf16.mxu0 %v453
    %909 = vmatpush1.bf16.msra.mxu0 %v452
    %910 = vmatprep.subr.bf16.mxu0 %v451
    %911 = vmatpush1.bf16.msra.mxu0 %v450
    %912 = vmatprep.subr.bf16.mxu0 %v449
    %913 = vmatpush1.bf16.msra.mxu0 %v448
    %914 = vmatprep.subr.bf16.mxu0 %v447
    %915 = vmatpush1.bf16.msra.mxu0 %v446
    %916 = vmatprep.subr.bf16.mxu0 0
    %917 = vmatpush2.bf16.msra.mxu0 0
    %918 = vmatprep.subr.bf16.mxu0 0
    %919 = vmatpush2.bf16.msra.mxu0 0
    %920 = vmatprep.subr.bf16.mxu0 0
    %921 = vmatpush2.bf16.msra.mxu0 0
    %922 = vmatprep.subr.bf16.mxu0 0
    %923 = vmatpush2.bf16.msra.mxu0 0
    %924 = vmatprep.subr.bf16.mxu0 0
    %925 = vmatpush2.bf16.msra.mxu0 0
    %926 = vmatprep.subr.bf16.mxu0 0
    %927 = vmatpush2.bf16.msra.mxu0 0
    %928 = vmatprep.subr.bf16.mxu0 0
    %929 = vmatpush2.bf16.msra.mxu0 0
    %930 = vmatprep.subr.bf16.mxu0 0
    %931 = vmatpush2.bf16.msra.mxu0 0
    %932 = vmatprep.mubr.bf16.mxu0 0
    %933 = vmatmul.mubr.bf16.gmra.mxu0 %v898
    %v934 = vpop.f32.mrf.mxu0
    %v935 = vadd.f32 0.0, %v934
    %v936 = vpop.f32.mrf.mxu0
    %v937 = vadd.f32 0.0, %v936
    %v938 = vpop.f32.mrf.mxu0
    %v939 = vpop.f32.mrf.mxu0
    %940 = vdwg.mxu0
    %v941 = vld [vmem:[#allocation3 + $0x40] sm:$0xff]
    %v942 = vadd.f32 %v941, %v935
    %v943 = vld [vmem:[#allocation3 + $0x38] sm:$0xff]
    %v944 = vadd.f32 %v943, %v937
    %v945 = vxor.u32 %v942, 2147483648
    %v946 = vmul.f32 %v945, 1.442695
    %v947 = vpow.pop %v946
    %v948 = vadd.f32 %v947, 1.0
    %v949 = vrcp.pop %v948
    %v950 = vmul.f32 1.0, %v949
    %v951 = vtanh.pop %v942
    %v952 = vxor.u32 %v944, 2147483648
    %v953 = vmul.f32 %v952, 1.442695
    %v954 = vpow.pop %v953
    %v955 = vadd.f32 %v954, 1.0
    %v956 = vrcp.pop %v955
    %v957 = vmul.f32 1.0, %v956
    %v958 = vtanh.pop %v944
    %v959 = vmul.f32 %v950, %v861
    %961 = vrot.lane.b32.xlu0 %v951, 64
    %v962 = vpop.permute.xlu0 %961
    %v964 = vmul.f32 %v950, %v962
    %966 = vrot.lane.b32.xlu0 %v964, 32
    %v967 = vpop.permute.xlu0 %966
    %v969 = vadd.f32 %v959, %v967
    %v970 = vmul.f32 %v957, %v872
    %972 = vrot.lane.b32.xlu0 %v958, 64
    %v973 = vpop.permute.xlu0 %972
    %v975 = vmul.f32 %v957, %v973
    %977 = vrot.lane.b32.xlu0 %v975, 32
    %v978 = vpop.permute.xlu0 %977
    %v980 = vadd.f32 %v970, %v978
    %v981 = vtanh.pop %v969
    %983 = vrot.lane.b32.xlu0 %v981, 64
    %v984 = vpop.permute.xlu0 %983
    %v986 = vmul.f32 %v950, %v984
    %v987 = vtanh.pop %v980
    %989 = vrot.lane.b32.xlu0 %v987, 64
    %v990 = vpop.permute.xlu0 %989
    %v992 = vmul.f32 %v957, %v990
    %994 = vrot.lane.b32.xlu0 %v986, 32
    %v995 = vpop.permute.xlu0 %994
    %997 = vst.msk [vmem:[#allocation2 + $0x20] sm:$0xff] %vm563, %v995
    %999 = vrot.lane.b32.xlu0 %v992, 64
    %v1000 = vpop.permute.xlu0 %999
    %1002 = vst.msk [vmem:[#allocation2 + $0x18] sm:$0xff] %vm569, %v1000
    %v1003 = vsel %vm563, %v995, %v1000
    %v1004 = vpack.c.bf16 %v1003, %v1003
    %v1006 = vsel %vm462, %v1004, 0
    %1008 = vmatprep.subr.bf16.mxu0 0
    %1009 = vmatpush1.bf16.msra.mxu0 0
    %1010 = vmatprep.subr.bf16.mxu0 0
    %1011 = vmatpush1.bf16.msra.mxu0 0
    %1012 = vmatprep.subr.bf16.mxu0 0
    %1013 = vmatpush1.bf16.msra.mxu0 0
    %1014 = vmatprep.subr.bf16.mxu0 0
    %1015 = vmatpush1.bf16.msra.mxu0 0
    %1016 = vmatprep.subr.bf16.mxu0 %v453
    %1017 = vmatpush1.bf16.msra.mxu0 %v452
    %1018 = vmatprep.subr.bf16.mxu0 %v451
    %1019 = vmatpush1.bf16.msra.mxu0 %v450
    %1020 = vmatprep.subr.bf16.mxu0 %v449
    %1021 = vmatpush1.bf16.msra.mxu0 %v448
    %1022 = vmatprep.subr.bf16.mxu0 %v447
    %1023 = vmatpush1.bf16.msra.mxu0 %v446
    %1024 = vmatprep.subr.bf16.mxu0 0
    %1025 = vmatpush2.bf16.msra.mxu0 0
    %1026 = vmatprep.subr.bf16.mxu0 0
    %1027 = vmatpush2.bf16.msra.mxu0 0
    %1028 = vmatprep.subr.bf16.mxu0 0
    %1029 = vmatpush2.bf16.msra.mxu0 0
    %1030 = vmatprep.subr.bf16.mxu0 0
    %1031 = vmatpush2.bf16.msra.mxu0 0
    %1032 = vmatprep.subr.bf16.mxu0 0
    %1033 = vmatpush2.bf16.msra.mxu0 0
    %1034 = vmatprep.subr.bf16.mxu0 0
    %1035 = vmatpush2.bf16.msra.mxu0 0
    %1036 = vmatprep.subr.bf16.mxu0 0
    %1037 = vmatpush2.bf16.msra.mxu0 0
    %1038 = vmatprep.subr.bf16.mxu0 0
    %1039 = vmatpush2.bf16.msra.mxu0 0
    %1040 = vmatprep.mubr.bf16.mxu0 0
    %1041 = vmatmul.mubr.bf16.gmra.mxu0 %v1006
    %v1042 = vpop.f32.mrf.mxu0
    %v1043 = vadd.f32 0.0, %v1042
    %v1044 = vpop.f32.mrf.mxu0
    %v1045 = vadd.f32 0.0, %v1044
    %v1046 = vpop.f32.mrf.mxu0
    %v1047 = vpop.f32.mrf.mxu0
    %1048 = vdwg.mxu0
    %v1049 = vld [vmem:[#allocation3 + $0x50] sm:$0xff]
    %v1050 = vadd.f32 %v1049, %v1043
    %v1051 = vld [vmem:[#allocation3 + $0x28] sm:$0xff]
    %v1052 = vadd.f32 %v1051, %v1045
    %v1053 = vxor.u32 %v1050, 2147483648
    %v1054 = vmul.f32 %v1053, 1.442695
    %v1055 = vpow.pop %v1054
    %v1056 = vadd.f32 %v1055, 1.0
    %v1057 = vrcp.pop %v1056
    %v1058 = vmul.f32 1.0, %v1057
    %v1059 = vtanh.pop %v1050
    %v1060 = vxor.u32 %v1052, 2147483648
    %v1061 = vmul.f32 %v1060, 1.442695
    %v1062 = vpow.pop %v1061
    %v1063 = vadd.f32 %v1062, 1.0
    %v1064 = vrcp.pop %v1063
    %v1065 = vmul.f32 1.0, %v1064
    %v1066 = vtanh.pop %v1052
    %v1067 = vmul.f32 %v1058, %v969
    %1069 = vrot.lane.b32.xlu0 %v1059, 64
    %v1070 = vpop.permute.xlu0 %1069
    %v1072 = vmul.f32 %v1058, %v1070
    %1074 = vrot.lane.b32.xlu0 %v1072, 32
    %v1075 = vpop.permute.xlu0 %1074
    %v1077 = vadd.f32 %v1067, %v1075
    %v1078 = vmul.f32 %v1065, %v980
    %1080 = vrot.lane.b32.xlu0 %v1066, 64
    %v1081 = vpop.permute.xlu0 %1080
    %v1083 = vmul.f32 %v1065, %v1081
    %1085 = vrot.lane.b32.xlu0 %v1083, 32
    %v1086 = vpop.permute.xlu0 %1085
    %v1088 = vadd.f32 %v1078, %v1086
    %v1089 = vtanh.pop %v1077
    %1091 = vrot.lane.b32.xlu0 %v1089, 64
    %v1092 = vpop.permute.xlu0 %1091
    %v1094 = vmul.f32 %v1058, %v1092
    %v1095 = vtanh.pop %v1088
    %1097 = vrot.lane.b32.xlu0 %v1095, 64
    %v1098 = vpop.permute.xlu0 %1097
    %v1100 = vmul.f32 %v1065, %v1098
    %1102 = vrot.lane.b32.xlu0 %v1094, 32
    %v1103 = vpop.permute.xlu0 %1102
    %1105 = vst.msk [vmem:[#allocation2 + $0x28] sm:$0xff] %vm563, %v1103
    %1107 = vrot.lane.b32.xlu0 %v1100, 64
    %v1108 = vpop.permute.xlu0 %1107
    %1110 = vst.msk [vmem:[#allocation2 + $0x10] sm:$0xff] %vm569, %v1108
    %v1111 = vsel %vm563, %v1103, %v1108
    %v1112 = vpack.c.bf16 %v1111, %v1111
    %v1114 = vsel %vm462, %v1112, 0
    %1116 = vmatprep.subr.bf16.mxu0 0
    %1117 = vmatpush1.bf16.msra.mxu0 0
    %1118 = vmatprep.subr.bf16.mxu0 0
    %1119 = vmatpush1.bf16.msra.mxu0 0
    %1120 = vmatprep.subr.bf16.mxu0 0
    %1121 = vmatpush1.bf16.msra.mxu0 0
    %1122 = vmatprep.subr.bf16.mxu0 0
    %1123 = vmatpush1.bf16.msra.mxu0 0
    %1124 = vmatprep.subr.bf16.mxu0 %v453
    %1125 = vmatpush1.bf16.msra.mxu0 %v452
    %1126 = vmatprep.subr.bf16.mxu0 %v451
    %1127 = vmatpush1.bf16.msra.mxu0 %v450
    %1128 = vmatprep.subr.bf16.mxu0 %v449
    %1129 = vmatpush1.bf16.msra.mxu0 %v448
    %1130 = vmatprep.subr.bf16.mxu0 %v447
    %1131 = vmatpush1.bf16.msra.mxu0 %v446
    %1132 = vmatprep.subr.bf16.mxu0 0
    %1133 = vmatpush2.bf16.msra.mxu0 0
    %1134 = vmatprep.subr.bf16.mxu0 0
    %1135 = vmatpush2.bf16.msra.mxu0 0
    %1136 = vmatprep.subr.bf16.mxu0 0
    %1137 = vmatpush2.bf16.msra.mxu0 0
    %1138 = vmatprep.subr.bf16.mxu0 0
    %1139 = vmatpush2.bf16.msra.mxu0 0
    %1140 = vmatprep.subr.bf16.mxu0 0
    %1141 = vmatpush2.bf16.msra.mxu0 0
    %1142 = vmatprep.subr.bf16.mxu0 0
    %1143 = vmatpush2.bf16.msra.mxu0 0
    %1144 = vmatprep.subr.bf16.mxu0 0
    %1145 = vmatpush2.bf16.msra.mxu0 0
    %1146 = vmatprep.subr.bf16.mxu0 0
    %1147 = vmatpush2.bf16.msra.mxu0 0
    %1148 = vmatprep.mubr.bf16.mxu0 0
    %1149 = vmatmul.mubr.bf16.gmra.mxu0 %v1114
    %v1150 = vpop.f32.mrf.mxu0
    %v1151 = vadd.f32 0.0, %v1150
    %v1152 = vpop.f32.mrf.mxu0
    %v1153 = vadd.f32 0.0, %v1152
    %v1154 = vpop.f32.mrf.mxu0
    %v1155 = vpop.f32.mrf.mxu0
    %1156 = vdwg.mxu0
    %v1157 = vld [vmem:[#allocation3 + $0x60] sm:$0xff]
    %v1158 = vadd.f32 %v1157, %v1151
    %v1159 = vld [vmem:[#allocation3 + $0x18] sm:$0xff]
    %v1160 = vadd.f32 %v1159, %v1153
    %v1161 = vxor.u32 %v1158, 2147483648
    %v1162 = vmul.f32 %v1161, 1.442695
    %v1163 = vpow.pop %v1162
    %v1164 = vadd.f32 %v1163, 1.0
    %v1165 = vrcp.pop %v1164
    %v1166 = vmul.f32 1.0, %v1165
    %v1167 = vtanh.pop %v1158
    %v1168 = vxor.u32 %v1160, 2147483648
    %v1169 = vmul.f32 %v1168, 1.442695
    %v1170 = vpow.pop %v1169
    %v1171 = vadd.f32 %v1170, 1.0
    %v1172 = vrcp.pop %v1171
    %v1173 = vmul.f32 1.0, %v1172
    %v1174 = vtanh.pop %v1160
    %v1175 = vmul.f32 %v1166, %v1077
    %1177 = vrot.lane.b32.xlu0 %v1167, 64
    %v1178 = vpop.permute.xlu0 %1177
    %v1180 = vmul.f32 %v1166, %v1178
    %1182 = vrot.lane.b32.xlu0 %v1180, 32
    %v1183 = vpop.permute.xlu0 %1182
    %v1185 = vadd.f32 %v1175, %v1183
    %v1186 = vmul.f32 %v1173, %v1088
    %1188 = vrot.lane.b32.xlu0 %v1174, 64
    %v1189 = vpop.permute.xlu0 %1188
    %v1191 = vmul.f32 %v1173, %v1189
    %1193 = vrot.lane.b32.xlu0 %v1191, 32
    %v1194 = vpop.permute.xlu0 %1193
    %v1196 = vadd.f32 %v1186, %v1194
    %v1197 = vtanh.pop %v1185
    %1199 = vrot.lane.b32.xlu0 %v1197, 64
    %v1200 = vpop.permute.xlu0 %1199
    %v1202 = vmul.f32 %v1166, %v1200
    %v1203 = vtanh.pop %v1196
    %1205 = vrot.lane.b32.xlu0 %v1203, 64
    %v1206 = vpop.permute.xlu0 %1205
    %v1208 = vmul.f32 %v1173, %v1206
    %1210 = vrot.lane.b32.xlu0 %v1202, 32
    %v1211 = vpop.permute.xlu0 %1210
    %1213 = vst.msk [vmem:[#allocation2 + $0x30] sm:$0xff] %vm563, %v1211
    %1215 = vrot.lane.b32.xlu0 %v1208, 64
    %v1216 = vpop.permute.xlu0 %1215
    %1218 = vst.msk [vmem:[#allocation2 + $0x8] sm:$0xff] %vm569, %v1216
    %v1219 = vsel %vm563, %v1211, %v1216
    %v1220 = vpack.c.bf16 %v1219, %v1219
    %v1222 = vsel %vm462, %v1220, 0
    %1224 = vmatprep.subr.bf16.mxu0 0
    %1225 = vmatpush1.bf16.msra.mxu0 0
    %1226 = vmatprep.subr.bf16.mxu0 0
    %1227 = vmatpush1.bf16.msra.mxu0 0
    %1228 = vmatprep.subr.bf16.mxu0 0
    %1229 = vmatpush1.bf16.msra.mxu0 0
    %1230 = vmatprep.subr.bf16.mxu0 0
    %1231 = vmatpush1.bf16.msra.mxu0 0
    %1232 = vmatprep.subr.bf16.mxu0 %v453
    %1233 = vmatpush1.bf16.msra.mxu0 %v452
    %1234 = vmatprep.subr.bf16.mxu0 %v451
    %1235 = vmatpush1.bf16.msra.mxu0 %v450
    %1236 = vmatprep.subr.bf16.mxu0 %v449
    %1237 = vmatpush1.bf16.msra.mxu0 %v448
    %1238 = vmatprep.subr.bf16.mxu0 %v447
    %1239 = vmatpush1.bf16.msra.mxu0 %v446
    %1240 = vmatprep.subr.bf16.mxu0 0
    %1241 = vmatpush2.bf16.msra.mxu0 0
    %1242 = vmatprep.subr.bf16.mxu0 0
    %1243 = vmatpush2.bf16.msra.mxu0 0
    %1244 = vmatprep.subr.bf16.mxu0 0
    %1245 = vmatpush2.bf16.msra.mxu0 0
    %1246 = vmatprep.subr.bf16.mxu0 0
    %1247 = vmatpush2.bf16.msra.mxu0 0
    %1248 = vmatprep.subr.bf16.mxu0 0
    %1249 = vmatpush2.bf16.msra.mxu0 0
    %1250 = vmatprep.subr.bf16.mxu0 0
    %1251 = vmatpush2.bf16.msra.mxu0 0
    %1252 = vmatprep.subr.bf16.mxu0 0
    %1253 = vmatpush2.bf16.msra.mxu0 0
    %1254 = vmatprep.subr.bf16.mxu0 0
    %1255 = vmatpush2.bf16.msra.mxu0 0
    %1256 = vmatprep.mubr.bf16.mxu0 0
    %1257 = vmatmul.mubr.bf16.gmra.mxu0 %v1222
    %v1258 = vpop.f32.mrf.mxu0
    %v1259 = vadd.f32 0.0, %v1258
    %v1260 = vpop.f32.mrf.mxu0
    %v1261 = vadd.f32 0.0, %v1260
    %v1262 = vpop.f32.mrf.mxu0
    %v1263 = vpop.f32.mrf.mxu0
    %1264 = vdwg.mxu0
    %v1265 = vld [vmem:[#allocation3 + $0x70] sm:$0xff]
    %v1266 = vadd.f32 %v1265, %v1259
    %v1267 = vld [vmem:[#allocation3 + $0x8] sm:$0xff]
    %v1268 = vadd.f32 %v1267, %v1261
    %v1269 = vxor.u32 %v1266, 2147483648
    %v1270 = vmul.f32 %v1269, 1.442695
    %v1271 = vpow.pop %v1270
    %v1272 = vadd.f32 %v1271, 1.0
    %v1273 = vrcp.pop %v1272
    %v1274 = vmul.f32 1.0, %v1273
    %v1275 = vtanh.pop %v1266
    %v1276 = vxor.u32 %v1268, 2147483648
    %v1277 = vmul.f32 %v1276, 1.442695
    %v1278 = vpow.pop %v1277
    %v1279 = vadd.f32 %v1278, 1.0
    %v1280 = vrcp.pop %v1279
    %v1281 = vmul.f32 1.0, %v1280
    %v1282 = vtanh.pop %v1268
    %v1283 = vmul.f32 %v1274, %v1185
    %1285 = vrot.lane.b32.xlu0 %v1275, 64
    %v1286 = vpop.permute.xlu0 %1285
    %v1288 = vmul.f32 %v1274, %v1286
    %1290 = vrot.lane.b32.xlu0 %v1288, 32
    %v1291 = vpop.permute.xlu0 %1290
    %v1293 = vadd.f32 %v1283, %v1291
    %v1294 = vmul.f32 %v1281, %v1196
    %1296 = vrot.lane.b32.xlu0 %v1282, 64
    %v1297 = vpop.permute.xlu0 %1296
    %v1299 = vmul.f32 %v1281, %v1297
    %1301 = vrot.lane.b32.xlu0 %v1299, 32
    %v1302 = vpop.permute.xlu0 %1301
    %v1304 = vadd.f32 %v1294, %v1302
    %v1305 = vtanh.pop %v1293
    %1307 = vrot.lane.b32.xlu0 %v1305, 64
    %v1308 = vpop.permute.xlu0 %1307
    %v1310 = vmul.f32 %v1274, %v1308
    %v1311 = vtanh.pop %v1304
    %1313 = vrot.lane.b32.xlu0 %v1311, 64
    %v1314 = vpop.permute.xlu0 %1313
    %v1316 = vmul.f32 %v1281, %v1314
    %1318 = vrot.lane.b32.xlu0 %v1310, 32
    %v1319 = vpop.permute.xlu0 %1318
    %1321 = vst.msk [vmem:[#allocation2 + $0x38] sm:$0xff] %vm563, %v1319
    %1323 = vrot.lane.b32.xlu0 %v1316, 64
    %v1324 = vpop.permute.xlu0 %1323
    %1326 = vst.msk [vmem:[#allocation2] sm:$0xff] %vm569, %v1324
    %v1327 = vld [vmem:[#allocation2] sm:$0xff]
    %v1328 = vld [vmem:[#allocation2 + $0x8] sm:$0xff]
    %v1329 = vld [vmem:[#allocation2 + $0x10] sm:$0xff]
    %v1330 = vld [vmem:[#allocation2 + $0x18] sm:$0xff]
    %v1331 = vld [vmem:[#allocation2 + $0x20] sm:$0xff]
    %v1332 = vld [vmem:[#allocation2 + $0x28] sm:$0xff]
    %v1333 = vld [vmem:[#allocation2 + $0x30] sm:$0xff]
    %v1334 = vld [vmem:[#allocation2 + $0x38] sm:$0xff]
    %v1335 = vpack.c.bf16 %v1328, %v1327
    %v1336 = vpack.c.bf16 %v1330, %v1329
    %v1337 = vpack.c.bf16 %v1332, %v1331
    %v1338 = vpack.c.bf16 %v1334, %v1333
    %v1339 = vld [vmem:[#allocation6] sm:$0xff]
    %v1340 = vld [vmem:[#allocation6 + $0x8] sm:$0xff]
    %v1341 = vld [vmem:[#allocation6 + $0x10] sm:$0xff]
    %v1342 = vld [vmem:[#allocation6 + $0x18] sm:$0xff]
    %v1343 = vld [vmem:[#allocation6 + $0x20] sm:$0xff]
    %v1344 = vld [vmem:[#allocation6 + $0x28] sm:$0xff]
    %v1345 = vld [vmem:[#allocation6 + $0x30] sm:$0xff]
    %v1346 = vld [vmem:[#allocation6 + $0x38] sm:$0xff]
    %v1347 = vld [vmem:[#allocation9] sm:$0x3]
    %v1349 = vlaneseq
    %v1350 = vshrl.u32 %v1349, 7
    %v1351 = vsub.s32 0, %v1350
    %v1352 = vrot.slane %v1347, %v1351
    %v1353 = vlaneseq
    %v1354 = vshrl.u32 %v1353, 7
    %v1355 = vsub.s32 1, %v1354
    %v1356 = vrot.slane %v1347, %v1355
    %v1367 = vunpack.c.l.b16 %v1339
    %v1368 = vunpack.c.h.b16 %v1339
    %v1369 = vunpack.c.l.b16 %v1340
    %v1370 = vunpack.c.h.b16 %v1340
    %v1371 = vunpack.c.l.b16 %v1341
    %v1372 = vunpack.c.h.b16 %v1341
    %v1373 = vunpack.c.l.b16 %v1342
    %v1374 = vunpack.c.h.b16 %v1342
    %v1375 = vunpack.c.l.b16 %v1343
    %v1376 = vunpack.c.h.b16 %v1343
    %v1377 = vunpack.c.l.b16 %v1344
    %v1378 = vunpack.c.h.b16 %v1344
    %v1379 = vunpack.c.l.b16 %v1345
    %v1380 = vunpack.c.h.b16 %v1345
    %v1381 = vunpack.c.l.b16 %v1346
    %v1382 = vunpack.c.h.b16 %v1346
    %v1383 = vpack.c.b16 %v1369, %v1367
    %v1384 = vpack.c.b16 %v1370, %v1368
    %v1385 = vpack.c.b16 %v1373, %v1371
    %v1386 = vpack.c.b16 %v1374, %v1372
    %v1387 = vpack.c.b16 %v1377, %v1375
    %v1388 = vpack.c.b16 %v1378, %v1376
    %v1389 = vpack.c.b16 %v1381, %v1379
    %v1390 = vpack.c.b16 %v1382, %v1380
    %v1400 = vsel %vm462, %v1335, 0
    %v1403 = vsel %vm462, %v1336, 0
    %v1406 = vsel %vm462, %v1337, 0
    %v1409 = vsel %vm462, %v1338, 0
    %1411 = vmatprep.subr.bf16.mxu0 0
    %1412 = vmatpush1.bf16.msra.mxu0 0
    %1413 = vmatprep.subr.bf16.mxu0 0
    %1414 = vmatpush1.bf16.msra.mxu0 0
    %1415 = vmatprep.subr.bf16.mxu0 0
    %1416 = vmatpush1.bf16.msra.mxu0 0
    %1417 = vmatprep.subr.bf16.mxu0 0
    %1418 = vmatpush1.bf16.msra.mxu0 0
    %1419 = vmatprep.subr.bf16.mxu0 %v1390
    %1420 = vmatpush1.bf16.msra.mxu0 %v1389
    %1421 = vmatprep.subr.bf16.mxu0 %v1388
    %1422 = vmatpush1.bf16.msra.mxu0 %v1387
    %1423 = vmatprep.subr.bf16.mxu0 %v1386
    %1424 = vmatpush1.bf16.msra.mxu0 %v1385
    %1425 = vmatprep.subr.bf16.mxu0 %v1384
    %1426 = vmatpush1.bf16.msra.mxu0 %v1383
    %1427 = vmatprep.subr.bf16.mxu0 0
    %1428 = vmatpush2.bf16.msra.mxu0 0
    %1429 = vmatprep.subr.bf16.mxu0 0
    %1430 = vmatpush2.bf16.msra.mxu0 0
    %1431 = vmatprep.subr.bf16.mxu0 0
    %1432 = vmatpush2.bf16.msra.mxu0 0
    %1433 = vmatprep.subr.bf16.mxu0 0
    %1434 = vmatpush2.bf16.msra.mxu0 0
    %1435 = vmatprep.subr.bf16.mxu0 0
    %1436 = vmatpush2.bf16.msra.mxu0 0
    %1437 = vmatprep.subr.bf16.mxu0 0
    %1438 = vmatpush2.bf16.msra.mxu0 0
    %1439 = vmatprep.subr.bf16.mxu0 0
    %1440 = vmatpush2.bf16.msra.mxu0 0
    %1441 = vmatprep.subr.bf16.mxu0 0
    %1442 = vmatpush2.bf16.msra.mxu0 0
    %1443 = vmatprep.mubr.bf16.mxu0 0
    %1444 = vmatmul.mubr.bf16.gmra.mxu0 %v1400
    %v1445 = vpop.f32.mrf.mxu0
    %v1446 = vadd.f32 %v1352, %v1445
    %v1447 = vpop.f32.mrf.mxu0
    %v1448 = vadd.f32 %v1356, %v1447
    %v1449 = vpop.f32.mrf.mxu0
    %v1450 = vadd.f32 %v1352, %v1449
    %v1451 = vpop.f32.mrf.mxu0
    %v1452 = vadd.f32 %v1356, %v1451
    %1453 = vmatprep.mubr.bf16.mxu0 0
    %1454 = vmatmul.mubr.bf16.gmra.mxu0 %v1403
    %v1455 = vpop.f32.mrf.mxu0
    %v1456 = vadd.f32 %v1352, %v1455
    %v1457 = vpop.f32.mrf.mxu0
    %v1458 = vadd.f32 %v1356, %v1457
    %v1459 = vpop.f32.mrf.mxu0
    %v1460 = vadd.f32 %v1352, %v1459
    %v1461 = vpop.f32.mrf.mxu0
    %v1462 = vadd.f32 %v1356, %v1461
    %1463 = vmatprep.mubr.bf16.mxu0 0
    %1464 = vmatmul.mubr.bf16.gmra.mxu0 %v1406
    %v1465 = vpop.f32.mrf.mxu0
    %v1466 = vadd.f32 %v1352, %v1465
    %v1467 = vpop.f32.mrf.mxu0
    %v1468 = vadd.f32 %v1356, %v1467
    %v1469 = vpop.f32.mrf.mxu0
    %v1470 = vadd.f32 %v1352, %v1469
    %v1471 = vpop.f32.mrf.mxu0
    %v1472 = vadd.f32 %v1356, %v1471
    %1473 = vmatprep.mubr.bf16.mxu0 0
    %1474 = vmatmul.mubr.bf16.gmra.mxu0 %v1409
    %v1475 = vpop.f32.mrf.mxu0
    %v1476 = vadd.f32 %v1352, %v1475
    %v1477 = vpop.f32.mrf.mxu0
    %v1478 = vadd.f32 %v1356, %v1477
    %v1479 = vpop.f32.mrf.mxu0
    %v1480 = vadd.f32 %v1352, %v1479
    %v1481 = vpop.f32.mrf.mxu0
    %v1482 = vadd.f32 %v1356, %v1481
    %1483 = vdwg.mxu0
    %1484 = vst [vmem:[#allocation3] sm:$0xff] %v1446
    %1485 = vst [vmem:[#allocation3 + $0x8] sm:$0xff] %v1448
    %1486 = vst [vmem:[#allocation3 + $0x10] sm:$0xff] %v1450
    %1487 = vst [vmem:[#allocation3 + $0x18] sm:$0xff] %v1452
    %1488 = vst [vmem:[#allocation3 + $0x20] sm:$0xff] %v1456
    %1489 = vst [vmem:[#allocation3 + $0x28] sm:$0xff] %v1458
    %1490 = vst [vmem:[#allocation3 + $0x30] sm:$0xff] %v1460
    %1491 = vst [vmem:[#allocation3 + $0x38] sm:$0xff] %v1462
    %1492 = vst [vmem:[#allocation3 + $0x40] sm:$0xff] %v1466
    %1493 = vst [vmem:[#allocation3 + $0x48] sm:$0xff] %v1468
    %1494 = vst [vmem:[#allocation3 + $0x50] sm:$0xff] %v1470
    %1495 = vst [vmem:[#allocation3 + $0x58] sm:$0xff] %v1472
    %1496 = vst [vmem:[#allocation3 + $0x60] sm:$0xff] %v1476
    %1497 = vst [vmem:[#allocation3 + $0x68] sm:$0xff] %v1478
    %1498 = vst [vmem:[#allocation3 + $0x70] sm:$0xff] %v1480
    %1499 = vst [vmem:[#allocation3 + $0x78] sm:$0xff] %v1482
    %v1500 = vld [vmem:[#allocation8] sm:$0xff]
    %v1501 = vld [vmem:[#allocation8 + $0x8] sm:$0xff]
    %v1502 = vld [vmem:[#allocation8 + $0x10] sm:$0xff]
    %v1503 = vld [vmem:[#allocation8 + $0x18] sm:$0xff]
    %v1504 = vld [vmem:[#allocation8 + $0x20] sm:$0xff]
    %v1505 = vld [vmem:[#allocation8 + $0x28] sm:$0xff]
    %v1506 = vld [vmem:[#allocation8 + $0x30] sm:$0xff]
    %v1507 = vld [vmem:[#allocation8 + $0x38] sm:$0xff]
    %v1516 = vunpack.c.l.b16 %v1500
    %v1517 = vunpack.c.h.b16 %v1500
    %v1518 = vunpack.c.l.b16 %v1501
    %v1519 = vunpack.c.h.b16 %v1501
    %v1520 = vunpack.c.l.b16 %v1502
    %v1521 = vunpack.c.h.b16 %v1502
    %v1522 = vunpack.c.l.b16 %v1503
    %v1523 = vunpack.c.h.b16 %v1503
    %v1524 = vunpack.c.l.b16 %v1504
    %v1525 = vunpack.c.h.b16 %v1504
    %v1526 = vunpack.c.l.b16 %v1505
    %v1527 = vunpack.c.h.b16 %v1505
    %v1528 = vunpack.c.l.b16 %v1506
    %v1529 = vunpack.c.h.b16 %v1506
    %v1530 = vunpack.c.l.b16 %v1507
    %v1531 = vunpack.c.h.b16 %v1507
    %v1532 = vpack.c.b16 %v1518, %v1516
    %v1533 = vpack.c.b16 %v1519, %v1517
    %v1534 = vpack.c.b16 %v1522, %v1520
    %v1535 = vpack.c.b16 %v1523, %v1521
    %v1536 = vpack.c.b16 %v1526, %v1524
    %v1537 = vpack.c.b16 %v1527, %v1525
    %v1538 = vpack.c.b16 %v1530, %v1528
    %v1539 = vpack.c.b16 %v1531, %v1529
    %1548 = vmatprep.subr.bf16.mxu0 0
    %1549 = vmatpush1.bf16.msra.mxu0 0
    %1550 = vmatprep.subr.bf16.mxu0 0
    %1551 = vmatpush1.bf16.msra.mxu0 0
    %1552 = vmatprep.subr.bf16.mxu0 0
    %1553 = vmatpush1.bf16.msra.mxu0 0
    %1554 = vmatprep.subr.bf16.mxu0 0
    %1555 = vmatpush1.bf16.msra.mxu0 0
    %1556 = vmatprep.subr.bf16.mxu0 %v1539
    %1557 = vmatpush1.bf16.msra.mxu0 %v1538
    %1558 = vmatprep.subr.bf16.mxu0 %v1537
    %1559 = vmatpush1.bf16.msra.mxu0 %v1536
    %1560 = vmatprep.subr.bf16.mxu0 %v1535
    %1561 = vmatpush1.bf16.msra.mxu0 %v1534
    %1562 = vmatprep.subr.bf16.mxu0 %v1533
    %1563 = vmatpush1.bf16.msra.mxu0 %v1532
    %1564 = vmatprep.subr.bf16.mxu0 0
    %1565 = vmatpush2.bf16.msra.mxu0 0
    %1566 = vmatprep.subr.bf16.mxu0 0
    %1567 = vmatpush2.bf16.msra.mxu0 0
    %1568 = vmatprep.subr.bf16.mxu0 0
    %1569 = vmatpush2.bf16.msra.mxu0 0
    %1570 = vmatprep.subr.bf16.mxu0 0
    %1571 = vmatpush2.bf16.msra.mxu0 0
    %1572 = vmatprep.subr.bf16.mxu0 0
    %1573 = vmatpush2.bf16.msra.mxu0 0
    %1574 = vmatprep.subr.bf16.mxu0 0
    %1575 = vmatpush2.bf16.msra.mxu0 0
    %1576 = vmatprep.subr.bf16.mxu0 0
    %1577 = vmatpush2.bf16.msra.mxu0 0
    %1578 = vmatprep.subr.bf16.mxu0 0
    %1579 = vmatpush2.bf16.msra.mxu0 0
    %1580 = vmatprep.mubr.bf16.mxu0 0
    %1581 = vmatmul.mubr.bf16.gmra.mxu0 %v464
    %v1582 = vpop.f32.mrf.mxu0
    %v1583 = vadd.f32 0.0, %v1582
    %v1584 = vpop.f32.mrf.mxu0
    %v1585 = vadd.f32 0.0, %v1584
    %v1586 = vpop.f32.mrf.mxu0
    %v1587 = vpop.f32.mrf.mxu0
    %1588 = vdwg.mxu0
    %v1589 = vld [vmem:[#allocation3] sm:$0xff]
    %v1590 = vadd.f32 %v1589, %v1583
    %v1591 = vld [vmem:[#allocation3 + $0x78] sm:$0xff]
    %v1592 = vadd.f32 %v1591, %v1585
    %v1593 = vxor.u32 %v1590, 2147483648
    %v1594 = vmul.f32 %v1593, 1.442695
    %v1595 = vpow.pop %v1594
    %v1596 = vadd.f32 %v1595, 1.0
    %v1597 = vrcp.pop %v1596
    %v1598 = vmul.f32 1.0, %v1597
    %v1599 = vtanh.pop %v1590
    %v1600 = vxor.u32 %v1592, 2147483648
    %v1601 = vmul.f32 %v1600, 1.442695
    %v1602 = vpow.pop %v1601
    %v1603 = vadd.f32 %v1602, 1.0
    %v1604 = vrcp.pop %v1603
    %v1605 = vmul.f32 1.0, %v1604
    %v1606 = vtanh.pop %v1592
    %v1607 = vmul.f32 %v1598, 0.0
    %1609 = vrot.lane.b32.xlu0 %v1599, 64
    %v1610 = vpop.permute.xlu0 %1609
    %v1612 = vmul.f32 %v1598, %v1610
    %1614 = vrot.lane.b32.xlu0 %v1612, 32
    %v1615 = vpop.permute.xlu0 %1614
    %v1617 = vadd.f32 %v1607, %v1615
    %v1618 = vmul.f32 %v1605, 0.0
    %1620 = vrot.lane.b32.xlu0 %v1606, 64
    %v1621 = vpop.permute.xlu0 %1620
    %v1623 = vmul.f32 %v1605, %v1621
    %1625 = vrot.lane.b32.xlu0 %v1623, 32
    %v1626 = vpop.permute.xlu0 %1625
    %v1628 = vadd.f32 %v1618, %v1626
    %v1629 = vtanh.pop %v1617
    %1631 = vrot.lane.b32.xlu0 %v1629, 64
    %v1632 = vpop.permute.xlu0 %1631
    %v1634 = vmul.f32 %v1598, %v1632
    %v1635 = vtanh.pop %v1628
    %1637 = vrot.lane.b32.xlu0 %v1635, 64
    %v1638 = vpop.permute.xlu0 %1637
    %v1640 = vmul.f32 %v1605, %v1638
    %1642 = vrot.lane.b32.xlu0 %v1634, 32
    %v1643 = vpop.permute.xlu0 %1642
    %1645 = vst.msk [vmem:[#allocation2] sm:$0xff] %vm563, %v1643
    %1647 = vrot.lane.b32.xlu0 %v1640, 64
    %v1648 = vpop.permute.xlu0 %1647
    %1650 = vst.msk [vmem:[#allocation2 + $0x38] sm:$0xff] %vm569, %v1648
    %v1651 = vsel %vm563, %v1643, %v1648
    %v1652 = vpack.c.bf16 %v1651, %v1651
    %v1654 = vsel %vm462, %v1652, 0
    %1656 = vmatprep.subr.bf16.mxu0 0
    %1657 = vmatpush1.bf16.msra.mxu0 0
    %1658 = vmatprep.subr.bf16.mxu0 0
    %1659 = vmatpush1.bf16.msra.mxu0 0
    %1660 = vmatprep.subr.bf16.mxu0 0
    %1661 = vmatpush1.bf16.msra.mxu0 0
    %1662 = vmatprep.subr.bf16.mxu0 0
    %1663 = vmatpush1.bf16.msra.mxu0 0
    %1664 = vmatprep.subr.bf16.mxu0 %v1539
    %1665 = vmatpush1.bf16.msra.mxu0 %v1538
    %1666 = vmatprep.subr.bf16.mxu0 %v1537
    %1667 = vmatpush1.bf16.msra.mxu0 %v1536
    %1668 = vmatprep.subr.bf16.mxu0 %v1535
    %1669 = vmatpush1.bf16.msra.mxu0 %v1534
    %1670 = vmatprep.subr.bf16.mxu0 %v1533
    %1671 = vmatpush1.bf16.msra.mxu0 %v1532
    %1672 = vmatprep.subr.bf16.mxu0 0
    %1673 = vmatpush2.bf16.msra.mxu0 0
    %1674 = vmatprep.subr.bf16.mxu0 0
    %1675 = vmatpush2.bf16.msra.mxu0 0
    %1676 = vmatprep.subr.bf16.mxu0 0
    %1677 = vmatpush2.bf16.msra.mxu0 0
    %1678 = vmatprep.subr.bf16.mxu0 0
    %1679 = vmatpush2.bf16.msra.mxu0 0
    %1680 = vmatprep.subr.bf16.mxu0 0
    %1681 = vmatpush2.bf16.msra.mxu0 0
    %1682 = vmatprep.subr.bf16.mxu0 0
    %1683 = vmatpush2.bf16.msra.mxu0 0
    %1684 = vmatprep.subr.bf16.mxu0 0
    %1685 = vmatpush2.bf16.msra.mxu0 0
    %1686 = vmatprep.subr.bf16.mxu0 0
    %1687 = vmatpush2.bf16.msra.mxu0 0
    %1688 = vmatprep.mubr.bf16.mxu0 0
    %1689 = vmatmul.mubr.bf16.gmra.mxu0 %v1654
    %v1690 = vpop.f32.mrf.mxu0
    %v1691 = vadd.f32 0.0, %v1690
    %v1692 = vpop.f32.mrf.mxu0
    %v1693 = vadd.f32 0.0, %v1692
    %v1694 = vpop.f32.mrf.mxu0
    %v1695 = vpop.f32.mrf.mxu0
    %1696 = vdwg.mxu0
    %v1697 = vld [vmem:[#allocation3 + $0x10] sm:$0xff]
    %v1698 = vadd.f32 %v1697, %v1691
    %v1699 = vld [vmem:[#allocation3 + $0x68] sm:$0xff]
    %v1700 = vadd.f32 %v1699, %v1693
    %v1701 = vxor.u32 %v1698, 2147483648
    %v1702 = vmul.f32 %v1701, 1.442695
    %v1703 = vpow.pop %v1702
    %v1704 = vadd.f32 %v1703, 1.0
    %v1705 = vrcp.pop %v1704
    %v1706 = vmul.f32 1.0, %v1705
    %v1707 = vtanh.pop %v1698
    %v1708 = vxor.u32 %v1700, 2147483648
    %v1709 = vmul.f32 %v1708, 1.442695
    %v1710 = vpow.pop %v1709
    %v1711 = vadd.f32 %v1710, 1.0
    %v1712 = vrcp.pop %v1711
    %v1713 = vmul.f32 1.0, %v1712
    %v1714 = vtanh.pop %v1700
    %v1715 = vmul.f32 %v1706, %v1617
    %1717 = vrot.lane.b32.xlu0 %v1707, 64
    %v1718 = vpop.permute.xlu0 %1717
    %v1720 = vmul.f32 %v1706, %v1718
    %1722 = vrot.lane.b32.xlu0 %v1720, 32
    %v1723 = vpop.permute.xlu0 %1722
    %v1725 = vadd.f32 %v1715, %v1723
    %v1726 = vmul.f32 %v1713, %v1628
    %1728 = vrot.lane.b32.xlu0 %v1714, 64
    %v1729 = vpop.permute.xlu0 %1728
    %v1731 = vmul.f32 %v1713, %v1729
    %1733 = vrot.lane.b32.xlu0 %v1731, 32
    %v1734 = vpop.permute.xlu0 %1733
    %v1736 = vadd.f32 %v1726, %v1734
    %v1737 = vtanh.pop %v1725
    %1739 = vrot.lane.b32.xlu0 %v1737, 64
    %v1740 = vpop.permute.xlu0 %1739
    %v1742 = vmul.f32 %v1706, %v1740
    %v1743 = vtanh.pop %v1736
    %1745 = vrot.lane.b32.xlu0 %v1743, 64
    %v1746 = vpop.permute.xlu0 %1745
    %v1748 = vmul.f32 %v1713, %v1746
    %1750 = vrot.lane.b32.xlu0 %v1742, 32
    %v1751 = vpop.permute.xlu0 %1750
    %1753 = vst.msk [vmem:[#allocation2 + $0x8] sm:$0xff] %vm563, %v1751
    %1755 = vrot.lane.b32.xlu0 %v1748, 64
    %v1756 = vpop.permute.xlu0 %1755
    %1758 = vst.msk [vmem:[#allocation2 + $0x30] sm:$0xff] %vm569, %v1756
    %v1759 = vsel %vm563, %v1751, %v1756
    %v1760 = vpack.c.bf16 %v1759, %v1759
    %v1762 = vsel %vm462, %v1760, 0
    %1764 = vmatprep.subr.bf16.mxu0 0
    %1765 = vmatpush1.bf16.msra.mxu0 0
    %1766 = vmatprep.subr.bf16.mxu0 0
    %1767 = vmatpush1.bf16.msra.mxu0 0
    %1768 = vmatprep.subr.bf16.mxu0 0
    %1769 = vmatpush1.bf16.msra.mxu0 0
    %1770 = vmatprep.subr.bf16.mxu0 0
    %1771 = vmatpush1.bf16.msra.mxu0 0
    %1772 = vmatprep.subr.bf16.mxu0 %v1539
    %1773 = vmatpush1.bf16.msra.mxu0 %v1538
    %1774 = vmatprep.subr.bf16.mxu0 %v1537
    %1775 = vmatpush1.bf16.msra.mxu0 %v1536
    %1776 = vmatprep.subr.bf16.mxu0 %v1535
    %1777 = vmatpush1.bf16.msra.mxu0 %v1534
    %1778 = vmatprep.subr.bf16.mxu0 %v1533
    %1779 = vmatpush1.bf16.msra.mxu0 %v1532
    %1780 = vmatprep.subr.bf16.mxu0 0
    %1781 = vmatpush2.bf16.msra.mxu0 0
    %1782 = vmatprep.subr.bf16.mxu0 0
    %1783 = vmatpush2.bf16.msra.mxu0 0
    %1784 = vmatprep.subr.bf16.mxu0 0
    %1785 = vmatpush2.bf16.msra.mxu0 0
    %1786 = vmatprep.subr.bf16.mxu0 0
    %1787 = vmatpush2.bf16.msra.mxu0 0
    %1788 = vmatprep.subr.bf16.mxu0 0
    %1789 = vmatpush2.bf16.msra.mxu0 0
    %1790 = vmatprep.subr.bf16.mxu0 0
    %1791 = vmatpush2.bf16.msra.mxu0 0
    %1792 = vmatprep.subr.bf16.mxu0 0
    %1793 = vmatpush2.bf16.msra.mxu0 0
    %1794 = vmatprep.subr.bf16.mxu0 0
    %1795 = vmatpush2.bf16.msra.mxu0 0
    %1796 = vmatprep.mubr.bf16.mxu0 0
    %1797 = vmatmul.mubr.bf16.gmra.mxu0 %v1762
    %v1798 = vpop.f32.mrf.mxu0
    %v1799 = vadd.f32 0.0, %v1798
    %v1800 = vpop.f32.mrf.mxu0
    %v1801 = vadd.f32 0.0, %v1800
    %v1802 = vpop.f32.mrf.mxu0
    %v1803 = vpop.f32.mrf.mxu0
    %1804 = vdwg.mxu0
    %v1805 = vld [vmem:[#allocation3 + $0x20] sm:$0xff]
    %v1806 = vadd.f32 %v1805, %v1799
    %v1807 = vld [vmem:[#allocation3 + $0x58] sm:$0xff]
    %v1808 = vadd.f32 %v1807, %v1801
    %v1809 = vxor.u32 %v1806, 2147483648
    %v1810 = vmul.f32 %v1809, 1.442695
    %v1811 = vpow.pop %v1810
    %v1812 = vadd.f32 %v1811, 1.0
    %v1813 = vrcp.pop %v1812
    %v1814 = vmul.f32 1.0, %v1813
    %v1815 = vtanh.pop %v1806
    %v1816 = vxor.u32 %v1808, 2147483648
    %v1817 = vmul.f32 %v1816, 1.442695
    %v1818 = vpow.pop %v1817
    %v1819 = vadd.f32 %v1818, 1.0
    %v1820 = vrcp.pop %v1819
    %v1821 = vmul.f32 1.0, %v1820
    %v1822 = vtanh.pop %v1808
    %v1823 = vmul.f32 %v1814, %v1725
    %1825 = vrot.lane.b32.xlu0 %v1815, 64
    %v1826 = vpop.permute.xlu0 %1825
    %v1828 = vmul.f32 %v1814, %v1826
    %1830 = vrot.lane.b32.xlu0 %v1828, 32
    %v1831 = vpop.permute.xlu0 %1830
    %v1833 = vadd.f32 %v1823, %v1831
    %v1834 = vmul.f32 %v1821, %v1736
    %1836 = vrot.lane.b32.xlu0 %v1822, 64
    %v1837 = vpop.permute.xlu0 %1836
    %v1839 = vmul.f32 %v1821, %v1837
    %1841 = vrot.lane.b32.xlu0 %v1839, 32
    %v1842 = vpop.permute.xlu0 %1841
    %v1844 = vadd.f32 %v1834, %v1842
    %v1845 = vtanh.pop %v1833
    %1847 = vrot.lane.b32.xlu0 %v1845, 64
    %v1848 = vpop.permute.xlu0 %1847
    %v1850 = vmul.f32 %v1814, %v1848
    %v1851 = vtanh.pop %v1844
    %1853 = vrot.lane.b32.xlu0 %v1851, 64
    %v1854 = vpop.permute.xlu0 %1853
    %v1856 = vmul.f32 %v1821, %v1854
    %1858 = vrot.lane.b32.xlu0 %v1850, 32
    %v1859 = vpop.permute.xlu0 %1858
    %1861 = vst.msk [vmem:[#allocation2 + $0x10] sm:$0xff] %vm563, %v1859
    %1863 = vrot.lane.b32.xlu0 %v1856, 64
    %v1864 = vpop.permute.xlu0 %1863
    %1866 = vst.msk [vmem:[#allocation2 + $0x28] sm:$0xff] %vm569, %v1864
    %v1867 = vsel %vm563, %v1859, %v1864
    %v1868 = vpack.c.bf16 %v1867, %v1867
    %v1870 = vsel %vm462, %v1868, 0
    %1872 = vmatprep.subr.bf16.mxu0 0
    %1873 = vmatpush1.bf16.msra.mxu0 0
    %1874 = vmatprep.subr.bf16.mxu0 0
    %1875 = vmatpush1.bf16.msra.mxu0 0
    %1876 = vmatprep.subr.bf16.mxu0 0
    %1877 = vmatpush1.bf16.msra.mxu0 0
    %1878 = vmatprep.subr.bf16.mxu0 0
    %1879 = vmatpush1.bf16.msra.mxu0 0
    %1880 = vmatprep.subr.bf16.mxu0 %v1539
    %1881 = vmatpush1.bf16.msra.mxu0 %v1538
    %1882 = vmatprep.subr.bf16.mxu0 %v1537
    %1883 = vmatpush1.bf16.msra.mxu0 %v1536
    %1884 = vmatprep.subr.bf16.mxu0 %v1535
    %1885 = vmatpush1.bf16.msra.mxu0 %v1534
    %1886 = vmatprep.subr.bf16.mxu0 %v1533
    %1887 = vmatpush1.bf16.msra.mxu0 %v1532
    %1888 = vmatprep.subr.bf16.mxu0 0
    %1889 = vmatpush2.bf16.msra.mxu0 0
    %1890 = vmatprep.subr.bf16.mxu0 0
    %1891 = vmatpush2.bf16.msra.mxu0 0
    %1892 = vmatprep.subr.bf16.mxu0 0
    %1893 = vmatpush2.bf16.msra.mxu0 0
    %1894 = vmatprep.subr.bf16.mxu0 0
    %1895 = vmatpush2.bf16.msra.mxu0 0
    %1896 = vmatprep.subr.bf16.mxu0 0
    %1897 = vmatpush2.bf16.msra.mxu0 0
    %1898 = vmatprep.subr.bf16.mxu0 0
    %1899 = vmatpush2.bf16.msra.mxu0 0
    %1900 = vmatprep.subr.bf16.mxu0 0
    %1901 = vmatpush2.bf16.msra.mxu0 0
    %1902 = vmatprep.subr.bf16.mxu0 0
    %1903 = vmatpush2.bf16.msra.mxu0 0
    %1904 = vmatprep.mubr.bf16.mxu0 0
    %1905 = vmatmul.mubr.bf16.gmra.mxu0 %v1870
    %v1906 = vpop.f32.mrf.mxu0
    %v1907 = vadd.f32 0.0, %v1906
    %v1908 = vpop.f32.mrf.mxu0
    %v1909 = vadd.f32 0.0, %v1908
    %v1910 = vpop.f32.mrf.mxu0
    %v1911 = vpop.f32.mrf.mxu0
    %1912 = vdwg.mxu0
    %v1913 = vld [vmem:[#allocation3 + $0x30] sm:$0xff]
    %v1914 = vadd.f32 %v1913, %v1907
    %v1915 = vld [vmem:[#allocation3 + $0x48] sm:$0xff]
    %v1916 = vadd.f32 %v1915, %v1909
    %v1917 = vxor.u32 %v1914, 2147483648
    %v1918 = vmul.f32 %v1917, 1.442695
    %v1919 = vpow.pop %v1918
    %v1920 = vadd.f32 %v1919, 1.0
    %v1921 = vrcp.pop %v1920
    %v1922 = vmul.f32 1.0, %v1921
    %v1923 = vtanh.pop %v1914
    %v1924 = vxor.u32 %v1916, 2147483648
    %v1925 = vmul.f32 %v1924, 1.442695
    %v1926 = vpow.pop %v1925
    %v1927 = vadd.f32 %v1926, 1.0
    %v1928 = vrcp.pop %v1927
    %v1929 = vmul.f32 1.0, %v1928
    %v1930 = vtanh.pop %v1916
    %v1931 = vmul.f32 %v1922, %v1833
    %1933 = vrot.lane.b32.xlu0 %v1923, 64
    %v1934 = vpop.permute.xlu0 %1933
    %v1936 = vmul.f32 %v1922, %v1934
    %1938 = vrot.lane.b32.xlu0 %v1936, 32
    %v1939 = vpop.permute.xlu0 %1938
    %v1941 = vadd.f32 %v1931, %v1939
    %v1942 = vmul.f32 %v1929, %v1844
    %1944 = vrot.lane.b32.xlu0 %v1930, 64
    %v1945 = vpop.permute.xlu0 %1944
    %v1947 = vmul.f32 %v1929, %v1945
    %1949 = vrot.lane.b32.xlu0 %v1947, 32
    %v1950 = vpop.permute.xlu0 %1949
    %v1952 = vadd.f32 %v1942, %v1950
    %v1953 = vtanh.pop %v1941
    %1955 = vrot.lane.b32.xlu0 %v1953, 64
    %v1956 = vpop.permute.xlu0 %1955
    %v1958 = vmul.f32 %v1922, %v1956
    %v1959 = vtanh.pop %v1952
    %1961 = vrot.lane.b32.xlu0 %v1959, 64
    %v1962 = vpop.permute.xlu0 %1961
    %v1964 = vmul.f32 %v1929, %v1962
    %1966 = vrot.lane.b32.xlu0 %v1958, 32
    %v1967 = vpop.permute.xlu0 %1966
    %1969 = vst.msk [vmem:[#allocation2 + $0x18] sm:$0xff] %vm563, %v1967
    %1971 = vrot.lane.b32.xlu0 %v1964, 64
    %v1972 = vpop.permute.xlu0 %1971
    %1974 = vst.msk [vmem:[#allocation2 + $0x20] sm:$0xff] %vm569, %v1972
    %v1975 = vsel %vm563, %v1967, %v1972
    %v1976 = vpack.c.bf16 %v1975, %v1975
    %v1978 = vsel %vm462, %v1976, 0
    %1980 = vmatprep.subr.bf16.mxu0 0
    %1981 = vmatpush1.bf16.msra.mxu0 0
    %1982 = vmatprep.subr.bf16.mxu0 0
    %1983 = vmatpush1.bf16.msra.mxu0 0
    %1984 = vmatprep.subr.bf16.mxu0 0
    %1985 = vmatpush1.bf16.msra.mxu0 0
    %1986 = vmatprep.subr.bf16.mxu0 0
    %1987 = vmatpush1.bf16.msra.mxu0 0
    %1988 = vmatprep.subr.bf16.mxu0 %v1539
    %1989 = vmatpush1.bf16.msra.mxu0 %v1538
    %1990 = vmatprep.subr.bf16.mxu0 %v1537
    %1991 = vmatpush1.bf16.msra.mxu0 %v1536
    %1992 = vmatprep.subr.bf16.mxu0 %v1535
    %1993 = vmatpush1.bf16.msra.mxu0 %v1534
    %1994 = vmatprep.subr.bf16.mxu0 %v1533
    %1995 = vmatpush1.bf16.msra.mxu0 %v1532
    %1996 = vmatprep.subr.bf16.mxu0 0
    %1997 = vmatpush2.bf16.msra.mxu0 0
    %1998 = vmatprep.subr.bf16.mxu0 0
    %1999 = vmatpush2.bf16.msra.mxu0 0
    %2000 = vmatprep.subr.bf16.mxu0 0
    %2001 = vmatpush2.bf16.msra.mxu0 0
    %2002 = vmatprep.subr.bf16.mxu0 0
    %2003 = vmatpush2.bf16.msra.mxu0 0
    %2004 = vmatprep.subr.bf16.mxu0 0
    %2005 = vmatpush2.bf16.msra.mxu0 0
    %2006 = vmatprep.subr.bf16.mxu0 0
    %2007 = vmatpush2.bf16.msra.mxu0 0
    %2008 = vmatprep.subr.bf16.mxu0 0
    %2009 = vmatpush2.bf16.msra.mxu0 0
    %2010 = vmatprep.subr.bf16.mxu0 0
    %2011 = vmatpush2.bf16.msra.mxu0 0
    %2012 = vmatprep.mubr.bf16.mxu0 0
    %2013 = vmatmul.mubr.bf16.gmra.mxu0 %v1978
    %v2014 = vpop.f32.mrf.mxu0
    %v2015 = vadd.f32 0.0, %v2014
    %v2016 = vpop.f32.mrf.mxu0
    %v2017 = vadd.f32 0.0, %v2016
    %v2018 = vpop.f32.mrf.mxu0
    %v2019 = vpop.f32.mrf.mxu0
    %2020 = vdwg.mxu0
    %v2021 = vld [vmem:[#allocation3 + $0x40] sm:$0xff]
    %v2022 = vadd.f32 %v2021, %v2015
    %v2023 = vld [vmem:[#allocation3 + $0x38] sm:$0xff]
    %v2024 = vadd.f32 %v2023, %v2017
    %v2025 = vxor.u32 %v2022, 2147483648
    %v2026 = vmul.f32 %v2025, 1.442695
    %v2027 = vpow.pop %v2026
    %v2028 = vadd.f32 %v2027, 1.0
    %v2029 = vrcp.pop %v2028
    %v2030 = vmul.f32 1.0, %v2029
    %v2031 = vtanh.pop %v2022
    %v2032 = vxor.u32 %v2024, 2147483648
    %v2033 = vmul.f32 %v2032, 1.442695
    %v2034 = vpow.pop %v2033
    %v2035 = vadd.f32 %v2034, 1.0
    %v2036 = vrcp.pop %v2035
    %v2037 = vmul.f32 1.0, %v2036
    %v2038 = vtanh.pop %v2024
    %v2039 = vmul.f32 %v2030, %v1941
    %2041 = vrot.lane.b32.xlu0 %v2031, 64
    %v2042 = vpop.permute.xlu0 %2041
    %v2044 = vmul.f32 %v2030, %v2042
    %2046 = vrot.lane.b32.xlu0 %v2044, 32
    %v2047 = vpop.permute.xlu0 %2046
    %v2049 = vadd.f32 %v2039, %v2047
    %v2050 = vmul.f32 %v2037, %v1952
    %2052 = vrot.lane.b32.xlu0 %v2038, 64
    %v2053 = vpop.permute.xlu0 %2052
    %v2055 = vmul.f32 %v2037, %v2053
    %2057 = vrot.lane.b32.xlu0 %v2055, 32
    %v2058 = vpop.permute.xlu0 %2057
    %v2060 = vadd.f32 %v2050, %v2058
    %v2061 = vtanh.pop %v2049
    %2063 = vrot.lane.b32.xlu0 %v2061, 64
    %v2064 = vpop.permute.xlu0 %2063
    %v2066 = vmul.f32 %v2030, %v2064
    %v2067 = vtanh.pop %v2060
    %2069 = vrot.lane.b32.xlu0 %v2067, 64
    %v2070 = vpop.permute.xlu0 %2069
    %v2072 = vmul.f32 %v2037, %v2070
    %2074 = vrot.lane.b32.xlu0 %v2066, 32
    %v2075 = vpop.permute.xlu0 %2074
    %2077 = vst.msk [vmem:[#allocation2 + $0x20] sm:$0xff] %vm563, %v2075
    %2079 = vrot.lane.b32.xlu0 %v2072, 64
    %v2080 = vpop.permute.xlu0 %2079
    %2082 = vst.msk [vmem:[#allocation2 + $0x18] sm:$0xff] %vm569, %v2080
    %v2083 = vsel %vm563, %v2075, %v2080
    %v2084 = vpack.c.bf16 %v2083, %v2083
    %v2086 = vsel %vm462, %v2084, 0
    %2088 = vmatprep.subr.bf16.mxu0 0
    %2089 = vmatpush1.bf16.msra.mxu0 0
    %2090 = vmatprep.subr.bf16.mxu0 0
    %2091 = vmatpush1.bf16.msra.mxu0 0
    %2092 = vmatprep.subr.bf16.mxu0 0
    %2093 = vmatpush1.bf16.msra.mxu0 0
    %2094 = vmatprep.subr.bf16.mxu0 0
    %2095 = vmatpush1.bf16.msra.mxu0 0
    %2096 = vmatprep.subr.bf16.mxu0 %v1539
    %2097 = vmatpush1.bf16.msra.mxu0 %v1538
    %2098 = vmatprep.subr.bf16.mxu0 %v1537
    %2099 = vmatpush1.bf16.msra.mxu0 %v1536
    %2100 = vmatprep.subr.bf16.mxu0 %v1535
    %2101 = vmatpush1.bf16.msra.mxu0 %v1534
    %2102 = vmatprep.subr.bf16.mxu0 %v1533
    %2103 = vmatpush1.bf16.msra.mxu0 %v1532
    %2104 = vmatprep.subr.bf16.mxu0 0
    %2105 = vmatpush2.bf16.msra.mxu0 0
    %2106 = vmatprep.subr.bf16.mxu0 0
    %2107 = vmatpush2.bf16.msra.mxu0 0
    %2108 = vmatprep.subr.bf16.mxu0 0
    %2109 = vmatpush2.bf16.msra.mxu0 0
    %2110 = vmatprep.subr.bf16.mxu0 0
    %2111 = vmatpush2.bf16.msra.mxu0 0
    %2112 = vmatprep.subr.bf16.mxu0 0
    %2113 = vmatpush2.bf16.msra.mxu0 0
    %2114 = vmatprep.subr.bf16.mxu0 0
    %2115 = vmatpush2.bf16.msra.mxu0 0
    %2116 = vmatprep.subr.bf16.mxu0 0
    %2117 = vmatpush2.bf16.msra.mxu0 0
    %2118 = vmatprep.subr.bf16.mxu0 0
    %2119 = vmatpush2.bf16.msra.mxu0 0
    %2120 = vmatprep.mubr.bf16.mxu0 0
    %2121 = vmatmul.mubr.bf16.gmra.mxu0 %v2086
    %v2122 = vpop.f32.mrf.mxu0
    %v2123 = vadd.f32 0.0, %v2122
    %v2124 = vpop.f32.mrf.mxu0
    %v2125 = vadd.f32 0.0, %v2124
    %v2126 = vpop.f32.mrf.mxu0
    %v2127 = vpop.f32.mrf.mxu0
    %2128 = vdwg.mxu0
    %v2129 = vld [vmem:[#allocation3 + $0x50] sm:$0xff]
    %v2130 = vadd.f32 %v2129, %v2123
    %v2131 = vld [vmem:[#allocation3 + $0x28] sm:$0xff]
    %v2132 = vadd.f32 %v2131, %v2125
    %v2133 = vxor.u32 %v2130, 2147483648
    %v2134 = vmul.f32 %v2133, 1.442695
    %v2135 = vpow.pop %v2134
    %v2136 = vadd.f32 %v2135, 1.0
    %v2137 = vrcp.pop %v2136
    %v2138 = vmul.f32 1.0, %v2137
    %v2139 = vtanh.pop %v2130
    %v2140 = vxor.u32 %v2132, 2147483648
    %v2141 = vmul.f32 %v2140, 1.442695
    %v2142 = vpow.pop %v2141
    %v2143 = vadd.f32 %v2142, 1.0
    %v2144 = vrcp.pop %v2143
    %v2145 = vmul.f32 1.0, %v2144
    %v2146 = vtanh.pop %v2132
    %v2147 = vmul.f32 %v2138, %v2049
    %2149 = vrot.lane.b32.xlu0 %v2139, 64
    %v2150 = vpop.permute.xlu0 %2149
    %v2152 = vmul.f32 %v2138, %v2150
    %2154 = vrot.lane.b32.xlu0 %v2152, 32
    %v2155 = vpop.permute.xlu0 %2154
    %v2157 = vadd.f32 %v2147, %v2155
    %v2158 = vmul.f32 %v2145, %v2060
    %2160 = vrot.lane.b32.xlu0 %v2146, 64
    %v2161 = vpop.permute.xlu0 %2160
    %v2163 = vmul.f32 %v2145, %v2161
    %2165 = vrot.lane.b32.xlu0 %v2163, 32
    %v2166 = vpop.permute.xlu0 %2165
    %v2168 = vadd.f32 %v2158, %v2166
    %v2169 = vtanh.pop %v2157
    %2171 = vrot.lane.b32.xlu0 %v2169, 64
    %v2172 = vpop.permute.xlu0 %2171
    %v2174 = vmul.f32 %v2138, %v2172
    %v2175 = vtanh.pop %v2168
    %2177 = vrot.lane.b32.xlu0 %v2175, 64
    %v2178 = vpop.permute.xlu0 %2177
    %v2180 = vmul.f32 %v2145, %v2178
    %2182 = vrot.lane.b32.xlu0 %v2174, 32
    %v2183 = vpop.permute.xlu0 %2182
    %2185 = vst.msk [vmem:[#allocation2 + $0x28] sm:$0xff] %vm563, %v2183
    %2187 = vrot.lane.b32.xlu0 %v2180, 64
    %v2188 = vpop.permute.xlu0 %2187
    %2190 = vst.msk [vmem:[#allocation2 + $0x10] sm:$0xff] %vm569, %v2188
    %v2191 = vsel %vm563, %v2183, %v2188
    %v2192 = vpack.c.bf16 %v2191, %v2191
    %v2194 = vsel %vm462, %v2192, 0
    %2196 = vmatprep.subr.bf16.mxu0 0
    %2197 = vmatpush1.bf16.msra.mxu0 0
    %2198 = vmatprep.subr.bf16.mxu0 0
    %2199 = vmatpush1.bf16.msra.mxu0 0
    %2200 = vmatprep.subr.bf16.mxu0 0
    %2201 = vmatpush1.bf16.msra.mxu0 0
    %2202 = vmatprep.subr.bf16.mxu0 0
    %2203 = vmatpush1.bf16.msra.mxu0 0
    %2204 = vmatprep.subr.bf16.mxu0 %v1539
    %2205 = vmatpush1.bf16.msra.mxu0 %v1538
    %2206 = vmatprep.subr.bf16.mxu0 %v1537
    %2207 = vmatpush1.bf16.msra.mxu0 %v1536
    %2208 = vmatprep.subr.bf16.mxu0 %v1535
    %2209 = vmatpush1.bf16.msra.mxu0 %v1534
    %2210 = vmatprep.subr.bf16.mxu0 %v1533
    %2211 = vmatpush1.bf16.msra.mxu0 %v1532
    %2212 = vmatprep.subr.bf16.mxu0 0
    %2213 = vmatpush2.bf16.msra.mxu0 0
    %2214 = vmatprep.subr.bf16.mxu0 0
    %2215 = vmatpush2.bf16.msra.mxu0 0
    %2216 = vmatprep.subr.bf16.mxu0 0
    %2217 = vmatpush2.bf16.msra.mxu0 0
    %2218 = vmatprep.subr.bf16.mxu0 0
    %2219 = vmatpush2.bf16.msra.mxu0 0
    %2220 = vmatprep.subr.bf16.mxu0 0
    %2221 = vmatpush2.bf16.msra.mxu0 0
    %2222 = vmatprep.subr.bf16.mxu0 0
    %2223 = vmatpush2.bf16.msra.mxu0 0
    %2224 = vmatprep.subr.bf16.mxu0 0
    %2225 = vmatpush2.bf16.msra.mxu0 0
    %2226 = vmatprep.subr.bf16.mxu0 0
    %2227 = vmatpush2.bf16.msra.mxu0 0
    %2228 = vmatprep.mubr.bf16.mxu0 0
    %2229 = vmatmul.mubr.bf16.gmra.mxu0 %v2194
    %v2230 = vpop.f32.mrf.mxu0
    %v2231 = vadd.f32 0.0, %v2230
    %v2232 = vpop.f32.mrf.mxu0
    %v2233 = vadd.f32 0.0, %v2232
    %v2234 = vpop.f32.mrf.mxu0
    %v2235 = vpop.f32.mrf.mxu0
    %2236 = vdwg.mxu0
    %v2237 = vld [vmem:[#allocation3 + $0x60] sm:$0xff]
    %v2238 = vadd.f32 %v2237, %v2231
    %v2239 = vld [vmem:[#allocation3 + $0x18] sm:$0xff]
    %v2240 = vadd.f32 %v2239, %v2233
    %v2241 = vxor.u32 %v2238, 2147483648
    %v2242 = vmul.f32 %v2241, 1.442695
    %v2243 = vpow.pop %v2242
    %v2244 = vadd.f32 %v2243, 1.0
    %v2245 = vrcp.pop %v2244
    %v2246 = vmul.f32 1.0, %v2245
    %v2247 = vtanh.pop %v2238
    %v2248 = vxor.u32 %v2240, 2147483648
    %v2249 = vmul.f32 %v2248, 1.442695
    %v2250 = vpow.pop %v2249
    %v2251 = vadd.f32 %v2250, 1.0
    %v2252 = vrcp.pop %v2251
    %v2253 = vmul.f32 1.0, %v2252
    %v2254 = vtanh.pop %v2240
    %v2255 = vmul.f32 %v2246, %v2157
    %2257 = vrot.lane.b32.xlu0 %v2247, 64
    %v2258 = vpop.permute.xlu0 %2257
    %v2260 = vmul.f32 %v2246, %v2258
    %2262 = vrot.lane.b32.xlu0 %v2260, 32
    %v2263 = vpop.permute.xlu0 %2262
    %v2265 = vadd.f32 %v2255, %v2263
    %v2266 = vmul.f32 %v2253, %v2168
    %2268 = vrot.lane.b32.xlu0 %v2254, 64
    %v2269 = vpop.permute.xlu0 %2268
    %v2271 = vmul.f32 %v2253, %v2269
    %2273 = vrot.lane.b32.xlu0 %v2271, 32
    %v2274 = vpop.permute.xlu0 %2273
    %v2276 = vadd.f32 %v2266, %v2274
    %v2277 = vtanh.pop %v2265
    %2279 = vrot.lane.b32.xlu0 %v2277, 64
    %v2280 = vpop.permute.xlu0 %2279
    %v2282 = vmul.f32 %v2246, %v2280
    %v2283 = vtanh.pop %v2276
    %2285 = vrot.lane.b32.xlu0 %v2283, 64
    %v2286 = vpop.permute.xlu0 %2285
    %v2288 = vmul.f32 %v2253, %v2286
    %2290 = vrot.lane.b32.xlu0 %v2282, 32
    %v2291 = vpop.permute.xlu0 %2290
    %2293 = vst.msk [vmem:[#allocation2 + $0x30] sm:$0xff] %vm563, %v2291
    %2295 = vrot.lane.b32.xlu0 %v2288, 64
    %v2296 = vpop.permute.xlu0 %2295
    %2298 = vst.msk [vmem:[#allocation2 + $0x8] sm:$0xff] %vm569, %v2296
    %v2299 = vsel %vm563, %v2291, %v2296
    %v2300 = vpack.c.bf16 %v2299, %v2299
    %v2302 = vsel %vm462, %v2300, 0
    %2304 = vmatprep.subr.bf16.mxu0 0
    %2305 = vmatpush1.bf16.msra.mxu0 0
    %2306 = vmatprep.subr.bf16.mxu0 0
    %2307 = vmatpush1.bf16.msra.mxu0 0
    %2308 = vmatprep.subr.bf16.mxu0 0
    %2309 = vmatpush1.bf16.msra.mxu0 0
    %2310 = vmatprep.subr.bf16.mxu0 0
    %2311 = vmatpush1.bf16.msra.mxu0 0
    %2312 = vmatprep.subr.bf16.mxu0 %v1539
    %2313 = vmatpush1.bf16.msra.mxu0 %v1538
    %2314 = vmatprep.subr.bf16.mxu0 %v1537
    %2315 = vmatpush1.bf16.msra.mxu0 %v1536
    %2316 = vmatprep.subr.bf16.mxu0 %v1535
    %2317 = vmatpush1.bf16.msra.mxu0 %v1534
    %2318 = vmatprep.subr.bf16.mxu0 %v1533
    %2319 = vmatpush1.bf16.msra.mxu0 %v1532
    %2320 = vmatprep.subr.bf16.mxu0 0
    %2321 = vmatpush2.bf16.msra.mxu0 0
    %2322 = vmatprep.subr.bf16.mxu0 0
    %2323 = vmatpush2.bf16.msra.mxu0 0
    %2324 = vmatprep.subr.bf16.mxu0 0
    %2325 = vmatpush2.bf16.msra.mxu0 0
    %2326 = vmatprep.subr.bf16.mxu0 0
    %2327 = vmatpush2.bf16.msra.mxu0 0
    %2328 = vmatprep.subr.bf16.mxu0 0
    %2329 = vmatpush2.bf16.msra.mxu0 0
    %2330 = vmatprep.subr.bf16.mxu0 0
    %2331 = vmatpush2.bf16.msra.mxu0 0
    %2332 = vmatprep.subr.bf16.mxu0 0
    %2333 = vmatpush2.bf16.msra.mxu0 0
    %2334 = vmatprep.subr.bf16.mxu0 0
    %2335 = vmatpush2.bf16.msra.mxu0 0
    %2336 = vmatprep.mubr.bf16.mxu0 0
    %2337 = vmatmul.mubr.bf16.gmra.mxu0 %v2302
    %v2338 = vpop.f32.mrf.mxu0
    %v2339 = vadd.f32 0.0, %v2338
    %v2340 = vpop.f32.mrf.mxu0
    %v2341 = vadd.f32 0.0, %v2340
    %v2342 = vpop.f32.mrf.mxu0
    %v2343 = vpop.f32.mrf.mxu0
    %2344 = vdwg.mxu0
    %v2345 = vld [vmem:[#allocation3 + $0x70] sm:$0xff]
    %v2346 = vadd.f32 %v2345, %v2339
    %v2347 = vld [vmem:[#allocation3 + $0x8] sm:$0xff]
    %v2348 = vadd.f32 %v2347, %v2341
    %v2349 = vxor.u32 %v2346, 2147483648
    %v2350 = vmul.f32 %v2349, 1.442695
    %v2351 = vpow.pop %v2350
    %v2352 = vadd.f32 %v2351, 1.0
    %v2353 = vrcp.pop %v2352
    %v2354 = vmul.f32 1.0, %v2353
    %v2355 = vtanh.pop %v2346
    %v2356 = vxor.u32 %v2348, 2147483648
    %v2357 = vmul.f32 %v2356, 1.442695
    %v2358 = vpow.pop %v2357
    %v2359 = vadd.f32 %v2358, 1.0
    %v2360 = vrcp.pop %v2359
    %v2361 = vmul.f32 1.0, %v2360
    %v2362 = vtanh.pop %v2348
    %v2363 = vmul.f32 %v2354, %v2265
    %2365 = vrot.lane.b32.xlu0 %v2355, 64
    %v2366 = vpop.permute.xlu0 %2365
    %v2368 = vmul.f32 %v2354, %v2366
    %2370 = vrot.lane.b32.xlu0 %v2368, 32
    %v2371 = vpop.permute.xlu0 %2370
    %v2373 = vadd.f32 %v2363, %v2371
    %v2374 = vmul.f32 %v2361, %v2276
    %2376 = vrot.lane.b32.xlu0 %v2362, 64
    %v2377 = vpop.permute.xlu0 %2376
    %v2379 = vmul.f32 %v2361, %v2377
    %2381 = vrot.lane.b32.xlu0 %v2379, 32
    %v2382 = vpop.permute.xlu0 %2381
    %v2384 = vadd.f32 %v2374, %v2382
    %v2385 = vtanh.pop %v2373
    %2387 = vrot.lane.b32.xlu0 %v2385, 64
    %v2388 = vpop.permute.xlu0 %2387
    %v2390 = vmul.f32 %v2354, %v2388
    %v2391 = vtanh.pop %v2384
    %2393 = vrot.lane.b32.xlu0 %v2391, 64
    %v2394 = vpop.permute.xlu0 %2393
    %v2396 = vmul.f32 %v2361, %v2394
    %2398 = vrot.lane.b32.xlu0 %v2390, 32
    %v2399 = vpop.permute.xlu0 %2398
    %2401 = vst.msk [vmem:[#allocation2 + $0x38] sm:$0xff] %vm563, %v2399
    %2403 = vrot.lane.b32.xlu0 %v2396, 64
    %v2404 = vpop.permute.xlu0 %2403
    %2406 = vst.msk [vmem:[#allocation2] sm:$0xff] %vm569, %v2404
    %v2407 = vld [vmem:[#allocation2] sm:$0xff]
    %v2408 = vld [vmem:[#allocation2 + $0x8] sm:$0xff]
    %v2409 = vld [vmem:[#allocation2 + $0x10] sm:$0xff]
    %v2410 = vld [vmem:[#allocation2 + $0x18] sm:$0xff]
    %v2411 = vld [vmem:[#allocation2 + $0x20] sm:$0xff]
    %v2412 = vld [vmem:[#allocation2 + $0x28] sm:$0xff]
    %v2413 = vld [vmem:[#allocation2 + $0x30] sm:$0xff]
    %v2414 = vld [vmem:[#allocation2 + $0x38] sm:$0xff]
    %v2415 = vpack.c.bf16 %v2408, %v2407
    %v2416 = vpack.c.bf16 %v2410, %v2409
    %v2417 = vpack.c.bf16 %v2412, %v2411
    %v2418 = vpack.c.bf16 %v2414, %v2413
    %v2419 = vld [vmem:[%s16] sm:$0xf]
    %v2420 = vld [vmem:[%s16 + $0x4] sm:$0xf]
    %v2421 = vld [vmem:[%s16 + $0x8] sm:$0xf]
    %v2422 = vld [vmem:[%s16 + $0xc] sm:$0xf]
    %v2423 = vld [vmem:[%s16 + $0x10] sm:$0xf]
    %v2424 = vld [vmem:[%s16 + $0x14] sm:$0xf]
    %v2425 = vld [vmem:[%s16 + $0x18] sm:$0xf]
    %v2426 = vld [vmem:[%s16 + $0x1c] sm:$0xf]
    %v2427 = vld [vmem:[#allocation23] sm:$0x1]
    %v2429 = vlaneseq
    %v2430 = vshrl.u32 %v2429, 7
    %v2431 = vsub.s32 0, %v2430
    %v2432 = vrot.slane %v2427, %v2431
    %v2442 = vunpack.c.l.b16 %v2419
    %v2443 = vunpack.c.l.b16 %v2420
    %v2444 = vunpack.c.l.b16 %v2421
    %v2445 = vunpack.c.l.b16 %v2422
    %v2446 = vunpack.c.l.b16 %v2423
    %v2447 = vunpack.c.l.b16 %v2424
    %v2448 = vunpack.c.l.b16 %v2425
    %v2449 = vunpack.c.l.b16 %v2426
    %v2450 = vpack.c.b16 %v2443, %v2442
    %v2451 = vpack.c.b16 %v2445, %v2444
    %v2452 = vpack.c.b16 %v2447, %v2446
    %v2453 = vpack.c.b16 %v2449, %v2448
    %v2459 = vsel %vm462, %v2415, 0
    %v2462 = vsel %vm462, %v2416, 0
    %v2465 = vsel %vm462, %v2417, 0
    %v2468 = vsel %vm462, %v2418, 0
    %2470 = vmatprep.subr.bf16.mxu0 0
    %2471 = vmatpush1.bf16.msra.mxu0 0
    %2472 = vmatprep.subr.bf16.mxu0 0
    %2473 = vmatpush1.bf16.msra.mxu0 0
    %2474 = vmatprep.subr.bf16.mxu0 0
    %2475 = vmatpush1.bf16.msra.mxu0 0
    %2476 = vmatprep.subr.bf16.mxu0 0
    %2477 = vmatpush1.bf16.msra.mxu0 0
    %2478 = vmatprep.subr.bf16.mxu0 0
    %2479 = vmatpush1.bf16.msra.mxu0 %v2453
    %2480 = vmatprep.subr.bf16.mxu0 0
    %2481 = vmatpush1.bf16.msra.mxu0 %v2452
    %2482 = vmatprep.subr.bf16.mxu0 0
    %2483 = vmatpush1.bf16.msra.mxu0 %v2451
    %2484 = vmatprep.subr.bf16.mxu0 0
    %2485 = vmatpush1.bf16.msra.mxu0 %v2450
    %2486 = vmatprep.subr.bf16.mxu0 0
    %2487 = vmatpush2.bf16.msra.mxu0 0
    %2488 = vmatprep.subr.bf16.mxu0 0
    %2489 = vmatpush2.bf16.msra.mxu0 0
    %2490 = vmatprep.subr.bf16.mxu0 0
    %2491 = vmatpush2.bf16.msra.mxu0 0
    %2492 = vmatprep.subr.bf16.mxu0 0
    %2493 = vmatpush2.bf16.msra.mxu0 0
    %2494 = vmatprep.subr.bf16.mxu0 0
    %2495 = vmatpush2.bf16.msra.mxu0 0
    %2496 = vmatprep.subr.bf16.mxu0 0
    %2497 = vmatpush2.bf16.msra.mxu0 0
    %2498 = vmatprep.subr.bf16.mxu0 0
    %2499 = vmatpush2.bf16.msra.mxu0 0
    %2500 = vmatprep.subr.bf16.mxu0 0
    %2501 = vmatpush2.bf16.msra.mxu0 0
    %2502 = vmatprep.mubr.bf16.mxu0 0
    %2503 = vmatmul.mubr.bf16.gmra.mxu0 %v2459
    %v2504 = vpop.f32.mrf.mxu0
    %v2505 = vadd.f32 %v2432, %v2504
    %v2506 = vpop.f32.mrf.mxu0
    %v2507 = vpop.f32.mrf.mxu0
    %v2508 = vadd.f32 %v2432, %v2507
    %v2509 = vpop.f32.mrf.mxu0
    %2510 = vmatprep.mubr.bf16.mxu0 0
    %2511 = vmatmul.mubr.bf16.gmra.mxu0 %v2462
    %v2512 = vpop.f32.mrf.mxu0
    %v2513 = vadd.f32 %v2432, %v2512
    %v2514 = vpop.f32.mrf.mxu0
    %v2515 = vpop.f32.mrf.mxu0
    %v2516 = vadd.f32 %v2432, %v2515
    %v2517 = vpop.f32.mrf.mxu0
    %2518 = vmatprep.mubr.bf16.mxu0 0
    %2519 = vmatmul.mubr.bf16.gmra.mxu0 %v2465
    %v2520 = vpop.f32.mrf.mxu0
    %v2521 = vadd.f32 %v2432, %v2520
    %v2522 = vpop.f32.mrf.mxu0
    %v2523 = vpop.f32.mrf.mxu0
    %v2524 = vadd.f32 %v2432, %v2523
    %v2525 = vpop.f32.mrf.mxu0
    %2526 = vmatprep.mubr.bf16.mxu0 0
    %2527 = vmatmul.mubr.bf16.gmra.mxu0 %v2468
    %v2528 = vpop.f32.mrf.mxu0
    %v2529 = vadd.f32 %v2432, %v2528
    %v2530 = vpop.f32.mrf.mxu0
    %v2531 = vpop.f32.mrf.mxu0
    %v2532 = vadd.f32 %v2432, %v2531
    %v2533 = vpop.f32.mrf.mxu0
    %2534 = vdwg.mxu0
    %v2535 = vtanh.pop %v2505
    %v2536 = vtanh.pop %v2508
    %v2537 = vtanh.pop %v2513
    %v2538 = vtanh.pop %v2516
    %v2539 = vtanh.pop %v2521
    %v2540 = vtanh.pop %v2524
    %v2541 = vtanh.pop %v2529
    %v2542 = vtanh.pop %v2532
    %v2543 = vmul.f32 %v2535, %v2535
    %v2544 = vmul.f32 %v2536, %v2536
    %v2545 = vmul.f32 %v2537, %v2537
    %v2546 = vmul.f32 %v2538, %v2538
    %v2547 = vmul.f32 %v2539, %v2539
    %v2548 = vmul.f32 %v2540, %v2540
    %v2549 = vmul.f32 %v2541, %v2541
    %v2550 = vmul.f32 %v2542, %v2542
    %v2551 = vadd.f32 %v2543, %v2544
    %v2552 = vadd.f32 %v2551, %v2545
    %v2553 = vadd.f32 %v2552, %v2546
    %v2554 = vadd.f32 %v2553, %v2547
    %v2555 = vadd.f32 %v2554, %v2548
    %v2556 = vadd.f32 %v2555, %v2549
    %v2557 = vadd.f32 %v2556, %v2550
    %v2558 = vrsqrt.pop %v2557
    %v2559 = vmul.f32 %v2557, %v2558
    %vm2560 = vcmp.eq.f32.partialorder %v2557, inf
    %v2561 = vsel %vm2560, %v2557, %v2559
    %vm2562 = vcmp.eq.f32.partialorder %v2557, 0.0
    %v2563 = vand.u32 %v2557, 2147483648
    %v2564 = vsel %vm2562, %v2563, %v2561
    %v2565 = vmax.f32 %v2564, 1e-12
    %v2566 = vrcp.pop %v2565
    %v2567 = vmul.f32 %v2535, %v2566
    %v2568 = vmul.f32 %v2536, %v2566
    %v2569 = vmul.f32 %v2537, %v2566
    %v2570 = vmul.f32 %v2538, %v2566
    %v2571 = vmul.f32 %v2539, %v2566
    %v2572 = vmul.f32 %v2540, %v2566
    %v2573 = vmul.f32 %v2541, %v2566
    %v2574 = vmul.f32 %v2542, %v2566
    %2575 = vst.msk [vmem:[%s21] sm:$0xff] %vm563, %v2567
    %2576 = vst.msk [vmem:[%s21 + $0x8] sm:$0xff] %vm563, %v2568
    %2577 = vst.msk [vmem:[%s21 + $0x10] sm:$0xff] %vm563, %v2569
    %2578 = vst.msk [vmem:[%s21 + $0x18] sm:$0xff] %vm563, %v2570
    %2579 = vst.msk [vmem:[%s21 + $0x20] sm:$0xff] %vm563, %v2571
    %2580 = vst.msk [vmem:[%s21 + $0x28] sm:$0xff] %vm563, %v2572
    %2581 = vst.msk [vmem:[%s21 + $0x30] sm:$0xff] %vm563, %v2573
    %2582 = vst.msk [vmem:[%s21 + $0x38] sm:$0xff] %vm563, %v2574
    %v2583 = vld [vmem:[#allocation2] sm:$0xff]
    %v2584 = vld [vmem:[#allocation2 + $0x8] sm:$0xff]
    %v2585 = vld [vmem:[#allocation2 + $0x10] sm:$0xff]
    %v2586 = vld [vmem:[#allocation2 + $0x18] sm:$0xff]
    %v2587 = vld [vmem:[#allocation2 + $0x20] sm:$0xff]
    %v2588 = vld [vmem:[#allocation2 + $0x28] sm:$0xff]
    %v2589 = vld [vmem:[#allocation2 + $0x30] sm:$0xff]
    %v2590 = vld [vmem:[#allocation2 + $0x38] sm:$0xff]
    %v2591 = vpack.c.bf16 %v2584, %v2583
    %v2592 = vpack.c.bf16 %v2586, %v2585
    %v2593 = vpack.c.bf16 %v2588, %v2587
    %v2594 = vpack.c.bf16 %v2590, %v2589
    %v2595 = vld [vmem:[#allocation11] sm:$0xff]
    %v2596 = vld [vmem:[#allocation11 + $0x8] sm:$0xff]
    %v2597 = vld [vmem:[#allocation11 + $0x10] sm:$0xff]
    %v2598 = vld [vmem:[#allocation11 + $0x18] sm:$0xff]
    %v2599 = vld [vmem:[#allocation11 + $0x20] sm:$0xff]
    %v2600 = vld [vmem:[#allocation11 + $0x28] sm:$0xff]
    %v2601 = vld [vmem:[#allocation11 + $0x30] sm:$0xff]
    %v2602 = vld [vmem:[#allocation11 + $0x38] sm:$0xff]
    %v2603 = vld [vmem:[#allocation14] sm:$0x3]
    %v2605 = vlaneseq
    %v2606 = vshrl.u32 %v2605, 7
    %v2607 = vsub.s32 0, %v2606
    %v2608 = vrot.slane %v2603, %v2607
    %v2609 = vlaneseq
    %v2610 = vshrl.u32 %v2609, 7
    %v2611 = vsub.s32 1, %v2610
    %v2612 = vrot.slane %v2603, %v2611
    %v2623 = vunpack.c.l.b16 %v2595
    %v2624 = vunpack.c.h.b16 %v2595
    %v2625 = vunpack.c.l.b16 %v2596
    %v2626 = vunpack.c.h.b16 %v2596
    %v2627 = vunpack.c.l.b16 %v2597
    %v2628 = vunpack.c.h.b16 %v2597
    %v2629 = vunpack.c.l.b16 %v2598
    %v2630 = vunpack.c.h.b16 %v2598
    %v2631 = vunpack.c.l.b16 %v2599
    %v2632 = vunpack.c.h.b16 %v2599
    %v2633 = vunpack.c.l.b16 %v2600
    %v2634 = vunpack.c.h.b16 %v2600
    %v2635 = vunpack.c.l.b16 %v2601
    %v2636 = vunpack.c.h.b16 %v2601
    %v2637 = vunpack.c.l.b16 %v2602
    %v2638 = vunpack.c.h.b16 %v2602
    %v2639 = vpack.c.b16 %v2625, %v2623
    %v2640 = vpack.c.b16 %v2626, %v2624
    %v2641 = vpack.c.b16 %v2629, %v2627
    %v2642 = vpack.c.b16 %v2630, %v2628
    %v2643 = vpack.c.b16 %v2633, %v2631
    %v2644 = vpack.c.b16 %v2634, %v2632
    %v2645 = vpack.c.b16 %v2637, %v2635
    %v2646 = vpack.c.b16 %v2638, %v2636
    %v2656 = vsel %vm462, %v2591, 0
    %v2659 = vsel %vm462, %v2592, 0
    %v2662 = vsel %vm462, %v2593, 0
    %v2665 = vsel %vm462, %v2594, 0
    %2667 = vmatprep.subr.bf16.mxu0 0
    %2668 = vmatpush1.bf16.msra.mxu0 0
    %2669 = vmatprep.subr.bf16.mxu0 0
    %2670 = vmatpush1.bf16.msra.mxu0 0
    %2671 = vmatprep.subr.bf16.mxu0 0
    %2672 = vmatpush1.bf16.msra.mxu0 0
    %2673 = vmatprep.subr.bf16.mxu0 0
    %2674 = vmatpush1.bf16.msra.mxu0 0
    %2675 = vmatprep.subr.bf16.mxu0 %v2646
    %2676 = vmatpush1.bf16.msra.mxu0 %v2645
    %2677 = vmatprep.subr.bf16.mxu0 %v2644
    %2678 = vmatpush1.bf16.msra.mxu0 %v2643
    %2679 = vmatprep.subr.bf16.mxu0 %v2642
    %2680 = vmatpush1.bf16.msra.mxu0 %v2641
    %2681 = vmatprep.subr.bf16.mxu0 %v2640
    %2682 = vmatpush1.bf16.msra.mxu0 %v2639
    %2683 = vmatprep.subr.bf16.mxu0 0
    %2684 = vmatpush2.bf16.msra.mxu0 0
    %2685 = vmatprep.subr.bf16.mxu0 0
    %2686 = vmatpush2.bf16.msra.mxu0 0
    %2687 = vmatprep.subr.bf16.mxu0 0
    %2688 = vmatpush2.bf16.msra.mxu0 0
    %2689 = vmatprep.subr.bf16.mxu0 0
    %2690 = vmatpush2.bf16.msra.mxu0 0
    %2691 = vmatprep.subr.bf16.mxu0 0
    %2692 = vmatpush2.bf16.msra.mxu0 0
    %2693 = vmatprep.subr.bf16.mxu0 0
    %2694 = vmatpush2.bf16.msra.mxu0 0
    %2695 = vmatprep.subr.bf16.mxu0 0
    %2696 = vmatpush2.bf16.msra.mxu0 0
    %2697 = vmatprep.subr.bf16.mxu0 0
    %2698 = vmatpush2.bf16.msra.mxu0 0
    %2699 = vmatprep.mubr.bf16.mxu0 0
    %2700 = vmatmul.mubr.bf16.gmra.mxu0 %v2656
    %v2701 = vpop.f32.mrf.mxu0
    %v2702 = vadd.f32 %v2608, %v2701
    %v2703 = vpop.f32.mrf.mxu0
    %v2704 = vadd.f32 %v2612, %v2703
    %v2705 = vpop.f32.mrf.mxu0
    %v2706 = vadd.f32 %v2608, %v2705
    %v2707 = vpop.f32.mrf.mxu0
    %v2708 = vadd.f32 %v2612, %v2707
    %2709 = vmatprep.mubr.bf16.mxu0 0
    %2710 = vmatmul.mubr.bf16.gmra.mxu0 %v2659
    %v2711 = vpop.f32.mrf.mxu0
    %v2712 = vadd.f32 %v2608, %v2711
    %v2713 = vpop.f32.mrf.mxu0
    %v2714 = vadd.f32 %v2612, %v2713
    %v2715 = vpop.f32.mrf.mxu0
    %v2716 = vadd.f32 %v2608, %v2715
    %v2717 = vpop.f32.mrf.mxu0
    %v2718 = vadd.f32 %v2612, %v2717
    %2719 = vmatprep.mubr.bf16.mxu0 0
    %2720 = vmatmul.mubr.bf16.gmra.mxu0 %v2662
    %v2721 = vpop.f32.mrf.mxu0
    %v2722 = vadd.f32 %v2608, %v2721
    %v2723 = vpop.f32.mrf.mxu0
    %v2724 = vadd.f32 %v2612, %v2723
    %v2725 = vpop.f32.mrf.mxu0
    %v2726 = vadd.f32 %v2608, %v2725
    %v2727 = vpop.f32.mrf.mxu0
    %v2728 = vadd.f32 %v2612, %v2727
    %2729 = vmatprep.mubr.bf16.mxu0 0
    %2730 = vmatmul.mubr.bf16.gmra.mxu0 %v2665
    %v2731 = vpop.f32.mrf.mxu0
    %v2732 = vadd.f32 %v2608, %v2731
    %v2733 = vpop.f32.mrf.mxu0
    %v2734 = vadd.f32 %v2612, %v2733
    %v2735 = vpop.f32.mrf.mxu0
    %v2736 = vadd.f32 %v2608, %v2735
    %v2737 = vpop.f32.mrf.mxu0
    %v2738 = vadd.f32 %v2612, %v2737
    %2739 = vdwg.mxu0
    %2740 = vst [vmem:[#allocation3] sm:$0xff] %v2702
    %2741 = vst [vmem:[#allocation3 + $0x8] sm:$0xff] %v2704
    %2742 = vst [vmem:[#allocation3 + $0x10] sm:$0xff] %v2706
    %2743 = vst [vmem:[#allocation3 + $0x18] sm:$0xff] %v2708
    %2744 = vst [vmem:[#allocation3 + $0x20] sm:$0xff] %v2712
    %2745 = vst [vmem:[#allocation3 + $0x28] sm:$0xff] %v2714
    %2746 = vst [vmem:[#allocation3 + $0x30] sm:$0xff] %v2716
    %2747 = vst [vmem:[#allocation3 + $0x38] sm:$0xff] %v2718
    %2748 = vst [vmem:[#allocation3 + $0x40] sm:$0xff] %v2722
    %2749 = vst [vmem:[#allocation3 + $0x48] sm:$0xff] %v2724
    %2750 = vst [vmem:[#allocation3 + $0x50] sm:$0xff] %v2726
    %2751 = vst [vmem:[#allocation3 + $0x58] sm:$0xff] %v2728
    %2752 = vst [vmem:[#allocation3 + $0x60] sm:$0xff] %v2732
    %2753 = vst [vmem:[#allocation3 + $0x68] sm:$0xff] %v2734
    %2754 = vst [vmem:[#allocation3 + $0x70] sm:$0xff] %v2736
    %2755 = vst [vmem:[#allocation3 + $0x78] sm:$0xff] %v2738
    %v2756 = vld [vmem:[#allocation12] sm:$0xff]
    %v2757 = vld [vmem:[#allocation12 + $0x8] sm:$0xff]
    %v2758 = vld [vmem:[#allocation12 + $0x10] sm:$0xff]
    %v2759 = vld [vmem:[#allocation12 + $0x18] sm:$0xff]
    %v2760 = vld [vmem:[#allocation12 + $0x20] sm:$0xff]
    %v2761 = vld [vmem:[#allocation12 + $0x28] sm:$0xff]
    %v2762 = vld [vmem:[#allocation12 + $0x30] sm:$0xff]
    %v2763 = vld [vmem:[#allocation12 + $0x38] sm:$0xff]
    %v2772 = vunpack.c.l.b16 %v2756
    %v2773 = vunpack.c.h.b16 %v2756
    %v2774 = vunpack.c.l.b16 %v2757
    %v2775 = vunpack.c.h.b16 %v2757
    %v2776 = vunpack.c.l.b16 %v2758
    %v2777 = vunpack.c.h.b16 %v2758
    %v2778 = vunpack.c.l.b16 %v2759
    %v2779 = vunpack.c.h.b16 %v2759
    %v2780 = vunpack.c.l.b16 %v2760
    %v2781 = vunpack.c.h.b16 %v2760
    %v2782 = vunpack.c.l.b16 %v2761
    %v2783 = vunpack.c.h.b16 %v2761
    %v2784 = vunpack.c.l.b16 %v2762
    %v2785 = vunpack.c.h.b16 %v2762
    %v2786 = vunpack.c.l.b16 %v2763
    %v2787 = vunpack.c.h.b16 %v2763
    %v2788 = vpack.c.b16 %v2774, %v2772
    %v2789 = vpack.c.b16 %v2775, %v2773
    %v2790 = vpack.c.b16 %v2778, %v2776
    %v2791 = vpack.c.b16 %v2779, %v2777
    %v2792 = vpack.c.b16 %v2782, %v2780
    %v2793 = vpack.c.b16 %v2783, %v2781
    %v2794 = vpack.c.b16 %v2786, %v2784
    %v2795 = vpack.c.b16 %v2787, %v2785
    %2804 = vmatprep.subr.bf16.mxu0 0
    %2805 = vmatpush1.bf16.msra.mxu0 0
    %2806 = vmatprep.subr.bf16.mxu0 0
    %2807 = vmatpush1.bf16.msra.mxu0 0
    %2808 = vmatprep.subr.bf16.mxu0 0
    %2809 = vmatpush1.bf16.msra.mxu0 0
    %2810 = vmatprep.subr.bf16.mxu0 0
    %2811 = vmatpush1.bf16.msra.mxu0 0
    %2812 = vmatprep.subr.bf16.mxu0 %v2795
    %2813 = vmatpush1.bf16.msra.mxu0 %v2794
    %2814 = vmatprep.subr.bf16.mxu0 %v2793
    %2815 = vmatpush1.bf16.msra.mxu0 %v2792
    %2816 = vmatprep.subr.bf16.mxu0 %v2791
    %2817 = vmatpush1.bf16.msra.mxu0 %v2790
    %2818 = vmatprep.subr.bf16.mxu0 %v2789
    %2819 = vmatpush1.bf16.msra.mxu0 %v2788
    %2820 = vmatprep.subr.bf16.mxu0 0
    %2821 = vmatpush2.bf16.msra.mxu0 0
    %2822 = vmatprep.subr.bf16.mxu0 0
    %2823 = vmatpush2.bf16.msra.mxu0 0
    %2824 = vmatprep.subr.bf16.mxu0 0
    %2825 = vmatpush2.bf16.msra.mxu0 0
    %2826 = vmatprep.subr.bf16.mxu0 0
    %2827 = vmatpush2.bf16.msra.mxu0 0
    %2828 = vmatprep.subr.bf16.mxu0 0
    %2829 = vmatpush2.bf16.msra.mxu0 0
    %2830 = vmatprep.subr.bf16.mxu0 0
    %2831 = vmatpush2.bf16.msra.mxu0 0
    %2832 = vmatprep.subr.bf16.mxu0 0
    %2833 = vmatpush2.bf16.msra.mxu0 0
    %2834 = vmatprep.subr.bf16.mxu0 0
    %2835 = vmatpush2.bf16.msra.mxu0 0
    %2836 = vmatprep.mubr.bf16.mxu0 0
    %2837 = vmatmul.mubr.bf16.gmra.mxu0 %v464
    %v2838 = vpop.f32.mrf.mxu0
    %v2839 = vadd.f32 0.0, %v2838
    %v2840 = vpop.f32.mrf.mxu0
    %v2841 = vadd.f32 0.0, %v2840
    %v2842 = vpop.f32.mrf.mxu0
    %v2843 = vpop.f32.mrf.mxu0
    %2844 = vdwg.mxu0
    %v2845 = vld [vmem:[#allocation3] sm:$0xff]
    %v2846 = vadd.f32 %v2845, %v2839
    %v2847 = vld [vmem:[#allocation3 + $0x78] sm:$0xff]
    %v2848 = vadd.f32 %v2847, %v2841
    %v2849 = vxor.u32 %v2846, 2147483648
    %v2850 = vmul.f32 %v2849, 1.442695
    %v2851 = vpow.pop %v2850
    %v2852 = vadd.f32 %v2851, 1.0
    %v2853 = vrcp.pop %v2852
    %v2854 = vmul.f32 1.0, %v2853
    %v2855 = vtanh.pop %v2846
    %v2856 = vxor.u32 %v2848, 2147483648
    %v2857 = vmul.f32 %v2856, 1.442695
    %v2858 = vpow.pop %v2857
    %v2859 = vadd.f32 %v2858, 1.0
    %v2860 = vrcp.pop %v2859
    %v2861 = vmul.f32 1.0, %v2860
    %v2862 = vtanh.pop %v2848
    %v2863 = vmul.f32 %v2854, 0.0
    %2865 = vrot.lane.b32.xlu0 %v2855, 64
    %v2866 = vpop.permute.xlu0 %2865
    %v2868 = vmul.f32 %v2854, %v2866
    %2870 = vrot.lane.b32.xlu0 %v2868, 32
    %v2871 = vpop.permute.xlu0 %2870
    %v2873 = vadd.f32 %v2863, %v2871
    %v2874 = vmul.f32 %v2861, 0.0
    %2876 = vrot.lane.b32.xlu0 %v2862, 64
    %v2877 = vpop.permute.xlu0 %2876
    %v2879 = vmul.f32 %v2861, %v2877
    %2881 = vrot.lane.b32.xlu0 %v2879, 32
    %v2882 = vpop.permute.xlu0 %2881
    %v2884 = vadd.f32 %v2874, %v2882
    %v2885 = vtanh.pop %v2873
    %2887 = vrot.lane.b32.xlu0 %v2885, 64
    %v2888 = vpop.permute.xlu0 %2887
    %v2890 = vmul.f32 %v2854, %v2888
    %v2891 = vtanh.pop %v2884
    %2893 = vrot.lane.b32.xlu0 %v2891, 64
    %v2894 = vpop.permute.xlu0 %2893
    %v2896 = vmul.f32 %v2861, %v2894
    %2898 = vrot.lane.b32.xlu0 %v2890, 32
    %v2899 = vpop.permute.xlu0 %2898
    %2901 = vst.msk [vmem:[#allocation2] sm:$0xff] %vm563, %v2899
    %2903 = vrot.lane.b32.xlu0 %v2896, 64
    %v2904 = vpop.permute.xlu0 %2903
    %2906 = vst.msk [vmem:[#allocation2 + $0x38] sm:$0xff] %vm569, %v2904
    %v2907 = vsel %vm563, %v2899, %v2904
    %v2908 = vpack.c.bf16 %v2907, %v2907
    %v2910 = vsel %vm462, %v2908, 0
    %2912 = vmatprep.subr.bf16.mxu0 0
    %2913 = vmatpush1.bf16.msra.mxu0 0
    %2914 = vmatprep.subr.bf16.mxu0 0
    %2915 = vmatpush1.bf16.msra.mxu0 0
    %2916 = vmatprep.subr.bf16.mxu0 0
    %2917 = vmatpush1.bf16.msra.mxu0 0
    %2918 = vmatprep.subr.bf16.mxu0 0
    %2919 = vmatpush1.bf16.msra.mxu0 0
    %2920 = vmatprep.subr.bf16.mxu0 %v2795
    %2921 = vmatpush1.bf16.msra.mxu0 %v2794
    %2922 = vmatprep.subr.bf16.mxu0 %v2793
    %2923 = vmatpush1.bf16.msra.mxu0 %v2792
    %2924 = vmatprep.subr.bf16.mxu0 %v2791
    %2925 = vmatpush1.bf16.msra.mxu0 %v2790
    %2926 = vmatprep.subr.bf16.mxu0 %v2789
    %2927 = vmatpush1.bf16.msra.mxu0 %v2788
    %2928 = vmatprep.subr.bf16.mxu0 0
    %2929 = vmatpush2.bf16.msra.mxu0 0
    %2930 = vmatprep.subr.bf16.mxu0 0
    %2931 = vmatpush2.bf16.msra.mxu0 0
    %2932 = vmatprep.subr.bf16.mxu0 0
    %2933 = vmatpush2.bf16.msra.mxu0 0
    %2934 = vmatprep.subr.bf16.mxu0 0
    %2935 = vmatpush2.bf16.msra.mxu0 0
    %2936 = vmatprep.subr.bf16.mxu0 0
    %2937 = vmatpush2.bf16.msra.mxu0 0
    %2938 = vmatprep.subr.bf16.mxu0 0
    %2939 = vmatpush2.bf16.msra.mxu0 0
    %2940 = vmatprep.subr.bf16.mxu0 0
    %2941 = vmatpush2.bf16.msra.mxu0 0
    %2942 = vmatprep.subr.bf16.mxu0 0
    %2943 = vmatpush2.bf16.msra.mxu0 0
    %2944 = vmatprep.mubr.bf16.mxu0 0
    %2945 = vmatmul.mubr.bf16.gmra.mxu0 %v2910
    %v2946 = vpop.f32.mrf.mxu0
    %v2947 = vadd.f32 0.0, %v2946
    %v2948 = vpop.f32.mrf.mxu0
    %v2949 = vadd.f32 0.0, %v2948
    %v2950 = vpop.f32.mrf.mxu0
    %v2951 = vpop.f32.mrf.mxu0
    %2952 = vdwg.mxu0
    %v2953 = vld [vmem:[#allocation3 + $0x10] sm:$0xff]
    %v2954 = vadd.f32 %v2953, %v2947
    %v2955 = vld [vmem:[#allocation3 + $0x68] sm:$0xff]
    %v2956 = vadd.f32 %v2955, %v2949
    %v2957 = vxor.u32 %v2954, 2147483648
    %v2958 = vmul.f32 %v2957, 1.442695
    %v2959 = vpow.pop %v2958
    %v2960 = vadd.f32 %v2959, 1.0
    %v2961 = vrcp.pop %v2960
    %v2962 = vmul.f32 1.0, %v2961
    %v2963 = vtanh.pop %v2954
    %v2964 = vxor.u32 %v2956, 2147483648
    %v2965 = vmul.f32 %v2964, 1.442695
    %v2966 = vpow.pop %v2965
    %v2967 = vadd.f32 %v2966, 1.0
    %v2968 = vrcp.pop %v2967
    %v2969 = vmul.f32 1.0, %v2968
    %v2970 = vtanh.pop %v2956
    %v2971 = vmul.f32 %v2962, %v2873
    %2973 = vrot.lane.b32.xlu0 %v2963, 64
    %v2974 = vpop.permute.xlu0 %2973
    %v2976 = vmul.f32 %v2962, %v2974
    %2978 = vrot.lane.b32.xlu0 %v2976, 32
    %v2979 = vpop.permute.xlu0 %2978
    %v2981 = vadd.f32 %v2971, %v2979
    %v2982 = vmul.f32 %v2969, %v2884
    %2984 = vrot.lane.b32.xlu0 %v2970, 64
    %v2985 = vpop.permute.xlu0 %2984
    %v2987 = vmul.f32 %v2969, %v2985
    %2989 = vrot.lane.b32.xlu0 %v2987, 32
    %v2990 = vpop.permute.xlu0 %2989
    %v2992 = vadd.f32 %v2982, %v2990
    %v2993 = vtanh.pop %v2981
    %2995 = vrot.lane.b32.xlu0 %v2993, 64
    %v2996 = vpop.permute.xlu0 %2995
    %v2998 = vmul.f32 %v2962, %v2996
    %v2999 = vtanh.pop %v2992
    %3001 = vrot.lane.b32.xlu0 %v2999, 64
    %v3002 = vpop.permute.xlu0 %3001
    %v3004 = vmul.f32 %v2969, %v3002
    %3006 = vrot.lane.b32.xlu0 %v2998, 32
    %v3007 = vpop.permute.xlu0 %3006
    %3009 = vst.msk [vmem:[#allocation2 + $0x8] sm:$0xff] %vm563, %v3007
    %3011 = vrot.lane.b32.xlu0 %v3004, 64
    %v3012 = vpop.permute.xlu0 %3011
    %3014 = vst.msk [vmem:[#allocation2 + $0x30] sm:$0xff] %vm569, %v3012
    %v3015 = vsel %vm563, %v3007, %v3012
    %v3016 = vpack.c.bf16 %v3015, %v3015
    %v3018 = vsel %vm462, %v3016, 0
    %3020 = vmatprep.subr.bf16.mxu0 0
    %3021 = vmatpush1.bf16.msra.mxu0 0
    %3022 = vmatprep.subr.bf16.mxu0 0
    %3023 = vmatpush1.bf16.msra.mxu0 0
    %3024 = vmatprep.subr.bf16.mxu0 0
    %3025 = vmatpush1.bf16.msra.mxu0 0
    %3026 = vmatprep.subr.bf16.mxu0 0
    %3027 = vmatpush1.bf16.msra.mxu0 0
    %3028 = vmatprep.subr.bf16.mxu0 %v2795
    %3029 = vmatpush1.bf16.msra.mxu0 %v2794
    %3030 = vmatprep.subr.bf16.mxu0 %v2793
    %3031 = vmatpush1.bf16.msra.mxu0 %v2792
    %3032 = vmatprep.subr.bf16.mxu0 %v2791
    %3033 = vmatpush1.bf16.msra.mxu0 %v2790
    %3034 = vmatprep.subr.bf16.mxu0 %v2789
    %3035 = vmatpush1.bf16.msra.mxu0 %v2788
    %3036 = vmatprep.subr.bf16.mxu0 0
    %3037 = vmatpush2.bf16.msra.mxu0 0
    %3038 = vmatprep.subr.bf16.mxu0 0
    %3039 = vmatpush2.bf16.msra.mxu0 0
    %3040 = vmatprep.subr.bf16.mxu0 0
    %3041 = vmatpush2.bf16.msra.mxu0 0
    %3042 = vmatprep.subr.bf16.mxu0 0
    %3043 = vmatpush2.bf16.msra.mxu0 0
    %3044 = vmatprep.subr.bf16.mxu0 0
    %3045 = vmatpush2.bf16.msra.mxu0 0
    %3046 = vmatprep.subr.bf16.mxu0 0
    %3047 = vmatpush2.bf16.msra.mxu0 0
    %3048 = vmatprep.subr.bf16.mxu0 0
    %3049 = vmatpush2.bf16.msra.mxu0 0
    %3050 = vmatprep.subr.bf16.mxu0 0
    %3051 = vmatpush2.bf16.msra.mxu0 0
    %3052 = vmatprep.mubr.bf16.mxu0 0
    %3053 = vmatmul.mubr.bf16.gmra.mxu0 %v3018
    %v3054 = vpop.f32.mrf.mxu0
    %v3055 = vadd.f32 0.0, %v3054
    %v3056 = vpop.f32.mrf.mxu0
    %v3057 = vadd.f32 0.0, %v3056
    %v3058 = vpop.f32.mrf.mxu0
    %v3059 = vpop.f32.mrf.mxu0
    %3060 = vdwg.mxu0
    %v3061 = vld [vmem:[#allocation3 + $0x20] sm:$0xff]
    %v3062 = vadd.f32 %v3061, %v3055
    %v3063 = vld [vmem:[#allocation3 + $0x58] sm:$0xff]
    %v3064 = vadd.f32 %v3063, %v3057
    %v3065 = vxor.u32 %v3062, 2147483648
    %v3066 = vmul.f32 %v3065, 1.442695
    %v3067 = vpow.pop %v3066
    %v3068 = vadd.f32 %v3067, 1.0
    %v3069 = vrcp.pop %v3068
    %v3070 = vmul.f32 1.0, %v3069
    %v3071 = vtanh.pop %v3062
    %v3072 = vxor.u32 %v3064, 2147483648
    %v3073 = vmul.f32 %v3072, 1.442695
    %v3074 = vpow.pop %v3073
    %v3075 = vadd.f32 %v3074, 1.0
    %v3076 = vrcp.pop %v3075
    %v3077 = vmul.f32 1.0, %v3076
    %v3078 = vtanh.pop %v3064
    %v3079 = vmul.f32 %v3070, %v2981
    %3081 = vrot.lane.b32.xlu0 %v3071, 64
    %v3082 = vpop.permute.xlu0 %3081
    %v3084 = vmul.f32 %v3070, %v3082
    %3086 = vrot.lane.b32.xlu0 %v3084, 32
    %v3087 = vpop.permute.xlu0 %3086
    %v3089 = vadd.f32 %v3079, %v3087
    %v3090 = vmul.f32 %v3077, %v2992
    %3092 = vrot.lane.b32.xlu0 %v3078, 64
    %v3093 = vpop.permute.xlu0 %3092
    %v3095 = vmul.f32 %v3077, %v3093
    %3097 = vrot.lane.b32.xlu0 %v3095, 32
    %v3098 = vpop.permute.xlu0 %3097
    %v3100 = vadd.f32 %v3090, %v3098
    %v3101 = vtanh.pop %v3089
    %3103 = vrot.lane.b32.xlu0 %v3101, 64
    %v3104 = vpop.permute.xlu0 %3103
    %v3106 = vmul.f32 %v3070, %v3104
    %v3107 = vtanh.pop %v3100
    %3109 = vrot.lane.b32.xlu0 %v3107, 64
    %v3110 = vpop.permute.xlu0 %3109
    %v3112 = vmul.f32 %v3077, %v3110
    %3114 = vrot.lane.b32.xlu0 %v3106, 32
    %v3115 = vpop.permute.xlu0 %3114
    %3117 = vst.msk [vmem:[#allocation2 + $0x10] sm:$0xff] %vm563, %v3115
    %3119 = vrot.lane.b32.xlu0 %v3112, 64
    %v3120 = vpop.permute.xlu0 %3119
    %3122 = vst.msk [vmem:[#allocation2 + $0x28] sm:$0xff] %vm569, %v3120
    %v3123 = vsel %vm563, %v3115, %v3120
    %v3124 = vpack.c.bf16 %v3123, %v3123
    %v3126 = vsel %vm462, %v3124, 0
    %3128 = vmatprep.subr.bf16.mxu0 0
    %3129 = vmatpush1.bf16.msra.mxu0 0
    %3130 = vmatprep.subr.bf16.mxu0 0
    %3131 = vmatpush1.bf16.msra.mxu0 0
    %3132 = vmatprep.subr.bf16.mxu0 0
    %3133 = vmatpush1.bf16.msra.mxu0 0
    %3134 = vmatprep.subr.bf16.mxu0 0
    %3135 = vmatpush1.bf16.msra.mxu0 0
    %3136 = vmatprep.subr.bf16.mxu0 %v2795
    %3137 = vmatpush1.bf16.msra.mxu0 %v2794
    %3138 = vmatprep.subr.bf16.mxu0 %v2793
    %3139 = vmatpush1.bf16.msra.mxu0 %v2792
    %3140 = vmatprep.subr.bf16.mxu0 %v2791
    %3141 = vmatpush1.bf16.msra.mxu0 %v2790
    %3142 = vmatprep.subr.bf16.mxu0 %v2789
    %3143 = vmatpush1.bf16.msra.mxu0 %v2788
    %3144 = vmatprep.subr.bf16.mxu0 0
    %3145 = vmatpush2.bf16.msra.mxu0 0
    %3146 = vmatprep.subr.bf16.mxu0 0
    %3147 = vmatpush2.bf16.msra.mxu0 0
    %3148 = vmatprep.subr.bf16.mxu0 0
    %3149 = vmatpush2.bf16.msra.mxu0 0
    %3150 = vmatprep.subr.bf16.mxu0 0
    %3151 = vmatpush2.bf16.msra.mxu0 0
    %3152 = vmatprep.subr.bf16.mxu0 0
    %3153 = vmatpush2.bf16.msra.mxu0 0
    %3154 = vmatprep.subr.bf16.mxu0 0
    %3155 = vmatpush2.bf16.msra.mxu0 0
    %3156 = vmatprep.subr.bf16.mxu0 0
    %3157 = vmatpush2.bf16.msra.mxu0 0
    %3158 = vmatprep.subr.bf16.mxu0 0
    %3159 = vmatpush2.bf16.msra.mxu0 0
    %3160 = vmatprep.mubr.bf16.mxu0 0
    %3161 = vmatmul.mubr.bf16.gmra.mxu0 %v3126
    %v3162 = vpop.f32.mrf.mxu0
    %v3163 = vadd.f32 0.0, %v3162
    %v3164 = vpop.f32.mrf.mxu0
    %v3165 = vadd.f32 0.0, %v3164
    %v3166 = vpop.f32.mrf.mxu0
    %v3167 = vpop.f32.mrf.mxu0
    %3168 = vdwg.mxu0
    %v3169 = vld [vmem:[#allocation3 + $0x30] sm:$0xff]
    %v3170 = vadd.f32 %v3169, %v3163
    %v3171 = vld [vmem:[#allocation3 + $0x48] sm:$0xff]
    %v3172 = vadd.f32 %v3171, %v3165
    %v3173 = vxor.u32 %v3170, 2147483648
    %v3174 = vmul.f32 %v3173, 1.442695
    %v3175 = vpow.pop %v3174
    %v3176 = vadd.f32 %v3175, 1.0
    %v3177 = vrcp.pop %v3176
    %v3178 = vmul.f32 1.0, %v3177
    %v3179 = vtanh.pop %v3170
    %v3180 = vxor.u32 %v3172, 2147483648
    %v3181 = vmul.f32 %v3180, 1.442695
    %v3182 = vpow.pop %v3181
    %v3183 = vadd.f32 %v3182, 1.0
    %v3184 = vrcp.pop %v3183
    %v3185 = vmul.f32 1.0, %v3184
    %v3186 = vtanh.pop %v3172
    %v3187 = vmul.f32 %v3178, %v3089
    %3189 = vrot.lane.b32.xlu0 %v3179, 64
    %v3190 = vpop.permute.xlu0 %3189
    %v3192 = vmul.f32 %v3178, %v3190
    %3194 = vrot.lane.b32.xlu0 %v3192, 32
    %v3195 = vpop.permute.xlu0 %3194
    %v3197 = vadd.f32 %v3187, %v3195
    %v3198 = vmul.f32 %v3185, %v3100
    %3200 = vrot.lane.b32.xlu0 %v3186, 64
    %v3201 = vpop.permute.xlu0 %3200
    %v3203 = vmul.f32 %v3185, %v3201
    %3205 = vrot.lane.b32.xlu0 %v3203, 32
    %v3206 = vpop.permute.xlu0 %3205
    %v3208 = vadd.f32 %v3198, %v3206
    %v3209 = vtanh.pop %v3197
    %3211 = vrot.lane.b32.xlu0 %v3209, 64
    %v3212 = vpop.permute.xlu0 %3211
    %v3214 = vmul.f32 %v3178, %v3212
    %v3215 = vtanh.pop %v3208
    %3217 = vrot.lane.b32.xlu0 %v3215, 64
    %v3218 = vpop.permute.xlu0 %3217
    %v3220 = vmul.f32 %v3185, %v3218
    %3222 = vrot.lane.b32.xlu0 %v3214, 32
    %v3223 = vpop.permute.xlu0 %3222
    %3225 = vst.msk [vmem:[#allocation2 + $0x18] sm:$0xff] %vm563, %v3223
    %3227 = vrot.lane.b32.xlu0 %v3220, 64
    %v3228 = vpop.permute.xlu0 %3227
    %3230 = vst.msk [vmem:[#allocation2 + $0x20] sm:$0xff] %vm569, %v3228
    %v3231 = vsel %vm563, %v3223, %v3228
    %v3232 = vpack.c.bf16 %v3231, %v3231
    %v3234 = vsel %vm462, %v3232, 0
    %3236 = vmatprep.subr.bf16.mxu0 0
    %3237 = vmatpush1.bf16.msra.mxu0 0
    %3238 = vmatprep.subr.bf16.mxu0 0
    %3239 = vmatpush1.bf16.msra.mxu0 0
    %3240 = vmatprep.subr.bf16.mxu0 0
    %3241 = vmatpush1.bf16.msra.mxu0 0
    %3242 = vmatprep.subr.bf16.mxu0 0
    %3243 = vmatpush1.bf16.msra.mxu0 0
    %3244 = vmatprep.subr.bf16.mxu0 %v2795
    %3245 = vmatpush1.bf16.msra.mxu0 %v2794
    %3246 = vmatprep.subr.bf16.mxu0 %v2793
    %3247 = vmatpush1.bf16.msra.mxu0 %v2792
    %3248 = vmatprep.subr.bf16.mxu0 %v2791
    %3249 = vmatpush1.bf16.msra.mxu0 %v2790
    %3250 = vmatprep.subr.bf16.mxu0 %v2789
    %3251 = vmatpush1.bf16.msra.mxu0 %v2788
    %3252 = vmatprep.subr.bf16.mxu0 0
    %3253 = vmatpush2.bf16.msra.mxu0 0
    %3254 = vmatprep.subr.bf16.mxu0 0
    %3255 = vmatpush2.bf16.msra.mxu0 0
    %3256 = vmatprep.subr.bf16.mxu0 0
    %3257 = vmatpush2.bf16.msra.mxu0 0
    %3258 = vmatprep.subr.bf16.mxu0 0
    %3259 = vmatpush2.bf16.msra.mxu0 0
    %3260 = vmatprep.subr.bf16.mxu0 0
    %3261 = vmatpush2.bf16.msra.mxu0 0
    %3262 = vmatprep.subr.bf16.mxu0 0
    %3263 = vmatpush2.bf16.msra.mxu0 0
    %3264 = vmatprep.subr.bf16.mxu0 0
    %3265 = vmatpush2.bf16.msra.mxu0 0
    %3266 = vmatprep.subr.bf16.mxu0 0
    %3267 = vmatpush2.bf16.msra.mxu0 0
    %3268 = vmatprep.mubr.bf16.mxu0 0
    %3269 = vmatmul.mubr.bf16.gmra.mxu0 %v3234
    %v3270 = vpop.f32.mrf.mxu0
    %v3271 = vadd.f32 0.0, %v3270
    %v3272 = vpop.f32.mrf.mxu0
    %v3273 = vadd.f32 0.0, %v3272
    %v3274 = vpop.f32.mrf.mxu0
    %v3275 = vpop.f32.mrf.mxu0
    %3276 = vdwg.mxu0
    %v3277 = vld [vmem:[#allocation3 + $0x40] sm:$0xff]
    %v3278 = vadd.f32 %v3277, %v3271
    %v3279 = vld [vmem:[#allocation3 + $0x38] sm:$0xff]
    %v3280 = vadd.f32 %v3279, %v3273
    %v3281 = vxor.u32 %v3278, 2147483648
    %v3282 = vmul.f32 %v3281, 1.442695
    %v3283 = vpow.pop %v3282
    %v3284 = vadd.f32 %v3283, 1.0
    %v3285 = vrcp.pop %v3284
    %v3286 = vmul.f32 1.0, %v3285
    %v3287 = vtanh.pop %v3278
    %v3288 = vxor.u32 %v3280, 2147483648
    %v3289 = vmul.f32 %v3288, 1.442695
    %v3290 = vpow.pop %v3289
    %v3291 = vadd.f32 %v3290, 1.0
    %v3292 = vrcp.pop %v3291
    %v3293 = vmul.f32 1.0, %v3292
    %v3294 = vtanh.pop %v3280
    %v3295 = vmul.f32 %v3286, %v3197
    %3297 = vrot.lane.b32.xlu0 %v3287, 64
    %v3298 = vpop.permute.xlu0 %3297
    %v3300 = vmul.f32 %v3286, %v3298
    %3302 = vrot.lane.b32.xlu0 %v3300, 32
    %v3303 = vpop.permute.xlu0 %3302
    %v3305 = vadd.f32 %v3295, %v3303
    %v3306 = vmul.f32 %v3293, %v3208
    %3308 = vrot.lane.b32.xlu0 %v3294, 64
    %v3309 = vpop.permute.xlu0 %3308
    %v3311 = vmul.f32 %v3293, %v3309
    %3313 = vrot.lane.b32.xlu0 %v3311, 32
    %v3314 = vpop.permute.xlu0 %3313
    %v3316 = vadd.f32 %v3306, %v3314
    %v3317 = vtanh.pop %v3305
    %3319 = vrot.lane.b32.xlu0 %v3317, 64
    %v3320 = vpop.permute.xlu0 %3319
    %v3322 = vmul.f32 %v3286, %v3320
    %v3323 = vtanh.pop %v3316
    %3325 = vrot.lane.b32.xlu0 %v3323, 64
    %v3326 = vpop.permute.xlu0 %3325
    %v3328 = vmul.f32 %v3293, %v3326
    %3330 = vrot.lane.b32.xlu0 %v3322, 32
    %v3331 = vpop.permute.xlu0 %3330
    %3333 = vst.msk [vmem:[#allocation2 + $0x20] sm:$0xff] %vm563, %v3331
    %3335 = vrot.lane.b32.xlu0 %v3328, 64
    %v3336 = vpop.permute.xlu0 %3335
    %3338 = vst.msk [vmem:[#allocation2 + $0x18] sm:$0xff] %vm569, %v3336
    %v3339 = vsel %vm563, %v3331, %v3336
    %v3340 = vpack.c.bf16 %v3339, %v3339
    %v3342 = vsel %vm462, %v3340, 0
    %3344 = vmatprep.subr.bf16.mxu0 0
    %3345 = vmatpush1.bf16.msra.mxu0 0
    %3346 = vmatprep.subr.bf16.mxu0 0
    %3347 = vmatpush1.bf16.msra.mxu0 0
    %3348 = vmatprep.subr.bf16.mxu0 0
    %3349 = vmatpush1.bf16.msra.mxu0 0
    %3350 = vmatprep.subr.bf16.mxu0 0
    %3351 = vmatpush1.bf16.msra.mxu0 0
    %3352 = vmatprep.subr.bf16.mxu0 %v2795
    %3353 = vmatpush1.bf16.msra.mxu0 %v2794
    %3354 = vmatprep.subr.bf16.mxu0 %v2793
    %3355 = vmatpush1.bf16.msra.mxu0 %v2792
    %3356 = vmatprep.subr.bf16.mxu0 %v2791
    %3357 = vmatpush1.bf16.msra.mxu0 %v2790
    %3358 = vmatprep.subr.bf16.mxu0 %v2789
    %3359 = vmatpush1.bf16.msra.mxu0 %v2788
    %3360 = vmatprep.subr.bf16.mxu0 0
    %3361 = vmatpush2.bf16.msra.mxu0 0
    %3362 = vmatprep.subr.bf16.mxu0 0
    %3363 = vmatpush2.bf16.msra.mxu0 0
    %3364 = vmatprep.subr.bf16.mxu0 0
    %3365 = vmatpush2.bf16.msra.mxu0 0
    %3366 = vmatprep.subr.bf16.mxu0 0
    %3367 = vmatpush2.bf16.msra.mxu0 0
    %3368 = vmatprep.subr.bf16.mxu0 0
    %3369 = vmatpush2.bf16.msra.mxu0 0
    %3370 = vmatprep.subr.bf16.mxu0 0
    %3371 = vmatpush2.bf16.msra.mxu0 0
    %3372 = vmatprep.subr.bf16.mxu0 0
    %3373 = vmatpush2.bf16.msra.mxu0 0
    %3374 = vmatprep.subr.bf16.mxu0 0
    %3375 = vmatpush2.bf16.msra.mxu0 0
    %3376 = vmatprep.mubr.bf16.mxu0 0
    %3377 = vmatmul.mubr.bf16.gmra.mxu0 %v3342
    %v3378 = vpop.f32.mrf.mxu0
    %v3379 = vadd.f32 0.0, %v3378
    %v3380 = vpop.f32.mrf.mxu0
    %v3381 = vadd.f32 0.0, %v3380
    %v3382 = vpop.f32.mrf.mxu0
    %v3383 = vpop.f32.mrf.mxu0
    %3384 = vdwg.mxu0
    %v3385 = vld [vmem:[#allocation3 + $0x50] sm:$0xff]
    %v3386 = vadd.f32 %v3385, %v3379
    %v3387 = vld [vmem:[#allocation3 + $0x28] sm:$0xff]
    %v3388 = vadd.f32 %v3387, %v3381
    %v3389 = vxor.u32 %v3386, 2147483648
    %v3390 = vmul.f32 %v3389, 1.442695
    %v3391 = vpow.pop %v3390
    %v3392 = vadd.f32 %v3391, 1.0
    %v3393 = vrcp.pop %v3392
    %v3394 = vmul.f32 1.0, %v3393
    %v3395 = vtanh.pop %v3386
    %v3396 = vxor.u32 %v3388, 2147483648
    %v3397 = vmul.f32 %v3396, 1.442695
    %v3398 = vpow.pop %v3397
    %v3399 = vadd.f32 %v3398, 1.0
    %v3400 = vrcp.pop %v3399
    %v3401 = vmul.f32 1.0, %v3400
    %v3402 = vtanh.pop %v3388
    %v3403 = vmul.f32 %v3394, %v3305
    %3405 = vrot.lane.b32.xlu0 %v3395, 64
    %v3406 = vpop.permute.xlu0 %3405
    %v3408 = vmul.f32 %v3394, %v3406
    %3410 = vrot.lane.b32.xlu0 %v3408, 32
    %v3411 = vpop.permute.xlu0 %3410
    %v3413 = vadd.f32 %v3403, %v3411
    %v3414 = vmul.f32 %v3401, %v3316
    %3416 = vrot.lane.b32.xlu0 %v3402, 64
    %v3417 = vpop.permute.xlu0 %3416
    %v3419 = vmul.f32 %v3401, %v3417
    %3421 = vrot.lane.b32.xlu0 %v3419, 32
    %v3422 = vpop.permute.xlu0 %3421
    %v3424 = vadd.f32 %v3414, %v3422
    %v3425 = vtanh.pop %v3413
    %3427 = vrot.lane.b32.xlu0 %v3425, 64
    %v3428 = vpop.permute.xlu0 %3427
    %v3430 = vmul.f32 %v3394, %v3428
    %v3431 = vtanh.pop %v3424
    %3433 = vrot.lane.b32.xlu0 %v3431, 64
    %v3434 = vpop.permute.xlu0 %3433
    %v3436 = vmul.f32 %v3401, %v3434
    %3438 = vrot.lane.b32.xlu0 %v3430, 32
    %v3439 = vpop.permute.xlu0 %3438
    %3441 = vst.msk [vmem:[#allocation2 + $0x28] sm:$0xff] %vm563, %v3439
    %3443 = vrot.lane.b32.xlu0 %v3436, 64
    %v3444 = vpop.permute.xlu0 %3443
    %3446 = vst.msk [vmem:[#allocation2 + $0x10] sm:$0xff] %vm569, %v3444
    %v3447 = vsel %vm563, %v3439, %v3444
    %v3448 = vpack.c.bf16 %v3447, %v3447
    %v3450 = vsel %vm462, %v3448, 0
    %3452 = vmatprep.subr.bf16.mxu0 0
    %3453 = vmatpush1.bf16.msra.mxu0 0
    %3454 = vmatprep.subr.bf16.mxu0 0
    %3455 = vmatpush1.bf16.msra.mxu0 0
    %3456 = vmatprep.subr.bf16.mxu0 0
    %3457 = vmatpush1.bf16.msra.mxu0 0
    %3458 = vmatprep.subr.bf16.mxu0 0
    %3459 = vmatpush1.bf16.msra.mxu0 0
    %3460 = vmatprep.subr.bf16.mxu0 %v2795
    %3461 = vmatpush1.bf16.msra.mxu0 %v2794
    %3462 = vmatprep.subr.bf16.mxu0 %v2793
    %3463 = vmatpush1.bf16.msra.mxu0 %v2792
    %3464 = vmatprep.subr.bf16.mxu0 %v2791
    %3465 = vmatpush1.bf16.msra.mxu0 %v2790
    %3466 = vmatprep.subr.bf16.mxu0 %v2789
    %3467 = vmatpush1.bf16.msra.mxu0 %v2788
    %3468 = vmatprep.subr.bf16.mxu0 0
    %3469 = vmatpush2.bf16.msra.mxu0 0
    %3470 = vmatprep.subr.bf16.mxu0 0
    %3471 = vmatpush2.bf16.msra.mxu0 0
    %3472 = vmatprep.subr.bf16.mxu0 0
    %3473 = vmatpush2.bf16.msra.mxu0 0
    %3474 = vmatprep.subr.bf16.mxu0 0
    %3475 = vmatpush2.bf16.msra.mxu0 0
    %3476 = vmatprep.subr.bf16.mxu0 0
    %3477 = vmatpush2.bf16.msra.mxu0 0
    %3478 = vmatprep.subr.bf16.mxu0 0
    %3479 = vmatpush2.bf16.msra.mxu0 0
    %3480 = vmatprep.subr.bf16.mxu0 0
    %3481 = vmatpush2.bf16.msra.mxu0 0
    %3482 = vmatprep.subr.bf16.mxu0 0
    %3483 = vmatpush2.bf16.msra.mxu0 0
    %3484 = vmatprep.mubr.bf16.mxu0 0
    %3485 = vmatmul.mubr.bf16.gmra.mxu0 %v3450
    %v3486 = vpop.f32.mrf.mxu0
    %v3487 = vadd.f32 0.0, %v3486
    %v3488 = vpop.f32.mrf.mxu0
    %v3489 = vadd.f32 0.0, %v3488
    %v3490 = vpop.f32.mrf.mxu0
    %v3491 = vpop.f32.mrf.mxu0
    %3492 = vdwg.mxu0
    %v3493 = vld [vmem:[#allocation3 + $0x60] sm:$0xff]
    %v3494 = vadd.f32 %v3493, %v3487
    %v3495 = vld [vmem:[#allocation3 + $0x18] sm:$0xff]
    %v3496 = vadd.f32 %v3495, %v3489
    %v3497 = vxor.u32 %v3494, 2147483648
    %v3498 = vmul.f32 %v3497, 1.442695
    %v3499 = vpow.pop %v3498
    %v3500 = vadd.f32 %v3499, 1.0
    %v3501 = vrcp.pop %v3500
    %v3502 = vmul.f32 1.0, %v3501
    %v3503 = vtanh.pop %v3494
    %v3504 = vxor.u32 %v3496, 2147483648
    %v3505 = vmul.f32 %v3504, 1.442695
    %v3506 = vpow.pop %v3505
    %v3507 = vadd.f32 %v3506, 1.0
    %v3508 = vrcp.pop %v3507
    %v3509 = vmul.f32 1.0, %v3508
    %v3510 = vtanh.pop %v3496
    %v3511 = vmul.f32 %v3502, %v3413
    %3513 = vrot.lane.b32.xlu0 %v3503, 64
    %v3514 = vpop.permute.xlu0 %3513
    %v3516 = vmul.f32 %v3502, %v3514
    %3518 = vrot.lane.b32.xlu0 %v3516, 32
    %v3519 = vpop.permute.xlu0 %3518
    %v3521 = vadd.f32 %v3511, %v3519
    %v3522 = vmul.f32 %v3509, %v3424
    %3524 = vrot.lane.b32.xlu0 %v3510, 64
    %v3525 = vpop.permute.xlu0 %3524
    %v3527 = vmul.f32 %v3509, %v3525
    %3529 = vrot.lane.b32.xlu0 %v3527, 32
    %v3530 = vpop.permute.xlu0 %3529
    %v3532 = vadd.f32 %v3522, %v3530
    %v3533 = vtanh.pop %v3521
    %3535 = vrot.lane.b32.xlu0 %v3533, 64
    %v3536 = vpop.permute.xlu0 %3535
    %v3538 = vmul.f32 %v3502, %v3536
    %v3539 = vtanh.pop %v3532
    %3541 = vrot.lane.b32.xlu0 %v3539, 64
    %v3542 = vpop.permute.xlu0 %3541
    %v3544 = vmul.f32 %v3509, %v3542
    %3546 = vrot.lane.b32.xlu0 %v3538, 32
    %v3547 = vpop.permute.xlu0 %3546
    %3549 = vst.msk [vmem:[#allocation2 + $0x30] sm:$0xff] %vm563, %v3547
    %3551 = vrot.lane.b32.xlu0 %v3544, 64
    %v3552 = vpop.permute.xlu0 %3551
    %3554 = vst.msk [vmem:[#allocation2 + $0x8] sm:$0xff] %vm569, %v3552
    %v3555 = vsel %vm563, %v3547, %v3552
    %v3556 = vpack.c.bf16 %v3555, %v3555
    %v3558 = vsel %vm462, %v3556, 0
    %3560 = vmatprep.subr.bf16.mxu0 0
    %3561 = vmatpush1.bf16.msra.mxu0 0
    %3562 = vmatprep.subr.bf16.mxu0 0
    %3563 = vmatpush1.bf16.msra.mxu0 0
    %3564 = vmatprep.subr.bf16.mxu0 0
    %3565 = vmatpush1.bf16.msra.mxu0 0
    %3566 = vmatprep.subr.bf16.mxu0 0
    %3567 = vmatpush1.bf16.msra.mxu0 0
    %3568 = vmatprep.subr.bf16.mxu0 %v2795
    %3569 = vmatpush1.bf16.msra.mxu0 %v2794
    %3570 = vmatprep.subr.bf16.mxu0 %v2793
    %3571 = vmatpush1.bf16.msra.mxu0 %v2792
    %3572 = vmatprep.subr.bf16.mxu0 %v2791
    %3573 = vmatpush1.bf16.msra.mxu0 %v2790
    %3574 = vmatprep.subr.bf16.mxu0 %v2789
    %3575 = vmatpush1.bf16.msra.mxu0 %v2788
    %3576 = vmatprep.subr.bf16.mxu0 0
    %3577 = vmatpush2.bf16.msra.mxu0 0
    %3578 = vmatprep.subr.bf16.mxu0 0
    %3579 = vmatpush2.bf16.msra.mxu0 0
    %3580 = vmatprep.subr.bf16.mxu0 0
    %3581 = vmatpush2.bf16.msra.mxu0 0
    %3582 = vmatprep.subr.bf16.mxu0 0
    %3583 = vmatpush2.bf16.msra.mxu0 0
    %3584 = vmatprep.subr.bf16.mxu0 0
    %3585 = vmatpush2.bf16.msra.mxu0 0
    %3586 = vmatprep.subr.bf16.mxu0 0
    %3587 = vmatpush2.bf16.msra.mxu0 0
    %3588 = vmatprep.subr.bf16.mxu0 0
    %3589 = vmatpush2.bf16.msra.mxu0 0
    %3590 = vmatprep.subr.bf16.mxu0 0
    %3591 = vmatpush2.bf16.msra.mxu0 0
    %3592 = vmatprep.mubr.bf16.mxu0 0
    %3593 = vmatmul.mubr.bf16.gmra.mxu0 %v3558
    %v3594 = vpop.f32.mrf.mxu0
    %v3595 = vadd.f32 0.0, %v3594
    %v3596 = vpop.f32.mrf.mxu0
    %v3597 = vadd.f32 0.0, %v3596
    %v3598 = vpop.f32.mrf.mxu0
    %v3599 = vpop.f32.mrf.mxu0
    %3600 = vdwg.mxu0
    %v3601 = vld [vmem:[#allocation3 + $0x70] sm:$0xff]
    %v3602 = vadd.f32 %v3601, %v3595
    %v3603 = vld [vmem:[#allocation3 + $0x8] sm:$0xff]
    %v3604 = vadd.f32 %v3603, %v3597
    %v3605 = vxor.u32 %v3602, 2147483648
    %v3606 = vmul.f32 %v3605, 1.442695
    %v3607 = vpow.pop %v3606
    %v3608 = vadd.f32 %v3607, 1.0
    %v3609 = vrcp.pop %v3608
    %v3610 = vmul.f32 1.0, %v3609
    %v3611 = vtanh.pop %v3602
    %v3612 = vxor.u32 %v3604, 2147483648
    %v3613 = vmul.f32 %v3612, 1.442695
    %v3614 = vpow.pop %v3613
    %v3615 = vadd.f32 %v3614, 1.0
    %v3616 = vrcp.pop %v3615
    %v3617 = vmul.f32 1.0, %v3616
    %v3618 = vtanh.pop %v3604
    %v3619 = vmul.f32 %v3610, %v3521
    %3621 = vrot.lane.b32.xlu0 %v3611, 64
    %v3622 = vpop.permute.xlu0 %3621
    %v3624 = vmul.f32 %v3610, %v3622
    %3626 = vrot.lane.b32.xlu0 %v3624, 32
    %v3627 = vpop.permute.xlu0 %3626
    %v3629 = vadd.f32 %v3619, %v3627
    %v3630 = vmul.f32 %v3617, %v3532
    %3632 = vrot.lane.b32.xlu0 %v3618, 64
    %v3633 = vpop.permute.xlu0 %3632
    %v3635 = vmul.f32 %v3617, %v3633
    %3637 = vrot.lane.b32.xlu0 %v3635, 32
    %v3638 = vpop.permute.xlu0 %3637
    %v3640 = vadd.f32 %v3630, %v3638
    %v3641 = vtanh.pop %v3629
    %3643 = vrot.lane.b32.xlu0 %v3641, 64
    %v3644 = vpop.permute.xlu0 %3643
    %v3646 = vmul.f32 %v3610, %v3644
    %v3647 = vtanh.pop %v3640
    %3649 = vrot.lane.b32.xlu0 %v3647, 64
    %v3650 = vpop.permute.xlu0 %3649
    %v3652 = vmul.f32 %v3617, %v3650
    %3654 = vrot.lane.b32.xlu0 %v3646, 32
    %v3655 = vpop.permute.xlu0 %3654
    %3657 = vst.msk [vmem:[#allocation2 + $0x38] sm:$0xff] %vm563, %v3655
    %3659 = vrot.lane.b32.xlu0 %v3652, 64
    %v3660 = vpop.permute.xlu0 %3659
    %3662 = vst.msk [vmem:[#allocation2] sm:$0xff] %vm569, %v3660
    %v3663 = vld [vmem:[#allocation2] sm:$0xff]
    %v3664 = vld [vmem:[#allocation2 + $0x8] sm:$0xff]
    %v3665 = vld [vmem:[#allocation2 + $0x10] sm:$0xff]
    %v3666 = vld [vmem:[#allocation2 + $0x18] sm:$0xff]
    %v3667 = vld [vmem:[#allocation2 + $0x20] sm:$0xff]
    %v3668 = vld [vmem:[#allocation2 + $0x28] sm:$0xff]
    %v3669 = vld [vmem:[#allocation2 + $0x30] sm:$0xff]
    %v3670 = vld [vmem:[#allocation2 + $0x38] sm:$0xff]
    %v3671 = vpack.c.bf16 %v3664, %v3663
    %v3672 = vpack.c.bf16 %v3666, %v3665
    %v3673 = vpack.c.bf16 %v3668, %v3667
    %v3674 = vpack.c.bf16 %v3670, %v3669
    %v3675 = vld [vmem:[#allocation15] sm:$0xff]
    %v3676 = vld [vmem:[#allocation15 + $0x8] sm:$0xff]
    %v3677 = vld [vmem:[#allocation15 + $0x10] sm:$0xff]
    %v3678 = vld [vmem:[#allocation15 + $0x18] sm:$0xff]
    %v3679 = vld [vmem:[#allocation15 + $0x20] sm:$0xff]
    %v3680 = vld [vmem:[#allocation15 + $0x28] sm:$0xff]
    %v3681 = vld [vmem:[#allocation15 + $0x30] sm:$0xff]
    %v3682 = vld [vmem:[#allocation15 + $0x38] sm:$0xff]
    %v3683 = vld [vmem:[#allocation18] sm:$0x3]
    %v3685 = vlaneseq
    %v3686 = vshrl.u32 %v3685, 7
    %v3687 = vsub.s32 0, %v3686
    %v3688 = vrot.slane %v3683, %v3687
    %v3689 = vlaneseq
    %v3690 = vshrl.u32 %v3689, 7
    %v3691 = vsub.s32 1, %v3690
    %v3692 = vrot.slane %v3683, %v3691
    %v3703 = vunpack.c.l.b16 %v3675
    %v3704 = vunpack.c.h.b16 %v3675
    %v3705 = vunpack.c.l.b16 %v3676
    %v3706 = vunpack.c.h.b16 %v3676
    %v3707 = vunpack.c.l.b16 %v3677
    %v3708 = vunpack.c.h.b16 %v3677
    %v3709 = vunpack.c.l.b16 %v3678
    %v3710 = vunpack.c.h.b16 %v3678
    %v3711 = vunpack.c.l.b16 %v3679
    %v3712 = vunpack.c.h.b16 %v3679
    %v3713 = vunpack.c.l.b16 %v3680
    %v3714 = vunpack.c.h.b16 %v3680
    %v3715 = vunpack.c.l.b16 %v3681
    %v3716 = vunpack.c.h.b16 %v3681
    %v3717 = vunpack.c.l.b16 %v3682
    %v3718 = vunpack.c.h.b16 %v3682
    %v3719 = vpack.c.b16 %v3705, %v3703
    %v3720 = vpack.c.b16 %v3706, %v3704
    %v3721 = vpack.c.b16 %v3709, %v3707
    %v3722 = vpack.c.b16 %v3710, %v3708
    %v3723 = vpack.c.b16 %v3713, %v3711
    %v3724 = vpack.c.b16 %v3714, %v3712
    %v3725 = vpack.c.b16 %v3717, %v3715
    %v3726 = vpack.c.b16 %v3718, %v3716
    %v3736 = vsel %vm462, %v3671, 0
    %v3739 = vsel %vm462, %v3672, 0
    %v3742 = vsel %vm462, %v3673, 0
    %v3745 = vsel %vm462, %v3674, 0
    %3747 = vmatprep.subr.bf16.mxu0 0
    %3748 = vmatpush1.bf16.msra.mxu0 0
    %3749 = vmatprep.subr.bf16.mxu0 0
    %3750 = vmatpush1.bf16.msra.mxu0 0
    %3751 = vmatprep.subr.bf16.mxu0 0
    %3752 = vmatpush1.bf16.msra.mxu0 0
    %3753 = vmatprep.subr.bf16.mxu0 0
    %3754 = vmatpush1.bf16.msra.mxu0 0
    %3755 = vmatprep.subr.bf16.mxu0 %v3726
    %3756 = vmatpush1.bf16.msra.mxu0 %v3725
    %3757 = vmatprep.subr.bf16.mxu0 %v3724
    %3758 = vmatpush1.bf16.msra.mxu0 %v3723
    %3759 = vmatprep.subr.bf16.mxu0 %v3722
    %3760 = vmatpush1.bf16.msra.mxu0 %v3721
    %3761 = vmatprep.subr.bf16.mxu0 %v3720
    %3762 = vmatpush1.bf16.msra.mxu0 %v3719
    %3763 = vmatprep.subr.bf16.mxu0 0
    %3764 = vmatpush2.bf16.msra.mxu0 0
    %3765 = vmatprep.subr.bf16.mxu0 0
    %3766 = vmatpush2.bf16.msra.mxu0 0
    %3767 = vmatprep.subr.bf16.mxu0 0
    %3768 = vmatpush2.bf16.msra.mxu0 0
    %3769 = vmatprep.subr.bf16.mxu0 0
    %3770 = vmatpush2.bf16.msra.mxu0 0
    %3771 = vmatprep.subr.bf16.mxu0 0
    %3772 = vmatpush2.bf16.msra.mxu0 0
    %3773 = vmatprep.subr.bf16.mxu0 0
    %3774 = vmatpush2.bf16.msra.mxu0 0
    %3775 = vmatprep.subr.bf16.mxu0 0
    %3776 = vmatpush2.bf16.msra.mxu0 0
    %3777 = vmatprep.subr.bf16.mxu0 0
    %3778 = vmatpush2.bf16.msra.mxu0 0
    %3779 = vmatprep.mubr.bf16.mxu0 0
    %3780 = vmatmul.mubr.bf16.gmra.mxu0 %v3736
    %v3781 = vpop.f32.mrf.mxu0
    %v3782 = vadd.f32 %v3688, %v3781
    %v3783 = vpop.f32.mrf.mxu0
    %v3784 = vadd.f32 %v3692, %v3783
    %v3785 = vpop.f32.mrf.mxu0
    %v3786 = vadd.f32 %v3688, %v3785
    %v3787 = vpop.f32.mrf.mxu0
    %v3788 = vadd.f32 %v3692, %v3787
    %3789 = vmatprep.mubr.bf16.mxu0 0
    %3790 = vmatmul.mubr.bf16.gmra.mxu0 %v3739
    %v3791 = vpop.f32.mrf.mxu0
    %v3792 = vadd.f32 %v3688, %v3791
    %v3793 = vpop.f32.mrf.mxu0
    %v3794 = vadd.f32 %v3692, %v3793
    %v3795 = vpop.f32.mrf.mxu0
    %v3796 = vadd.f32 %v3688, %v3795
    %v3797 = vpop.f32.mrf.mxu0
    %v3798 = vadd.f32 %v3692, %v3797
    %3799 = vmatprep.mubr.bf16.mxu0 0
    %3800 = vmatmul.mubr.bf16.gmra.mxu0 %v3742
    %v3801 = vpop.f32.mrf.mxu0
    %v3802 = vadd.f32 %v3688, %v3801
    %v3803 = vpop.f32.mrf.mxu0
    %v3804 = vadd.f32 %v3692, %v3803
    %v3805 = vpop.f32.mrf.mxu0
    %v3806 = vadd.f32 %v3688, %v3805
    %v3807 = vpop.f32.mrf.mxu0
    %v3808 = vadd.f32 %v3692, %v3807
    %3809 = vmatprep.mubr.bf16.mxu0 0
    %3810 = vmatmul.mubr.bf16.gmra.mxu0 %v3745
    %v3811 = vpop.f32.mrf.mxu0
    %v3812 = vadd.f32 %v3688, %v3811
    %v3813 = vpop.f32.mrf.mxu0
    %v3814 = vadd.f32 %v3692, %v3813
    %v3815 = vpop.f32.mrf.mxu0
    %v3816 = vadd.f32 %v3688, %v3815
    %v3817 = vpop.f32.mrf.mxu0
    %v3818 = vadd.f32 %v3692, %v3817
    %3819 = vdwg.mxu0
    %3820 = vst [vmem:[#allocation3] sm:$0xff] %v3782
    %3821 = vst [vmem:[#allocation3 + $0x8] sm:$0xff] %v3784
    %3822 = vst [vmem:[#allocation3 + $0x10] sm:$0xff] %v3786
    %3823 = vst [vmem:[#allocation3 + $0x18] sm:$0xff] %v3788
    %3824 = vst [vmem:[#allocation3 + $0x20] sm:$0xff] %v3792
    %3825 = vst [vmem:[#allocation3 + $0x28] sm:$0xff] %v3794
    %3826 = vst [vmem:[#allocation3 + $0x30] sm:$0xff] %v3796
    %3827 = vst [vmem:[#allocation3 + $0x38] sm:$0xff] %v3798
    %3828 = vst [vmem:[#allocation3 + $0x40] sm:$0xff] %v3802
    %3829 = vst [vmem:[#allocation3 + $0x48] sm:$0xff] %v3804
    %3830 = vst [vmem:[#allocation3 + $0x50] sm:$0xff] %v3806
    %3831 = vst [vmem:[#allocation3 + $0x58] sm:$0xff] %v3808
    %3832 = vst [vmem:[#allocation3 + $0x60] sm:$0xff] %v3812
    %3833 = vst [vmem:[#allocation3 + $0x68] sm:$0xff] %v3814
    %3834 = vst [vmem:[#allocation3 + $0x70] sm:$0xff] %v3816
    %3835 = vst [vmem:[#allocation3 + $0x78] sm:$0xff] %v3818
    %v3836 = vld [vmem:[#allocation17] sm:$0xff]
    %v3837 = vld [vmem:[#allocation17 + $0x8] sm:$0xff]
    %v3838 = vld [vmem:[#allocation17 + $0x10] sm:$0xff]
    %v3839 = vld [vmem:[#allocation17 + $0x18] sm:$0xff]
    %v3840 = vld [vmem:[#allocation17 + $0x20] sm:$0xff]
    %v3841 = vld [vmem:[#allocation17 + $0x28] sm:$0xff]
    %v3842 = vld [vmem:[#allocation17 + $0x30] sm:$0xff]
    %v3843 = vld [vmem:[#allocation17 + $0x38] sm:$0xff]
    %v3852 = vunpack.c.l.b16 %v3836
    %v3853 = vunpack.c.h.b16 %v3836
    %v3854 = vunpack.c.l.b16 %v3837
    %v3855 = vunpack.c.h.b16 %v3837
    %v3856 = vunpack.c.l.b16 %v3838
    %v3857 = vunpack.c.h.b16 %v3838
    %v3858 = vunpack.c.l.b16 %v3839
    %v3859 = vunpack.c.h.b16 %v3839
    %v3860 = vunpack.c.l.b16 %v3840
    %v3861 = vunpack.c.h.b16 %v3840
    %v3862 = vunpack.c.l.b16 %v3841
    %v3863 = vunpack.c.h.b16 %v3841
    %v3864 = vunpack.c.l.b16 %v3842
    %v3865 = vunpack.c.h.b16 %v3842
    %v3866 = vunpack.c.l.b16 %v3843
    %v3867 = vunpack.c.h.b16 %v3843
    %v3868 = vpack.c.b16 %v3854, %v3852
    %v3869 = vpack.c.b16 %v3855, %v3853
    %v3870 = vpack.c.b16 %v3858, %v3856
    %v3871 = vpack.c.b16 %v3859, %v3857
    %v3872 = vpack.c.b16 %v3862, %v3860
    %v3873 = vpack.c.b16 %v3863, %v3861
    %v3874 = vpack.c.b16 %v3866, %v3864
    %v3875 = vpack.c.b16 %v3867, %v3865
    %3884 = vmatprep.subr.bf16.mxu0 0
    %3885 = vmatpush1.bf16.msra.mxu0 0
    %3886 = vmatprep.subr.bf16.mxu0 0
    %3887 = vmatpush1.bf16.msra.mxu0 0
    %3888 = vmatprep.subr.bf16.mxu0 0
    %3889 = vmatpush1.bf16.msra.mxu0 0
    %3890 = vmatprep.subr.bf16.mxu0 0
    %3891 = vmatpush1.bf16.msra.mxu0 0
    %3892 = vmatprep.subr.bf16.mxu0 %v3875
    %3893 = vmatpush1.bf16.msra.mxu0 %v3874
    %3894 = vmatprep.subr.bf16.mxu0 %v3873
    %3895 = vmatpush1.bf16.msra.mxu0 %v3872
    %3896 = vmatprep.subr.bf16.mxu0 %v3871
    %3897 = vmatpush1.bf16.msra.mxu0 %v3870
    %3898 = vmatprep.subr.bf16.mxu0 %v3869
    %3899 = vmatpush1.bf16.msra.mxu0 %v3868
    %3900 = vmatprep.subr.bf16.mxu0 0
    %3901 = vmatpush2.bf16.msra.mxu0 0
    %3902 = vmatprep.subr.bf16.mxu0 0
    %3903 = vmatpush2.bf16.msra.mxu0 0
    %3904 = vmatprep.subr.bf16.mxu0 0
    %3905 = vmatpush2.bf16.msra.mxu0 0
    %3906 = vmatprep.subr.bf16.mxu0 0
    %3907 = vmatpush2.bf16.msra.mxu0 0
    %3908 = vmatprep.subr.bf16.mxu0 0
    %3909 = vmatpush2.bf16.msra.mxu0 0
    %3910 = vmatprep.subr.bf16.mxu0 0
    %3911 = vmatpush2.bf16.msra.mxu0 0
    %3912 = vmatprep.subr.bf16.mxu0 0
    %3913 = vmatpush2.bf16.msra.mxu0 0
    %3914 = vmatprep.subr.bf16.mxu0 0
    %3915 = vmatpush2.bf16.msra.mxu0 0
    %3916 = vmatprep.mubr.bf16.mxu0 0
    %3917 = vmatmul.mubr.bf16.gmra.mxu0 %v464
    %v3918 = vpop.f32.mrf.mxu0
    %v3919 = vadd.f32 0.0, %v3918
    %v3920 = vpop.f32.mrf.mxu0
    %v3921 = vadd.f32 0.0, %v3920
    %v3922 = vpop.f32.mrf.mxu0
    %v3923 = vpop.f32.mrf.mxu0
    %3924 = vdwg.mxu0
    %v3925 = vld [vmem:[#allocation3] sm:$0xff]
    %v3926 = vadd.f32 %v3925, %v3919
    %v3927 = vld [vmem:[#allocation3 + $0x78] sm:$0xff]
    %v3928 = vadd.f32 %v3927, %v3921
    %v3929 = vxor.u32 %v3926, 2147483648
    %v3930 = vmul.f32 %v3929, 1.442695
    %v3931 = vpow.pop %v3930
    %v3932 = vadd.f32 %v3931, 1.0
    %v3933 = vrcp.pop %v3932
    %v3934 = vmul.f32 1.0, %v3933
    %v3935 = vtanh.pop %v3926
    %v3936 = vxor.u32 %v3928, 2147483648
    %v3937 = vmul.f32 %v3936, 1.442695
    %v3938 = vpow.pop %v3937
    %v3939 = vadd.f32 %v3938, 1.0
    %v3940 = vrcp.pop %v3939
    %v3941 = vmul.f32 1.0, %v3940
    %v3942 = vtanh.pop %v3928
    %v3943 = vmul.f32 %v3934, 0.0
    %3945 = vrot.lane.b32.xlu0 %v3935, 64
    %v3946 = vpop.permute.xlu0 %3945
    %v3948 = vmul.f32 %v3934, %v3946
    %3950 = vrot.lane.b32.xlu0 %v3948, 32
    %v3951 = vpop.permute.xlu0 %3950
    %v3953 = vadd.f32 %v3943, %v3951
    %v3954 = vmul.f32 %v3941, 0.0
    %3956 = vrot.lane.b32.xlu0 %v3942, 64
    %v3957 = vpop.permute.xlu0 %3956
    %v3959 = vmul.f32 %v3941, %v3957
    %3961 = vrot.lane.b32.xlu0 %v3959, 32
    %v3962 = vpop.permute.xlu0 %3961
    %v3964 = vadd.f32 %v3954, %v3962
    %v3965 = vtanh.pop %v3953
    %3967 = vrot.lane.b32.xlu0 %v3965, 64
    %v3968 = vpop.permute.xlu0 %3967
    %v3970 = vmul.f32 %v3934, %v3968
    %v3971 = vtanh.pop %v3964
    %3973 = vrot.lane.b32.xlu0 %v3971, 64
    %v3974 = vpop.permute.xlu0 %3973
    %v3976 = vmul.f32 %v3941, %v3974
    %3978 = vrot.lane.b32.xlu0 %v3970, 32
    %v3979 = vpop.permute.xlu0 %3978
    %3981 = vst.msk [vmem:[#allocation2] sm:$0xff] %vm563, %v3979
    %3983 = vrot.lane.b32.xlu0 %v3976, 64
    %v3984 = vpop.permute.xlu0 %3983
    %3986 = vst.msk [vmem:[#allocation2 + $0x38] sm:$0xff] %vm569, %v3984
    %v3987 = vsel %vm563, %v3979, %v3984
    %v3988 = vpack.c.bf16 %v3987, %v3987
    %v3990 = vsel %vm462, %v3988, 0
    %3992 = vmatprep.subr.bf16.mxu0 0
    %3993 = vmatpush1.bf16.msra.mxu0 0
    %3994 = vmatprep.subr.bf16.mxu0 0
    %3995 = vmatpush1.bf16.msra.mxu0 0
    %3996 = vmatprep.subr.bf16.mxu0 0
    %3997 = vmatpush1.bf16.msra.mxu0 0
    %3998 = vmatprep.subr.bf16.mxu0 0
    %3999 = vmatpush1.bf16.msra.mxu0 0
    %4000 = vmatprep.subr.bf16.mxu0 %v3875
    %4001 = vmatpush1.bf16.msra.mxu0 %v3874
    %4002 = vmatprep.subr.bf16.mxu0 %v3873
    %4003 = vmatpush1.bf16.msra.mxu0 %v3872
    %4004 = vmatprep.subr.bf16.mxu0 %v3871
    %4005 = vmatpush1.bf16.msra.mxu0 %v3870
    %4006 = vmatprep.subr.bf16.mxu0 %v3869
    %4007 = vmatpush1.bf16.msra.mxu0 %v3868
    %4008 = vmatprep.subr.bf16.mxu0 0
    %4009 = vmatpush2.bf16.msra.mxu0 0
    %4010 = vmatprep.subr.bf16.mxu0 0
    %4011 = vmatpush2.bf16.msra.mxu0 0
    %4012 = vmatprep.subr.bf16.mxu0 0
    %4013 = vmatpush2.bf16.msra.mxu0 0
    %4014 = vmatprep.subr.bf16.mxu0 0
    %4015 = vmatpush2.bf16.msra.mxu0 0
    %4016 = vmatprep.subr.bf16.mxu0 0
    %4017 = vmatpush2.bf16.msra.mxu0 0
    %4018 = vmatprep.subr.bf16.mxu0 0
    %4019 = vmatpush2.bf16.msra.mxu0 0
    %4020 = vmatprep.subr.bf16.mxu0 0
    %4021 = vmatpush2.bf16.msra.mxu0 0
    %4022 = vmatprep.subr.bf16.mxu0 0
    %4023 = vmatpush2.bf16.msra.mxu0 0
    %4024 = vmatprep.mubr.bf16.mxu0 0
    %4025 = vmatmul.mubr.bf16.gmra.mxu0 %v3990
    %v4026 = vpop.f32.mrf.mxu0
    %v4027 = vadd.f32 0.0, %v4026
    %v4028 = vpop.f32.mrf.mxu0
    %v4029 = vadd.f32 0.0, %v4028
    %v4030 = vpop.f32.mrf.mxu0
    %v4031 = vpop.f32.mrf.mxu0
    %4032 = vdwg.mxu0
    %v4033 = vld [vmem:[#allocation3 + $0x10] sm:$0xff]
    %v4034 = vadd.f32 %v4033, %v4027
    %v4035 = vld [vmem:[#allocation3 + $0x68] sm:$0xff]
    %v4036 = vadd.f32 %v4035, %v4029
    %v4037 = vxor.u32 %v4034, 2147483648
    %v4038 = vmul.f32 %v4037, 1.442695
    %v4039 = vpow.pop %v4038
    %v4040 = vadd.f32 %v4039, 1.0
    %v4041 = vrcp.pop %v4040
    %v4042 = vmul.f32 1.0, %v4041
    %v4043 = vtanh.pop %v4034
    %v4044 = vxor.u32 %v4036, 2147483648
    %v4045 = vmul.f32 %v4044, 1.442695
    %v4046 = vpow.pop %v4045
    %v4047 = vadd.f32 %v4046, 1.0
    %v4048 = vrcp.pop %v4047
    %v4049 = vmul.f32 1.0, %v4048
    %v4050 = vtanh.pop %v4036
    %v4051 = vmul.f32 %v4042, %v3953
    %4053 = vrot.lane.b32.xlu0 %v4043, 64
    %v4054 = vpop.permute.xlu0 %4053
    %v4056 = vmul.f32 %v4042, %v4054
    %4058 = vrot.lane.b32.xlu0 %v4056, 32
    %v4059 = vpop.permute.xlu0 %4058
    %v4061 = vadd.f32 %v4051, %v4059
    %v4062 = vmul.f32 %v4049, %v3964
    %4064 = vrot.lane.b32.xlu0 %v4050, 64
    %v4065 = vpop.permute.xlu0 %4064
    %v4067 = vmul.f32 %v4049, %v4065
    %4069 = vrot.lane.b32.xlu0 %v4067, 32
    %v4070 = vpop.permute.xlu0 %4069
    %v4072 = vadd.f32 %v4062, %v4070
    %v4073 = vtanh.pop %v4061
    %4075 = vrot.lane.b32.xlu0 %v4073, 64
    %v4076 = vpop.permute.xlu0 %4075
    %v4078 = vmul.f32 %v4042, %v4076
    %v4079 = vtanh.pop %v4072
    %4081 = vrot.lane.b32.xlu0 %v4079, 64
    %v4082 = vpop.permute.xlu0 %4081
    %v4084 = vmul.f32 %v4049, %v4082
    %4086 = vrot.lane.b32.xlu0 %v4078, 32
    %v4087 = vpop.permute.xlu0 %4086
    %4089 = vst.msk [vmem:[#allocation2 + $0x8] sm:$0xff] %vm563, %v4087
    %4091 = vrot.lane.b32.xlu0 %v4084, 64
    %v4092 = vpop.permute.xlu0 %4091
    %4094 = vst.msk [vmem:[#allocation2 + $0x30] sm:$0xff] %vm569, %v4092
    %v4095 = vsel %vm563, %v4087, %v4092
    %v4096 = vpack.c.bf16 %v4095, %v4095
    %v4098 = vsel %vm462, %v4096, 0
    %4100 = vmatprep.subr.bf16.mxu0 0
    %4101 = vmatpush1.bf16.msra.mxu0 0
    %4102 = vmatprep.subr.bf16.mxu0 0
    %4103 = vmatpush1.bf16.msra.mxu0 0
    %4104 = vmatprep.subr.bf16.mxu0 0
    %4105 = vmatpush1.bf16.msra.mxu0 0
    %4106 = vmatprep.subr.bf16.mxu0 0
    %4107 = vmatpush1.bf16.msra.mxu0 0
    %4108 = vmatprep.subr.bf16.mxu0 %v3875
    %4109 = vmatpush1.bf16.msra.mxu0 %v3874
    %4110 = vmatprep.subr.bf16.mxu0 %v3873
    %4111 = vmatpush1.bf16.msra.mxu0 %v3872
    %4112 = vmatprep.subr.bf16.mxu0 %v3871
    %4113 = vmatpush1.bf16.msra.mxu0 %v3870
    %4114 = vmatprep.subr.bf16.mxu0 %v3869
    %4115 = vmatpush1.bf16.msra.mxu0 %v3868
    %4116 = vmatprep.subr.bf16.mxu0 0
    %4117 = vmatpush2.bf16.msra.mxu0 0
    %4118 = vmatprep.subr.bf16.mxu0 0
    %4119 = vmatpush2.bf16.msra.mxu0 0
    %4120 = vmatprep.subr.bf16.mxu0 0
    %4121 = vmatpush2.bf16.msra.mxu0 0
    %4122 = vmatprep.subr.bf16.mxu0 0
    %4123 = vmatpush2.bf16.msra.mxu0 0
    %4124 = vmatprep.subr.bf16.mxu0 0
    %4125 = vmatpush2.bf16.msra.mxu0 0
    %4126 = vmatprep.subr.bf16.mxu0 0
    %4127 = vmatpush2.bf16.msra.mxu0 0
    %4128 = vmatprep.subr.bf16.mxu0 0
    %4129 = vmatpush2.bf16.msra.mxu0 0
    %4130 = vmatprep.subr.bf16.mxu0 0
    %4131 = vmatpush2.bf16.msra.mxu0 0
    %4132 = vmatprep.mubr.bf16.mxu0 0
    %4133 = vmatmul.mubr.bf16.gmra.mxu0 %v4098
    %v4134 = vpop.f32.mrf.mxu0
    %v4135 = vadd.f32 0.0, %v4134
    %v4136 = vpop.f32.mrf.mxu0
    %v4137 = vadd.f32 0.0, %v4136
    %v4138 = vpop.f32.mrf.mxu0
    %v4139 = vpop.f32.mrf.mxu0
    %4140 = vdwg.mxu0
    %v4141 = vld [vmem:[#allocation3 + $0x20] sm:$0xff]
    %v4142 = vadd.f32 %v4141, %v4135
    %v4143 = vld [vmem:[#allocation3 + $0x58] sm:$0xff]
    %v4144 = vadd.f32 %v4143, %v4137
    %v4145 = vxor.u32 %v4142, 2147483648
    %v4146 = vmul.f32 %v4145, 1.442695
    %v4147 = vpow.pop %v4146
    %v4148 = vadd.f32 %v4147, 1.0
    %v4149 = vrcp.pop %v4148
    %v4150 = vmul.f32 1.0, %v4149
    %v4151 = vtanh.pop %v4142
    %v4152 = vxor.u32 %v4144, 2147483648
    %v4153 = vmul.f32 %v4152, 1.442695
    %v4154 = vpow.pop %v4153
    %v4155 = vadd.f32 %v4154, 1.0
    %v4156 = vrcp.pop %v4155
    %v4157 = vmul.f32 1.0, %v4156
    %v4158 = vtanh.pop %v4144
    %v4159 = vmul.f32 %v4150, %v4061
    %4161 = vrot.lane.b32.xlu0 %v4151, 64
    %v4162 = vpop.permute.xlu0 %4161
    %v4164 = vmul.f32 %v4150, %v4162
    %4166 = vrot.lane.b32.xlu0 %v4164, 32
    %v4167 = vpop.permute.xlu0 %4166
    %v4169 = vadd.f32 %v4159, %v4167
    %v4170 = vmul.f32 %v4157, %v4072
    %4172 = vrot.lane.b32.xlu0 %v4158, 64
    %v4173 = vpop.permute.xlu0 %4172
    %v4175 = vmul.f32 %v4157, %v4173
    %4177 = vrot.lane.b32.xlu0 %v4175, 32
    %v4178 = vpop.permute.xlu0 %4177
    %v4180 = vadd.f32 %v4170, %v4178
    %v4181 = vtanh.pop %v4169
    %4183 = vrot.lane.b32.xlu0 %v4181, 64
    %v4184 = vpop.permute.xlu0 %4183
    %v4186 = vmul.f32 %v4150, %v4184
    %v4187 = vtanh.pop %v4180
    %4189 = vrot.lane.b32.xlu0 %v4187, 64
    %v4190 = vpop.permute.xlu0 %4189
    %v4192 = vmul.f32 %v4157, %v4190
    %4194 = vrot.lane.b32.xlu0 %v4186, 32
    %v4195 = vpop.permute.xlu0 %4194
    %4197 = vst.msk [vmem:[#allocation2 + $0x10] sm:$0xff] %vm563, %v4195
    %4199 = vrot.lane.b32.xlu0 %v4192, 64
    %v4200 = vpop.permute.xlu0 %4199
    %4202 = vst.msk [vmem:[#allocation2 + $0x28] sm:$0xff] %vm569, %v4200
    %v4203 = vsel %vm563, %v4195, %v4200
    %v4204 = vpack.c.bf16 %v4203, %v4203
    %v4206 = vsel %vm462, %v4204, 0
    %4208 = vmatprep.subr.bf16.mxu0 0
    %4209 = vmatpush1.bf16.msra.mxu0 0
    %4210 = vmatprep.subr.bf16.mxu0 0
    %4211 = vmatpush1.bf16.msra.mxu0 0
    %4212 = vmatprep.subr.bf16.mxu0 0
    %4213 = vmatpush1.bf16.msra.mxu0 0
    %4214 = vmatprep.subr.bf16.mxu0 0
    %4215 = vmatpush1.bf16.msra.mxu0 0
    %4216 = vmatprep.subr.bf16.mxu0 %v3875
    %4217 = vmatpush1.bf16.msra.mxu0 %v3874
    %4218 = vmatprep.subr.bf16.mxu0 %v3873
    %4219 = vmatpush1.bf16.msra.mxu0 %v3872
    %4220 = vmatprep.subr.bf16.mxu0 %v3871
    %4221 = vmatpush1.bf16.msra.mxu0 %v3870
    %4222 = vmatprep.subr.bf16.mxu0 %v3869
    %4223 = vmatpush1.bf16.msra.mxu0 %v3868
    %4224 = vmatprep.subr.bf16.mxu0 0
    %4225 = vmatpush2.bf16.msra.mxu0 0
    %4226 = vmatprep.subr.bf16.mxu0 0
    %4227 = vmatpush2.bf16.msra.mxu0 0
    %4228 = vmatprep.subr.bf16.mxu0 0
    %4229 = vmatpush2.bf16.msra.mxu0 0
    %4230 = vmatprep.subr.bf16.mxu0 0
    %4231 = vmatpush2.bf16.msra.mxu0 0
    %4232 = vmatprep.subr.bf16.mxu0 0
    %4233 = vmatpush2.bf16.msra.mxu0 0
    %4234 = vmatprep.subr.bf16.mxu0 0
    %4235 = vmatpush2.bf16.msra.mxu0 0
    %4236 = vmatprep.subr.bf16.mxu0 0
    %4237 = vmatpush2.bf16.msra.mxu0 0
    %4238 = vmatprep.subr.bf16.mxu0 0
    %4239 = vmatpush2.bf16.msra.mxu0 0
    %4240 = vmatprep.mubr.bf16.mxu0 0
    %4241 = vmatmul.mubr.bf16.gmra.mxu0 %v4206
    %v4242 = vpop.f32.mrf.mxu0
    %v4243 = vadd.f32 0.0, %v4242
    %v4244 = vpop.f32.mrf.mxu0
    %v4245 = vadd.f32 0.0, %v4244
    %v4246 = vpop.f32.mrf.mxu0
    %v4247 = vpop.f32.mrf.mxu0
    %4248 = vdwg.mxu0
    %v4249 = vld [vmem:[#allocation3 + $0x30] sm:$0xff]
    %v4250 = vadd.f32 %v4249, %v4243
    %v4251 = vld [vmem:[#allocation3 + $0x48] sm:$0xff]
    %v4252 = vadd.f32 %v4251, %v4245
    %v4253 = vxor.u32 %v4250, 2147483648
    %v4254 = vmul.f32 %v4253, 1.442695
    %v4255 = vpow.pop %v4254
    %v4256 = vadd.f32 %v4255, 1.0
    %v4257 = vrcp.pop %v4256
    %v4258 = vmul.f32 1.0, %v4257
    %v4259 = vtanh.pop %v4250
    %v4260 = vxor.u32 %v4252, 2147483648
    %v4261 = vmul.f32 %v4260, 1.442695
    %v4262 = vpow.pop %v4261
    %v4263 = vadd.f32 %v4262, 1.0
    %v4264 = vrcp.pop %v4263
    %v4265 = vmul.f32 1.0, %v4264
    %v4266 = vtanh.pop %v4252
    %v4267 = vmul.f32 %v4258, %v4169
    %4269 = vrot.lane.b32.xlu0 %v4259, 64
    %v4270 = vpop.permute.xlu0 %4269
    %v4272 = vmul.f32 %v4258, %v4270
    %4274 = vrot.lane.b32.xlu0 %v4272, 32
    %v4275 = vpop.permute.xlu0 %4274
    %v4277 = vadd.f32 %v4267, %v4275
    %v4278 = vmul.f32 %v4265, %v4180
    %4280 = vrot.lane.b32.xlu0 %v4266, 64
    %v4281 = vpop.permute.xlu0 %4280
    %v4283 = vmul.f32 %v4265, %v4281
    %4285 = vrot.lane.b32.xlu0 %v4283, 32
    %v4286 = vpop.permute.xlu0 %4285
    %v4288 = vadd.f32 %v4278, %v4286
    %v4289 = vtanh.pop %v4277
    %4291 = vrot.lane.b32.xlu0 %v4289, 64
    %v4292 = vpop.permute.xlu0 %4291
    %v4294 = vmul.f32 %v4258, %v4292
    %v4295 = vtanh.pop %v4288
    %4297 = vrot.lane.b32.xlu0 %v4295, 64
    %v4298 = vpop.permute.xlu0 %4297
    %v4300 = vmul.f32 %v4265, %v4298
    %4302 = vrot.lane.b32.xlu0 %v4294, 32
    %v4303 = vpop.permute.xlu0 %4302
    %4305 = vst.msk [vmem:[#allocation2 + $0x18] sm:$0xff] %vm563, %v4303
    %4307 = vrot.lane.b32.xlu0 %v4300, 64
    %v4308 = vpop.permute.xlu0 %4307
    %4310 = vst.msk [vmem:[#allocation2 + $0x20] sm:$0xff] %vm569, %v4308
    %v4311 = vsel %vm563, %v4303, %v4308
    %v4312 = vpack.c.bf16 %v4311, %v4311
    %v4314 = vsel %vm462, %v4312, 0
    %4316 = vmatprep.subr.bf16.mxu0 0
    %4317 = vmatpush1.bf16.msra.mxu0 0
    %4318 = vmatprep.subr.bf16.mxu0 0
    %4319 = vmatpush1.bf16.msra.mxu0 0
    %4320 = vmatprep.subr.bf16.mxu0 0
    %4321 = vmatpush1.bf16.msra.mxu0 0
    %4322 = vmatprep.subr.bf16.mxu0 0
    %4323 = vmatpush1.bf16.msra.mxu0 0
    %4324 = vmatprep.subr.bf16.mxu0 %v3875
    %4325 = vmatpush1.bf16.msra.mxu0 %v3874
    %4326 = vmatprep.subr.bf16.mxu0 %v3873
    %4327 = vmatpush1.bf16.msra.mxu0 %v3872
    %4328 = vmatprep.subr.bf16.mxu0 %v3871
    %4329 = vmatpush1.bf16.msra.mxu0 %v3870
    %4330 = vmatprep.subr.bf16.mxu0 %v3869
    %4331 = vmatpush1.bf16.msra.mxu0 %v3868
    %4332 = vmatprep.subr.bf16.mxu0 0
    %4333 = vmatpush2.bf16.msra.mxu0 0
    %4334 = vmatprep.subr.bf16.mxu0 0
    %4335 = vmatpush2.bf16.msra.mxu0 0
    %4336 = vmatprep.subr.bf16.mxu0 0
    %4337 = vmatpush2.bf16.msra.mxu0 0
    %4338 = vmatprep.subr.bf16.mxu0 0
    %4339 = vmatpush2.bf16.msra.mxu0 0
    %4340 = vmatprep.subr.bf16.mxu0 0
    %4341 = vmatpush2.bf16.msra.mxu0 0
    %4342 = vmatprep.subr.bf16.mxu0 0
    %4343 = vmatpush2.bf16.msra.mxu0 0
    %4344 = vmatprep.subr.bf16.mxu0 0
    %4345 = vmatpush2.bf16.msra.mxu0 0
    %4346 = vmatprep.subr.bf16.mxu0 0
    %4347 = vmatpush2.bf16.msra.mxu0 0
    %4348 = vmatprep.mubr.bf16.mxu0 0
    %4349 = vmatmul.mubr.bf16.gmra.mxu0 %v4314
    %v4350 = vpop.f32.mrf.mxu0
    %v4351 = vadd.f32 0.0, %v4350
    %v4352 = vpop.f32.mrf.mxu0
    %v4353 = vadd.f32 0.0, %v4352
    %v4354 = vpop.f32.mrf.mxu0
    %v4355 = vpop.f32.mrf.mxu0
    %4356 = vdwg.mxu0
    %v4357 = vld [vmem:[#allocation3 + $0x40] sm:$0xff]
    %v4358 = vadd.f32 %v4357, %v4351
    %v4359 = vld [vmem:[#allocation3 + $0x38] sm:$0xff]
    %v4360 = vadd.f32 %v4359, %v4353
    %v4361 = vxor.u32 %v4358, 2147483648
    %v4362 = vmul.f32 %v4361, 1.442695
    %v4363 = vpow.pop %v4362
    %v4364 = vadd.f32 %v4363, 1.0
    %v4365 = vrcp.pop %v4364
    %v4366 = vmul.f32 1.0, %v4365
    %v4367 = vtanh.pop %v4358
    %v4368 = vxor.u32 %v4360, 2147483648
    %v4369 = vmul.f32 %v4368, 1.442695
    %v4370 = vpow.pop %v4369
    %v4371 = vadd.f32 %v4370, 1.0
    %v4372 = vrcp.pop %v4371
    %v4373 = vmul.f32 1.0, %v4372
    %v4374 = vtanh.pop %v4360
    %v4375 = vmul.f32 %v4366, %v4277
    %4377 = vrot.lane.b32.xlu0 %v4367, 64
    %v4378 = vpop.permute.xlu0 %4377
    %v4380 = vmul.f32 %v4366, %v4378
    %4382 = vrot.lane.b32.xlu0 %v4380, 32
    %v4383 = vpop.permute.xlu0 %4382
    %v4385 = vadd.f32 %v4375, %v4383
    %v4386 = vmul.f32 %v4373, %v4288
    %4388 = vrot.lane.b32.xlu0 %v4374, 64
    %v4389 = vpop.permute.xlu0 %4388
    %v4391 = vmul.f32 %v4373, %v4389
    %4393 = vrot.lane.b32.xlu0 %v4391, 32
    %v4394 = vpop.permute.xlu0 %4393
    %v4396 = vadd.f32 %v4386, %v4394
    %v4397 = vtanh.pop %v4385
    %4399 = vrot.lane.b32.xlu0 %v4397, 64
    %v4400 = vpop.permute.xlu0 %4399
    %v4402 = vmul.f32 %v4366, %v4400
    %v4403 = vtanh.pop %v4396
    %4405 = vrot.lane.b32.xlu0 %v4403, 64
    %v4406 = vpop.permute.xlu0 %4405
    %v4408 = vmul.f32 %v4373, %v4406
    %4410 = vrot.lane.b32.xlu0 %v4402, 32
    %v4411 = vpop.permute.xlu0 %4410
    %4413 = vst.msk [vmem:[#allocation2 + $0x20] sm:$0xff] %vm563, %v4411
    %4415 = vrot.lane.b32.xlu0 %v4408, 64
    %v4416 = vpop.permute.xlu0 %4415
    %4418 = vst.msk [vmem:[#allocation2 + $0x18] sm:$0xff] %vm569, %v4416
    %v4419 = vsel %vm563, %v4411, %v4416
    %v4420 = vpack.c.bf16 %v4419, %v4419
    %v4422 = vsel %vm462, %v4420, 0
    %4424 = vmatprep.subr.bf16.mxu0 0
    %4425 = vmatpush1.bf16.msra.mxu0 0
    %4426 = vmatprep.subr.bf16.mxu0 0
    %4427 = vmatpush1.bf16.msra.mxu0 0
    %4428 = vmatprep.subr.bf16.mxu0 0
    %4429 = vmatpush1.bf16.msra.mxu0 0
    %4430 = vmatprep.subr.bf16.mxu0 0
    %4431 = vmatpush1.bf16.msra.mxu0 0
    %4432 = vmatprep.subr.bf16.mxu0 %v3875
    %4433 = vmatpush1.bf16.msra.mxu0 %v3874
    %4434 = vmatprep.subr.bf16.mxu0 %v3873
    %4435 = vmatpush1.bf16.msra.mxu0 %v3872
    %4436 = vmatprep.subr.bf16.mxu0 %v3871
    %4437 = vmatpush1.bf16.msra.mxu0 %v3870
    %4438 = vmatprep.subr.bf16.mxu0 %v3869
    %4439 = vmatpush1.bf16.msra.mxu0 %v3868
    %4440 = vmatprep.subr.bf16.mxu0 0
    %4441 = vmatpush2.bf16.msra.mxu0 0
    %4442 = vmatprep.subr.bf16.mxu0 0
    %4443 = vmatpush2.bf16.msra.mxu0 0
    %4444 = vmatprep.subr.bf16.mxu0 0
    %4445 = vmatpush2.bf16.msra.mxu0 0
    %4446 = vmatprep.subr.bf16.mxu0 0
    %4447 = vmatpush2.bf16.msra.mxu0 0
    %4448 = vmatprep.subr.bf16.mxu0 0
    %4449 = vmatpush2.bf16.msra.mxu0 0
    %4450 = vmatprep.subr.bf16.mxu0 0
    %4451 = vmatpush2.bf16.msra.mxu0 0
    %4452 = vmatprep.subr.bf16.mxu0 0
    %4453 = vmatpush2.bf16.msra.mxu0 0
    %4454 = vmatprep.subr.bf16.mxu0 0
    %4455 = vmatpush2.bf16.msra.mxu0 0
    %4456 = vmatprep.mubr.bf16.mxu0 0
    %4457 = vmatmul.mubr.bf16.gmra.mxu0 %v4422
    %v4458 = vpop.f32.mrf.mxu0
    %v4459 = vadd.f32 0.0, %v4458
    %v4460 = vpop.f32.mrf.mxu0
    %v4461 = vadd.f32 0.0, %v4460
    %v4462 = vpop.f32.mrf.mxu0
    %v4463 = vpop.f32.mrf.mxu0
    %4464 = vdwg.mxu0
    %v4465 = vld [vmem:[#allocation3 + $0x50] sm:$0xff]
    %v4466 = vadd.f32 %v4465, %v4459
    %v4467 = vld [vmem:[#allocation3 + $0x28] sm:$0xff]
    %v4468 = vadd.f32 %v4467, %v4461
    %v4469 = vxor.u32 %v4466, 2147483648
    %v4470 = vmul.f32 %v4469, 1.442695
    %v4471 = vpow.pop %v4470
    %v4472 = vadd.f32 %v4471, 1.0
    %v4473 = vrcp.pop %v4472
    %v4474 = vmul.f32 1.0, %v4473
    %v4475 = vtanh.pop %v4466
    %v4476 = vxor.u32 %v4468, 2147483648
    %v4477 = vmul.f32 %v4476, 1.442695
    %v4478 = vpow.pop %v4477
    %v4479 = vadd.f32 %v4478, 1.0
    %v4480 = vrcp.pop %v4479
    %v4481 = vmul.f32 1.0, %v4480
    %v4482 = vtanh.pop %v4468
    %v4483 = vmul.f32 %v4474, %v4385
    %4485 = vrot.lane.b32.xlu0 %v4475, 64
    %v4486 = vpop.permute.xlu0 %4485
    %v4488 = vmul.f32 %v4474, %v4486
    %4490 = vrot.lane.b32.xlu0 %v4488, 32
    %v4491 = vpop.permute.xlu0 %4490
    %v4493 = vadd.f32 %v4483, %v4491
    %v4494 = vmul.f32 %v4481, %v4396
    %4496 = vrot.lane.b32.xlu0 %v4482, 64
    %v4497 = vpop.permute.xlu0 %4496
    %v4499 = vmul.f32 %v4481, %v4497
    %4501 = vrot.lane.b32.xlu0 %v4499, 32
    %v4502 = vpop.permute.xlu0 %4501
    %v4504 = vadd.f32 %v4494, %v4502
    %v4505 = vtanh.pop %v4493
    %4507 = vrot.lane.b32.xlu0 %v4505, 64
    %v4508 = vpop.permute.xlu0 %4507
    %v4510 = vmul.f32 %v4474, %v4508
    %v4511 = vtanh.pop %v4504
    %4513 = vrot.lane.b32.xlu0 %v4511, 64
    %v4514 = vpop.permute.xlu0 %4513
    %v4516 = vmul.f32 %v4481, %v4514
    %4518 = vrot.lane.b32.xlu0 %v4510, 32
    %v4519 = vpop.permute.xlu0 %4518
    %4521 = vst.msk [vmem:[#allocation2 + $0x28] sm:$0xff] %vm563, %v4519
    %4523 = vrot.lane.b32.xlu0 %v4516, 64
    %v4524 = vpop.permute.xlu0 %4523
    %4526 = vst.msk [vmem:[#allocation2 + $0x10] sm:$0xff] %vm569, %v4524
    %v4527 = vsel %vm563, %v4519, %v4524
    %v4528 = vpack.c.bf16 %v4527, %v4527
    %v4530 = vsel %vm462, %v4528, 0
    %4532 = vmatprep.subr.bf16.mxu0 0
    %4533 = vmatpush1.bf16.msra.mxu0 0
    %4534 = vmatprep.subr.bf16.mxu0 0
    %4535 = vmatpush1.bf16.msra.mxu0 0
    %4536 = vmatprep.subr.bf16.mxu0 0
    %4537 = vmatpush1.bf16.msra.mxu0 0
    %4538 = vmatprep.subr.bf16.mxu0 0
    %4539 = vmatpush1.bf16.msra.mxu0 0
    %4540 = vmatprep.subr.bf16.mxu0 %v3875
    %4541 = vmatpush1.bf16.msra.mxu0 %v3874
    %4542 = vmatprep.subr.bf16.mxu0 %v3873
    %4543 = vmatpush1.bf16.msra.mxu0 %v3872
    %4544 = vmatprep.subr.bf16.mxu0 %v3871
    %4545 = vmatpush1.bf16.msra.mxu0 %v3870
    %4546 = vmatprep.subr.bf16.mxu0 %v3869
    %4547 = vmatpush1.bf16.msra.mxu0 %v3868
    %4548 = vmatprep.subr.bf16.mxu0 0
    %4549 = vmatpush2.bf16.msra.mxu0 0
    %4550 = vmatprep.subr.bf16.mxu0 0
    %4551 = vmatpush2.bf16.msra.mxu0 0
    %4552 = vmatprep.subr.bf16.mxu0 0
    %4553 = vmatpush2.bf16.msra.mxu0 0
    %4554 = vmatprep.subr.bf16.mxu0 0
    %4555 = vmatpush2.bf16.msra.mxu0 0
    %4556 = vmatprep.subr.bf16.mxu0 0
    %4557 = vmatpush2.bf16.msra.mxu0 0
    %4558 = vmatprep.subr.bf16.mxu0 0
    %4559 = vmatpush2.bf16.msra.mxu0 0
    %4560 = vmatprep.subr.bf16.mxu0 0
    %4561 = vmatpush2.bf16.msra.mxu0 0
    %4562 = vmatprep.subr.bf16.mxu0 0
    %4563 = vmatpush2.bf16.msra.mxu0 0
    %4564 = vmatprep.mubr.bf16.mxu0 0
    %4565 = vmatmul.mubr.bf16.gmra.mxu0 %v4530
    %v4566 = vpop.f32.mrf.mxu0
    %v4567 = vadd.f32 0.0, %v4566
    %v4568 = vpop.f32.mrf.mxu0
    %v4569 = vadd.f32 0.0, %v4568
    %v4570 = vpop.f32.mrf.mxu0
    %v4571 = vpop.f32.mrf.mxu0
    %4572 = vdwg.mxu0
    %v4573 = vld [vmem:[#allocation3 + $0x60] sm:$0xff]
    %v4574 = vadd.f32 %v4573, %v4567
    %v4575 = vld [vmem:[#allocation3 + $0x18] sm:$0xff]
    %v4576 = vadd.f32 %v4575, %v4569
    %v4577 = vxor.u32 %v4574, 2147483648
    %v4578 = vmul.f32 %v4577, 1.442695
    %v4579 = vpow.pop %v4578
    %v4580 = vadd.f32 %v4579, 1.0
    %v4581 = vrcp.pop %v4580
    %v4582 = vmul.f32 1.0, %v4581
    %v4583 = vtanh.pop %v4574
    %v4584 = vxor.u32 %v4576, 2147483648
    %v4585 = vmul.f32 %v4584, 1.442695
    %v4586 = vpow.pop %v4585
    %v4587 = vadd.f32 %v4586, 1.0
    %v4588 = vrcp.pop %v4587
    %v4589 = vmul.f32 1.0, %v4588
    %v4590 = vtanh.pop %v4576
    %v4591 = vmul.f32 %v4582, %v4493
    %4593 = vrot.lane.b32.xlu0 %v4583, 64
    %v4594 = vpop.permute.xlu0 %4593
    %v4596 = vmul.f32 %v4582, %v4594
    %4598 = vrot.lane.b32.xlu0 %v4596, 32
    %v4599 = vpop.permute.xlu0 %4598
    %v4601 = vadd.f32 %v4591, %v4599
    %v4602 = vmul.f32 %v4589, %v4504
    %4604 = vrot.lane.b32.xlu0 %v4590, 64
    %v4605 = vpop.permute.xlu0 %4604
    %v4607 = vmul.f32 %v4589, %v4605
    %4609 = vrot.lane.b32.xlu0 %v4607, 32
    %v4610 = vpop.permute.xlu0 %4609
    %v4612 = vadd.f32 %v4602, %v4610
    %v4613 = vtanh.pop %v4601
    %4615 = vrot.lane.b32.xlu0 %v4613, 64
    %v4616 = vpop.permute.xlu0 %4615
    %v4618 = vmul.f32 %v4582, %v4616
    %v4619 = vtanh.pop %v4612
    %4621 = vrot.lane.b32.xlu0 %v4619, 64
    %v4622 = vpop.permute.xlu0 %4621
    %v4624 = vmul.f32 %v4589, %v4622
    %4626 = vrot.lane.b32.xlu0 %v4618, 32
    %v4627 = vpop.permute.xlu0 %4626
    %4629 = vst.msk [vmem:[#allocation2 + $0x30] sm:$0xff] %vm563, %v4627
    %4631 = vrot.lane.b32.xlu0 %v4624, 64
    %v4632 = vpop.permute.xlu0 %4631
    %4634 = vst.msk [vmem:[#allocation2 + $0x8] sm:$0xff] %vm569, %v4632
    %v4635 = vsel %vm563, %v4627, %v4632
    %v4636 = vpack.c.bf16 %v4635, %v4635
    %v4638 = vsel %vm462, %v4636, 0
    %4640 = vmatprep.subr.bf16.mxu0 0
    %4641 = vmatpush1.bf16.msra.mxu0 0
    %4642 = vmatprep.subr.bf16.mxu0 0
    %4643 = vmatpush1.bf16.msra.mxu0 0
    %4644 = vmatprep.subr.bf16.mxu0 0
    %4645 = vmatpush1.bf16.msra.mxu0 0
    %4646 = vmatprep.subr.bf16.mxu0 0
    %4647 = vmatpush1.bf16.msra.mxu0 0
    %4648 = vmatprep.subr.bf16.mxu0 %v3875
    %4649 = vmatpush1.bf16.msra.mxu0 %v3874
    %4650 = vmatprep.subr.bf16.mxu0 %v3873
    %4651 = vmatpush1.bf16.msra.mxu0 %v3872
    %4652 = vmatprep.subr.bf16.mxu0 %v3871
    %4653 = vmatpush1.bf16.msra.mxu0 %v3870
    %4654 = vmatprep.subr.bf16.mxu0 %v3869
    %4655 = vmatpush1.bf16.msra.mxu0 %v3868
    %4656 = vmatprep.subr.bf16.mxu0 0
    %4657 = vmatpush2.bf16.msra.mxu0 0
    %4658 = vmatprep.subr.bf16.mxu0 0
    %4659 = vmatpush2.bf16.msra.mxu0 0
    %4660 = vmatprep.subr.bf16.mxu0 0
    %4661 = vmatpush2.bf16.msra.mxu0 0
    %4662 = vmatprep.subr.bf16.mxu0 0
    %4663 = vmatpush2.bf16.msra.mxu0 0
    %4664 = vmatprep.subr.bf16.mxu0 0
    %4665 = vmatpush2.bf16.msra.mxu0 0
    %4666 = vmatprep.subr.bf16.mxu0 0
    %4667 = vmatpush2.bf16.msra.mxu0 0
    %4668 = vmatprep.subr.bf16.mxu0 0
    %4669 = vmatpush2.bf16.msra.mxu0 0
    %4670 = vmatprep.subr.bf16.mxu0 0
    %4671 = vmatpush2.bf16.msra.mxu0 0
    %4672 = vmatprep.mubr.bf16.mxu0 0
    %4673 = vmatmul.mubr.bf16.gmra.mxu0 %v4638
    %v4674 = vpop.f32.mrf.mxu0
    %v4675 = vadd.f32 0.0, %v4674
    %v4676 = vpop.f32.mrf.mxu0
    %v4677 = vadd.f32 0.0, %v4676
    %v4678 = vpop.f32.mrf.mxu0
    %v4679 = vpop.f32.mrf.mxu0
    %4680 = vdwg.mxu0
    %v4681 = vld [vmem:[#allocation3 + $0x70] sm:$0xff]
    %v4682 = vadd.f32 %v4681, %v4675
    %v4683 = vld [vmem:[#allocation3 + $0x8] sm:$0xff]
    %v4684 = vadd.f32 %v4683, %v4677
    %v4685 = vxor.u32 %v4682, 2147483648
    %v4686 = vmul.f32 %v4685, 1.442695
    %v4687 = vpow.pop %v4686
    %v4688 = vadd.f32 %v4687, 1.0
    %v4689 = vrcp.pop %v4688
    %v4690 = vmul.f32 1.0, %v4689
    %v4691 = vtanh.pop %v4682
    %v4692 = vxor.u32 %v4684, 2147483648
    %v4693 = vmul.f32 %v4692, 1.442695
    %v4694 = vpow.pop %v4693
    %v4695 = vadd.f32 %v4694, 1.0
    %v4696 = vrcp.pop %v4695
    %v4697 = vmul.f32 1.0, %v4696
    %v4698 = vtanh.pop %v4684
    %v4699 = vmul.f32 %v4690, %v4601
    %4701 = vrot.lane.b32.xlu0 %v4691, 64
    %v4702 = vpop.permute.xlu0 %4701
    %v4704 = vmul.f32 %v4690, %v4702
    %4706 = vrot.lane.b32.xlu0 %v4704, 32
    %v4707 = vpop.permute.xlu0 %4706
    %v4709 = vadd.f32 %v4699, %v4707
    %v4710 = vmul.f32 %v4697, %v4612
    %4712 = vrot.lane.b32.xlu0 %v4698, 64
    %v4713 = vpop.permute.xlu0 %4712
    %v4715 = vmul.f32 %v4697, %v4713
    %4717 = vrot.lane.b32.xlu0 %v4715, 32
    %v4718 = vpop.permute.xlu0 %4717
    %v4720 = vadd.f32 %v4710, %v4718
    %v4721 = vtanh.pop %v4709
    %4723 = vrot.lane.b32.xlu0 %v4721, 64
    %v4724 = vpop.permute.xlu0 %4723
    %v4726 = vmul.f32 %v4690, %v4724
    %v4727 = vtanh.pop %v4720
    %4729 = vrot.lane.b32.xlu0 %v4727, 64
    %v4730 = vpop.permute.xlu0 %4729
    %v4732 = vmul.f32 %v4697, %v4730
    %4734 = vrot.lane.b32.xlu0 %v4726, 32
    %v4735 = vpop.permute.xlu0 %4734
    %4737 = vst.msk [vmem:[#allocation2 + $0x38] sm:$0xff] %vm563, %v4735
    %4739 = vrot.lane.b32.xlu0 %v4732, 64
    %v4740 = vpop.permute.xlu0 %4739
    %4742 = vst.msk [vmem:[#allocation2] sm:$0xff] %vm569, %v4740
    %v4743 = vld [vmem:[#allocation2] sm:$0xff]
    %v4744 = vld [vmem:[#allocation2 + $0x8] sm:$0xff]
    %v4745 = vld [vmem:[#allocation2 + $0x10] sm:$0xff]
    %v4746 = vld [vmem:[#allocation2 + $0x18] sm:$0xff]
    %v4747 = vld [vmem:[#allocation2 + $0x20] sm:$0xff]
    %v4748 = vld [vmem:[#allocation2 + $0x28] sm:$0xff]
    %v4749 = vld [vmem:[#allocation2 + $0x30] sm:$0xff]
    %v4750 = vld [vmem:[#allocation2 + $0x38] sm:$0xff]
    %v4751 = vpack.c.bf16 %v4744, %v4743
    %v4752 = vpack.c.bf16 %v4746, %v4745
    %v4753 = vpack.c.bf16 %v4748, %v4747
    %v4754 = vpack.c.bf16 %v4750, %v4749
    %v4755 = vld [vmem:[#allocation20] sm:$0xff]
    %v4756 = vld [vmem:[#allocation20 + $0x8] sm:$0xff]
    %v4757 = vld [vmem:[#allocation20 + $0x10] sm:$0xff]
    %v4758 = vld [vmem:[#allocation20 + $0x18] sm:$0xff]
    %v4759 = vld [vmem:[#allocation20 + $0x20] sm:$0xff]
    %v4760 = vld [vmem:[#allocation20 + $0x28] sm:$0xff]
    %v4761 = vld [vmem:[#allocation20 + $0x30] sm:$0xff]
    %v4762 = vld [vmem:[#allocation20 + $0x38] sm:$0xff]
    %v4763 = vld [vmem:[#allocation21] sm:$0x3]
    %v4765 = vlaneseq
    %v4766 = vshrl.u32 %v4765, 7
    %v4767 = vsub.s32 0, %v4766
    %v4768 = vrot.slane %v4763, %v4767
    %v4769 = vlaneseq
    %v4770 = vshrl.u32 %v4769, 7
    %v4771 = vsub.s32 1, %v4770
    %v4772 = vrot.slane %v4763, %v4771
    %v4783 = vunpack.c.l.b16 %v4755
    %v4784 = vunpack.c.h.b16 %v4755
    %v4785 = vunpack.c.l.b16 %v4756
    %v4786 = vunpack.c.h.b16 %v4756
    %v4787 = vunpack.c.l.b16 %v4757
    %v4788 = vunpack.c.h.b16 %v4757
    %v4789 = vunpack.c.l.b16 %v4758
    %v4790 = vunpack.c.h.b16 %v4758
    %v4791 = vunpack.c.l.b16 %v4759
    %v4792 = vunpack.c.h.b16 %v4759
    %v4793 = vunpack.c.l.b16 %v4760
    %v4794 = vunpack.c.h.b16 %v4760
    %v4795 = vunpack.c.l.b16 %v4761
    %v4796 = vunpack.c.h.b16 %v4761
    %v4797 = vunpack.c.l.b16 %v4762
    %v4798 = vunpack.c.h.b16 %v4762
    %v4799 = vpack.c.b16 %v4785, %v4783
    %v4800 = vpack.c.b16 %v4786, %v4784
    %v4801 = vpack.c.b16 %v4789, %v4787
    %v4802 = vpack.c.b16 %v4790, %v4788
    %v4803 = vpack.c.b16 %v4793, %v4791
    %v4804 = vpack.c.b16 %v4794, %v4792
    %v4805 = vpack.c.b16 %v4797, %v4795
    %v4806 = vpack.c.b16 %v4798, %v4796
    %v4816 = vsel %vm462, %v4751, 0
    %v4819 = vsel %vm462, %v4752, 0
    %v4822 = vsel %vm462, %v4753, 0
    %v4825 = vsel %vm462, %v4754, 0
    %4827 = vmatprep.subr.bf16.mxu0 0
    %4828 = vmatpush1.bf16.msra.mxu0 0
    %4829 = vmatprep.subr.bf16.mxu0 0
    %4830 = vmatpush1.bf16.msra.mxu0 0
    %4831 = vmatprep.subr.bf16.mxu0 0
    %4832 = vmatpush1.bf16.msra.mxu0 0
    %4833 = vmatprep.subr.bf16.mxu0 0
    %4834 = vmatpush1.bf16.msra.mxu0 0
    %4835 = vmatprep.subr.bf16.mxu0 %v4806
    %4836 = vmatpush1.bf16.msra.mxu0 %v4805
    %4837 = vmatprep.subr.bf16.mxu0 %v4804
    %4838 = vmatpush1.bf16.msra.mxu0 %v4803
    %4839 = vmatprep.subr.bf16.mxu0 %v4802
    %4840 = vmatpush1.bf16.msra.mxu0 %v4801
    %4841 = vmatprep.subr.bf16.mxu0 %v4800
    %4842 = vmatpush1.bf16.msra.mxu0 %v4799
    %4843 = vmatprep.subr.bf16.mxu0 0
    %4844 = vmatpush2.bf16.msra.mxu0 0
    %4845 = vmatprep.subr.bf16.mxu0 0
    %4846 = vmatpush2.bf16.msra.mxu0 0
    %4847 = vmatprep.subr.bf16.mxu0 0
    %4848 = vmatpush2.bf16.msra.mxu0 0
    %4849 = vmatprep.subr.bf16.mxu0 0
    %4850 = vmatpush2.bf16.msra.mxu0 0
    %4851 = vmatprep.subr.bf16.mxu0 0
    %4852 = vmatpush2.bf16.msra.mxu0 0
    %4853 = vmatprep.subr.bf16.mxu0 0
    %4854 = vmatpush2.bf16.msra.mxu0 0
    %4855 = vmatprep.subr.bf16.mxu0 0
    %4856 = vmatpush2.bf16.msra.mxu0 0
    %4857 = vmatprep.subr.bf16.mxu0 0
    %4858 = vmatpush2.bf16.msra.mxu0 0
    %4859 = vmatprep.mubr.bf16.mxu0 0
    %4860 = vmatmul.mubr.bf16.gmra.mxu0 %v4816
    %v4861 = vpop.f32.mrf.mxu0
    %v4862 = vadd.f32 %v4768, %v4861
    %v4863 = vpop.f32.mrf.mxu0
    %v4864 = vadd.f32 %v4772, %v4863
    %v4865 = vpop.f32.mrf.mxu0
    %v4866 = vadd.f32 %v4768, %v4865
    %v4867 = vpop.f32.mrf.mxu0
    %v4868 = vadd.f32 %v4772, %v4867
    %4869 = vmatprep.mubr.bf16.mxu0 0
    %4870 = vmatmul.mubr.bf16.gmra.mxu0 %v4819
    %v4871 = vpop.f32.mrf.mxu0
    %v4872 = vadd.f32 %v4768, %v4871
    %v4873 = vpop.f32.mrf.mxu0
    %v4874 = vadd.f32 %v4772, %v4873
    %v4875 = vpop.f32.mrf.mxu0
    %v4876 = vadd.f32 %v4768, %v4875
    %v4877 = vpop.f32.mrf.mxu0
    %v4878 = vadd.f32 %v4772, %v4877
    %4879 = vmatprep.mubr.bf16.mxu0 0
    %4880 = vmatmul.mubr.bf16.gmra.mxu0 %v4822
    %v4881 = vpop.f32.mrf.mxu0
    %v4882 = vadd.f32 %v4768, %v4881
    %v4883 = vpop.f32.mrf.mxu0
    %v4884 = vadd.f32 %v4772, %v4883
    %v4885 = vpop.f32.mrf.mxu0
    %v4886 = vadd.f32 %v4768, %v4885
    %v4887 = vpop.f32.mrf.mxu0
    %v4888 = vadd.f32 %v4772, %v4887
    %4889 = vmatprep.mubr.bf16.mxu0 0
    %4890 = vmatmul.mubr.bf16.gmra.mxu0 %v4825
    %v4891 = vpop.f32.mrf.mxu0
    %v4892 = vadd.f32 %v4768, %v4891
    %v4893 = vpop.f32.mrf.mxu0
    %v4894 = vadd.f32 %v4772, %v4893
    %v4895 = vpop.f32.mrf.mxu0
    %v4896 = vadd.f32 %v4768, %v4895
    %v4897 = vpop.f32.mrf.mxu0
    %v4898 = vadd.f32 %v4772, %v4897
    %4899 = vdwg.mxu0
    %4900 = vst [vmem:[#allocation3] sm:$0xff] %v4862
    %4901 = vst [vmem:[#allocation3 + $0x8] sm:$0xff] %v4864
    %4902 = vst [vmem:[#allocation3 + $0x10] sm:$0xff] %v4866
    %4903 = vst [vmem:[#allocation3 + $0x18] sm:$0xff] %v4868
    %4904 = vst [vmem:[#allocation3 + $0x20] sm:$0xff] %v4872
    %4905 = vst [vmem:[#allocation3 + $0x28] sm:$0xff] %v4874
    %4906 = vst [vmem:[#allocation3 + $0x30] sm:$0xff] %v4876
    %4907 = vst [vmem:[#allocation3 + $0x38] sm:$0xff] %v4878
    %4908 = vst [vmem:[#allocation3 + $0x40] sm:$0xff] %v4882
    %4909 = vst [vmem:[#allocation3 + $0x48] sm:$0xff] %v4884
    %4910 = vst [vmem:[#allocation3 + $0x50] sm:$0xff] %v4886
    %4911 = vst [vmem:[#allocation3 + $0x58] sm:$0xff] %v4888
    %4912 = vst [vmem:[#allocation3 + $0x60] sm:$0xff] %v4892
    %4913 = vst [vmem:[#allocation3 + $0x68] sm:$0xff] %v4894
    %4914 = vst [vmem:[#allocation3 + $0x70] sm:$0xff] %v4896
    %4915 = vst [vmem:[#allocation3 + $0x78] sm:$0xff] %v4898
    %v4916 = vld [vmem:[%s14] sm:$0xff]
    %v4917 = vld [vmem:[%s14 + $0x8] sm:$0xff]
    %v4918 = vld [vmem:[%s14 + $0x10] sm:$0xff]
    %v4919 = vld [vmem:[%s14 + $0x18] sm:$0xff]
    %v4920 = vld [vmem:[%s14 + $0x20] sm:$0xff]
    %v4921 = vld [vmem:[%s14 + $0x28] sm:$0xff]
    %v4922 = vld [vmem:[%s14 + $0x30] sm:$0xff]
    %v4923 = vld [vmem:[%s14 + $0x38] sm:$0xff]
    %v4932 = vunpack.c.l.b16 %v4916
    %v4933 = vunpack.c.h.b16 %v4916
    %v4934 = vunpack.c.l.b16 %v4917
    %v4935 = vunpack.c.h.b16 %v4917
    %v4936 = vunpack.c.l.b16 %v4918
    %v4937 = vunpack.c.h.b16 %v4918
    %v4938 = vunpack.c.l.b16 %v4919
    %v4939 = vunpack.c.h.b16 %v4919
    %v4940 = vunpack.c.l.b16 %v4920
    %v4941 = vunpack.c.h.b16 %v4920
    %v4942 = vunpack.c.l.b16 %v4921
    %v4943 = vunpack.c.h.b16 %v4921
    %v4944 = vunpack.c.l.b16 %v4922
    %v4945 = vunpack.c.h.b16 %v4922
    %v4946 = vunpack.c.l.b16 %v4923
    %v4947 = vunpack.c.h.b16 %v4923
    %v4948 = vpack.c.b16 %v4934, %v4932
    %v4949 = vpack.c.b16 %v4935, %v4933
    %v4950 = vpack.c.b16 %v4938, %v4936
    %v4951 = vpack.c.b16 %v4939, %v4937
    %v4952 = vpack.c.b16 %v4942, %v4940
    %v4953 = vpack.c.b16 %v4943, %v4941
    %v4954 = vpack.c.b16 %v4946, %v4944
    %v4955 = vpack.c.b16 %v4947, %v4945
    %4964 = vmatprep.subr.bf16.mxu0 0
    %4965 = vmatpush1.bf16.msra.mxu0 0
    %4966 = vmatprep.subr.bf16.mxu0 0
    %4967 = vmatpush1.bf16.msra.mxu0 0
    %4968 = vmatprep.subr.bf16.mxu0 0
    %4969 = vmatpush1.bf16.msra.mxu0 0
    %4970 = vmatprep.subr.bf16.mxu0 0
    %4971 = vmatpush1.bf16.msra.mxu0 0
    %4972 = vmatprep.subr.bf16.mxu0 %v4955
    %4973 = vmatpush1.bf16.msra.mxu0 %v4954
    %4974 = vmatprep.subr.bf16.mxu0 %v4953
    %4975 = vmatpush1.bf16.msra.mxu0 %v4952
    %4976 = vmatprep.subr.bf16.mxu0 %v4951
    %4977 = vmatpush1.bf16.msra.mxu0 %v4950
    %4978 = vmatprep.subr.bf16.mxu0 %v4949
    %4979 = vmatpush1.bf16.msra.mxu0 %v4948
    %4980 = vmatprep.subr.bf16.mxu0 0
    %4981 = vmatpush2.bf16.msra.mxu0 0
    %4982 = vmatprep.subr.bf16.mxu0 0
    %4983 = vmatpush2.bf16.msra.mxu0 0
    %4984 = vmatprep.subr.bf16.mxu0 0
    %4985 = vmatpush2.bf16.msra.mxu0 0
    %4986 = vmatprep.subr.bf16.mxu0 0
    %4987 = vmatpush2.bf16.msra.mxu0 0
    %4988 = vmatprep.subr.bf16.mxu0 0
    %4989 = vmatpush2.bf16.msra.mxu0 0
    %4990 = vmatprep.subr.bf16.mxu0 0
    %4991 = vmatpush2.bf16.msra.mxu0 0
    %4992 = vmatprep.subr.bf16.mxu0 0
    %4993 = vmatpush2.bf16.msra.mxu0 0
    %4994 = vmatprep.subr.bf16.mxu0 0
    %4995 = vmatpush2.bf16.msra.mxu0 0
    %4996 = vmatprep.mubr.bf16.mxu0 0
    %4997 = vmatmul.mubr.bf16.gmra.mxu0 %v464
    %v4998 = vpop.f32.mrf.mxu0
    %v4999 = vadd.f32 0.0, %v4998
    %v5000 = vpop.f32.mrf.mxu0
    %v5001 = vadd.f32 0.0, %v5000
    %v5002 = vpop.f32.mrf.mxu0
    %v5003 = vpop.f32.mrf.mxu0
    %5004 = vdwg.mxu0
    %v5005 = vld [vmem:[#allocation3] sm:$0xff]
    %v5006 = vadd.f32 %v5005, %v4999
    %v5007 = vld [vmem:[#allocation3 + $0x78] sm:$0xff]
    %v5008 = vadd.f32 %v5007, %v5001
    %v5009 = vxor.u32 %v5006, 2147483648
    %v5010 = vmul.f32 %v5009, 1.442695
    %v5011 = vpow.pop %v5010
    %v5012 = vadd.f32 %v5011, 1.0
    %v5013 = vrcp.pop %v5012
    %v5014 = vmul.f32 1.0, %v5013
    %v5015 = vtanh.pop %v5006
    %v5016 = vxor.u32 %v5008, 2147483648
    %v5017 = vmul.f32 %v5016, 1.442695
    %v5018 = vpow.pop %v5017
    %v5019 = vadd.f32 %v5018, 1.0
    %v5020 = vrcp.pop %v5019
    %v5021 = vmul.f32 1.0, %v5020
    %v5022 = vtanh.pop %v5008
    %v5023 = vmul.f32 %v5014, 0.0
    %5025 = vrot.lane.b32.xlu0 %v5015, 64
    %v5026 = vpop.permute.xlu0 %5025
    %v5028 = vmul.f32 %v5014, %v5026
    %5030 = vrot.lane.b32.xlu0 %v5028, 32
    %v5031 = vpop.permute.xlu0 %5030
    %v5033 = vadd.f32 %v5023, %v5031
    %v5034 = vmul.f32 %v5021, 0.0
    %5036 = vrot.lane.b32.xlu0 %v5022, 64
    %v5037 = vpop.permute.xlu0 %5036
    %v5039 = vmul.f32 %v5021, %v5037
    %5041 = vrot.lane.b32.xlu0 %v5039, 32
    %v5042 = vpop.permute.xlu0 %5041
    %v5044 = vadd.f32 %v5034, %v5042
    %v5045 = vtanh.pop %v5033
    %5047 = vrot.lane.b32.xlu0 %v5045, 64
    %v5048 = vpop.permute.xlu0 %5047
    %v5050 = vmul.f32 %v5014, %v5048
    %v5051 = vtanh.pop %v5044
    %5053 = vrot.lane.b32.xlu0 %v5051, 64
    %v5054 = vpop.permute.xlu0 %5053
    %v5056 = vmul.f32 %v5021, %v5054
    %5058 = vrot.lane.b32.xlu0 %v5050, 32
    %v5059 = vpop.permute.xlu0 %5058
    %5061 = vst.msk [vmem:[#allocation2] sm:$0xff] %vm563, %v5059
    %5063 = vrot.lane.b32.xlu0 %v5056, 64
    %v5064 = vpop.permute.xlu0 %5063
    %5066 = vst.msk [vmem:[#allocation2 + $0x38] sm:$0xff] %vm569, %v5064
    %v5067 = vsel %vm563, %v5059, %v5064
    %v5068 = vpack.c.bf16 %v5067, %v5067
    %v5070 = vsel %vm462, %v5068, 0
    %5072 = vmatprep.subr.bf16.mxu0 0
    %5073 = vmatpush1.bf16.msra.mxu0 0
    %5074 = vmatprep.subr.bf16.mxu0 0
    %5075 = vmatpush1.bf16.msra.mxu0 0
    %5076 = vmatprep.subr.bf16.mxu0 0
    %5077 = vmatpush1.bf16.msra.mxu0 0
    %5078 = vmatprep.subr.bf16.mxu0 0
    %5079 = vmatpush1.bf16.msra.mxu0 0
    %5080 = vmatprep.subr.bf16.mxu0 %v4955
    %5081 = vmatpush1.bf16.msra.mxu0 %v4954
    %5082 = vmatprep.subr.bf16.mxu0 %v4953
    %5083 = vmatpush1.bf16.msra.mxu0 %v4952
    %5084 = vmatprep.subr.bf16.mxu0 %v4951
    %5085 = vmatpush1.bf16.msra.mxu0 %v4950
    %5086 = vmatprep.subr.bf16.mxu0 %v4949
    %5087 = vmatpush1.bf16.msra.mxu0 %v4948
    %5088 = vmatprep.subr.bf16.mxu0 0
    %5089 = vmatpush2.bf16.msra.mxu0 0
    %5090 = vmatprep.subr.bf16.mxu0 0
    %5091 = vmatpush2.bf16.msra.mxu0 0
    %5092 = vmatprep.subr.bf16.mxu0 0
    %5093 = vmatpush2.bf16.msra.mxu0 0
    %5094 = vmatprep.subr.bf16.mxu0 0
    %5095 = vmatpush2.bf16.msra.mxu0 0
    %5096 = vmatprep.subr.bf16.mxu0 0
    %5097 = vmatpush2.bf16.msra.mxu0 0
    %5098 = vmatprep.subr.bf16.mxu0 0
    %5099 = vmatpush2.bf16.msra.mxu0 0
    %5100 = vmatprep.subr.bf16.mxu0 0
    %5101 = vmatpush2.bf16.msra.mxu0 0
    %5102 = vmatprep.subr.bf16.mxu0 0
    %5103 = vmatpush2.bf16.msra.mxu0 0
    %5104 = vmatprep.mubr.bf16.mxu0 0
    %5105 = vmatmul.mubr.bf16.gmra.mxu0 %v5070
    %v5106 = vpop.f32.mrf.mxu0
    %v5107 = vadd.f32 0.0, %v5106
    %v5108 = vpop.f32.mrf.mxu0
    %v5109 = vadd.f32 0.0, %v5108
    %v5110 = vpop.f32.mrf.mxu0
    %v5111 = vpop.f32.mrf.mxu0
    %5112 = vdwg.mxu0
    %v5113 = vld [vmem:[#allocation3 + $0x10] sm:$0xff]
    %v5114 = vadd.f32 %v5113, %v5107
    %v5115 = vld [vmem:[#allocation3 + $0x68] sm:$0xff]
    %v5116 = vadd.f32 %v5115, %v5109
    %v5117 = vxor.u32 %v5114, 2147483648
    %v5118 = vmul.f32 %v5117, 1.442695
    %v5119 = vpow.pop %v5118
    %v5120 = vadd.f32 %v5119, 1.0
    %v5121 = vrcp.pop %v5120
    %v5122 = vmul.f32 1.0, %v5121
    %v5123 = vtanh.pop %v5114
    %v5124 = vxor.u32 %v5116, 2147483648
    %v5125 = vmul.f32 %v5124, 1.442695
    %v5126 = vpow.pop %v5125
    %v5127 = vadd.f32 %v5126, 1.0
    %v5128 = vrcp.pop %v5127
    %v5129 = vmul.f32 1.0, %v5128
    %v5130 = vtanh.pop %v5116
    %v5131 = vmul.f32 %v5122, %v5033
    %5133 = vrot.lane.b32.xlu0 %v5123, 64
    %v5134 = vpop.permute.xlu0 %5133
    %v5136 = vmul.f32 %v5122, %v5134
    %5138 = vrot.lane.b32.xlu0 %v5136, 32
    %v5139 = vpop.permute.xlu0 %5138
    %v5141 = vadd.f32 %v5131, %v5139
    %v5142 = vmul.f32 %v5129, %v5044
    %5144 = vrot.lane.b32.xlu0 %v5130, 64
    %v5145 = vpop.permute.xlu0 %5144
    %v5147 = vmul.f32 %v5129, %v5145
    %5149 = vrot.lane.b32.xlu0 %v5147, 32
    %v5150 = vpop.permute.xlu0 %5149
    %v5152 = vadd.f32 %v5142, %v5150
    %v5153 = vtanh.pop %v5141
    %5155 = vrot.lane.b32.xlu0 %v5153, 64
    %v5156 = vpop.permute.xlu0 %5155
    %v5158 = vmul.f32 %v5122, %v5156
    %v5159 = vtanh.pop %v5152
    %5161 = vrot.lane.b32.xlu0 %v5159, 64
    %v5162 = vpop.permute.xlu0 %5161
    %v5164 = vmul.f32 %v5129, %v5162
    %5166 = vrot.lane.b32.xlu0 %v5158, 32
    %v5167 = vpop.permute.xlu0 %5166
    %5169 = vst.msk [vmem:[#allocation2 + $0x8] sm:$0xff] %vm563, %v5167
    %5171 = vrot.lane.b32.xlu0 %v5164, 64
    %v5172 = vpop.permute.xlu0 %5171
    %5174 = vst.msk [vmem:[#allocation2 + $0x30] sm:$0xff] %vm569, %v5172
    %v5175 = vsel %vm563, %v5167, %v5172
    %v5176 = vpack.c.bf16 %v5175, %v5175
    %v5178 = vsel %vm462, %v5176, 0
    %5180 = vmatprep.subr.bf16.mxu0 0
    %5181 = vmatpush1.bf16.msra.mxu0 0
    %5182 = vmatprep.subr.bf16.mxu0 0
    %5183 = vmatpush1.bf16.msra.mxu0 0
    %5184 = vmatprep.subr.bf16.mxu0 0
    %5185 = vmatpush1.bf16.msra.mxu0 0
    %5186 = vmatprep.subr.bf16.mxu0 0
    %5187 = vmatpush1.bf16.msra.mxu0 0
    %5188 = vmatprep.subr.bf16.mxu0 %v4955
    %5189 = vmatpush1.bf16.msra.mxu0 %v4954
    %5190 = vmatprep.subr.bf16.mxu0 %v4953
    %5191 = vmatpush1.bf16.msra.mxu0 %v4952
    %5192 = vmatprep.subr.bf16.mxu0 %v4951
    %5193 = vmatpush1.bf16.msra.mxu0 %v4950
    %5194 = vmatprep.subr.bf16.mxu0 %v4949
    %5195 = vmatpush1.bf16.msra.mxu0 %v4948
    %5196 = vmatprep.subr.bf16.mxu0 0
    %5197 = vmatpush2.bf16.msra.mxu0 0
    %5198 = vmatprep.subr.bf16.mxu0 0
    %5199 = vmatpush2.bf16.msra.mxu0 0
    %5200 = vmatprep.subr.bf16.mxu0 0
    %5201 = vmatpush2.bf16.msra.mxu0 0
    %5202 = vmatprep.subr.bf16.mxu0 0
    %5203 = vmatpush2.bf16.msra.mxu0 0
    %5204 = vmatprep.subr.bf16.mxu0 0
    %5205 = vmatpush2.bf16.msra.mxu0 0
    %5206 = vmatprep.subr.bf16.mxu0 0
    %5207 = vmatpush2.bf16.msra.mxu0 0
    %5208 = vmatprep.subr.bf16.mxu0 0
    %5209 = vmatpush2.bf16.msra.mxu0 0
    %5210 = vmatprep.subr.bf16.mxu0 0
    %5211 = vmatpush2.bf16.msra.mxu0 0
    %5212 = vmatprep.mubr.bf16.mxu0 0
    %5213 = vmatmul.mubr.bf16.gmra.mxu0 %v5178
    %v5214 = vpop.f32.mrf.mxu0
    %v5215 = vadd.f32 0.0, %v5214
    %v5216 = vpop.f32.mrf.mxu0
    %v5217 = vadd.f32 0.0, %v5216
    %v5218 = vpop.f32.mrf.mxu0
    %v5219 = vpop.f32.mrf.mxu0
    %5220 = vdwg.mxu0
    %v5221 = vld [vmem:[#allocation3 + $0x20] sm:$0xff]
    %v5222 = vadd.f32 %v5221, %v5215
    %v5223 = vld [vmem:[#allocation3 + $0x58] sm:$0xff]
    %v5224 = vadd.f32 %v5223, %v5217
    %v5225 = vxor.u32 %v5222, 2147483648
    %v5226 = vmul.f32 %v5225, 1.442695
    %v5227 = vpow.pop %v5226
    %v5228 = vadd.f32 %v5227, 1.0
    %v5229 = vrcp.pop %v5228
    %v5230 = vmul.f32 1.0, %v5229
    %v5231 = vtanh.pop %v5222
    %v5232 = vxor.u32 %v5224, 2147483648
    %v5233 = vmul.f32 %v5232, 1.442695
    %v5234 = vpow.pop %v5233
    %v5235 = vadd.f32 %v5234, 1.0
    %v5236 = vrcp.pop %v5235
    %v5237 = vmul.f32 1.0, %v5236
    %v5238 = vtanh.pop %v5224
    %v5239 = vmul.f32 %v5230, %v5141
    %5241 = vrot.lane.b32.xlu0 %v5231, 64
    %v5242 = vpop.permute.xlu0 %5241
    %v5244 = vmul.f32 %v5230, %v5242
    %5246 = vrot.lane.b32.xlu0 %v5244, 32
    %v5247 = vpop.permute.xlu0 %5246
    %v5249 = vadd.f32 %v5239, %v5247
    %v5250 = vmul.f32 %v5237, %v5152
    %5252 = vrot.lane.b32.xlu0 %v5238, 64
    %v5253 = vpop.permute.xlu0 %5252
    %v5255 = vmul.f32 %v5237, %v5253
    %5257 = vrot.lane.b32.xlu0 %v5255, 32
    %v5258 = vpop.permute.xlu0 %5257
    %v5260 = vadd.f32 %v5250, %v5258
    %v5261 = vtanh.pop %v5249
    %5263 = vrot.lane.b32.xlu0 %v5261, 64
    %v5264 = vpop.permute.xlu0 %5263
    %v5266 = vmul.f32 %v5230, %v5264
    %v5267 = vtanh.pop %v5260
    %5269 = vrot.lane.b32.xlu0 %v5267, 64
    %v5270 = vpop.permute.xlu0 %5269
    %v5272 = vmul.f32 %v5237, %v5270
    %5274 = vrot.lane.b32.xlu0 %v5266, 32
    %v5275 = vpop.permute.xlu0 %5274
    %5277 = vst.msk [vmem:[#allocation2 + $0x10] sm:$0xff] %vm563, %v5275
    %5279 = vrot.lane.b32.xlu0 %v5272, 64
    %v5280 = vpop.permute.xlu0 %5279
    %5282 = vst.msk [vmem:[#allocation2 + $0x28] sm:$0xff] %vm569, %v5280
    %v5283 = vsel %vm563, %v5275, %v5280
    %v5284 = vpack.c.bf16 %v5283, %v5283
    %v5286 = vsel %vm462, %v5284, 0
    %5288 = vmatprep.subr.bf16.mxu0 0
    %5289 = vmatpush1.bf16.msra.mxu0 0
    %5290 = vmatprep.subr.bf16.mxu0 0
    %5291 = vmatpush1.bf16.msra.mxu0 0
    %5292 = vmatprep.subr.bf16.mxu0 0
    %5293 = vmatpush1.bf16.msra.mxu0 0
    %5294 = vmatprep.subr.bf16.mxu0 0
    %5295 = vmatpush1.bf16.msra.mxu0 0
    %5296 = vmatprep.subr.bf16.mxu0 %v4955
    %5297 = vmatpush1.bf16.msra.mxu0 %v4954
    %5298 = vmatprep.subr.bf16.mxu0 %v4953
    %5299 = vmatpush1.bf16.msra.mxu0 %v4952
    %5300 = vmatprep.subr.bf16.mxu0 %v4951
    %5301 = vmatpush1.bf16.msra.mxu0 %v4950
    %5302 = vmatprep.subr.bf16.mxu0 %v4949
    %5303 = vmatpush1.bf16.msra.mxu0 %v4948
    %5304 = vmatprep.subr.bf16.mxu0 0
    %5305 = vmatpush2.bf16.msra.mxu0 0
    %5306 = vmatprep.subr.bf16.mxu0 0
    %5307 = vmatpush2.bf16.msra.mxu0 0
    %5308 = vmatprep.subr.bf16.mxu0 0
    %5309 = vmatpush2.bf16.msra.mxu0 0
    %5310 = vmatprep.subr.bf16.mxu0 0
    %5311 = vmatpush2.bf16.msra.mxu0 0
    %5312 = vmatprep.subr.bf16.mxu0 0
    %5313 = vmatpush2.bf16.msra.mxu0 0
    %5314 = vmatprep.subr.bf16.mxu0 0
    %5315 = vmatpush2.bf16.msra.mxu0 0
    %5316 = vmatprep.subr.bf16.mxu0 0
    %5317 = vmatpush2.bf16.msra.mxu0 0
    %5318 = vmatprep.subr.bf16.mxu0 0
    %5319 = vmatpush2.bf16.msra.mxu0 0
    %5320 = vmatprep.mubr.bf16.mxu0 0
    %5321 = vmatmul.mubr.bf16.gmra.mxu0 %v5286
    %v5322 = vpop.f32.mrf.mxu0
    %v5323 = vadd.f32 0.0, %v5322
    %v5324 = vpop.f32.mrf.mxu0
    %v5325 = vadd.f32 0.0, %v5324
    %v5326 = vpop.f32.mrf.mxu0
    %v5327 = vpop.f32.mrf.mxu0
    %5328 = vdwg.mxu0
    %v5329 = vld [vmem:[#allocation3 + $0x30] sm:$0xff]
    %v5330 = vadd.f32 %v5329, %v5323
    %v5331 = vld [vmem:[#allocation3 + $0x48] sm:$0xff]
    %v5332 = vadd.f32 %v5331, %v5325
    %v5333 = vxor.u32 %v5330, 2147483648
    %v5334 = vmul.f32 %v5333, 1.442695
    %v5335 = vpow.pop %v5334
    %v5336 = vadd.f32 %v5335, 1.0
    %v5337 = vrcp.pop %v5336
    %v5338 = vmul.f32 1.0, %v5337
    %v5339 = vtanh.pop %v5330
    %v5340 = vxor.u32 %v5332, 2147483648
    %v5341 = vmul.f32 %v5340, 1.442695
    %v5342 = vpow.pop %v5341
    %v5343 = vadd.f32 %v5342, 1.0
    %v5344 = vrcp.pop %v5343
    %v5345 = vmul.f32 1.0, %v5344
    %v5346 = vtanh.pop %v5332
    %v5347 = vmul.f32 %v5338, %v5249
    %5349 = vrot.lane.b32.xlu0 %v5339, 64
    %v5350 = vpop.permute.xlu0 %5349
    %v5352 = vmul.f32 %v5338, %v5350
    %5354 = vrot.lane.b32.xlu0 %v5352, 32
    %v5355 = vpop.permute.xlu0 %5354
    %v5357 = vadd.f32 %v5347, %v5355
    %v5358 = vmul.f32 %v5345, %v5260
    %5360 = vrot.lane.b32.xlu0 %v5346, 64
    %v5361 = vpop.permute.xlu0 %5360
    %v5363 = vmul.f32 %v5345, %v5361
    %5365 = vrot.lane.b32.xlu0 %v5363, 32
    %v5366 = vpop.permute.xlu0 %5365
    %v5368 = vadd.f32 %v5358, %v5366
    %v5369 = vtanh.pop %v5357
    %5371 = vrot.lane.b32.xlu0 %v5369, 64
    %v5372 = vpop.permute.xlu0 %5371
    %v5374 = vmul.f32 %v5338, %v5372
    %v5375 = vtanh.pop %v5368
    %5377 = vrot.lane.b32.xlu0 %v5375, 64
    %v5378 = vpop.permute.xlu0 %5377
    %v5380 = vmul.f32 %v5345, %v5378
    %5382 = vrot.lane.b32.xlu0 %v5374, 32
    %v5383 = vpop.permute.xlu0 %5382
    %5385 = vst.msk [vmem:[#allocation2 + $0x18] sm:$0xff] %vm563, %v5383
    %5387 = vrot.lane.b32.xlu0 %v5380, 64
    %v5388 = vpop.permute.xlu0 %5387
    %5390 = vst.msk [vmem:[#allocation2 + $0x20] sm:$0xff] %vm569, %v5388
    %v5391 = vsel %vm563, %v5383, %v5388
    %v5392 = vpack.c.bf16 %v5391, %v5391
    %v5394 = vsel %vm462, %v5392, 0
    %5396 = vmatprep.subr.bf16.mxu0 0
    %5397 = vmatpush1.bf16.msra.mxu0 0
    %5398 = vmatprep.subr.bf16.mxu0 0
    %5399 = vmatpush1.bf16.msra.mxu0 0
    %5400 = vmatprep.subr.bf16.mxu0 0
    %5401 = vmatpush1.bf16.msra.mxu0 0
    %5402 = vmatprep.subr.bf16.mxu0 0
    %5403 = vmatpush1.bf16.msra.mxu0 0
    %5404 = vmatprep.subr.bf16.mxu0 %v4955
    %5405 = vmatpush1.bf16.msra.mxu0 %v4954
    %5406 = vmatprep.subr.bf16.mxu0 %v4953
    %5407 = vmatpush1.bf16.msra.mxu0 %v4952
    %5408 = vmatprep.subr.bf16.mxu0 %v4951
    %5409 = vmatpush1.bf16.msra.mxu0 %v4950
    %5410 = vmatprep.subr.bf16.mxu0 %v4949
    %5411 = vmatpush1.bf16.msra.mxu0 %v4948
    %5412 = vmatprep.subr.bf16.mxu0 0
    %5413 = vmatpush2.bf16.msra.mxu0 0
    %5414 = vmatprep.subr.bf16.mxu0 0
    %5415 = vmatpush2.bf16.msra.mxu0 0
    %5416 = vmatprep.subr.bf16.mxu0 0
    %5417 = vmatpush2.bf16.msra.mxu0 0
    %5418 = vmatprep.subr.bf16.mxu0 0
    %5419 = vmatpush2.bf16.msra.mxu0 0
    %5420 = vmatprep.subr.bf16.mxu0 0
    %5421 = vmatpush2.bf16.msra.mxu0 0
    %5422 = vmatprep.subr.bf16.mxu0 0
    %5423 = vmatpush2.bf16.msra.mxu0 0
    %5424 = vmatprep.subr.bf16.mxu0 0
    %5425 = vmatpush2.bf16.msra.mxu0 0
    %5426 = vmatprep.subr.bf16.mxu0 0
    %5427 = vmatpush2.bf16.msra.mxu0 0
    %5428 = vmatprep.mubr.bf16.mxu0 0
    %5429 = vmatmul.mubr.bf16.gmra.mxu0 %v5394
    %v5430 = vpop.f32.mrf.mxu0
    %v5431 = vadd.f32 0.0, %v5430
    %v5432 = vpop.f32.mrf.mxu0
    %v5433 = vadd.f32 0.0, %v5432
    %v5434 = vpop.f32.mrf.mxu0
    %v5435 = vpop.f32.mrf.mxu0
    %5436 = vdwg.mxu0
    %v5437 = vld [vmem:[#allocation3 + $0x40] sm:$0xff]
    %v5438 = vadd.f32 %v5437, %v5431
    %v5439 = vld [vmem:[#allocation3 + $0x38] sm:$0xff]
    %v5440 = vadd.f32 %v5439, %v5433
    %v5441 = vxor.u32 %v5438, 2147483648
    %v5442 = vmul.f32 %v5441, 1.442695
    %v5443 = vpow.pop %v5442
    %v5444 = vadd.f32 %v5443, 1.0
    %v5445 = vrcp.pop %v5444
    %v5446 = vmul.f32 1.0, %v5445
    %v5447 = vtanh.pop %v5438
    %v5448 = vxor.u32 %v5440, 2147483648
    %v5449 = vmul.f32 %v5448, 1.442695
    %v5450 = vpow.pop %v5449
    %v5451 = vadd.f32 %v5450, 1.0
    %v5452 = vrcp.pop %v5451
    %v5453 = vmul.f32 1.0, %v5452
    %v5454 = vtanh.pop %v5440
    %v5455 = vmul.f32 %v5446, %v5357
    %5457 = vrot.lane.b32.xlu0 %v5447, 64
    %v5458 = vpop.permute.xlu0 %5457
    %v5460 = vmul.f32 %v5446, %v5458
    %5462 = vrot.lane.b32.xlu0 %v5460, 32
    %v5463 = vpop.permute.xlu0 %5462
    %v5465 = vadd.f32 %v5455, %v5463
    %v5466 = vmul.f32 %v5453, %v5368
    %5468 = vrot.lane.b32.xlu0 %v5454, 64
    %v5469 = vpop.permute.xlu0 %5468
    %v5471 = vmul.f32 %v5453, %v5469
    %5473 = vrot.lane.b32.xlu0 %v5471, 32
    %v5474 = vpop.permute.xlu0 %5473
    %v5476 = vadd.f32 %v5466, %v5474
    %v5477 = vtanh.pop %v5465
    %5479 = vrot.lane.b32.xlu0 %v5477, 64
    %v5480 = vpop.permute.xlu0 %5479
    %v5482 = vmul.f32 %v5446, %v5480
    %v5483 = vtanh.pop %v5476
    %5485 = vrot.lane.b32.xlu0 %v5483, 64
    %v5486 = vpop.permute.xlu0 %5485
    %v5488 = vmul.f32 %v5453, %v5486
    %5490 = vrot.lane.b32.xlu0 %v5482, 32
    %v5491 = vpop.permute.xlu0 %5490
    %5493 = vst.msk [vmem:[#allocation2 + $0x20] sm:$0xff] %vm563, %v5491
    %5495 = vrot.lane.b32.xlu0 %v5488, 64
    %v5496 = vpop.permute.xlu0 %5495
    %5498 = vst.msk [vmem:[#allocation2 + $0x18] sm:$0xff] %vm569, %v5496
    %v5499 = vsel %vm563, %v5491, %v5496
    %v5500 = vpack.c.bf16 %v5499, %v5499
    %v5502 = vsel %vm462, %v5500, 0
    %5504 = vmatprep.subr.bf16.mxu0 0
    %5505 = vmatpush1.bf16.msra.mxu0 0
    %5506 = vmatprep.subr.bf16.mxu0 0
    %5507 = vmatpush1.bf16.msra.mxu0 0
    %5508 = vmatprep.subr.bf16.mxu0 0
    %5509 = vmatpush1.bf16.msra.mxu0 0
    %5510 = vmatprep.subr.bf16.mxu0 0
    %5511 = vmatpush1.bf16.msra.mxu0 0
    %5512 = vmatprep.subr.bf16.mxu0 %v4955
    %5513 = vmatpush1.bf16.msra.mxu0 %v4954
    %5514 = vmatprep.subr.bf16.mxu0 %v4953
    %5515 = vmatpush1.bf16.msra.mxu0 %v4952
    %5516 = vmatprep.subr.bf16.mxu0 %v4951
    %5517 = vmatpush1.bf16.msra.mxu0 %v4950
    %5518 = vmatprep.subr.bf16.mxu0 %v4949
    %5519 = vmatpush1.bf16.msra.mxu0 %v4948
    %5520 = vmatprep.subr.bf16.mxu0 0
    %5521 = vmatpush2.bf16.msra.mxu0 0
    %5522 = vmatprep.subr.bf16.mxu0 0
    %5523 = vmatpush2.bf16.msra.mxu0 0
    %5524 = vmatprep.subr.bf16.mxu0 0
    %5525 = vmatpush2.bf16.msra.mxu0 0
    %5526 = vmatprep.subr.bf16.mxu0 0
    %5527 = vmatpush2.bf16.msra.mxu0 0
    %5528 = vmatprep.subr.bf16.mxu0 0
    %5529 = vmatpush2.bf16.msra.mxu0 0
    %5530 = vmatprep.subr.bf16.mxu0 0
    %5531 = vmatpush2.bf16.msra.mxu0 0
    %5532 = vmatprep.subr.bf16.mxu0 0
    %5533 = vmatpush2.bf16.msra.mxu0 0
    %5534 = vmatprep.subr.bf16.mxu0 0
    %5535 = vmatpush2.bf16.msra.mxu0 0
    %5536 = vmatprep.mubr.bf16.mxu0 0
    %5537 = vmatmul.mubr.bf16.gmra.mxu0 %v5502
    %v5538 = vpop.f32.mrf.mxu0
    %v5539 = vadd.f32 0.0, %v5538
    %v5540 = vpop.f32.mrf.mxu0
    %v5541 = vadd.f32 0.0, %v5540
    %v5542 = vpop.f32.mrf.mxu0
    %v5543 = vpop.f32.mrf.mxu0
    %5544 = vdwg.mxu0
    %v5545 = vld [vmem:[#allocation3 + $0x50] sm:$0xff]
    %v5546 = vadd.f32 %v5545, %v5539
    %v5547 = vld [vmem:[#allocation3 + $0x28] sm:$0xff]
    %v5548 = vadd.f32 %v5547, %v5541
    %v5549 = vxor.u32 %v5546, 2147483648
    %v5550 = vmul.f32 %v5549, 1.442695
    %v5551 = vpow.pop %v5550
    %v5552 = vadd.f32 %v5551, 1.0
    %v5553 = vrcp.pop %v5552
    %v5554 = vmul.f32 1.0, %v5553
    %v5555 = vtanh.pop %v5546
    %v5556 = vxor.u32 %v5548, 2147483648
    %v5557 = vmul.f32 %v5556, 1.442695
    %v5558 = vpow.pop %v5557
    %v5559 = vadd.f32 %v5558, 1.0
    %v5560 = vrcp.pop %v5559
    %v5561 = vmul.f32 1.0, %v5560
    %v5562 = vtanh.pop %v5548
    %v5563 = vmul.f32 %v5554, %v5465
    %5565 = vrot.lane.b32.xlu0 %v5555, 64
    %v5566 = vpop.permute.xlu0 %5565
    %v5568 = vmul.f32 %v5554, %v5566
    %5570 = vrot.lane.b32.xlu0 %v5568, 32
    %v5571 = vpop.permute.xlu0 %5570
    %v5573 = vadd.f32 %v5563, %v5571
    %v5574 = vmul.f32 %v5561, %v5476
    %5576 = vrot.lane.b32.xlu0 %v5562, 64
    %v5577 = vpop.permute.xlu0 %5576
    %v5579 = vmul.f32 %v5561, %v5577
    %5581 = vrot.lane.b32.xlu0 %v5579, 32
    %v5582 = vpop.permute.xlu0 %5581
    %v5584 = vadd.f32 %v5574, %v5582
    %v5585 = vtanh.pop %v5573
    %5587 = vrot.lane.b32.xlu0 %v5585, 64
    %v5588 = vpop.permute.xlu0 %5587
    %v5590 = vmul.f32 %v5554, %v5588
    %v5591 = vtanh.pop %v5584
    %5593 = vrot.lane.b32.xlu0 %v5591, 64
    %v5594 = vpop.permute.xlu0 %5593
    %v5596 = vmul.f32 %v5561, %v5594
    %5598 = vrot.lane.b32.xlu0 %v5590, 32
    %v5599 = vpop.permute.xlu0 %5598
    %5601 = vst.msk [vmem:[#allocation2 + $0x28] sm:$0xff] %vm563, %v5599
    %5603 = vrot.lane.b32.xlu0 %v5596, 64
    %v5604 = vpop.permute.xlu0 %5603
    %5606 = vst.msk [vmem:[#allocation2 + $0x10] sm:$0xff] %vm569, %v5604
    %v5607 = vsel %vm563, %v5599, %v5604
    %v5608 = vpack.c.bf16 %v5607, %v5607
    %v5610 = vsel %vm462, %v5608, 0
    %5612 = vmatprep.subr.bf16.mxu0 0
    %5613 = vmatpush1.bf16.msra.mxu0 0
    %5614 = vmatprep.subr.bf16.mxu0 0
    %5615 = vmatpush1.bf16.msra.mxu0 0
    %5616 = vmatprep.subr.bf16.mxu0 0
    %5617 = vmatpush1.bf16.msra.mxu0 0
    %5618 = vmatprep.subr.bf16.mxu0 0
    %5619 = vmatpush1.bf16.msra.mxu0 0
    %5620 = vmatprep.subr.bf16.mxu0 %v4955
    %5621 = vmatpush1.bf16.msra.mxu0 %v4954
    %5622 = vmatprep.subr.bf16.mxu0 %v4953
    %5623 = vmatpush1.bf16.msra.mxu0 %v4952
    %5624 = vmatprep.subr.bf16.mxu0 %v4951
    %5625 = vmatpush1.bf16.msra.mxu0 %v4950
    %5626 = vmatprep.subr.bf16.mxu0 %v4949
    %5627 = vmatpush1.bf16.msra.mxu0 %v4948
    %5628 = vmatprep.subr.bf16.mxu0 0
    %5629 = vmatpush2.bf16.msra.mxu0 0
    %5630 = vmatprep.subr.bf16.mxu0 0
    %5631 = vmatpush2.bf16.msra.mxu0 0
    %5632 = vmatprep.subr.bf16.mxu0 0
    %5633 = vmatpush2.bf16.msra.mxu0 0
    %5634 = vmatprep.subr.bf16.mxu0 0
    %5635 = vmatpush2.bf16.msra.mxu0 0
    %5636 = vmatprep.subr.bf16.mxu0 0
    %5637 = vmatpush2.bf16.msra.mxu0 0
    %5638 = vmatprep.subr.bf16.mxu0 0
    %5639 = vmatpush2.bf16.msra.mxu0 0
    %5640 = vmatprep.subr.bf16.mxu0 0
    %5641 = vmatpush2.bf16.msra.mxu0 0
    %5642 = vmatprep.subr.bf16.mxu0 0
    %5643 = vmatpush2.bf16.msra.mxu0 0
    %5644 = vmatprep.mubr.bf16.mxu0 0
    %5645 = vmatmul.mubr.bf16.gmra.mxu0 %v5610
    %v5646 = vpop.f32.mrf.mxu0
    %v5647 = vadd.f32 0.0, %v5646
    %v5648 = vpop.f32.mrf.mxu0
    %v5649 = vadd.f32 0.0, %v5648
    %v5650 = vpop.f32.mrf.mxu0
    %v5651 = vpop.f32.mrf.mxu0
    %5652 = vdwg.mxu0
    %v5653 = vld [vmem:[#allocation3 + $0x60] sm:$0xff]
    %v5654 = vadd.f32 %v5653, %v5647
    %v5655 = vld [vmem:[#allocation3 + $0x18] sm:$0xff]
    %v5656 = vadd.f32 %v5655, %v5649
    %v5657 = vxor.u32 %v5654, 2147483648
    %v5658 = vmul.f32 %v5657, 1.442695
    %v5659 = vpow.pop %v5658
    %v5660 = vadd.f32 %v5659, 1.0
    %v5661 = vrcp.pop %v5660
    %v5662 = vmul.f32 1.0, %v5661
    %v5663 = vtanh.pop %v5654
    %v5664 = vxor.u32 %v5656, 2147483648
    %v5665 = vmul.f32 %v5664, 1.442695
    %v5666 = vpow.pop %v5665
    %v5667 = vadd.f32 %v5666, 1.0
    %v5668 = vrcp.pop %v5667
    %v5669 = vmul.f32 1.0, %v5668
    %v5670 = vtanh.pop %v5656
    %v5671 = vmul.f32 %v5662, %v5573
    %5673 = vrot.lane.b32.xlu0 %v5663, 64
    %v5674 = vpop.permute.xlu0 %5673
    %v5676 = vmul.f32 %v5662, %v5674
    %5678 = vrot.lane.b32.xlu0 %v5676, 32
    %v5679 = vpop.permute.xlu0 %5678
    %v5681 = vadd.f32 %v5671, %v5679
    %v5682 = vmul.f32 %v5669, %v5584
    %5684 = vrot.lane.b32.xlu0 %v5670, 64
    %v5685 = vpop.permute.xlu0 %5684
    %v5687 = vmul.f32 %v5669, %v5685
    %5689 = vrot.lane.b32.xlu0 %v5687, 32
    %v5690 = vpop.permute.xlu0 %5689
    %v5692 = vadd.f32 %v5682, %v5690
    %v5693 = vtanh.pop %v5681
    %5695 = vrot.lane.b32.xlu0 %v5693, 64
    %v5696 = vpop.permute.xlu0 %5695
    %v5698 = vmul.f32 %v5662, %v5696
    %v5699 = vtanh.pop %v5692
    %5701 = vrot.lane.b32.xlu0 %v5699, 64
    %v5702 = vpop.permute.xlu0 %5701
    %v5704 = vmul.f32 %v5669, %v5702
    %5706 = vrot.lane.b32.xlu0 %v5698, 32
    %v5707 = vpop.permute.xlu0 %5706
    %5709 = vst.msk [vmem:[#allocation2 + $0x30] sm:$0xff] %vm563, %v5707
    %5711 = vrot.lane.b32.xlu0 %v5704, 64
    %v5712 = vpop.permute.xlu0 %5711
    %5714 = vst.msk [vmem:[#allocation2 + $0x8] sm:$0xff] %vm569, %v5712
    %v5715 = vsel %vm563, %v5707, %v5712
    %v5716 = vpack.c.bf16 %v5715, %v5715
    %v5718 = vsel %vm462, %v5716, 0
    %5720 = vmatprep.subr.bf16.mxu0 0
    %5721 = vmatpush1.bf16.msra.mxu0 0
    %5722 = vmatprep.subr.bf16.mxu0 0
    %5723 = vmatpush1.bf16.msra.mxu0 0
    %5724 = vmatprep.subr.bf16.mxu0 0
    %5725 = vmatpush1.bf16.msra.mxu0 0
    %5726 = vmatprep.subr.bf16.mxu0 0
    %5727 = vmatpush1.bf16.msra.mxu0 0
    %5728 = vmatprep.subr.bf16.mxu0 %v4955
    %5729 = vmatpush1.bf16.msra.mxu0 %v4954
    %5730 = vmatprep.subr.bf16.mxu0 %v4953
    %5731 = vmatpush1.bf16.msra.mxu0 %v4952
    %5732 = vmatprep.subr.bf16.mxu0 %v4951
    %5733 = vmatpush1.bf16.msra.mxu0 %v4950
    %5734 = vmatprep.subr.bf16.mxu0 %v4949
    %5735 = vmatpush1.bf16.msra.mxu0 %v4948
    %5736 = vmatprep.subr.bf16.mxu0 0
    %5737 = vmatpush2.bf16.msra.mxu0 0
    %5738 = vmatprep.subr.bf16.mxu0 0
    %5739 = vmatpush2.bf16.msra.mxu0 0
    %5740 = vmatprep.subr.bf16.mxu0 0
    %5741 = vmatpush2.bf16.msra.mxu0 0
    %5742 = vmatprep.subr.bf16.mxu0 0
    %5743 = vmatpush2.bf16.msra.mxu0 0
    %5744 = vmatprep.subr.bf16.mxu0 0
    %5745 = vmatpush2.bf16.msra.mxu0 0
    %5746 = vmatprep.subr.bf16.mxu0 0
    %5747 = vmatpush2.bf16.msra.mxu0 0
    %5748 = vmatprep.subr.bf16.mxu0 0
    %5749 = vmatpush2.bf16.msra.mxu0 0
    %5750 = vmatprep.subr.bf16.mxu0 0
    %5751 = vmatpush2.bf16.msra.mxu0 0
    %5752 = vmatprep.mubr.bf16.mxu0 0
    %5753 = vmatmul.mubr.bf16.gmra.mxu0 %v5718
    %v5754 = vpop.f32.mrf.mxu0
    %v5755 = vadd.f32 0.0, %v5754
    %v5756 = vpop.f32.mrf.mxu0
    %v5757 = vadd.f32 0.0, %v5756
    %v5758 = vpop.f32.mrf.mxu0
    %v5759 = vpop.f32.mrf.mxu0
    %5760 = vdwg.mxu0
    %v5761 = vld [vmem:[#allocation3 + $0x70] sm:$0xff]
    %v5762 = vadd.f32 %v5761, %v5755
    %v5763 = vld [vmem:[#allocation3 + $0x8] sm:$0xff]
    %v5764 = vadd.f32 %v5763, %v5757
    %v5765 = vxor.u32 %v5762, 2147483648
    %v5766 = vmul.f32 %v5765, 1.442695
    %v5767 = vpow.pop %v5766
    %v5768 = vadd.f32 %v5767, 1.0
    %v5769 = vrcp.pop %v5768
    %v5770 = vmul.f32 1.0, %v5769
    %v5771 = vtanh.pop %v5762
    %v5772 = vxor.u32 %v5764, 2147483648
    %v5773 = vmul.f32 %v5772, 1.442695
    %v5774 = vpow.pop %v5773
    %v5775 = vadd.f32 %v5774, 1.0
    %v5776 = vrcp.pop %v5775
    %v5777 = vmul.f32 1.0, %v5776
    %v5778 = vtanh.pop %v5764
    %v5779 = vmul.f32 %v5770, %v5681
    %5781 = vrot.lane.b32.xlu0 %v5771, 64
    %v5782 = vpop.permute.xlu0 %5781
    %v5784 = vmul.f32 %v5770, %v5782
    %5786 = vrot.lane.b32.xlu0 %v5784, 32
    %v5787 = vpop.permute.xlu0 %5786
    %v5789 = vadd.f32 %v5779, %v5787
    %v5790 = vmul.f32 %v5777, %v5692
    %5792 = vrot.lane.b32.xlu0 %v5778, 64
    %v5793 = vpop.permute.xlu0 %5792
    %v5795 = vmul.f32 %v5777, %v5793
    %5797 = vrot.lane.b32.xlu0 %v5795, 32
    %v5798 = vpop.permute.xlu0 %5797
    %v5800 = vadd.f32 %v5790, %v5798
    %v5801 = vtanh.pop %v5789
    %5803 = vrot.lane.b32.xlu0 %v5801, 64
    %v5804 = vpop.permute.xlu0 %5803
    %v5806 = vmul.f32 %v5770, %v5804
    %v5807 = vtanh.pop %v5800
    %5809 = vrot.lane.b32.xlu0 %v5807, 64
    %v5810 = vpop.permute.xlu0 %5809
    %v5812 = vmul.f32 %v5777, %v5810
    %5814 = vrot.lane.b32.xlu0 %v5806, 32
    %v5815 = vpop.permute.xlu0 %5814
    %5817 = vst.msk [vmem:[#allocation2 + $0x38] sm:$0xff] %vm563, %v5815
    %5819 = vrot.lane.b32.xlu0 %v5812, 64
    %v5820 = vpop.permute.xlu0 %5819
    %5822 = vst.msk [vmem:[#allocation2] sm:$0xff] %vm569, %v5820
    %v5823 = vld [vmem:[#allocation2] sm:$0xff]
    %v5824 = vld [vmem:[#allocation2 + $0x8] sm:$0xff]
    %v5825 = vld [vmem:[#allocation2 + $0x10] sm:$0xff]
    %v5826 = vld [vmem:[#allocation2 + $0x18] sm:$0xff]
    %v5827 = vld [vmem:[#allocation2 + $0x20] sm:$0xff]
    %v5828 = vld [vmem:[#allocation2 + $0x28] sm:$0xff]
    %v5829 = vld [vmem:[#allocation2 + $0x30] sm:$0xff]
    %v5830 = vld [vmem:[#allocation2 + $0x38] sm:$0xff]
    %v5831 = vpack.c.bf16 %v5824, %v5823
    %v5832 = vpack.c.bf16 %v5826, %v5825
    %v5833 = vpack.c.bf16 %v5828, %v5827
    %v5834 = vpack.c.bf16 %v5830, %v5829
    %v5835 = vld [vmem:[#allocation24] sm:$0xf]
    %v5836 = vld [vmem:[#allocation24 + $0x4] sm:$0xf]
    %v5837 = vld [vmem:[#allocation24 + $0x8] sm:$0xf]
    %v5838 = vld [vmem:[#allocation24 + $0xc] sm:$0xf]
    %v5839 = vld [vmem:[#allocation24 + $0x10] sm:$0xf]
    %v5840 = vld [vmem:[#allocation24 + $0x14] sm:$0xf]
    %v5841 = vld [vmem:[#allocation24 + $0x18] sm:$0xf]
    %v5842 = vld [vmem:[#allocation24 + $0x1c] sm:$0xf]
    %v5843 = vld [vmem:[#allocation26] sm:$0x1]
    %v5845 = vlaneseq
    %v5846 = vshrl.u32 %v5845, 7
    %v5847 = vsub.s32 0, %v5846
    %v5848 = vrot.slane %v5843, %v5847
    %v5858 = vunpack.c.l.b16 %v5835
    %v5859 = vunpack.c.l.b16 %v5836
    %v5860 = vunpack.c.l.b16 %v5837
    %v5861 = vunpack.c.l.b16 %v5838
    %v5862 = vunpack.c.l.b16 %v5839
    %v5863 = vunpack.c.l.b16 %v5840
    %v5864 = vunpack.c.l.b16 %v5841
    %v5865 = vunpack.c.l.b16 %v5842
    %v5866 = vpack.c.b16 %v5859, %v5858
    %v5867 = vpack.c.b16 %v5861, %v5860
    %v5868 = vpack.c.b16 %v5863, %v5862
    %v5869 = vpack.c.b16 %v5865, %v5864
    %v5875 = vsel %vm462, %v5831, 0
    %v5878 = vsel %vm462, %v5832, 0
    %v5881 = vsel %vm462, %v5833, 0
    %v5884 = vsel %vm462, %v5834, 0
    %5886 = vmatprep.subr.bf16.mxu0 0
    %5887 = vmatpush1.bf16.msra.mxu0 0
    %5888 = vmatprep.subr.bf16.mxu0 0
    %5889 = vmatpush1.bf16.msra.mxu0 0
    %5890 = vmatprep.subr.bf16.mxu0 0
    %5891 = vmatpush1.bf16.msra.mxu0 0
    %5892 = vmatprep.subr.bf16.mxu0 0
    %5893 = vmatpush1.bf16.msra.mxu0 0
    %5894 = vmatprep.subr.bf16.mxu0 0
    %5895 = vmatpush1.bf16.msra.mxu0 %v5869
    %5896 = vmatprep.subr.bf16.mxu0 0
    %5897 = vmatpush1.bf16.msra.mxu0 %v5868
    %5898 = vmatprep.subr.bf16.mxu0 0
    %5899 = vmatpush1.bf16.msra.mxu0 %v5867
    %5900 = vmatprep.subr.bf16.mxu0 0
    %5901 = vmatpush1.bf16.msra.mxu0 %v5866
    %5902 = vmatprep.subr.bf16.mxu0 0
    %5903 = vmatpush2.bf16.msra.mxu0 0
    %5904 = vmatprep.subr.bf16.mxu0 0
    %5905 = vmatpush2.bf16.msra.mxu0 0
    %5906 = vmatprep.subr.bf16.mxu0 0
    %5907 = vmatpush2.bf16.msra.mxu0 0
    %5908 = vmatprep.subr.bf16.mxu0 0
    %5909 = vmatpush2.bf16.msra.mxu0 0
    %5910 = vmatprep.subr.bf16.mxu0 0
    %5911 = vmatpush2.bf16.msra.mxu0 0
    %5912 = vmatprep.subr.bf16.mxu0 0
    %5913 = vmatpush2.bf16.msra.mxu0 0
    %5914 = vmatprep.subr.bf16.mxu0 0
    %5915 = vmatpush2.bf16.msra.mxu0 0
    %5916 = vmatprep.subr.bf16.mxu0 0
    %5917 = vmatpush2.bf16.msra.mxu0 0
    %5918 = vmatprep.mubr.bf16.mxu0 0
    %5919 = vmatmul.mubr.bf16.gmra.mxu0 %v5875
    %v5920 = vpop.f32.mrf.mxu0
    %v5921 = vadd.f32 %v5848, %v5920
    %v5922 = vpop.f32.mrf.mxu0
    %v5923 = vpop.f32.mrf.mxu0
    %v5924 = vadd.f32 %v5848, %v5923
    %v5925 = vpop.f32.mrf.mxu0
    %5926 = vmatprep.mubr.bf16.mxu0 0
    %5927 = vmatmul.mubr.bf16.gmra.mxu0 %v5878
    %v5928 = vpop.f32.mrf.mxu0
    %v5929 = vadd.f32 %v5848, %v5928
    %v5930 = vpop.f32.mrf.mxu0
    %v5931 = vpop.f32.mrf.mxu0
    %v5932 = vadd.f32 %v5848, %v5931
    %v5933 = vpop.f32.mrf.mxu0
    %5934 = vmatprep.mubr.bf16.mxu0 0
    %5935 = vmatmul.mubr.bf16.gmra.mxu0 %v5881
    %v5936 = vpop.f32.mrf.mxu0
    %v5937 = vadd.f32 %v5848, %v5936
    %v5938 = vpop.f32.mrf.mxu0
    %v5939 = vpop.f32.mrf.mxu0
    %v5940 = vadd.f32 %v5848, %v5939
    %v5941 = vpop.f32.mrf.mxu0
    %5942 = vmatprep.mubr.bf16.mxu0 0
    %5943 = vmatmul.mubr.bf16.gmra.mxu0 %v5884
    %v5944 = vpop.f32.mrf.mxu0
    %v5945 = vadd.f32 %v5848, %v5944
    %v5946 = vpop.f32.mrf.mxu0
    %v5947 = vpop.f32.mrf.mxu0
    %v5948 = vadd.f32 %v5848, %v5947
    %v5949 = vpop.f32.mrf.mxu0
    %5950 = vdwg.mxu0
    %v5951 = vxor.u32 %v5921, 2147483648
    %v5952 = vxor.u32 %v5924, 2147483648
    %v5953 = vxor.u32 %v5929, 2147483648
    %v5954 = vxor.u32 %v5932, 2147483648
    %v5955 = vxor.u32 %v5937, 2147483648
    %v5956 = vxor.u32 %v5940, 2147483648
    %v5957 = vxor.u32 %v5945, 2147483648
    %v5958 = vxor.u32 %v5948, 2147483648
    %v5959 = vmul.f32 %v5951, 1.442695
    %v5960 = vpow.pop %v5959
    %v5961 = vmul.f32 %v5952, 1.442695
    %v5962 = vpow.pop %v5961
    %v5963 = vmul.f32 %v5953, 1.442695
    %v5964 = vpow.pop %v5963
    %v5965 = vmul.f32 %v5954, 1.442695
    %v5966 = vpow.pop %v5965
    %v5967 = vmul.f32 %v5955, 1.442695
    %v5968 = vpow.pop %v5967
    %v5969 = vmul.f32 %v5956, 1.442695
    %v5970 = vpow.pop %v5969
    %v5971 = vmul.f32 %v5957, 1.442695
    %v5972 = vpow.pop %v5971
    %v5973 = vmul.f32 %v5958, 1.442695
    %v5974 = vpow.pop %v5973
    %v5975 = vadd.f32 %v5960, 1.0
    %v5976 = vadd.f32 %v5962, 1.0
    %v5977 = vadd.f32 %v5964, 1.0
    %v5978 = vadd.f32 %v5966, 1.0
    %v5979 = vadd.f32 %v5968, 1.0
    %v5980 = vadd.f32 %v5970, 1.0
    %v5981 = vadd.f32 %v5972, 1.0
    %v5982 = vadd.f32 %v5974, 1.0
    %v5983 = vrcp.pop %v5975
    %v5984 = vmul.f32 1.0, %v5983
    %v5985 = vrcp.pop %v5976
    %v5986 = vmul.f32 1.0, %v5985
    %v5987 = vrcp.pop %v5977
    %v5988 = vmul.f32 1.0, %v5987
    %v5989 = vrcp.pop %v5978
    %v5990 = vmul.f32 1.0, %v5989
    %v5991 = vrcp.pop %v5979
    %v5992 = vmul.f32 1.0, %v5991
    %v5993 = vrcp.pop %v5980
    %v5994 = vmul.f32 1.0, %v5993
    %v5995 = vrcp.pop %v5981
    %v5996 = vmul.f32 1.0, %v5995
    %v5997 = vrcp.pop %v5982
    %v5998 = vmul.f32 1.0, %v5997
    %vm5999 = vcmask 15360
    %6000 = vst.msk [vmem:[%s20] sm:$0xff] %vm5999, %v5984
    %6001 = vst.msk [vmem:[%s20 + $0x8] sm:$0xff] %vm5999, %v5986
    %6002 = vst.msk [vmem:[%s20 + $0x10] sm:$0xff] %vm5999, %v5988
    %6003 = vst.msk [vmem:[%s20 + $0x18] sm:$0xff] %vm5999, %v5990
    %6004 = vst.msk [vmem:[%s20 + $0x20] sm:$0xff] %vm5999, %v5992
    %6005 = vst.msk [vmem:[%s20 + $0x28] sm:$0xff] %vm5999, %v5994
    %6006 = vst.msk [vmem:[%s20 + $0x30] sm:$0xff] %vm5999, %v5996
    %6007 = vst.msk [vmem:[%s20 + $0x38] sm:$0xff] %vm5999, %v5998
    // Predicated region
    $region142: #{_lambda_.1} parent=1 // pred_check
      _
    $region143: #{_lambda_.1} parent=1 // pred_check_branch
      %6009 = sbr.rel (0) target = $region145
    $region144: #{_lambda_.1} parent=1 // pred_region
      _
    $region145: #{_lambda_.1} parent=1 // pred_fallthru
      _
    // Predicated region
    $region146: #{_lambda_.1} parent=1 // pred_check
      _
    $region147: #{_lambda_.1} parent=1 // pred_check_branch
      %6011 = sbr.rel (0) target = $region149
    $region148: #{_lambda_.1} parent=1 // pred_region
      _
    $region149: #{_lambda_.1} parent=1 // pred_fallthru
      _
    // Predicated region
    $region150: #{_lambda_.1} parent=1 // pred_check
      _
    $region151: #{_lambda_.1} parent=1 // pred_check_branch
      %6013 = sbr.rel (0) target = $region153
    $region152: #{_lambda_.1} parent=1 // pred_region
      _
    $region153: #{_lambda_.1} parent=1 // pred_fallthru
      _
    // Predicated region
    $region154: #{_lambda_.1} parent=1 // pred_check
      _
    $region155: #{_lambda_.1} parent=1 // pred_check_branch
      %6015 = sbr.rel (0) target = $region157
    $region156: #{_lambda_.1} parent=1 // pred_region
      _
    $region157: #{_lambda_.1} parent=1 // pred_fallthru
      _
    %6016 = vsyncpa [#allocation5], 1
    %6017 = vsyncpa [#allocation7], 1
    %6018 = vsyncpa [#allocation10], 1
    %6019 = vsyncpa [#allocation13], 1
    %6020 = vsyncpa [#allocation16], 1
    %6021 = vsyncpa [#allocation19], 1
    %6022 = vsyncpa [#allocation22], 1
    %6023 = vsyncpa [#allocation25], 1

</llo_original>
